<compile_context>
chip_gen: v6e
topology: v6e:2x2x1
jax: 0.10.0
libtpu: 0.0.40
codegen_flags: <defaults>
</compile_context>

<pallas_src>
import functools

import jax
import jax.numpy as jnp
from jax import lax
from jax.experimental import pallas as pl
from jax.experimental.pallas import tpu as pltpu

EPS = 1e-5


# ---------------------------------------------------------------------------
# Kernel: two ResBlock1D blocks fused, one batch element per grid step
# ---------------------------------------------------------------------------
def _resnet_stage_kernel(x_ref, w_ref, b_ref, o_ref, cat_ref, *, l_valid):
    # x_ref  : (1, C, Lp)  activations, NCL layout, zero-padded columns >= l_valid
    # w_ref  : (4, C, 3C)  BN-folded im2col conv weights [blk1.c1, blk1.c2, blk2.c1, blk2.c2]
    # b_ref  : (C, 4)      BN-folded biases, one column per conv
    # o_ref  : (1, C, Lp)
    # cat_ref: (3C, Lp)    shared f32 VMEM scratch for the im2col slab
    C, Lp = x_ref.shape[1], x_ref.shape[2]

    # Lane-validity mask (columns >= l_valid are padding); hoisted, reused 3x.
    col = lax.broadcasted_iota(jnp.int32, (C, Lp), 1)
    valid = (col < l_valid).astype(jnp.float32)

    def conv3(h, w, bias):
        # h is (C, Lp) f32 and guaranteed zero for columns >= l_valid (< Lp), so the
        # roll wrap-around columns are zero == the reference's zero padding.
        cat_ref[0:C, :] = pltpu.roll(h, 1, axis=1)                # tap 0: h[l-1]
        cat_ref[C:2 * C, :] = h                                   # tap 1: h[l]
        cat_ref[2 * C:3 * C, :] = pltpu.roll(h, Lp - 1, axis=1)   # tap 2: h[l+1]
        return jnp.dot(w, cat_ref[...], preferred_element_type=jnp.float32) + bias

    x = x_ref[0].astype(jnp.float32)                              # (C, Lp)

    # ---- ResBlock1D #1 ----
    h = jnp.maximum(conv3(x, w_ref[0], b_ref[:, 0:1]), 0.0) * valid
    h = conv3(h, w_ref[1], b_ref[:, 1:2])
    y = jnp.maximum(x + h, 0.0) * valid                           # residual + ReLU

    # ---- ResBlock1D #2 ----
    h = jnp.maximum(conv3(y, w_ref[2], b_ref[:, 2:3]), 0.0) * valid
    h = conv3(h, w_ref[3], b_ref[:, 3:4])
    # Padded columns may be nonzero here; the wrapper slices them off.
    o_ref[0] = jnp.maximum(y + h, 0.0).astype(o_ref.dtype)


# ---------------------------------------------------------------------------
# Wrapper: fold BN into conv weights, pad L to a lane multiple, launch once
# ---------------------------------------------------------------------------
def _fold_conv_bn(w, b, gamma, beta, mean, var):
    # w: (C_out, C_in, 3) PyTorch Conv1d layout; b/gamma/beta/mean/var: (C_out,)
    # Conv1d -> BatchNorm1d(inference)  ==  Conv1d with scaled weights + shifted bias.
    scale = gamma * lax.rsqrt(var + EPS)
    w_f = w * scale[:, None, None]
    b_f = (b - mean) * scale + beta
    # im2col weight layout matching the slab [h[l-1]; h[l]; h[l+1]]:
    #   w_cat[co, k*C_in + ci] = w_f[co, ci, k]
    c_out, c_in, k = w.shape
    w_cat = jnp.transpose(w_f, (0, 2, 1)).reshape(c_out, k * c_in)
    return w_cat, b_f


def resnet_stage_pallas(x_ncl, params1, params2):
    # x_ncl: (N, C, L) float32, PyTorch NCL layout, used natively.
    N, C, L = x_ncl.shape
    Lp = pl.cdiv(L, 128) * 128
    if Lp == L:
        Lp += 128  # always keep >= 1 zero column so the rolled halo taps read zeros

    folds = []
    for p in (params1, params2):
        folds.append(_fold_conv_bn(p["w1"], p["b1"], p["g1"], p["be1"], p["m1"], p["v1"]))
        folds.append(_fold_conv_bn(p["w2"], p["b2"], p["g2"], p["be2"], p["m2"], p["v2"]))
    w_all = jnp.stack([w for w, _ in folds], axis=0)              # (4, C, 3C)
    b_all = jnp.stack([b for _, b in folds], axis=1)              # (C, 4)

    x_pad = jnp.pad(x_ncl, ((0, 0), (0, 0), (0, Lp - L)))

    kernel = functools.partial(_resnet_stage_kernel, l_valid=L)
    out = pl.pallas_call(
        kernel,
        out_shape=jax.ShapeDtypeStruct((N, C, Lp), x_ncl.dtype),
        grid_spec=pltpu.PrefetchScalarGridSpec(
            num_scalar_prefetch=0,
            grid=(N,),
            in_specs=[
                pl.BlockSpec((1, C, Lp), lambda n: (n, 0, 0)),        # activations
                pl.BlockSpec((4, C, 3 * C), lambda n: (0, 0, 0)),     # folded weights (grid-invariant)
                pl.BlockSpec((C, 4), lambda n: (0, 0)),               # packed biases
            ],
            out_specs=pl.BlockSpec((1, C, Lp), lambda n: (n, 0, 0)),
            scratch_shapes=[pltpu.VMEM((3 * C, Lp), jnp.float32)],    # shared im2col slab
        ),
        compiler_params=pltpu.CompilerParams(
            dimension_semantics=("parallel",)),
    )(x_pad, w_all, b_all)
    return out[:, :, :L]


# ---------------------------------------------------------------------------
# Pure-JAX reference (PyTorch semantics: Conv1d + inference-mode BatchNorm1d)
# ---------------------------------------------------------------------------
def resblock1d_ref(x_ncl, params):
    dn = ("NCW", "OIW", "NCW")

    def conv_bn(h, w, b, g, be, m, v):
        y = lax.conv_general_dilated(h, w, window_strides=(1,), padding=((1, 1),),
                                     dimension_numbers=dn)
        y = y + b[None, :, None]
        return ((y - m[None, :, None]) * lax.rsqrt(v[None, :, None] + EPS)
                * g[None, :, None] + be[None, :, None])

    x = x_ncl.astype(jnp.float32)
    h = jnp.maximum(conv_bn(x, params["w1"], params["b1"], params["g1"],
                            params["be1"], params["m1"], params["v1"]), 0.0)
    h = conv_bn(h, params["w2"], params["b2"], params["g2"],
                params["be2"], params["m2"], params["v2"])
    return jnp.maximum(x + h, 0.0)


def resnet_stage_ref(x_ncl, params1, params2):
    # resnet = ResBlock1D(128) -> ResBlock1D(128) -> Dropout (identity in eval)
    return resblock1d_ref(resblock1d_ref(x_ncl, params1), params2)


def make_params(key, C):
    ks = jax.random.split(key, 12)
    p = {}
    # Conv weights in PyTorch layout (C_out, C_in, K=3); biases/BN params are (C,).
    p["w1"] = 0.1 * jax.random.normal(ks[0], (C, C, 3), jnp.float32)
    p["b1"] = 0.1 * jax.random.normal(ks[1], (C,), jnp.float32)
    p["w2"] = 0.1 * jax.random.normal(ks[2], (C, C, 3), jnp.float32)
    p["b2"] = 0.1 * jax.random.normal(ks[3], (C,), jnp.float32)
    p["g1"] = 1.0 + 0.1 * jax.random.normal(ks[4], (C,), jnp.float32)
    p["be1"] = 0.1 * jax.random.normal(ks[5], (C,), jnp.float32)
    p["m1"] = 0.05 * jax.random.normal(ks[6], (C,), jnp.float32)
    p["v1"] = 1.0 + 0.2 * jax.random.uniform(ks[7], (C,), jnp.float32)
    p["g2"] = 1.0 + 0.1 * jax.random.normal(ks[8], (C,), jnp.float32)
    p["be2"] = 0.1 * jax.random.normal(ks[9], (C,), jnp.float32)
    p["m2"] = 0.05 * jax.random.normal(ks[10], (C,), jnp.float32)
    p["v2"] = 1.0 + 0.2 * jax.random.uniform(ks[11], (C,), jnp.float32)
    return p


if __name__ == "__main__":
    key = jax.random.PRNGKey(0)
    k_x, k_p1, k_p2 = jax.random.split(key, 3)

    # Shapes of the resnet stage inside RawFeatureExtractor: (N, 128, 500).
    N, C, L = 2, 128, 500
    x = jax.random.normal(k_x, (N, C, L), jnp.float32)
    p1 = make_params(k_p1, C)
    p2 = make_params(k_p2, C)

    resnet_stage = jax.jit(resnet_stage_pallas)
    out = resnet_stage(x, p1, p2)
    out = jax.block_until_ready(out)

    ref = resnet_stage_ref(x, p1, p2)
    assert out.shape == (N, C, L)
    max_err = float(jnp.max(jnp.abs(out - ref)))
    assert jnp.allclose(out, ref, atol=2e-3, rtol=2e-3), f"mismatch vs reference: {max_err}"

    print("KERNEL_OK")
</pallas_src>

<mosaic_0001>
module attributes {stable_mosaic.version = 11 : i64} {
  func.func @_resnet_stage_kernel(%arg0: i32, %arg1: memref<1x128x512xf32, #tpu.memory_space<vmem>>, %arg2: memref<4x128x384xf32, #tpu.memory_space<vmem>>, %arg3: memref<128x4xf32, #tpu.memory_space<vmem>>, %arg4: memref<1x128x512xf32, #tpu.memory_space<vmem>>, %arg5: memref<384x512xf32, #tpu.memory_space<vmem>>) attributes {dimension_semantics = [#tpu.dimension_semantics<parallel>], iteration_bounds = array<i64: 2>, scalar_prefetch = 0 : i64, scratch_operands = 1 : i64, tpu.core_type = #tpu.core_type<tc>, window_params = [{transform_indices = @transform_0, window_bounds = array<i64: 1, 128, 512>}, {pipeline_mode = #tpu.pipeline_mode<synchronous>, transform_indices = @transform_1, window_bounds = array<i64: 4, 128, 384>}, {pipeline_mode = #tpu.pipeline_mode<synchronous>, transform_indices = @transform_2, window_bounds = array<i64: 128, 4>}, {transform_indices = @transform_3, window_bounds = array<i64: 1, 128, 512>}]} {
    %0 = tpu.iota {dimensions = array<i32: 1>} : vector<128x512xi32>
    %c500_i32 = arith.constant 500 : i32
    %1 = vector.broadcast %c500_i32 : i32 to vector<128x512xi32>
    %2 = arith.cmpi slt, %0, %1 : vector<128x512xi32>
    %3 = arith.extui %2 : vector<128x512xi1> to vector<128x512xi32>
    %4 = arith.sitofp %3 : vector<128x512xi32> to vector<128x512xf32>
    %c0 = arith.constant 0 : index
    %c0_0 = arith.constant 0 : index
    %c0_1 = arith.constant 0 : index
    %5 = vector.load %arg1[%c0, %c0_0, %c0_1] : memref<1x128x512xf32, #tpu.memory_space<vmem>>, vector<1x128x512xf32>
    %6 = vector.shape_cast %5 : vector<1x128x512xf32> to vector<128x512xf32>
    %c0_2 = arith.constant 0 : index
    %c0_3 = arith.constant 0 : index
    %c0_4 = arith.constant 0 : index
    %7 = vector.load %arg2[%c0_2, %c0_3, %c0_4] : memref<4x128x384xf32, #tpu.memory_space<vmem>>, vector<1x128x384xf32>
    %8 = vector.shape_cast %7 : vector<1x128x384xf32> to vector<128x384xf32>
    %c0_5 = arith.constant 0 : index
    %c0_6 = arith.constant 0 : index
    %9 = vector.load %arg3[%c0_5, %c0_6] : memref<128x4xf32, #tpu.memory_space<vmem>>, vector<128x1xf32>
    %c1_i32 = arith.constant 1 : i32
    %10 = tpu.dynamic_rotate %6 by %c1_i32 dim 1 : vector<128x512xf32>, i32 -> vector<128x512xf32>
    %c0_7 = arith.constant 0 : index
    %c0_8 = arith.constant 0 : index
    %11 = vector.load %arg5[%c0_7, %c0_8] : memref<384x512xf32, #tpu.memory_space<vmem>>, vector<128x512xf32>
    tpu.vector_store %arg5[%c0_7, %c0_8], %10 {strides = array<i32>} : memref<384x512xf32, #tpu.memory_space<vmem>>, vector<128x512xf32>,
    %c128 = arith.constant 128 : index
    %c0_9 = arith.constant 0 : index
    %12 = vector.load %arg5[%c128, %c0_9] : memref<384x512xf32, #tpu.memory_space<vmem>>, vector<128x512xf32>
    tpu.vector_store %arg5[%c128, %c0_9], %6 {strides = array<i32>} : memref<384x512xf32, #tpu.memory_space<vmem>>, vector<128x512xf32>,
    %c511_i32 = arith.constant 511 : i32
    %13 = tpu.dynamic_rotate %6 by %c511_i32 dim 1 : vector<128x512xf32>, i32 -> vector<128x512xf32>
    %c256 = arith.constant 256 : index
    %c0_10 = arith.constant 0 : index
    %14 = vector.load %arg5[%c256, %c0_10] : memref<384x512xf32, #tpu.memory_space<vmem>>, vector<128x512xf32>
    tpu.vector_store %arg5[%c256, %c0_10], %13 {strides = array<i32>} : memref<384x512xf32, #tpu.memory_space<vmem>>, vector<128x512xf32>,
    %c0_11 = arith.constant 0 : index
    %c0_12 = arith.constant 0 : index
    %15 = vector.load %arg5[%c0_11, %c0_12] : memref<384x512xf32, #tpu.memory_space<vmem>>, vector<384x512xf32>
    %cst = arith.constant dense<0.000000e+00> : vector<128x512xf32>
    %16 = tpu.matmul %8, %15, %cst {dimension_numbers = #tpu.dot_dimension_numbers<[1], [0], [0], [1], [0, 0, 1, 1], [], []>} : vector<128x384xf32>, vector<384x512xf32>, vector<128x512xf32> -> vector<128x512xf32>
    %17 = vector.broadcast %9 : vector<128x1xf32> to vector<128x512xf32>
    %18 = arith.addf %16, %17 : vector<128x512xf32>
    %cst_13 = arith.constant 0.000000e+00 : f32
    %19 = vector.broadcast %cst_13 : f32 to vector<128x512xf32>
    %20 = arith.maximumf %18, %19 : vector<128x512xf32>
    %21 = arith.mulf %20, %4 : vector<128x512xf32>
    %c1 = arith.constant 1 : index
    %c0_14 = arith.constant 0 : index
    %c0_15 = arith.constant 0 : index
    %22 = vector.load %arg2[%c1, %c0_14, %c0_15] : memref<4x128x384xf32, #tpu.memory_space<vmem>>, vector<1x128x384xf32>
    %23 = vector.shape_cast %22 : vector<1x128x384xf32> to vector<128x384xf32>
    %c0_16 = arith.constant 0 : index
    %c1_17 = arith.constant 1 : index
    %24 = vector.load %arg3[%c0_16, %c1_17] : memref<128x4xf32, #tpu.memory_space<vmem>>, vector<128x1xf32>
    %c1_i32_18 = arith.constant 1 : i32
    %25 = tpu.dynamic_rotate %21 by %c1_i32_18 dim 1 : vector<128x512xf32>, i32 -> vector<128x512xf32>
    %c0_19 = arith.constant 0 : index
    %c0_20 = arith.constant 0 : index
    %26 = vector.load %arg5[%c0_19, %c0_20] : memref<384x512xf32, #tpu.memory_space<vmem>>, vector<128x512xf32>
    tpu.vector_store %arg5[%c0_19, %c0_20], %25 {strides = array<i32>} : memref<384x512xf32, #tpu.memory_space<vmem>>, vector<128x512xf32>,
    %c128_21 = arith.constant 128 : index
    %c0_22 = arith.constant 0 : index
    %27 = vector.load %arg5[%c128_21, %c0_22] : memref<384x512xf32, #tpu.memory_space<vmem>>, vector<128x512xf32>
    tpu.vector_store %arg5[%c128_21, %c0_22], %21 {strides = array<i32>} : memref<384x512xf32, #tpu.memory_space<vmem>>, vector<128x512xf32>,
    %c511_i32_23 = arith.constant 511 : i32
    %28 = tpu.dynamic_rotate %21 by %c511_i32_23 dim 1 : vector<128x512xf32>, i32 -> vector<128x512xf32>
    %c256_24 = arith.constant 256 : index
    %c0_25 = arith.constant 0 : index
    %29 = vector.load %arg5[%c256_24, %c0_25] : memref<384x512xf32, #tpu.memory_space<vmem>>, vector<128x512xf32>
    tpu.vector_store %arg5[%c256_24, %c0_25], %28 {strides = array<i32>} : memref<384x512xf32, #tpu.memory_space<vmem>>, vector<128x512xf32>,
    %c0_26 = arith.constant 0 : index
    %c0_27 = arith.constant 0 : index
    %30 = vector.load %arg5[%c0_26, %c0_27] : memref<384x512xf32, #tpu.memory_space<vmem>>, vector<384x512xf32>
    %cst_28 = arith.constant dense<0.000000e+00> : vector<128x512xf32>
    %31 = tpu.matmul %23, %30, %cst_28 {dimension_numbers = #tpu.dot_dimension_numbers<[1], [0], [0], [1], [0, 0, 1, 1], [], []>} : vector<128x384xf32>, vector<384x512xf32>, vector<128x512xf32> -> vector<128x512xf32>
    %32 = vector.broadcast %24 : vector<128x1xf32> to vector<128x512xf32>
    %33 = arith.addf %31, %32 : vector<128x512xf32>
    %34 = arith.addf %6, %33 : vector<128x512xf32>
    %cst_29 = arith.constant 0.000000e+00 : f32
    %35 = vector.broadcast %cst_29 : f32 to vector<128x512xf32>
    %36 = arith.maximumf %34, %35 : vector<128x512xf32>
    %37 = arith.mulf %36, %4 : vector<128x512xf32>
    %c2 = arith.constant 2 : index
    %c0_30 = arith.constant 0 : index
    %c0_31 = arith.constant 0 : index
    %38 = vector.load %arg2[%c2, %c0_30, %c0_31] : memref<4x128x384xf32, #tpu.memory_space<vmem>>, vector<1x128x384xf32>
    %39 = vector.shape_cast %38 : vector<1x128x384xf32> to vector<128x384xf32>
    %c0_32 = arith.constant 0 : index
    %c2_33 = arith.constant 2 : index
    %40 = vector.load %arg3[%c0_32, %c2_33] : memref<128x4xf32, #tpu.memory_space<vmem>>, vector<128x1xf32>
    %c1_i32_34 = arith.constant 1 : i32
    %41 = tpu.dynamic_rotate %37 by %c1_i32_34 dim 1 : vector<128x512xf32>, i32 -> vector<128x512xf32>
    %c0_35 = arith.constant 0 : index
    %c0_36 = arith.constant 0 : index
    %42 = vector.load %arg5[%c0_35, %c0_36] : memref<384x512xf32, #tpu.memory_space<vmem>>, vector<128x512xf32>
    tpu.vector_store %arg5[%c0_35, %c0_36], %41 {strides = array<i32>} : memref<384x512xf32, #tpu.memory_space<vmem>>, vector<128x512xf32>,
    %c128_37 = arith.constant 128 : index
    %c0_38 = arith.constant 0 : index
    %43 = vector.load %arg5[%c128_37, %c0_38] : memref<384x512xf32, #tpu.memory_space<vmem>>, vector<128x512xf32>
    tpu.vector_store %arg5[%c128_37, %c0_38], %37 {strides = array<i32>} : memref<384x512xf32, #tpu.memory_space<vmem>>, vector<128x512xf32>,
    %c511_i32_39 = arith.constant 511 : i32
    %44 = tpu.dynamic_rotate %37 by %c511_i32_39 dim 1 : vector<128x512xf32>, i32 -> vector<128x512xf32>
    %c256_40 = arith.constant 256 : index
    %c0_41 = arith.constant 0 : index
    %45 = vector.load %arg5[%c256_40, %c0_41] : memref<384x512xf32, #tpu.memory_space<vmem>>, vector<128x512xf32>
    tpu.vector_store %arg5[%c256_40, %c0_41], %44 {strides = array<i32>} : memref<384x512xf32, #tpu.memory_space<vmem>>, vector<128x512xf32>,
    %c0_42 = arith.constant 0 : index
    %c0_43 = arith.constant 0 : index
    %46 = vector.load %arg5[%c0_42, %c0_43] : memref<384x512xf32, #tpu.memory_space<vmem>>, vector<384x512xf32>
    %cst_44 = arith.constant dense<0.000000e+00> : vector<128x512xf32>
    %47 = tpu.matmul %39, %46, %cst_44 {dimension_numbers = #tpu.dot_dimension_numbers<[1], [0], [0], [1], [0, 0, 1, 1], [], []>} : vector<128x384xf32>, vector<384x512xf32>, vector<128x512xf32> -> vector<128x512xf32>
    %48 = vector.broadcast %40 : vector<128x1xf32> to vector<128x512xf32>
    %49 = arith.addf %47, %48 : vector<128x512xf32>
    %cst_45 = arith.constant 0.000000e+00 : f32
    %50 = vector.broadcast %cst_45 : f32 to vector<128x512xf32>
    %51 = arith.maximumf %49, %50 : vector<128x512xf32>
    %52 = arith.mulf %51, %4 : vector<128x512xf32>
    %c3 = arith.constant 3 : index
    %c0_46 = arith.constant 0 : index
    %c0_47 = arith.constant 0 : index
    %53 = vector.load %arg2[%c3, %c0_46, %c0_47] : memref<4x128x384xf32, #tpu.memory_space<vmem>>, vector<1x128x384xf32>
    %54 = vector.shape_cast %53 : vector<1x128x384xf32> to vector<128x384xf32>
    %c0_48 = arith.constant 0 : index
    %c3_49 = arith.constant 3 : index
    %55 = vector.load %arg3[%c0_48, %c3_49] : memref<128x4xf32, #tpu.memory_space<vmem>>, vector<128x1xf32>
    %c1_i32_50 = arith.constant 1 : i32
    %56 = tpu.dynamic_rotate %52 by %c1_i32_50 dim 1 : vector<128x512xf32>, i32 -> vector<128x512xf32>
    %c0_51 = arith.constant 0 : index
    %c0_52 = arith.constant 0 : index
    %57 = vector.load %arg5[%c0_51, %c0_52] : memref<384x512xf32, #tpu.memory_space<vmem>>, vector<128x512xf32>
    tpu.vector_store %arg5[%c0_51, %c0_52], %56 {strides = array<i32>} : memref<384x512xf32, #tpu.memory_space<vmem>>, vector<128x512xf32>,
    %c128_53 = arith.constant 128 : index
    %c0_54 = arith.constant 0 : index
    %58 = vector.load %arg5[%c128_53, %c0_54] : memref<384x512xf32, #tpu.memory_space<vmem>>, vector<128x512xf32>
    tpu.vector_store %arg5[%c128_53, %c0_54], %52 {strides = array<i32>} : memref<384x512xf32, #tpu.memory_space<vmem>>, vector<128x512xf32>,
    %c511_i32_55 = arith.constant 511 : i32
    %59 = tpu.dynamic_rotate %52 by %c511_i32_55 dim 1 : vector<128x512xf32>, i32 -> vector<128x512xf32>
    %c256_56 = arith.constant 256 : index
    %c0_57 = arith.constant 0 : index
    %60 = vector.load %arg5[%c256_56, %c0_57] : memref<384x512xf32, #tpu.memory_space<vmem>>, vector<128x512xf32>
    tpu.vector_store %arg5[%c256_56, %c0_57], %59 {strides = array<i32>} : memref<384x512xf32, #tpu.memory_space<vmem>>, vector<128x512xf32>,
    %c0_58 = arith.constant 0 : index
    %c0_59 = arith.constant 0 : index
    %61 = vector.load %arg5[%c0_58, %c0_59] : memref<384x512xf32, #tpu.memory_space<vmem>>, vector<384x512xf32>
    %cst_60 = arith.constant dense<0.000000e+00> : vector<128x512xf32>
    %62 = tpu.matmul %54, %61, %cst_60 {dimension_numbers = #tpu.dot_dimension_numbers<[1], [0], [0], [1], [0, 0, 1, 1], [], []>} : vector<128x384xf32>, vector<384x512xf32>, vector<128x512xf32> -> vector<128x512xf32>
    %63 = vector.broadcast %55 : vector<128x1xf32> to vector<128x512xf32>
    %64 = arith.addf %62, %63 : vector<128x512xf32>
    %65 = arith.addf %37, %64 : vector<128x512xf32>
    %cst_61 = arith.constant 0.000000e+00 : f32
    %66 = vector.broadcast %cst_61 : f32 to vector<128x512xf32>
    %67 = arith.maximumf %65, %66 : vector<128x512xf32>
    %c0_62 = arith.constant 0 : index
    %c0_63 = arith.constant 0 : index
    %c0_64 = arith.constant 0 : index
    %68 = vector.load %arg4[%c0_62, %c0_63, %c0_64] : memref<1x128x512xf32, #tpu.memory_space<vmem>>, vector<1x128x512xf32>
    %69 = vector.shape_cast %68 : vector<1x128x512xf32> to vector<128x512xf32>
    %70 = vector.shape_cast %67 : vector<128x512xf32> to vector<1x128x512xf32>
    tpu.vector_store %arg4[%c0_62, %c0_63, %c0_64], %70 {strides = array<i32>} : memref<1x128x512xf32, #tpu.memory_space<vmem>>, vector<1x128x512xf32>,
    return
  }
  func.func @transform_0(%arg0: i32) -> (i32, i32, i32) {
    %c0_i32 = arith.constant 0 : i32
    %c0_i32_0 = arith.constant 0 : i32
    %c0_i32_1 = arith.constant 0 : i32
    return %arg0, %c0_i32, %c0_i32_0 : i32, i32, i32
  }
  func.func @transform_1(%arg0: i32) -> (i32, i32, i32) {
    %c0_i32 = arith.constant 0 : i32
    %c0_i32_0 = arith.constant 0 : i32
    %c0_i32_1 = arith.constant 0 : i32
    %c0_i32_2 = arith.constant 0 : i32
    return %c0_i32, %c0_i32_0, %c0_i32_1 : i32, i32, i32
  }
  func.func @transform_2(%arg0: i32) -> (i32, i32) {
    %c0_i32 = arith.constant 0 : i32
    %c0_i32_0 = arith.constant 0 : i32
    %c0_i32_1 = arith.constant 0 : i32
    return %c0_i32, %c0_i32_0 : i32, i32
  }
  func.func @transform_3(%arg0: i32) -> (i32, i32, i32) {
    %c0_i32 = arith.constant 0 : i32
    %c0_i32_0 = arith.constant 0 : i32
    %c0_i32_1 = arith.constant 0 : i32
    return %arg0, %c0_i32, %c0_i32_0 : i32, i32, i32
  }
}

</mosaic_0001>

<llo_original>
// kernel: resnet_stage_pallas.1
$region0: #{resnet_stage_pallas.1}
  #allocation0 [shape = 'u32[]', space=smem, size = 0x4, offset = 0x4, fixed_abs, tag = 'smem constant byte address 0x4 - core index']
  #allocation1 [shape = 'u32[144,128]{1,0:T(1,128)}', space=vmem, size = 0x12000, scoped, tag = 'internal scratch']
  #allocation2 [shape = 'f32[384,512]{1,0:T(8,128)}', space=vmem, size = 0xc0000, scoped, tag = 'scratch operand']
  %s0 = inlined_call_operand.vmem [shape: f32[2,128,512], index: 0, kind: input, shape index: {}]
  %s1 = inlined_call_operand.vmem [shape: f32[4,128,384], index: 1, kind: input, shape index: {}]
  %s2 = inlined_call_operand.vmem [shape: f32[128,4], index: 2, kind: input, shape index: {}]
  %s3 = inlined_call_operand.vmem [shape: f32[2,128,512], index: 3, kind: output, shape index: {}]
  %s4 = sld [smem:[#allocation0]]
  $region45: #{resnet_stage_pallas.1} parent=0
    _
  %s6 = ssub.s32 1, %s4
  %s7 = scalar_select 0, %s6, %s4
  loop: start=0, step=1, limit=4
  $region2: #{resnet_stage_pallas.1} parent=0 // loop_pre_header
    _
  $region3: #{resnet_stage_pallas.1} parent=0 // loop_header
    %s9 = sphi 0, %s13
    %p10 = scmp.ge.s32.totalorder %s9, 4
    %s19 = sphi 0, %s21
    %s22 = sphi 0, %s19
    %s23 = sphi 0, %s22
    %s39 = sphi 0, %s23
    %s43 = sphi 0, %s43
    %s45 = sphi 0, %s43
    %s46 = sphi 0, %s45
    %s60 = sphi 0, %s46
    %s64 = sphi 0, %s64
    %s66 = sphi 0, %s64
    %s67 = sphi 0, %s66
    %s81 = sphi 0, %s67
    %s87 = sphi 0, %s89
    %s90 = sphi 0, %s87
    %s91 = sphi 0, %s90
    %s107 = sphi 0, %s91
  $region4: #{resnet_stage_pallas.1} parent=0 // loop_header_branch
    %12 = sbr.rel (%p10) target = $region8
  $region5: #{resnet_stage_pallas.1} parent=0 // loop_body
    %s14 = ssub.s32 %s9, 1
    %s15 = ssub.s32 %s9, 2
    %s16 = sadd.s32 %s9, 1
    %s17 = ssub.s32 %s9, %s16
    %p18 = scmp.eq.s32.totalorder %s17, 0
    %s20 = sadd.s32 %s19, 1
    %s21 = scalar_select %p18, %s19, %s20
    %p24 = pneg %p18
    %p25 = scmp.eq.s32.totalorder %s9, 1
    %p26 = por %p24, %p25
    %p27 = scmp.ne.s32.totalorder %s19, %s22
    %p28 = scmp.eq.s32.totalorder %s9, 0
    %p29 = por %p27, %p28
    %p30 = scmp.ne.s32.totalorder %s19, %s22
    %p31 = scmp.eq.s32.totalorder %s14, 1
    %p32 = por %p30, %p31
    %p33 = scmp.ne.s32.totalorder %s22, %s23
    %p34 = scmp.eq.s32.totalorder %s14, 0
    %p35 = por %p33, %p34
    %p36 = scmp.ne.s32.totalorder %s22, %s23
    %p37 = scmp.eq.s32.totalorder %s15, 1
    %p38 = por %p36, %p37
    %p40 = scmp.ne.s32.totalorder %s23, %s39
    %p41 = scmp.eq.s32.totalorder %s15, 0
    %p42 = por %p40, %p41
    %s44 = sadd.s32 %s43, 1
    %p47 = scmp.eq.s32.totalorder %s9, 1
    %p48 = scmp.ne.s32.totalorder %s43, %s45
    %p49 = scmp.eq.s32.totalorder %s9, 0
    %p50 = por %p48, %p49
    %p51 = scmp.ne.s32.totalorder %s43, %s45
    %p52 = scmp.eq.s32.totalorder %s14, 1
    %p53 = por %p51, %p52
    %p54 = scmp.ne.s32.totalorder %s45, %s46
    %p55 = scmp.eq.s32.totalorder %s14, 0
    %p56 = por %p54, %p55
    %p57 = scmp.ne.s32.totalorder %s45, %s46
    %p58 = scmp.eq.s32.totalorder %s15, 1
    %p59 = por %p57, %p58
    %p61 = scmp.ne.s32.totalorder %s46, %s60
    %p62 = scmp.eq.s32.totalorder %s15, 0
    %p63 = por %p61, %p62
    %s65 = sadd.s32 %s64, 1
    %p68 = scmp.eq.s32.totalorder %s9, 1
    %p69 = scmp.ne.s32.totalorder %s64, %s66
    %p70 = scmp.eq.s32.totalorder %s9, 0
    %p71 = por %p69, %p70
    %p72 = scmp.ne.s32.totalorder %s64, %s66
    %p73 = scmp.eq.s32.totalorder %s14, 1
    %p74 = por %p72, %p73
    %p75 = scmp.ne.s32.totalorder %s66, %s67
    %p76 = scmp.eq.s32.totalorder %s14, 0
    %p77 = por %p75, %p76
    %p78 = scmp.ne.s32.totalorder %s66, %s67
    %p79 = scmp.eq.s32.totalorder %s15, 1
    %p80 = por %p78, %p79
    %p82 = scmp.ne.s32.totalorder %s67, %s81
    %p83 = scmp.eq.s32.totalorder %s15, 0
    %p84 = por %p82, %p83
    %s85 = ssub.s32 %s9, %s16
    %p86 = scmp.eq.s32.totalorder %s85, 0
    %s88 = sadd.s32 %s87, 1
    %s89 = scalar_select %p86, %s87, %s88
    %p92 = pneg %p86
    %p93 = scmp.eq.s32.totalorder %s9, 1
    %p94 = por %p92, %p93
    %p95 = scmp.ne.s32.totalorder %s87, %s90
    %p96 = scmp.eq.s32.totalorder %s9, 0
    %p97 = por %p95, %p96
    %p98 = scmp.ne.s32.totalorder %s87, %s90
    %p99 = scmp.eq.s32.totalorder %s14, 1
    %p100 = por %p98, %p99
    %p101 = scmp.ne.s32.totalorder %s90, %s91
    %p102 = scmp.eq.s32.totalorder %s14, 0
    %p103 = por %p101, %p102
    %p104 = scmp.ne.s32.totalorder %s90, %s91
    %p105 = scmp.eq.s32.totalorder %s15, 1
    %p106 = por %p104, %p105
    %p108 = scmp.ne.s32.totalorder %s91, %s107
    %p109 = scmp.eq.s32.totalorder %s15, 0
    %p110 = por %p108, %p109
    %p111 = scmp.le.s32.totalorder 1, %s9
    %p112 = scmp.lt.s32.totalorder %s9, 3
    %p113 = pnand %p111, %p112
    %p114 = pneg %p113
    // Predicated region
    $region9: #{resnet_stage_pallas.1} parent=5 // pred_check
      _
    $region10: #{resnet_stage_pallas.1} parent=5 // pred_check_branch
      %116 = sbr.rel (%p113) target = $region12
    $region11: #{resnet_stage_pallas.1} parent=5 // pred_region
      %s117 = ssub.s32 %s9, 1
      // Predicated region
      $region13: #{resnet_stage_pallas.1} parent=11 // pred_check
        %p118 = pneg %p56
      $region14: #{resnet_stage_pallas.1} parent=11 // pred_check_branch
        %120 = sbr.rel (%p118) target = $region16
      $region15: #{resnet_stage_pallas.1} parent=11 // pred_region
        _
      $region16: #{resnet_stage_pallas.1} parent=11 // pred_fallthru
        _
      // Predicated region
      $region17: #{resnet_stage_pallas.1} parent=11 // pred_check
        %p121 = pneg %p77
      $region18: #{resnet_stage_pallas.1} parent=11 // pred_check_branch
        %123 = sbr.rel (%p121) target = $region20
      $region19: #{resnet_stage_pallas.1} parent=11 // pred_region
        _
      $region20: #{resnet_stage_pallas.1} parent=11 // pred_fallthru
        _
    $region12: #{resnet_stage_pallas.1} parent=5 // pred_fallthru
      _
    %p124 = scmp.lt.s32.totalorder %s9, 2
    // Predicated region
    $region21: #{resnet_stage_pallas.1} parent=5 // pred_check
      %p125 = pneg %p124
    $region22: #{resnet_stage_pallas.1} parent=5 // pred_check_branch
      %127 = sbr.rel (%p125) target = $region24
    $region23: #{resnet_stage_pallas.1} parent=5 // pred_region
      // Predicated region
      $region25: #{resnet_stage_pallas.1} parent=23 // pred_check
        %p128 = pneg %p29
      $region26: #{resnet_stage_pallas.1} parent=23 // pred_check_branch
        %130 = sbr.rel (%p128) target = $region28
      $region27: #{resnet_stage_pallas.1} parent=23 // pred_region
        %p131 = scmp.lt.s32.totalorder %s9, 1
        %s132 = scalar_select %p131, %s9, 1
        %s133 = smul.addr %s132, 64
        %s134 = smul.addr %s133, 8
        %s135 = scalar_lea.vmem %s0, %s134
      $region28: #{resnet_stage_pallas.1} parent=23 // pred_fallthru
        _
    $region24: #{resnet_stage_pallas.1} parent=5 // pred_fallthru
      _
    %p136 = scmp.le.s32.totalorder 1, %s9
    %p137 = scmp.lt.s32.totalorder %s9, 3
    %p138 = pnand %p136, %p137
    %p139 = pneg %p138
    // Predicated region
    $region29: #{resnet_stage_pallas.1} parent=5 // pred_check
      _
    $region30: #{resnet_stage_pallas.1} parent=5 // pred_check_branch
      %141 = sbr.rel (%p138) target = $region32
    $region31: #{resnet_stage_pallas.1} parent=5 // pred_region
      %s142 = ssub.s32 %s9, 1
      %p143 = scmp.lt.s32.totalorder %s14, 1
      %s144 = scalar_select %p143, %s14, 1
      %s145 = smul.addr %s144, 64
      %s146 = smul.addr %s145, 8
      %s147 = scalar_lea.vmem %s0, %s146
      %p148 = pneg %p35
      %p149 = pneg %p32
      %p150 = pneg %p56
      %p151 = pneg %p53
      %p152 = pneg %p77
      %p153 = pneg %p74
      %p154 = pneg %p103
      %p155 = pneg %p100
      %p156 = scmp.lt.s32.totalorder %s14, 1
      %s157 = scalar_select %p156, %s14, 1
      %s158 = smul.addr %s157, 64
      %s159 = smul.addr %s158, 8
      %s160 = scalar_lea.vmem %s3, %s159
      %p161 = scmp.lt.s32.totalorder %s14, 1
      %s162 = scalar_select %p161, %s14, 1
      %s163 = smul.addr %s162, 64
      %s164 = smul.addr %s163, 8
      %s165 = scalar_lea.vmem %s0, %s164
      %p166 = scmp.lt.s32.totalorder %s14, 1
      %s167 = scalar_select %p166, %s14, 1
      %s168 = smul.addr %s167, 64
      %s169 = smul.addr %s168, 8
      %s170 = scalar_lea.vmem %s3, %s169
      %v171 = vlaneseq
      %v172 = vand.u32 %v171, 127
      %v173 = vadd.s32 %v172, 128
      %v174 = vadd.s32 %v172, 256
      %v175 = vadd.s32 %v172, 384
      %vm176 = vcmp.lt.s32.totalorder %v172, 500
      %vm177 = vcmp.lt.s32.totalorder %v173, 500
      %vm178 = vcmp.lt.s32.totalorder %v174, 500
      %vm179 = vcmp.lt.s32.totalorder %v175, 500
      %v180 = vsel %vm176, 1, 0
      %v181 = vsel %vm177, 1, 0
      %v182 = vsel %vm178, 1, 0
      %v183 = vsel %vm179, 1, 0
      %v184 = vcvt.s32.f32 %v180
      %v185 = vcvt.s32.f32 %v181
      %v186 = vcvt.s32.f32 %v182
      %v187 = vcvt.s32.f32 %v183
      %v188 = vld [vmem:[%s165] sm:$0xff]
      %v189 = vld [vmem:[%s165 + $0x8] sm:$0xff]
      %v190 = vld [vmem:[%s165 + $0x10] sm:$0xff]
      %v191 = vld [vmem:[%s165 + $0x18] sm:$0xff]
      %v192 = vld [vmem:[%s165 + $0x20] sm:$0xff]
      %v193 = vld [vmem:[%s165 + $0x28] sm:$0xff]
      %v194 = vld [vmem:[%s165 + $0x30] sm:$0xff]
      %v195 = vld [vmem:[%s165 + $0x38] sm:$0xff]
      %v196 = vld [vmem:[%s165 + $0x40] sm:$0xff]
      %v197 = vld [vmem:[%s165 + $0x48] sm:$0xff]
      %v198 = vld [vmem:[%s165 + $0x50] sm:$0xff]
      %v199 = vld [vmem:[%s165 + $0x58] sm:$0xff]
      %v200 = vld [vmem:[%s165 + $0x60] sm:$0xff]
      %v201 = vld [vmem:[%s165 + $0x68] sm:$0xff]
      %v202 = vld [vmem:[%s165 + $0x70] sm:$0xff]
      %v203 = vld [vmem:[%s165 + $0x78] sm:$0xff]
      %v204 = vld [vmem:[%s165 + $0x80] sm:$0xff]
      %v205 = vld [vmem:[%s165 + $0x88] sm:$0xff]
      %v206 = vld [vmem:[%s165 + $0x90] sm:$0xff]
      %v207 = vld [vmem:[%s165 + $0x98] sm:$0xff]
      %v208 = vld [vmem:[%s165 + $0xa0] sm:$0xff]
      %v209 = vld [vmem:[%s165 + $0xa8] sm:$0xff]
      %v210 = vld [vmem:[%s165 + $0xb0] sm:$0xff]
      %v211 = vld [vmem:[%s165 + $0xb8] sm:$0xff]
      %v212 = vld [vmem:[%s165 + $0xc0] sm:$0xff]
      %v213 = vld [vmem:[%s165 + $0xc8] sm:$0xff]
      %v214 = vld [vmem:[%s165 + $0xd0] sm:$0xff]
      %v215 = vld [vmem:[%s165 + $0xd8] sm:$0xff]
      %v216 = vld [vmem:[%s165 + $0xe0] sm:$0xff]
      %v217 = vld [vmem:[%s165 + $0xe8] sm:$0xff]
      %v218 = vld [vmem:[%s165 + $0xf0] sm:$0xff]
      %v219 = vld [vmem:[%s165 + $0xf8] sm:$0xff]
      %v220 = vld [vmem:[%s165 + $0x100] sm:$0xff]
      %v221 = vld [vmem:[%s165 + $0x108] sm:$0xff]
      %v222 = vld [vmem:[%s165 + $0x110] sm:$0xff]
      %v223 = vld [vmem:[%s165 + $0x118] sm:$0xff]
      %v224 = vld [vmem:[%s165 + $0x120] sm:$0xff]
      %v225 = vld [vmem:[%s165 + $0x128] sm:$0xff]
      %v226 = vld [vmem:[%s165 + $0x130] sm:$0xff]
      %v227 = vld [vmem:[%s165 + $0x138] sm:$0xff]
      %v228 = vld [vmem:[%s165 + $0x140] sm:$0xff]
      %v229 = vld [vmem:[%s165 + $0x148] sm:$0xff]
      %v230 = vld [vmem:[%s165 + $0x150] sm:$0xff]
      %v231 = vld [vmem:[%s165 + $0x158] sm:$0xff]
      %v232 = vld [vmem:[%s165 + $0x160] sm:$0xff]
      %v233 = vld [vmem:[%s165 + $0x168] sm:$0xff]
      %v234 = vld [vmem:[%s165 + $0x170] sm:$0xff]
      %v235 = vld [vmem:[%s165 + $0x178] sm:$0xff]
      %v236 = vld [vmem:[%s165 + $0x180] sm:$0xff]
      %v237 = vld [vmem:[%s165 + $0x188] sm:$0xff]
      %v238 = vld [vmem:[%s165 + $0x190] sm:$0xff]
      %v239 = vld [vmem:[%s165 + $0x198] sm:$0xff]
      %v240 = vld [vmem:[%s165 + $0x1a0] sm:$0xff]
      %v241 = vld [vmem:[%s165 + $0x1a8] sm:$0xff]
      %v242 = vld [vmem:[%s165 + $0x1b0] sm:$0xff]
      %v243 = vld [vmem:[%s165 + $0x1b8] sm:$0xff]
      %v244 = vld [vmem:[%s165 + $0x1c0] sm:$0xff]
      %v245 = vld [vmem:[%s165 + $0x1c8] sm:$0xff]
      %v246 = vld [vmem:[%s165 + $0x1d0] sm:$0xff]
      %v247 = vld [vmem:[%s165 + $0x1d8] sm:$0xff]
      %v248 = vld [vmem:[%s165 + $0x1e0] sm:$0xff]
      %v249 = vld [vmem:[%s165 + $0x1e8] sm:$0xff]
      %v250 = vld [vmem:[%s165 + $0x1f0] sm:$0xff]
      %v251 = vld [vmem:[%s165 + $0x1f8] sm:$0xff]
      %v252 = vld [vmem:[%s1] sm:$0xff]
      %v253 = vld [vmem:[%s1 + $0x8] sm:$0xff]
      %v254 = vld [vmem:[%s1 + $0x10] sm:$0xff]
      %v255 = vld [vmem:[%s1 + $0x18] sm:$0xff]
      %v256 = vld [vmem:[%s1 + $0x20] sm:$0xff]
      %v257 = vld [vmem:[%s1 + $0x28] sm:$0xff]
      %v258 = vld [vmem:[%s1 + $0x30] sm:$0xff]
      %v259 = vld [vmem:[%s1 + $0x38] sm:$0xff]
      %v260 = vld [vmem:[%s1 + $0x40] sm:$0xff]
      %v261 = vld [vmem:[%s1 + $0x48] sm:$0xff]
      %v262 = vld [vmem:[%s1 + $0x50] sm:$0xff]
      %v263 = vld [vmem:[%s1 + $0x58] sm:$0xff]
      %v264 = vld [vmem:[%s1 + $0x60] sm:$0xff]
      %v265 = vld [vmem:[%s1 + $0x68] sm:$0xff]
      %v266 = vld [vmem:[%s1 + $0x70] sm:$0xff]
      %v267 = vld [vmem:[%s1 + $0x78] sm:$0xff]
      %v268 = vld [vmem:[%s1 + $0x80] sm:$0xff]
      %v269 = vld [vmem:[%s1 + $0x88] sm:$0xff]
      %v270 = vld [vmem:[%s1 + $0x90] sm:$0xff]
      %v271 = vld [vmem:[%s1 + $0x98] sm:$0xff]
      %v272 = vld [vmem:[%s1 + $0xa0] sm:$0xff]
      %v273 = vld [vmem:[%s1 + $0xa8] sm:$0xff]
      %v274 = vld [vmem:[%s1 + $0xb0] sm:$0xff]
      %v275 = vld [vmem:[%s1 + $0xb8] sm:$0xff]
      %v276 = vld [vmem:[%s1 + $0xc0] sm:$0xff]
      %v277 = vld [vmem:[%s1 + $0xc8] sm:$0xff]
      %v278 = vld [vmem:[%s1 + $0xd0] sm:$0xff]
      %v279 = vld [vmem:[%s1 + $0xd8] sm:$0xff]
      %v280 = vld [vmem:[%s1 + $0xe0] sm:$0xff]
      %v281 = vld [vmem:[%s1 + $0xe8] sm:$0xff]
      %v282 = vld [vmem:[%s1 + $0xf0] sm:$0xff]
      %v283 = vld [vmem:[%s1 + $0xf8] sm:$0xff]
      %v284 = vld [vmem:[%s1 + $0x100] sm:$0xff]
      %v285 = vld [vmem:[%s1 + $0x108] sm:$0xff]
      %v286 = vld [vmem:[%s1 + $0x110] sm:$0xff]
      %v287 = vld [vmem:[%s1 + $0x118] sm:$0xff]
      %v288 = vld [vmem:[%s1 + $0x120] sm:$0xff]
      %v289 = vld [vmem:[%s1 + $0x128] sm:$0xff]
      %v290 = vld [vmem:[%s1 + $0x130] sm:$0xff]
      %v291 = vld [vmem:[%s1 + $0x138] sm:$0xff]
      %v292 = vld [vmem:[%s1 + $0x140] sm:$0xff]
      %v293 = vld [vmem:[%s1 + $0x148] sm:$0xff]
      %v294 = vld [vmem:[%s1 + $0x150] sm:$0xff]
      %v295 = vld [vmem:[%s1 + $0x158] sm:$0xff]
      %v296 = vld [vmem:[%s1 + $0x160] sm:$0xff]
      %v297 = vld [vmem:[%s1 + $0x168] sm:$0xff]
      %v298 = vld [vmem:[%s1 + $0x170] sm:$0xff]
      %v299 = vld [vmem:[%s1 + $0x178] sm:$0xff]
      %v300 = vld [vmem:[%s2] sm:$0xff]
      %v301 = vld [vmem:[%s2 + $0x8] sm:$0xff]
      %v302 = vld [vmem:[%s2 + $0x10] sm:$0xff]
      %v303 = vld [vmem:[%s2 + $0x18] sm:$0xff]
      %v304 = vld [vmem:[%s2 + $0x20] sm:$0xff]
      %v305 = vld [vmem:[%s2 + $0x28] sm:$0xff]
      %v306 = vld [vmem:[%s2 + $0x30] sm:$0xff]
      %v307 = vld [vmem:[%s2 + $0x38] sm:$0xff]
      %v308 = vld [vmem:[%s2 + $0x40] sm:$0xff]
      %v309 = vld [vmem:[%s2 + $0x48] sm:$0xff]
      %v310 = vld [vmem:[%s2 + $0x50] sm:$0xff]
      %v311 = vld [vmem:[%s2 + $0x58] sm:$0xff]
      %v312 = vld [vmem:[%s2 + $0x60] sm:$0xff]
      %v313 = vld [vmem:[%s2 + $0x68] sm:$0xff]
      %v314 = vld [vmem:[%s2 + $0x70] sm:$0xff]
      %v315 = vld [vmem:[%s2 + $0x78] sm:$0xff]
      %316 = vrot.lane.b32.xlu0 %v188, 1
      %v317 = vpop.permute.xlu0 %316
      %318 = vrot.lane.b32.xlu0 %v192, 1
      %v319 = vpop.permute.xlu0 %318
      %320 = vrot.lane.b32.xlu0 %v196, 1
      %v321 = vpop.permute.xlu0 %320
      %322 = vrot.lane.b32.xlu0 %v200, 1
      %v323 = vpop.permute.xlu0 %322
      %324 = vrot.lane.b32.xlu0 %v204, 1
      %v325 = vpop.permute.xlu0 %324
      %326 = vrot.lane.b32.xlu0 %v208, 1
      %v327 = vpop.permute.xlu0 %326
      %328 = vrot.lane.b32.xlu0 %v212, 1
      %v329 = vpop.permute.xlu0 %328
      %330 = vrot.lane.b32.xlu0 %v216, 1
      %v331 = vpop.permute.xlu0 %330
      %332 = vrot.lane.b32.xlu0 %v220, 1
      %v333 = vpop.permute.xlu0 %332
      %334 = vrot.lane.b32.xlu0 %v224, 1
      %v335 = vpop.permute.xlu0 %334
      %336 = vrot.lane.b32.xlu0 %v228, 1
      %v337 = vpop.permute.xlu0 %336
      %338 = vrot.lane.b32.xlu0 %v232, 1
      %v339 = vpop.permute.xlu0 %338
      %340 = vrot.lane.b32.xlu0 %v236, 1
      %v341 = vpop.permute.xlu0 %340
      %342 = vrot.lane.b32.xlu0 %v240, 1
      %v343 = vpop.permute.xlu0 %342
      %344 = vrot.lane.b32.xlu0 %v244, 1
      %v345 = vpop.permute.xlu0 %344
      %346 = vrot.lane.b32.xlu0 %v248, 1
      %v347 = vpop.permute.xlu0 %346
      %348 = vrot.lane.b32.xlu0 %v189, 1
      %v349 = vpop.permute.xlu0 %348
      %350 = vrot.lane.b32.xlu0 %v193, 1
      %v351 = vpop.permute.xlu0 %350
      %352 = vrot.lane.b32.xlu0 %v197, 1
      %v353 = vpop.permute.xlu0 %352
      %354 = vrot.lane.b32.xlu0 %v201, 1
      %v355 = vpop.permute.xlu0 %354
      %356 = vrot.lane.b32.xlu0 %v205, 1
      %v357 = vpop.permute.xlu0 %356
      %358 = vrot.lane.b32.xlu0 %v209, 1
      %v359 = vpop.permute.xlu0 %358
      %360 = vrot.lane.b32.xlu0 %v213, 1
      %v361 = vpop.permute.xlu0 %360
      %362 = vrot.lane.b32.xlu0 %v217, 1
      %v363 = vpop.permute.xlu0 %362
      %364 = vrot.lane.b32.xlu0 %v221, 1
      %v365 = vpop.permute.xlu0 %364
      %366 = vrot.lane.b32.xlu0 %v225, 1
      %v367 = vpop.permute.xlu0 %366
      %368 = vrot.lane.b32.xlu0 %v229, 1
      %v369 = vpop.permute.xlu0 %368
      %370 = vrot.lane.b32.xlu0 %v233, 1
      %v371 = vpop.permute.xlu0 %370
      %372 = vrot.lane.b32.xlu0 %v237, 1
      %v373 = vpop.permute.xlu0 %372
      %374 = vrot.lane.b32.xlu0 %v241, 1
      %v375 = vpop.permute.xlu0 %374
      %376 = vrot.lane.b32.xlu0 %v245, 1
      %v377 = vpop.permute.xlu0 %376
      %378 = vrot.lane.b32.xlu0 %v249, 1
      %v379 = vpop.permute.xlu0 %378
      %380 = vrot.lane.b32.xlu0 %v190, 1
      %v381 = vpop.permute.xlu0 %380
      %382 = vrot.lane.b32.xlu0 %v194, 1
      %v383 = vpop.permute.xlu0 %382
      %384 = vrot.lane.b32.xlu0 %v198, 1
      %v385 = vpop.permute.xlu0 %384
      %386 = vrot.lane.b32.xlu0 %v202, 1
      %v387 = vpop.permute.xlu0 %386
      %388 = vrot.lane.b32.xlu0 %v206, 1
      %v389 = vpop.permute.xlu0 %388
      %390 = vrot.lane.b32.xlu0 %v210, 1
      %v391 = vpop.permute.xlu0 %390
      %392 = vrot.lane.b32.xlu0 %v214, 1
      %v393 = vpop.permute.xlu0 %392
      %394 = vrot.lane.b32.xlu0 %v218, 1
      %v395 = vpop.permute.xlu0 %394
      %396 = vrot.lane.b32.xlu0 %v222, 1
      %v397 = vpop.permute.xlu0 %396
      %398 = vrot.lane.b32.xlu0 %v226, 1
      %v399 = vpop.permute.xlu0 %398
      %400 = vrot.lane.b32.xlu0 %v230, 1
      %v401 = vpop.permute.xlu0 %400
      %402 = vrot.lane.b32.xlu0 %v234, 1
      %v403 = vpop.permute.xlu0 %402
      %404 = vrot.lane.b32.xlu0 %v238, 1
      %v405 = vpop.permute.xlu0 %404
      %406 = vrot.lane.b32.xlu0 %v242, 1
      %v407 = vpop.permute.xlu0 %406
      %408 = vrot.lane.b32.xlu0 %v246, 1
      %v409 = vpop.permute.xlu0 %408
      %410 = vrot.lane.b32.xlu0 %v250, 1
      %v411 = vpop.permute.xlu0 %410
      %412 = vrot.lane.b32.xlu0 %v191, 1
      %v413 = vpop.permute.xlu0 %412
      %414 = vrot.lane.b32.xlu0 %v195, 1
      %v415 = vpop.permute.xlu0 %414
      %416 = vrot.lane.b32.xlu0 %v199, 1
      %v417 = vpop.permute.xlu0 %416
      %418 = vrot.lane.b32.xlu0 %v203, 1
      %v419 = vpop.permute.xlu0 %418
      %420 = vrot.lane.b32.xlu0 %v207, 1
      %v421 = vpop.permute.xlu0 %420
      %422 = vrot.lane.b32.xlu0 %v211, 1
      %v423 = vpop.permute.xlu0 %422
      %424 = vrot.lane.b32.xlu0 %v215, 1
      %v425 = vpop.permute.xlu0 %424
      %426 = vrot.lane.b32.xlu0 %v219, 1
      %v427 = vpop.permute.xlu0 %426
      %428 = vrot.lane.b32.xlu0 %v223, 1
      %v429 = vpop.permute.xlu0 %428
      %430 = vrot.lane.b32.xlu0 %v227, 1
      %v431 = vpop.permute.xlu0 %430
      %432 = vrot.lane.b32.xlu0 %v231, 1
      %v433 = vpop.permute.xlu0 %432
      %434 = vrot.lane.b32.xlu0 %v235, 1
      %v435 = vpop.permute.xlu0 %434
      %436 = vrot.lane.b32.xlu0 %v239, 1
      %v437 = vpop.permute.xlu0 %436
      %438 = vrot.lane.b32.xlu0 %v243, 1
      %v439 = vpop.permute.xlu0 %438
      %440 = vrot.lane.b32.xlu0 %v247, 1
      %v441 = vpop.permute.xlu0 %440
      %442 = vrot.lane.b32.xlu0 %v251, 1
      %v443 = vpop.permute.xlu0 %442
      %vm444 = vcmp.lt.s32.totalorder %v172, 1
      %v445 = vsel %vm444, %v381, %v413
      %v446 = vsel %vm444, %v383, %v415
      %v447 = vsel %vm444, %v385, %v417
      %v448 = vsel %vm444, %v387, %v419
      %v449 = vsel %vm444, %v389, %v421
      %v450 = vsel %vm444, %v391, %v423
      %v451 = vsel %vm444, %v393, %v425
      %v452 = vsel %vm444, %v395, %v427
      %v453 = vsel %vm444, %v397, %v429
      %v454 = vsel %vm444, %v399, %v431
      %v455 = vsel %vm444, %v401, %v433
      %v456 = vsel %vm444, %v403, %v435
      %v457 = vsel %vm444, %v405, %v437
      %v458 = vsel %vm444, %v407, %v439
      %v459 = vsel %vm444, %v409, %v441
      %v460 = vsel %vm444, %v411, %v443
      %v461 = vsel %vm444, %v349, %v381
      %v462 = vsel %vm444, %v351, %v383
      %v463 = vsel %vm444, %v353, %v385
      %v464 = vsel %vm444, %v355, %v387
      %v465 = vsel %vm444, %v357, %v389
      %v466 = vsel %vm444, %v359, %v391
      %v467 = vsel %vm444, %v361, %v393
      %v468 = vsel %vm444, %v363, %v395
      %v469 = vsel %vm444, %v365, %v397
      %v470 = vsel %vm444, %v367, %v399
      %v471 = vsel %vm444, %v369, %v401
      %v472 = vsel %vm444, %v371, %v403
      %v473 = vsel %vm444, %v373, %v405
      %v474 = vsel %vm444, %v375, %v407
      %v475 = vsel %vm444, %v377, %v409
      %v476 = vsel %vm444, %v379, %v411
      %v477 = vsel %vm444, %v317, %v349
      %v478 = vsel %vm444, %v319, %v351
      %v479 = vsel %vm444, %v321, %v353
      %v480 = vsel %vm444, %v323, %v355
      %v481 = vsel %vm444, %v325, %v357
      %v482 = vsel %vm444, %v327, %v359
      %v483 = vsel %vm444, %v329, %v361
      %v484 = vsel %vm444, %v331, %v363
      %v485 = vsel %vm444, %v333, %v365
      %v486 = vsel %vm444, %v335, %v367
      %v487 = vsel %vm444, %v337, %v369
      %v488 = vsel %vm444, %v339, %v371
      %v489 = vsel %vm444, %v341, %v373
      %v490 = vsel %vm444, %v343, %v375
      %v491 = vsel %vm444, %v345, %v377
      %v492 = vsel %vm444, %v347, %v379
      %v493 = vsel %vm444, %v413, %v317
      %v494 = vsel %vm444, %v415, %v319
      %v495 = vsel %vm444, %v417, %v321
      %v496 = vsel %vm444, %v419, %v323
      %v497 = vsel %vm444, %v421, %v325
      %v498 = vsel %vm444, %v423, %v327
      %v499 = vsel %vm444, %v425, %v329
      %v500 = vsel %vm444, %v427, %v331
      %v501 = vsel %vm444, %v429, %v333
      %v502 = vsel %vm444, %v431, %v335
      %v503 = vsel %vm444, %v433, %v337
      %v504 = vsel %vm444, %v435, %v339
      %v505 = vsel %vm444, %v437, %v341
      %v506 = vsel %vm444, %v439, %v343
      %v507 = vsel %vm444, %v441, %v345
      %v508 = vsel %vm444, %v443, %v347
      %509 = vst [vmem:[#allocation2] sm:$0xff] %v493
      %510 = vst [vmem:[#allocation2 + $0x8] sm:$0xff] %v477
      %511 = vst [vmem:[#allocation2 + $0x10] sm:$0xff] %v461
      %512 = vst [vmem:[#allocation2 + $0x18] sm:$0xff] %v445
      %513 = vst [vmem:[#allocation2 + $0x20] sm:$0xff] %v494
      %514 = vst [vmem:[#allocation2 + $0x28] sm:$0xff] %v478
      %515 = vst [vmem:[#allocation2 + $0x30] sm:$0xff] %v462
      %516 = vst [vmem:[#allocation2 + $0x38] sm:$0xff] %v446
      %517 = vst [vmem:[#allocation2 + $0x40] sm:$0xff] %v495
      %518 = vst [vmem:[#allocation2 + $0x48] sm:$0xff] %v479
      %519 = vst [vmem:[#allocation2 + $0x50] sm:$0xff] %v463
      %520 = vst [vmem:[#allocation2 + $0x58] sm:$0xff] %v447
      %521 = vst [vmem:[#allocation2 + $0x60] sm:$0xff] %v496
      %522 = vst [vmem:[#allocation2 + $0x68] sm:$0xff] %v480
      %523 = vst [vmem:[#allocation2 + $0x70] sm:$0xff] %v464
      %524 = vst [vmem:[#allocation2 + $0x78] sm:$0xff] %v448
      %525 = vst [vmem:[#allocation2 + $0x80] sm:$0xff] %v497
      %526 = vst [vmem:[#allocation2 + $0x88] sm:$0xff] %v481
      %527 = vst [vmem:[#allocation2 + $0x90] sm:$0xff] %v465
      %528 = vst [vmem:[#allocation2 + $0x98] sm:$0xff] %v449
      %529 = vst [vmem:[#allocation2 + $0xa0] sm:$0xff] %v498
      %530 = vst [vmem:[#allocation2 + $0xa8] sm:$0xff] %v482
      %531 = vst [vmem:[#allocation2 + $0xb0] sm:$0xff] %v466
      %532 = vst [vmem:[#allocation2 + $0xb8] sm:$0xff] %v450
      %533 = vst [vmem:[#allocation2 + $0xc0] sm:$0xff] %v499
      %534 = vst [vmem:[#allocation2 + $0xc8] sm:$0xff] %v483
      %535 = vst [vmem:[#allocation2 + $0xd0] sm:$0xff] %v467
      %536 = vst [vmem:[#allocation2 + $0xd8] sm:$0xff] %v451
      %537 = vst [vmem:[#allocation2 + $0xe0] sm:$0xff] %v500
      %538 = vst [vmem:[#allocation2 + $0xe8] sm:$0xff] %v484
      %539 = vst [vmem:[#allocation2 + $0xf0] sm:$0xff] %v468
      %540 = vst [vmem:[#allocation2 + $0xf8] sm:$0xff] %v452
      %541 = vst [vmem:[#allocation2 + $0x100] sm:$0xff] %v501
      %542 = vst [vmem:[#allocation2 + $0x108] sm:$0xff] %v485
      %543 = vst [vmem:[#allocation2 + $0x110] sm:$0xff] %v469
      %544 = vst [vmem:[#allocation2 + $0x118] sm:$0xff] %v453
      %545 = vst [vmem:[#allocation2 + $0x120] sm:$0xff] %v502
      %546 = vst [vmem:[#allocation2 + $0x128] sm:$0xff] %v486
      %547 = vst [vmem:[#allocation2 + $0x130] sm:$0xff] %v470
      %548 = vst [vmem:[#allocation2 + $0x138] sm:$0xff] %v454
      %549 = vst [vmem:[#allocation2 + $0x140] sm:$0xff] %v503
      %550 = vst [vmem:[#allocation2 + $0x148] sm:$0xff] %v487
      %551 = vst [vmem:[#allocation2 + $0x150] sm:$0xff] %v471
      %552 = vst [vmem:[#allocation2 + $0x158] sm:$0xff] %v455
      %553 = vst [vmem:[#allocation2 + $0x160] sm:$0xff] %v504
      %554 = vst [vmem:[#allocation2 + $0x168] sm:$0xff] %v488
      %555 = vst [vmem:[#allocation2 + $0x170] sm:$0xff] %v472
      %556 = vst [vmem:[#allocation2 + $0x178] sm:$0xff] %v456
      %557 = vst [vmem:[#allocation2 + $0x180] sm:$0xff] %v505
      %558 = vst [vmem:[#allocation2 + $0x188] sm:$0xff] %v489
      %559 = vst [vmem:[#allocation2 + $0x190] sm:$0xff] %v473
      %560 = vst [vmem:[#allocation2 + $0x198] sm:$0xff] %v457
      %561 = vst [vmem:[#allocation2 + $0x1a0] sm:$0xff] %v506
      %562 = vst [vmem:[#allocation2 + $0x1a8] sm:$0xff] %v490
      %563 = vst [vmem:[#allocation2 + $0x1b0] sm:$0xff] %v474
      %564 = vst [vmem:[#allocation2 + $0x1b8] sm:$0xff] %v458
      %565 = vst [vmem:[#allocation2 + $0x1c0] sm:$0xff] %v507
      %566 = vst [vmem:[#allocation2 + $0x1c8] sm:$0xff] %v491
      %567 = vst [vmem:[#allocation2 + $0x1d0] sm:$0xff] %v475
      %568 = vst [vmem:[#allocation2 + $0x1d8] sm:$0xff] %v459
      %569 = vst [vmem:[#allocation2 + $0x1e0] sm:$0xff] %v508
      %570 = vst [vmem:[#allocation2 + $0x1e8] sm:$0xff] %v492
      %571 = vst [vmem:[#allocation2 + $0x1f0] sm:$0xff] %v476
      %572 = vst [vmem:[#allocation2 + $0x1f8] sm:$0xff] %v460
      %573 = vst [vmem:[#allocation2 + $0x200] sm:$0xff] %v188
      %574 = vst [vmem:[#allocation2 + $0x208] sm:$0xff] %v189
      %575 = vst [vmem:[#allocation2 + $0x210] sm:$0xff] %v190
      %576 = vst [vmem:[#allocation2 + $0x218] sm:$0xff] %v191
      %577 = vst [vmem:[#allocation2 + $0x220] sm:$0xff] %v192
      %578 = vst [vmem:[#allocation2 + $0x228] sm:$0xff] %v193
      %579 = vst [vmem:[#allocation2 + $0x230] sm:$0xff] %v194
      %580 = vst [vmem:[#allocation2 + $0x238] sm:$0xff] %v195
      %581 = vst [vmem:[#allocation2 + $0x240] sm:$0xff] %v196
      %582 = vst [vmem:[#allocation2 + $0x248] sm:$0xff] %v197
      %583 = vst [vmem:[#allocation2 + $0x250] sm:$0xff] %v198
      %584 = vst [vmem:[#allocation2 + $0x258] sm:$0xff] %v199
      %585 = vst [vmem:[#allocation2 + $0x260] sm:$0xff] %v200
      %586 = vst [vmem:[#allocation2 + $0x268] sm:$0xff] %v201
      %587 = vst [vmem:[#allocation2 + $0x270] sm:$0xff] %v202
      %588 = vst [vmem:[#allocation2 + $0x278] sm:$0xff] %v203
      %589 = vst [vmem:[#allocation2 + $0x280] sm:$0xff] %v204
      %590 = vst [vmem:[#allocation2 + $0x288] sm:$0xff] %v205
      %591 = vst [vmem:[#allocation2 + $0x290] sm:$0xff] %v206
      %592 = vst [vmem:[#allocation2 + $0x298] sm:$0xff] %v207
      %593 = vst [vmem:[#allocation2 + $0x2a0] sm:$0xff] %v208
      %594 = vst [vmem:[#allocation2 + $0x2a8] sm:$0xff] %v209
      %595 = vst [vmem:[#allocation2 + $0x2b0] sm:$0xff] %v210
      %596 = vst [vmem:[#allocation2 + $0x2b8] sm:$0xff] %v211
      %597 = vst [vmem:[#allocation2 + $0x2c0] sm:$0xff] %v212
      %598 = vst [vmem:[#allocation2 + $0x2c8] sm:$0xff] %v213
      %599 = vst [vmem:[#allocation2 + $0x2d0] sm:$0xff] %v214
      %600 = vst [vmem:[#allocation2 + $0x2d8] sm:$0xff] %v215
      %601 = vst [vmem:[#allocation2 + $0x2e0] sm:$0xff] %v216
      %602 = vst [vmem:[#allocation2 + $0x2e8] sm:$0xff] %v217
      %603 = vst [vmem:[#allocation2 + $0x2f0] sm:$0xff] %v218
      %604 = vst [vmem:[#allocation2 + $0x2f8] sm:$0xff] %v219
      %605 = vst [vmem:[#allocation2 + $0x300] sm:$0xff] %v220
      %606 = vst [vmem:[#allocation2 + $0x308] sm:$0xff] %v221
      %607 = vst [vmem:[#allocation2 + $0x310] sm:$0xff] %v222
      %608 = vst [vmem:[#allocation2 + $0x318] sm:$0xff] %v223
      %609 = vst [vmem:[#allocation2 + $0x320] sm:$0xff] %v224
      %610 = vst [vmem:[#allocation2 + $0x328] sm:$0xff] %v225
      %611 = vst [vmem:[#allocation2 + $0x330] sm:$0xff] %v226
      %612 = vst [vmem:[#allocation2 + $0x338] sm:$0xff] %v227
      %613 = vst [vmem:[#allocation2 + $0x340] sm:$0xff] %v228
      %614 = vst [vmem:[#allocation2 + $0x348] sm:$0xff] %v229
      %615 = vst [vmem:[#allocation2 + $0x350] sm:$0xff] %v230
      %616 = vst [vmem:[#allocation2 + $0x358] sm:$0xff] %v231
      %617 = vst [vmem:[#allocation2 + $0x360] sm:$0xff] %v232
      %618 = vst [vmem:[#allocation2 + $0x368] sm:$0xff] %v233
      %619 = vst [vmem:[#allocation2 + $0x370] sm:$0xff] %v234
      %620 = vst [vmem:[#allocation2 + $0x378] sm:$0xff] %v235
      %621 = vst [vmem:[#allocation2 + $0x380] sm:$0xff] %v236
      %622 = vst [vmem:[#allocation2 + $0x388] sm:$0xff] %v237
      %623 = vst [vmem:[#allocation2 + $0x390] sm:$0xff] %v238
      %624 = vst [vmem:[#allocation2 + $0x398] sm:$0xff] %v239
      %625 = vst [vmem:[#allocation2 + $0x3a0] sm:$0xff] %v240
      %626 = vst [vmem:[#allocation2 + $0x3a8] sm:$0xff] %v241
      %627 = vst [vmem:[#allocation2 + $0x3b0] sm:$0xff] %v242
      %628 = vst [vmem:[#allocation2 + $0x3b8] sm:$0xff] %v243
      %629 = vst [vmem:[#allocation2 + $0x3c0] sm:$0xff] %v244
      %630 = vst [vmem:[#allocation2 + $0x3c8] sm:$0xff] %v245
      %631 = vst [vmem:[#allocation2 + $0x3d0] sm:$0xff] %v246
      %632 = vst [vmem:[#allocation2 + $0x3d8] sm:$0xff] %v247
      %633 = vst [vmem:[#allocation2 + $0x3e0] sm:$0xff] %v248
      %634 = vst [vmem:[#allocation2 + $0x3e8] sm:$0xff] %v249
      %635 = vst [vmem:[#allocation2 + $0x3f0] sm:$0xff] %v250
      %636 = vst [vmem:[#allocation2 + $0x3f8] sm:$0xff] %v251
      %637 = vrot.lane.b32.xlu0 %v188, 127
      %v638 = vpop.permute.xlu0 %637
      %639 = vrot.lane.b32.xlu0 %v192, 127
      %v640 = vpop.permute.xlu0 %639
      %641 = vrot.lane.b32.xlu0 %v196, 127
      %v642 = vpop.permute.xlu0 %641
      %643 = vrot.lane.b32.xlu0 %v200, 127
      %v644 = vpop.permute.xlu0 %643
      %645 = vrot.lane.b32.xlu0 %v204, 127
      %v646 = vpop.permute.xlu0 %645
      %647 = vrot.lane.b32.xlu0 %v208, 127
      %v648 = vpop.permute.xlu0 %647
      %649 = vrot.lane.b32.xlu0 %v212, 127
      %v650 = vpop.permute.xlu0 %649
      %651 = vrot.lane.b32.xlu0 %v216, 127
      %v652 = vpop.permute.xlu0 %651
      %653 = vrot.lane.b32.xlu0 %v220, 127
      %v654 = vpop.permute.xlu0 %653
      %655 = vrot.lane.b32.xlu0 %v224, 127
      %v656 = vpop.permute.xlu0 %655
      %657 = vrot.lane.b32.xlu0 %v228, 127
      %v658 = vpop.permute.xlu0 %657
      %659 = vrot.lane.b32.xlu0 %v232, 127
      %v660 = vpop.permute.xlu0 %659
      %661 = vrot.lane.b32.xlu0 %v236, 127
      %v662 = vpop.permute.xlu0 %661
      %663 = vrot.lane.b32.xlu0 %v240, 127
      %v664 = vpop.permute.xlu0 %663
      %665 = vrot.lane.b32.xlu0 %v244, 127
      %v666 = vpop.permute.xlu0 %665
      %667 = vrot.lane.b32.xlu0 %v248, 127
      %v668 = vpop.permute.xlu0 %667
      %669 = vrot.lane.b32.xlu0 %v189, 127
      %v670 = vpop.permute.xlu0 %669
      %671 = vrot.lane.b32.xlu0 %v193, 127
      %v672 = vpop.permute.xlu0 %671
      %673 = vrot.lane.b32.xlu0 %v197, 127
      %v674 = vpop.permute.xlu0 %673
      %675 = vrot.lane.b32.xlu0 %v201, 127
      %v676 = vpop.permute.xlu0 %675
      %677 = vrot.lane.b32.xlu0 %v205, 127
      %v678 = vpop.permute.xlu0 %677
      %679 = vrot.lane.b32.xlu0 %v209, 127
      %v680 = vpop.permute.xlu0 %679
      %681 = vrot.lane.b32.xlu0 %v213, 127
      %v682 = vpop.permute.xlu0 %681
      %683 = vrot.lane.b32.xlu0 %v217, 127
      %v684 = vpop.permute.xlu0 %683
      %685 = vrot.lane.b32.xlu0 %v221, 127
      %v686 = vpop.permute.xlu0 %685
      %687 = vrot.lane.b32.xlu0 %v225, 127
      %v688 = vpop.permute.xlu0 %687
      %689 = vrot.lane.b32.xlu0 %v229, 127
      %v690 = vpop.permute.xlu0 %689
      %691 = vrot.lane.b32.xlu0 %v233, 127
      %v692 = vpop.permute.xlu0 %691
      %693 = vrot.lane.b32.xlu0 %v237, 127
      %v694 = vpop.permute.xlu0 %693
      %695 = vrot.lane.b32.xlu0 %v241, 127
      %v696 = vpop.permute.xlu0 %695
      %697 = vrot.lane.b32.xlu0 %v245, 127
      %v698 = vpop.permute.xlu0 %697
      %699 = vrot.lane.b32.xlu0 %v249, 127
      %v700 = vpop.permute.xlu0 %699
      %701 = vrot.lane.b32.xlu0 %v190, 127
      %v702 = vpop.permute.xlu0 %701
      %703 = vrot.lane.b32.xlu0 %v194, 127
      %v704 = vpop.permute.xlu0 %703
      %705 = vrot.lane.b32.xlu0 %v198, 127
      %v706 = vpop.permute.xlu0 %705
      %707 = vrot.lane.b32.xlu0 %v202, 127
      %v708 = vpop.permute.xlu0 %707
      %709 = vrot.lane.b32.xlu0 %v206, 127
      %v710 = vpop.permute.xlu0 %709
      %711 = vrot.lane.b32.xlu0 %v210, 127
      %v712 = vpop.permute.xlu0 %711
      %713 = vrot.lane.b32.xlu0 %v214, 127
      %v714 = vpop.permute.xlu0 %713
      %715 = vrot.lane.b32.xlu0 %v218, 127
      %v716 = vpop.permute.xlu0 %715
      %717 = vrot.lane.b32.xlu0 %v222, 127
      %v718 = vpop.permute.xlu0 %717
      %719 = vrot.lane.b32.xlu0 %v226, 127
      %v720 = vpop.permute.xlu0 %719
      %721 = vrot.lane.b32.xlu0 %v230, 127
      %v722 = vpop.permute.xlu0 %721
      %723 = vrot.lane.b32.xlu0 %v234, 127
      %v724 = vpop.permute.xlu0 %723
      %725 = vrot.lane.b32.xlu0 %v238, 127
      %v726 = vpop.permute.xlu0 %725
      %727 = vrot.lane.b32.xlu0 %v242, 127
      %v728 = vpop.permute.xlu0 %727
      %729 = vrot.lane.b32.xlu0 %v246, 127
      %v730 = vpop.permute.xlu0 %729
      %731 = vrot.lane.b32.xlu0 %v250, 127
      %v732 = vpop.permute.xlu0 %731
      %733 = vrot.lane.b32.xlu0 %v191, 127
      %v734 = vpop.permute.xlu0 %733
      %735 = vrot.lane.b32.xlu0 %v195, 127
      %v736 = vpop.permute.xlu0 %735
      %737 = vrot.lane.b32.xlu0 %v199, 127
      %v738 = vpop.permute.xlu0 %737
      %739 = vrot.lane.b32.xlu0 %v203, 127
      %v740 = vpop.permute.xlu0 %739
      %741 = vrot.lane.b32.xlu0 %v207, 127
      %v742 = vpop.permute.xlu0 %741
      %743 = vrot.lane.b32.xlu0 %v211, 127
      %v744 = vpop.permute.xlu0 %743
      %745 = vrot.lane.b32.xlu0 %v215, 127
      %v746 = vpop.permute.xlu0 %745
      %747 = vrot.lane.b32.xlu0 %v219, 127
      %v748 = vpop.permute.xlu0 %747
      %749 = vrot.lane.b32.xlu0 %v223, 127
      %v750 = vpop.permute.xlu0 %749
      %751 = vrot.lane.b32.xlu0 %v227, 127
      %v752 = vpop.permute.xlu0 %751
      %753 = vrot.lane.b32.xlu0 %v231, 127
      %v754 = vpop.permute.xlu0 %753
      %755 = vrot.lane.b32.xlu0 %v235, 127
      %v756 = vpop.permute.xlu0 %755
      %757 = vrot.lane.b32.xlu0 %v239, 127
      %v758 = vpop.permute.xlu0 %757
      %759 = vrot.lane.b32.xlu0 %v243, 127
      %v760 = vpop.permute.xlu0 %759
      %761 = vrot.lane.b32.xlu0 %v247, 127
      %v762 = vpop.permute.xlu0 %761
      %763 = vrot.lane.b32.xlu0 %v251, 127
      %v764 = vpop.permute.xlu0 %763
      %vm765 = vcmp.lt.s32.totalorder %v172, 127
      %v766 = vsel %vm765, %v702, %v734
      %v767 = vsel %vm765, %v704, %v736
      %v768 = vsel %vm765, %v706, %v738
      %v769 = vsel %vm765, %v708, %v740
      %v770 = vsel %vm765, %v710, %v742
      %v771 = vsel %vm765, %v712, %v744
      %v772 = vsel %vm765, %v714, %v746
      %v773 = vsel %vm765, %v716, %v748
      %v774 = vsel %vm765, %v718, %v750
      %v775 = vsel %vm765, %v720, %v752
      %v776 = vsel %vm765, %v722, %v754
      %v777 = vsel %vm765, %v724, %v756
      %v778 = vsel %vm765, %v726, %v758
      %v779 = vsel %vm765, %v728, %v760
      %v780 = vsel %vm765, %v730, %v762
      %v781 = vsel %vm765, %v732, %v764
      %v782 = vsel %vm765, %v670, %v702
      %v783 = vsel %vm765, %v672, %v704
      %v784 = vsel %vm765, %v674, %v706
      %v785 = vsel %vm765, %v676, %v708
      %v786 = vsel %vm765, %v678, %v710
      %v787 = vsel %vm765, %v680, %v712
      %v788 = vsel %vm765, %v682, %v714
      %v789 = vsel %vm765, %v684, %v716
      %v790 = vsel %vm765, %v686, %v718
      %v791 = vsel %vm765, %v688, %v720
      %v792 = vsel %vm765, %v690, %v722
      %v793 = vsel %vm765, %v692, %v724
      %v794 = vsel %vm765, %v694, %v726
      %v795 = vsel %vm765, %v696, %v728
      %v796 = vsel %vm765, %v698, %v730
      %v797 = vsel %vm765, %v700, %v732
      %v798 = vsel %vm765, %v638, %v670
      %v799 = vsel %vm765, %v640, %v672
      %v800 = vsel %vm765, %v642, %v674
      %v801 = vsel %vm765, %v644, %v676
      %v802 = vsel %vm765, %v646, %v678
      %v803 = vsel %vm765, %v648, %v680
      %v804 = vsel %vm765, %v650, %v682
      %v805 = vsel %vm765, %v652, %v684
      %v806 = vsel %vm765, %v654, %v686
      %v807 = vsel %vm765, %v656, %v688
      %v808 = vsel %vm765, %v658, %v690
      %v809 = vsel %vm765, %v660, %v692
      %v810 = vsel %vm765, %v662, %v694
      %v811 = vsel %vm765, %v664, %v696
      %v812 = vsel %vm765, %v666, %v698
      %v813 = vsel %vm765, %v668, %v700
      %v814 = vsel %vm765, %v734, %v638
      %v815 = vsel %vm765, %v736, %v640
      %v816 = vsel %vm765, %v738, %v642
      %v817 = vsel %vm765, %v740, %v644
      %v818 = vsel %vm765, %v742, %v646
      %v819 = vsel %vm765, %v744, %v648
      %v820 = vsel %vm765, %v746, %v650
      %v821 = vsel %vm765, %v748, %v652
      %v822 = vsel %vm765, %v750, %v654
      %v823 = vsel %vm765, %v752, %v656
      %v824 = vsel %vm765, %v754, %v658
      %v825 = vsel %vm765, %v756, %v660
      %v826 = vsel %vm765, %v758, %v662
      %v827 = vsel %vm765, %v760, %v664
      %v828 = vsel %vm765, %v762, %v666
      %v829 = vsel %vm765, %v764, %v668
      %830 = vst [vmem:[#allocation2 + $0x400] sm:$0xff] %v798
      %831 = vst [vmem:[#allocation2 + $0x408] sm:$0xff] %v782
      %832 = vst [vmem:[#allocation2 + $0x410] sm:$0xff] %v766
      %833 = vst [vmem:[#allocation2 + $0x418] sm:$0xff] %v814
      %834 = vst [vmem:[#allocation2 + $0x420] sm:$0xff] %v799
      %835 = vst [vmem:[#allocation2 + $0x428] sm:$0xff] %v783
      %836 = vst [vmem:[#allocation2 + $0x430] sm:$0xff] %v767
      %837 = vst [vmem:[#allocation2 + $0x438] sm:$0xff] %v815
      %838 = vst [vmem:[#allocation2 + $0x440] sm:$0xff] %v800
      %839 = vst [vmem:[#allocation2 + $0x448] sm:$0xff] %v784
      %840 = vst [vmem:[#allocation2 + $0x450] sm:$0xff] %v768
      %841 = vst [vmem:[#allocation2 + $0x458] sm:$0xff] %v816
      %842 = vst [vmem:[#allocation2 + $0x460] sm:$0xff] %v801
      %843 = vst [vmem:[#allocation2 + $0x468] sm:$0xff] %v785
      %844 = vst [vmem:[#allocation2 + $0x470] sm:$0xff] %v769
      %845 = vst [vmem:[#allocation2 + $0x478] sm:$0xff] %v817
      %846 = vst [vmem:[#allocation2 + $0x480] sm:$0xff] %v802
      %847 = vst [vmem:[#allocation2 + $0x488] sm:$0xff] %v786
      %848 = vst [vmem:[#allocation2 + $0x490] sm:$0xff] %v770
      %849 = vst [vmem:[#allocation2 + $0x498] sm:$0xff] %v818
      %850 = vst [vmem:[#allocation2 + $0x4a0] sm:$0xff] %v803
      %851 = vst [vmem:[#allocation2 + $0x4a8] sm:$0xff] %v787
      %852 = vst [vmem:[#allocation2 + $0x4b0] sm:$0xff] %v771
      %853 = vst [vmem:[#allocation2 + $0x4b8] sm:$0xff] %v819
      %854 = vst [vmem:[#allocation2 + $0x4c0] sm:$0xff] %v804
      %855 = vst [vmem:[#allocation2 + $0x4c8] sm:$0xff] %v788
      %856 = vst [vmem:[#allocation2 + $0x4d0] sm:$0xff] %v772
      %857 = vst [vmem:[#allocation2 + $0x4d8] sm:$0xff] %v820
      %858 = vst [vmem:[#allocation2 + $0x4e0] sm:$0xff] %v805
      %859 = vst [vmem:[#allocation2 + $0x4e8] sm:$0xff] %v789
      %860 = vst [vmem:[#allocation2 + $0x4f0] sm:$0xff] %v773
      %861 = vst [vmem:[#allocation2 + $0x4f8] sm:$0xff] %v821
      %862 = vst [vmem:[#allocation2 + $0x500] sm:$0xff] %v806
      %863 = vst [vmem:[#allocation2 + $0x508] sm:$0xff] %v790
      %864 = vst [vmem:[#allocation2 + $0x510] sm:$0xff] %v774
      %865 = vst [vmem:[#allocation2 + $0x518] sm:$0xff] %v822
      %866 = vst [vmem:[#allocation2 + $0x520] sm:$0xff] %v807
      %867 = vst [vmem:[#allocation2 + $0x528] sm:$0xff] %v791
      %868 = vst [vmem:[#allocation2 + $0x530] sm:$0xff] %v775
      %869 = vst [vmem:[#allocation2 + $0x538] sm:$0xff] %v823
      %870 = vst [vmem:[#allocation2 + $0x540] sm:$0xff] %v808
      %871 = vst [vmem:[#allocation2 + $0x548] sm:$0xff] %v792
      %872 = vst [vmem:[#allocation2 + $0x550] sm:$0xff] %v776
      %873 = vst [vmem:[#allocation2 + $0x558] sm:$0xff] %v824
      %874 = vst [vmem:[#allocation2 + $0x560] sm:$0xff] %v809
      %875 = vst [vmem:[#allocation2 + $0x568] sm:$0xff] %v793
      %876 = vst [vmem:[#allocation2 + $0x570] sm:$0xff] %v777
      %877 = vst [vmem:[#allocation2 + $0x578] sm:$0xff] %v825
      %878 = vst [vmem:[#allocation2 + $0x580] sm:$0xff] %v810
      %879 = vst [vmem:[#allocation2 + $0x588] sm:$0xff] %v794
      %880 = vst [vmem:[#allocation2 + $0x590] sm:$0xff] %v778
      %881 = vst [vmem:[#allocation2 + $0x598] sm:$0xff] %v826
      %882 = vst [vmem:[#allocation2 + $0x5a0] sm:$0xff] %v811
      %883 = vst [vmem:[#allocation2 + $0x5a8] sm:$0xff] %v795
      %884 = vst [vmem:[#allocation2 + $0x5b0] sm:$0xff] %v779
      %885 = vst [vmem:[#allocation2 + $0x5b8] sm:$0xff] %v827
      %886 = vst [vmem:[#allocation2 + $0x5c0] sm:$0xff] %v812
      %887 = vst [vmem:[#allocation2 + $0x5c8] sm:$0xff] %v796
      %888 = vst [vmem:[#allocation2 + $0x5d0] sm:$0xff] %v780
      %889 = vst [vmem:[#allocation2 + $0x5d8] sm:$0xff] %v828
      %890 = vst [vmem:[#allocation2 + $0x5e0] sm:$0xff] %v813
      %891 = vst [vmem:[#allocation2 + $0x5e8] sm:$0xff] %v797
      %892 = vst [vmem:[#allocation2 + $0x5f0] sm:$0xff] %v781
      %893 = vst [vmem:[#allocation2 + $0x5f8] sm:$0xff] %v829
      %v894 = vld [vmem:[#allocation2] sm:$0xff]
      %v895 = vld [vmem:[#allocation2 + $0x8] sm:$0xff]
      %v896 = vld [vmem:[#allocation2 + $0x10] sm:$0xff]
      %v897 = vld [vmem:[#allocation2 + $0x18] sm:$0xff]
      %v898 = vld [vmem:[#allocation2 + $0x20] sm:$0xff]
      %v899 = vld [vmem:[#allocation2 + $0x28] sm:$0xff]
      %v900 = vld [vmem:[#allocation2 + $0x30] sm:$0xff]
      %v901 = vld [vmem:[#allocation2 + $0x38] sm:$0xff]
      %v902 = vld [vmem:[#allocation2 + $0x40] sm:$0xff]
      %v903 = vld [vmem:[#allocation2 + $0x48] sm:$0xff]
      %v904 = vld [vmem:[#allocation2 + $0x50] sm:$0xff]
      %v905 = vld [vmem:[#allocation2 + $0x58] sm:$0xff]
      %v906 = vld [vmem:[#allocation2 + $0x60] sm:$0xff]
      %v907 = vld [vmem:[#allocation2 + $0x68] sm:$0xff]
      %v908 = vld [vmem:[#allocation2 + $0x70] sm:$0xff]
      %v909 = vld [vmem:[#allocation2 + $0x78] sm:$0xff]
      %v910 = vld [vmem:[#allocation2 + $0x80] sm:$0xff]
      %v911 = vld [vmem:[#allocation2 + $0x88] sm:$0xff]
      %v912 = vld [vmem:[#allocation2 + $0x90] sm:$0xff]
      %v913 = vld [vmem:[#allocation2 + $0x98] sm:$0xff]
      %v914 = vld [vmem:[#allocation2 + $0xa0] sm:$0xff]
      %v915 = vld [vmem:[#allocation2 + $0xa8] sm:$0xff]
      %v916 = vld [vmem:[#allocation2 + $0xb0] sm:$0xff]
      %v917 = vld [vmem:[#allocation2 + $0xb8] sm:$0xff]
      %v918 = vld [vmem:[#allocation2 + $0xc0] sm:$0xff]
      %v919 = vld [vmem:[#allocation2 + $0xc8] sm:$0xff]
      %v920 = vld [vmem:[#allocation2 + $0xd0] sm:$0xff]
      %v921 = vld [vmem:[#allocation2 + $0xd8] sm:$0xff]
      %v922 = vld [vmem:[#allocation2 + $0xe0] sm:$0xff]
      %v923 = vld [vmem:[#allocation2 + $0xe8] sm:$0xff]
      %v924 = vld [vmem:[#allocation2 + $0xf0] sm:$0xff]
      %v925 = vld [vmem:[#allocation2 + $0xf8] sm:$0xff]
      %v926 = vld [vmem:[#allocation2 + $0x100] sm:$0xff]
      %v927 = vld [vmem:[#allocation2 + $0x108] sm:$0xff]
      %v928 = vld [vmem:[#allocation2 + $0x110] sm:$0xff]
      %v929 = vld [vmem:[#allocation2 + $0x118] sm:$0xff]
      %v930 = vld [vmem:[#allocation2 + $0x120] sm:$0xff]
      %v931 = vld [vmem:[#allocation2 + $0x128] sm:$0xff]
      %v932 = vld [vmem:[#allocation2 + $0x130] sm:$0xff]
      %v933 = vld [vmem:[#allocation2 + $0x138] sm:$0xff]
      %v934 = vld [vmem:[#allocation2 + $0x140] sm:$0xff]
      %v935 = vld [vmem:[#allocation2 + $0x148] sm:$0xff]
      %v936 = vld [vmem:[#allocation2 + $0x150] sm:$0xff]
      %v937 = vld [vmem:[#allocation2 + $0x158] sm:$0xff]
      %v938 = vld [vmem:[#allocation2 + $0x160] sm:$0xff]
      %v939 = vld [vmem:[#allocation2 + $0x168] sm:$0xff]
      %v940 = vld [vmem:[#allocation2 + $0x170] sm:$0xff]
      %v941 = vld [vmem:[#allocation2 + $0x178] sm:$0xff]
      %v942 = vld [vmem:[#allocation2 + $0x180] sm:$0xff]
      %v943 = vld [vmem:[#allocation2 + $0x188] sm:$0xff]
      %v944 = vld [vmem:[#allocation2 + $0x190] sm:$0xff]
      %v945 = vld [vmem:[#allocation2 + $0x198] sm:$0xff]
      %v946 = vld [vmem:[#allocation2 + $0x1a0] sm:$0xff]
      %v947 = vld [vmem:[#allocation2 + $0x1a8] sm:$0xff]
      %v948 = vld [vmem:[#allocation2 + $0x1b0] sm:$0xff]
      %v949 = vld [vmem:[#allocation2 + $0x1b8] sm:$0xff]
      %v950 = vld [vmem:[#allocation2 + $0x1c0] sm:$0xff]
      %v951 = vld [vmem:[#allocation2 + $0x1c8] sm:$0xff]
      %v952 = vld [vmem:[#allocation2 + $0x1d0] sm:$0xff]
      %v953 = vld [vmem:[#allocation2 + $0x1d8] sm:$0xff]
      %v954 = vld [vmem:[#allocation2 + $0x1e0] sm:$0xff]
      %v955 = vld [vmem:[#allocation2 + $0x1e8] sm:$0xff]
      %v956 = vld [vmem:[#allocation2 + $0x1f0] sm:$0xff]
      %v957 = vld [vmem:[#allocation2 + $0x1f8] sm:$0xff]
      %v958 = vld [vmem:[#allocation2 + $0x200] sm:$0xff]
      %v959 = vld [vmem:[#allocation2 + $0x208] sm:$0xff]
      %v960 = vld [vmem:[#allocation2 + $0x210] sm:$0xff]
      %v961 = vld [vmem:[#allocation2 + $0x218] sm:$0xff]
      %v962 = vld [vmem:[#allocation2 + $0x220] sm:$0xff]
      %v963 = vld [vmem:[#allocation2 + $0x228] sm:$0xff]
      %v964 = vld [vmem:[#allocation2 + $0x230] sm:$0xff]
      %v965 = vld [vmem:[#allocation2 + $0x238] sm:$0xff]
      %v966 = vld [vmem:[#allocation2 + $0x240] sm:$0xff]
      %v967 = vld [vmem:[#allocation2 + $0x248] sm:$0xff]
      %v968 = vld [vmem:[#allocation2 + $0x250] sm:$0xff]
      %v969 = vld [vmem:[#allocation2 + $0x258] sm:$0xff]
      %v970 = vld [vmem:[#allocation2 + $0x260] sm:$0xff]
      %v971 = vld [vmem:[#allocation2 + $0x268] sm:$0xff]
      %v972 = vld [vmem:[#allocation2 + $0x270] sm:$0xff]
      %v973 = vld [vmem:[#allocation2 + $0x278] sm:$0xff]
      %v974 = vld [vmem:[#allocation2 + $0x280] sm:$0xff]
      %v975 = vld [vmem:[#allocation2 + $0x288] sm:$0xff]
      %v976 = vld [vmem:[#allocation2 + $0x290] sm:$0xff]
      %v977 = vld [vmem:[#allocation2 + $0x298] sm:$0xff]
      %v978 = vld [vmem:[#allocation2 + $0x2a0] sm:$0xff]
      %v979 = vld [vmem:[#allocation2 + $0x2a8] sm:$0xff]
      %v980 = vld [vmem:[#allocation2 + $0x2b0] sm:$0xff]
      %v981 = vld [vmem:[#allocation2 + $0x2b8] sm:$0xff]
      %v982 = vld [vmem:[#allocation2 + $0x2c0] sm:$0xff]
      %v983 = vld [vmem:[#allocation2 + $0x2c8] sm:$0xff]
      %v984 = vld [vmem:[#allocation2 + $0x2d0] sm:$0xff]
      %v985 = vld [vmem:[#allocation2 + $0x2d8] sm:$0xff]
      %v986 = vld [vmem:[#allocation2 + $0x2e0] sm:$0xff]
      %v987 = vld [vmem:[#allocation2 + $0x2e8] sm:$0xff]
      %v988 = vld [vmem:[#allocation2 + $0x2f0] sm:$0xff]
      %v989 = vld [vmem:[#allocation2 + $0x2f8] sm:$0xff]
      %v990 = vld [vmem:[#allocation2 + $0x300] sm:$0xff]
      %v991 = vld [vmem:[#allocation2 + $0x308] sm:$0xff]
      %v992 = vld [vmem:[#allocation2 + $0x310] sm:$0xff]
      %v993 = vld [vmem:[#allocation2 + $0x318] sm:$0xff]
      %v994 = vld [vmem:[#allocation2 + $0x320] sm:$0xff]
      %v995 = vld [vmem:[#allocation2 + $0x328] sm:$0xff]
      %v996 = vld [vmem:[#allocation2 + $0x330] sm:$0xff]
      %v997 = vld [vmem:[#allocation2 + $0x338] sm:$0xff]
      %v998 = vld [vmem:[#allocation2 + $0x340] sm:$0xff]
      %v999 = vld [vmem:[#allocation2 + $0x348] sm:$0xff]
      %v1000 = vld [vmem:[#allocation2 + $0x350] sm:$0xff]
      %v1001 = vld [vmem:[#allocation2 + $0x358] sm:$0xff]
      %v1002 = vld [vmem:[#allocation2 + $0x360] sm:$0xff]
      %v1003 = vld [vmem:[#allocation2 + $0x368] sm:$0xff]
      %v1004 = vld [vmem:[#allocation2 + $0x370] sm:$0xff]
      %v1005 = vld [vmem:[#allocation2 + $0x378] sm:$0xff]
      %v1006 = vld [vmem:[#allocation2 + $0x380] sm:$0xff]
      %v1007 = vld [vmem:[#allocation2 + $0x388] sm:$0xff]
      %v1008 = vld [vmem:[#allocation2 + $0x390] sm:$0xff]
      %v1009 = vld [vmem:[#allocation2 + $0x398] sm:$0xff]
      %v1010 = vld [vmem:[#allocation2 + $0x3a0] sm:$0xff]
      %v1011 = vld [vmem:[#allocation2 + $0x3a8] sm:$0xff]
      %v1012 = vld [vmem:[#allocation2 + $0x3b0] sm:$0xff]
      %v1013 = vld [vmem:[#allocation2 + $0x3b8] sm:$0xff]
      %v1014 = vld [vmem:[#allocation2 + $0x3c0] sm:$0xff]
      %v1015 = vld [vmem:[#allocation2 + $0x3c8] sm:$0xff]
      %v1016 = vld [vmem:[#allocation2 + $0x3d0] sm:$0xff]
      %v1017 = vld [vmem:[#allocation2 + $0x3d8] sm:$0xff]
      %v1018 = vld [vmem:[#allocation2 + $0x3e0] sm:$0xff]
      %v1019 = vld [vmem:[#allocation2 + $0x3e8] sm:$0xff]
      %v1020 = vld [vmem:[#allocation2 + $0x3f0] sm:$0xff]
      %v1021 = vld [vmem:[#allocation2 + $0x3f8] sm:$0xff]
      %v1022 = vld [vmem:[#allocation2 + $0x400] sm:$0xff]
      %v1023 = vld [vmem:[#allocation2 + $0x408] sm:$0xff]
      %v1024 = vld [vmem:[#allocation2 + $0x410] sm:$0xff]
      %v1025 = vld [vmem:[#allocation2 + $0x418] sm:$0xff]
      %v1026 = vld [vmem:[#allocation2 + $0x420] sm:$0xff]
      %v1027 = vld [vmem:[#allocation2 + $0x428] sm:$0xff]
      %v1028 = vld [vmem:[#allocation2 + $0x430] sm:$0xff]
      %v1029 = vld [vmem:[#allocation2 + $0x438] sm:$0xff]
      %v1030 = vld [vmem:[#allocation2 + $0x440] sm:$0xff]
      %v1031 = vld [vmem:[#allocation2 + $0x448] sm:$0xff]
      %v1032 = vld [vmem:[#allocation2 + $0x450] sm:$0xff]
      %v1033 = vld [vmem:[#allocation2 + $0x458] sm:$0xff]
      %v1034 = vld [vmem:[#allocation2 + $0x460] sm:$0xff]
      %v1035 = vld [vmem:[#allocation2 + $0x468] sm:$0xff]
      %v1036 = vld [vmem:[#allocation2 + $0x470] sm:$0xff]
      %v1037 = vld [vmem:[#allocation2 + $0x478] sm:$0xff]
      %v1038 = vld [vmem:[#allocation2 + $0x480] sm:$0xff]
      %v1039 = vld [vmem:[#allocation2 + $0x488] sm:$0xff]
      %v1040 = vld [vmem:[#allocation2 + $0x490] sm:$0xff]
      %v1041 = vld [vmem:[#allocation2 + $0x498] sm:$0xff]
      %v1042 = vld [vmem:[#allocation2 + $0x4a0] sm:$0xff]
      %v1043 = vld [vmem:[#allocation2 + $0x4a8] sm:$0xff]
      %v1044 = vld [vmem:[#allocation2 + $0x4b0] sm:$0xff]
      %v1045 = vld [vmem:[#allocation2 + $0x4b8] sm:$0xff]
      %v1046 = vld [vmem:[#allocation2 + $0x4c0] sm:$0xff]
      %v1047 = vld [vmem:[#allocation2 + $0x4c8] sm:$0xff]
      %v1048 = vld [vmem:[#allocation2 + $0x4d0] sm:$0xff]
      %v1049 = vld [vmem:[#allocation2 + $0x4d8] sm:$0xff]
      %v1050 = vld [vmem:[#allocation2 + $0x4e0] sm:$0xff]
      %v1051 = vld [vmem:[#allocation2 + $0x4e8] sm:$0xff]
      %v1052 = vld [vmem:[#allocation2 + $0x4f0] sm:$0xff]
      %v1053 = vld [vmem:[#allocation2 + $0x4f8] sm:$0xff]
      %v1054 = vld [vmem:[#allocation2 + $0x500] sm:$0xff]
      %v1055 = vld [vmem:[#allocation2 + $0x508] sm:$0xff]
      %v1056 = vld [vmem:[#allocation2 + $0x510] sm:$0xff]
      %v1057 = vld [vmem:[#allocation2 + $0x518] sm:$0xff]
      %v1058 = vld [vmem:[#allocation2 + $0x520] sm:$0xff]
      %v1059 = vld [vmem:[#allocation2 + $0x528] sm:$0xff]
      %v1060 = vld [vmem:[#allocation2 + $0x530] sm:$0xff]
      %v1061 = vld [vmem:[#allocation2 + $0x538] sm:$0xff]
      %v1062 = vld [vmem:[#allocation2 + $0x540] sm:$0xff]
      %v1063 = vld [vmem:[#allocation2 + $0x548] sm:$0xff]
      %v1064 = vld [vmem:[#allocation2 + $0x550] sm:$0xff]
      %v1065 = vld [vmem:[#allocation2 + $0x558] sm:$0xff]
      %v1066 = vld [vmem:[#allocation2 + $0x560] sm:$0xff]
      %v1067 = vld [vmem:[#allocation2 + $0x568] sm:$0xff]
      %v1068 = vld [vmem:[#allocation2 + $0x570] sm:$0xff]
      %v1069 = vld [vmem:[#allocation2 + $0x578] sm:$0xff]
      %v1070 = vld [vmem:[#allocation2 + $0x580] sm:$0xff]
      %v1071 = vld [vmem:[#allocation2 + $0x588] sm:$0xff]
      %v1072 = vld [vmem:[#allocation2 + $0x590] sm:$0xff]
      %v1073 = vld [vmem:[#allocation2 + $0x598] sm:$0xff]
      %v1074 = vld [vmem:[#allocation2 + $0x5a0] sm:$0xff]
      %v1075 = vld [vmem:[#allocation2 + $0x5a8] sm:$0xff]
      %v1076 = vld [vmem:[#allocation2 + $0x5b0] sm:$0xff]
      %v1077 = vld [vmem:[#allocation2 + $0x5b8] sm:$0xff]
      %v1078 = vld [vmem:[#allocation2 + $0x5c0] sm:$0xff]
      %v1079 = vld [vmem:[#allocation2 + $0x5c8] sm:$0xff]
      %v1080 = vld [vmem:[#allocation2 + $0x5d0] sm:$0xff]
      %v1081 = vld [vmem:[#allocation2 + $0x5d8] sm:$0xff]
      %v1082 = vld [vmem:[#allocation2 + $0x5e0] sm:$0xff]
      %v1083 = vld [vmem:[#allocation2 + $0x5e8] sm:$0xff]
      %v1084 = vld [vmem:[#allocation2 + $0x5f0] sm:$0xff]
      %v1085 = vld [vmem:[#allocation2 + $0x5f8] sm:$0xff]
      %1087 = vset.pattern.permute.xlu0 0
      %1088 = vperm.xlu0 %1087, %v300
      %v1089 = vpop.permute.xlu0 %1088
      %1092 = vset.pattern.permute.xlu0 0
      %1093 = vperm.xlu0 %1092, %v301
      %v1094 = vpop.permute.xlu0 %1093
      %1097 = vset.pattern.permute.xlu0 0
      %1098 = vperm.xlu0 %1097, %v302
      %v1099 = vpop.permute.xlu0 %1098
      %1102 = vset.pattern.permute.xlu0 0
      %1103 = vperm.xlu0 %1102, %v303
      %v1104 = vpop.permute.xlu0 %1103
      %1107 = vset.pattern.permute.xlu0 0
      %1108 = vperm.xlu0 %1107, %v304
      %v1109 = vpop.permute.xlu0 %1108
      %1112 = vset.pattern.permute.xlu0 0
      %1113 = vperm.xlu0 %1112, %v305
      %v1114 = vpop.permute.xlu0 %1113
      %1117 = vset.pattern.permute.xlu0 0
      %1118 = vperm.xlu0 %1117, %v306
      %v1119 = vpop.permute.xlu0 %1118
      %1122 = vset.pattern.permute.xlu0 0
      %1123 = vperm.xlu0 %1122, %v307
      %v1124 = vpop.permute.xlu0 %1123
      %1127 = vset.pattern.permute.xlu0 0
      %1128 = vperm.xlu0 %1127, %v308
      %v1129 = vpop.permute.xlu0 %1128
      %1132 = vset.pattern.permute.xlu0 0
      %1133 = vperm.xlu0 %1132, %v309
      %v1134 = vpop.permute.xlu0 %1133
      %1137 = vset.pattern.permute.xlu0 0
      %1138 = vperm.xlu0 %1137, %v310
      %v1139 = vpop.permute.xlu0 %1138
      %1142 = vset.pattern.permute.xlu0 0
      %1143 = vperm.xlu0 %1142, %v311
      %v1144 = vpop.permute.xlu0 %1143
      %1147 = vset.pattern.permute.xlu0 0
      %1148 = vperm.xlu0 %1147, %v312
      %v1149 = vpop.permute.xlu0 %1148
      %1152 = vset.pattern.permute.xlu0 0
      %1153 = vperm.xlu0 %1152, %v313
      %v1154 = vpop.permute.xlu0 %1153
      %1157 = vset.pattern.permute.xlu0 0
      %1158 = vperm.xlu0 %1157, %v314
      %v1159 = vpop.permute.xlu0 %1158
      %1162 = vset.pattern.permute.xlu0 0
      %1163 = vperm.xlu0 %1162, %v315
      %v1164 = vpop.permute.xlu0 %1163
      %1166 = vmatprep.subr.mxu0 %v955
      %1167 = vmatpush1.msra.mxu0 %v954
      %1168 = vmatprep.subr.mxu0 %v951
      %1169 = vmatpush1.msra.mxu0 %v950
      %1170 = vmatprep.subr.mxu0 %v947
      %1171 = vmatpush1.msra.mxu0 %v946
      %1172 = vmatprep.subr.mxu0 %v943
      %1173 = vmatpush1.msra.mxu0 %v942
      %1174 = vmatprep.subr.mxu0 %v939
      %1175 = vmatpush1.msra.mxu0 %v938
      %1176 = vmatprep.subr.mxu0 %v935
      %1177 = vmatpush1.msra.mxu0 %v934
      %1178 = vmatprep.subr.mxu0 %v931
      %1179 = vmatpush1.msra.mxu0 %v930
      %1180 = vmatprep.subr.mxu0 %v927
      %1181 = vmatpush1.msra.mxu0 %v926
      %1182 = vmatprep.subr.mxu0 %v923
      %1183 = vmatpush1.msra.mxu0 %v922
      %1184 = vmatprep.subr.mxu0 %v919
      %1185 = vmatpush1.msra.mxu0 %v918
      %1186 = vmatprep.subr.mxu0 %v915
      %1187 = vmatpush1.msra.mxu0 %v914
      %1188 = vmatprep.subr.mxu0 %v911
      %1189 = vmatpush1.msra.mxu0 %v910
      %1190 = vmatprep.subr.mxu0 %v907
      %1191 = vmatpush1.msra.mxu0 %v906
      %1192 = vmatprep.subr.mxu0 %v903
      %1193 = vmatpush1.msra.mxu0 %v902
      %1194 = vmatprep.subr.mxu0 %v899
      %1195 = vmatpush1.msra.mxu0 %v898
      %1196 = vmatprep.subr.mxu0 %v895
      %1197 = vmatpush1.msra.mxu0 %v894
      %1198 = vmatprep.subr.mxu0 %v1019
      %1199 = vmatpush2.msra.mxu0 %v1018
      %1200 = vmatprep.subr.mxu0 %v1015
      %1201 = vmatpush2.msra.mxu0 %v1014
      %1202 = vmatprep.subr.mxu0 %v1011
      %1203 = vmatpush2.msra.mxu0 %v1010
      %1204 = vmatprep.subr.mxu0 %v1007
      %1205 = vmatpush2.msra.mxu0 %v1006
      %1206 = vmatprep.subr.mxu0 %v1003
      %1207 = vmatpush2.msra.mxu0 %v1002
      %1208 = vmatprep.subr.mxu0 %v999
      %1209 = vmatpush2.msra.mxu0 %v998
      %1210 = vmatprep.subr.mxu0 %v995
      %1211 = vmatpush2.msra.mxu0 %v994
      %1212 = vmatprep.subr.mxu0 %v991
      %1213 = vmatpush2.msra.mxu0 %v990
      %1214 = vmatprep.subr.mxu0 %v987
      %1215 = vmatpush2.msra.mxu0 %v986
      %1216 = vmatprep.subr.mxu0 %v983
      %1217 = vmatpush2.msra.mxu0 %v982
      %1218 = vmatprep.subr.mxu0 %v979
      %1219 = vmatpush2.msra.mxu0 %v978
      %1220 = vmatprep.subr.mxu0 %v975
      %1221 = vmatpush2.msra.mxu0 %v974
      %1222 = vmatprep.subr.mxu0 %v971
      %1223 = vmatpush2.msra.mxu0 %v970
      %1224 = vmatprep.subr.mxu0 %v967
      %1225 = vmatpush2.msra.mxu0 %v966
      %1226 = vmatprep.subr.mxu0 %v963
      %1227 = vmatpush2.msra.mxu0 %v962
      %1228 = vmatprep.subr.mxu0 %v959
      %1229 = vmatpush2.msra.mxu0 %v958
      %1230 = vmatprep.mubr.f32.mxu0 %v253
      %1231 = vmatmul.mubr.f32.gmra.mxu0 %v252
      %v1232 = vpop.f32.mrf.mxu0
      %v1233 = vadd.f32 %v1089, %v1232
      %v1234 = vpop.f32.mrf.mxu0
      %v1235 = vadd.f32 %v1089, %v1234
      %1236 = vmatprep.mubr.f32.mxu0 %v256
      %1237 = vmatmul.mubr.f32.gmra.mxu0 %v255
      %v1238 = vpop.f32.mrf.mxu0
      %v1239 = vadd.f32 %v1094, %v1238
      %v1240 = vpop.f32.mrf.mxu0
      %v1241 = vadd.f32 %v1094, %v1240
      %1242 = vmatprep.mubr.f32.mxu0 %v259
      %1243 = vmatmul.mubr.f32.gmra.mxu0 %v258
      %v1244 = vpop.f32.mrf.mxu0
      %v1245 = vadd.f32 %v1099, %v1244
      %v1246 = vpop.f32.mrf.mxu0
      %v1247 = vadd.f32 %v1099, %v1246
      %1248 = vmatprep.mubr.f32.mxu0 %v262
      %1249 = vmatmul.mubr.f32.gmra.mxu0 %v261
      %v1250 = vpop.f32.mrf.mxu0
      %v1251 = vadd.f32 %v1104, %v1250
      %v1252 = vpop.f32.mrf.mxu0
      %v1253 = vadd.f32 %v1104, %v1252
      %1254 = vmatprep.mubr.f32.mxu0 %v265
      %1255 = vmatmul.mubr.f32.gmra.mxu0 %v264
      %v1256 = vpop.f32.mrf.mxu0
      %v1257 = vadd.f32 %v1109, %v1256
      %v1258 = vpop.f32.mrf.mxu0
      %v1259 = vadd.f32 %v1109, %v1258
      %1260 = vmatprep.mubr.f32.mxu0 %v268
      %1261 = vmatmul.mubr.f32.gmra.mxu0 %v267
      %v1262 = vpop.f32.mrf.mxu0
      %v1263 = vadd.f32 %v1114, %v1262
      %v1264 = vpop.f32.mrf.mxu0
      %v1265 = vadd.f32 %v1114, %v1264
      %1266 = vmatprep.mubr.f32.mxu0 %v271
      %1267 = vmatmul.mubr.f32.gmra.mxu0 %v270
      %v1268 = vpop.f32.mrf.mxu0
      %v1269 = vadd.f32 %v1119, %v1268
      %v1270 = vpop.f32.mrf.mxu0
      %v1271 = vadd.f32 %v1119, %v1270
      %1272 = vmatprep.mubr.f32.mxu0 %v274
      %1273 = vmatmul.mubr.f32.gmra.mxu0 %v273
      %v1274 = vpop.f32.mrf.mxu0
      %v1275 = vadd.f32 %v1124, %v1274
      %v1276 = vpop.f32.mrf.mxu0
      %v1277 = vadd.f32 %v1124, %v1276
      %1278 = vmatprep.mubr.f32.mxu0 %v277
      %1279 = vmatmul.mubr.f32.gmra.mxu0 %v276
      %v1280 = vpop.f32.mrf.mxu0
      %v1281 = vadd.f32 %v1129, %v1280
      %v1282 = vpop.f32.mrf.mxu0
      %v1283 = vadd.f32 %v1129, %v1282
      %1284 = vmatprep.mubr.f32.mxu0 %v280
      %1285 = vmatmul.mubr.f32.gmra.mxu0 %v279
      %v1286 = vpop.f32.mrf.mxu0
      %v1287 = vadd.f32 %v1134, %v1286
      %v1288 = vpop.f32.mrf.mxu0
      %v1289 = vadd.f32 %v1134, %v1288
      %1290 = vmatprep.mubr.f32.mxu0 %v283
      %1291 = vmatmul.mubr.f32.gmra.mxu0 %v282
      %v1292 = vpop.f32.mrf.mxu0
      %v1293 = vadd.f32 %v1139, %v1292
      %v1294 = vpop.f32.mrf.mxu0
      %v1295 = vadd.f32 %v1139, %v1294
      %1296 = vmatprep.mubr.f32.mxu0 %v286
      %1297 = vmatmul.mubr.f32.gmra.mxu0 %v285
      %v1298 = vpop.f32.mrf.mxu0
      %v1299 = vadd.f32 %v1144, %v1298
      %v1300 = vpop.f32.mrf.mxu0
      %v1301 = vadd.f32 %v1144, %v1300
      %1302 = vmatprep.mubr.f32.mxu0 %v289
      %1303 = vmatmul.mubr.f32.gmra.mxu0 %v288
      %v1304 = vpop.f32.mrf.mxu0
      %v1305 = vadd.f32 %v1149, %v1304
      %v1306 = vpop.f32.mrf.mxu0
      %v1307 = vadd.f32 %v1149, %v1306
      %1308 = vmatprep.mubr.f32.mxu0 %v292
      %1309 = vmatmul.mubr.f32.gmra.mxu0 %v291
      %v1310 = vpop.f32.mrf.mxu0
      %v1311 = vadd.f32 %v1154, %v1310
      %v1312 = vpop.f32.mrf.mxu0
      %v1313 = vadd.f32 %v1154, %v1312
      %1314 = vmatprep.mubr.f32.mxu0 %v295
      %1315 = vmatmul.mubr.f32.gmra.mxu0 %v294
      %v1316 = vpop.f32.mrf.mxu0
      %v1317 = vadd.f32 %v1159, %v1316
      %v1318 = vpop.f32.mrf.mxu0
      %v1319 = vadd.f32 %v1159, %v1318
      %1320 = vmatprep.mubr.f32.mxu0 %v298
      %1321 = vmatmul.mubr.f32.gmra.mxu0 %v297
      %v1322 = vpop.f32.mrf.mxu0
      %v1323 = vadd.f32 %v1164, %v1322
      %v1324 = vpop.f32.mrf.mxu0
      %v1325 = vadd.f32 %v1164, %v1324
      %1326 = vdwg.mxu0
      %1327 = vmatprep.subr.mxu0 %v1083
      %1328 = vmatpush1.msra.mxu0 %v1082
      %1329 = vmatprep.subr.mxu0 %v1079
      %1330 = vmatpush1.msra.mxu0 %v1078
      %1331 = vmatprep.subr.mxu0 %v1075
      %1332 = vmatpush1.msra.mxu0 %v1074
      %1333 = vmatprep.subr.mxu0 %v1071
      %1334 = vmatpush1.msra.mxu0 %v1070
      %1335 = vmatprep.subr.mxu0 %v1067
      %1336 = vmatpush1.msra.mxu0 %v1066
      %1337 = vmatprep.subr.mxu0 %v1063
      %1338 = vmatpush1.msra.mxu0 %v1062
      %1339 = vmatprep.subr.mxu0 %v1059
      %1340 = vmatpush1.msra.mxu0 %v1058
      %1341 = vmatprep.subr.mxu0 %v1055
      %1342 = vmatpush1.msra.mxu0 %v1054
      %1343 = vmatprep.subr.mxu0 %v1051
      %1344 = vmatpush1.msra.mxu0 %v1050
      %1345 = vmatprep.subr.mxu0 %v1047
      %1346 = vmatpush1.msra.mxu0 %v1046
      %1347 = vmatprep.subr.mxu0 %v1043
      %1348 = vmatpush1.msra.mxu0 %v1042
      %1349 = vmatprep.subr.mxu0 %v1039
      %1350 = vmatpush1.msra.mxu0 %v1038
      %1351 = vmatprep.subr.mxu0 %v1035
      %1352 = vmatpush1.msra.mxu0 %v1034
      %1353 = vmatprep.subr.mxu0 %v1031
      %1354 = vmatpush1.msra.mxu0 %v1030
      %1355 = vmatprep.subr.mxu0 %v1027
      %1356 = vmatpush1.msra.mxu0 %v1026
      %1357 = vmatprep.subr.mxu0 %v1023
      %1358 = vmatpush1.msra.mxu0 %v1022
      %1359 = vmatprep.subr.mxu0 0.0
      %1360 = vmatpush2.msra.mxu0 0.0
      %1361 = vmatprep.subr.mxu0 0.0
      %1362 = vmatpush2.msra.mxu0 0.0
      %1363 = vmatprep.subr.mxu0 0.0
      %1364 = vmatpush2.msra.mxu0 0.0
      %1365 = vmatprep.subr.mxu0 0.0
      %1366 = vmatpush2.msra.mxu0 0.0
      %1367 = vmatprep.subr.mxu0 0.0
      %1368 = vmatpush2.msra.mxu0 0.0
      %1369 = vmatprep.subr.mxu0 0.0
      %1370 = vmatpush2.msra.mxu0 0.0
      %1371 = vmatprep.subr.mxu0 0.0
      %1372 = vmatpush2.msra.mxu0 0.0
      %1373 = vmatprep.subr.mxu0 0.0
      %1374 = vmatpush2.msra.mxu0 0.0
      %1375 = vmatprep.subr.mxu0 0.0
      %1376 = vmatpush2.msra.mxu0 0.0
      %1377 = vmatprep.subr.mxu0 0.0
      %1378 = vmatpush2.msra.mxu0 0.0
      %1379 = vmatprep.subr.mxu0 0.0
      %1380 = vmatpush2.msra.mxu0 0.0
      %1381 = vmatprep.subr.mxu0 0.0
      %1382 = vmatpush2.msra.mxu0 0.0
      %1383 = vmatprep.subr.mxu0 0.0
      %1384 = vmatpush2.msra.mxu0 0.0
      %1385 = vmatprep.subr.mxu0 0.0
      %1386 = vmatpush2.msra.mxu0 0.0
      %1387 = vmatprep.subr.mxu0 0.0
      %1388 = vmatpush2.msra.mxu0 0.0
      %1389 = vmatprep.subr.mxu0 0.0
      %1390 = vmatpush2.msra.mxu0 0.0
      %1391 = vmatprep.mubr.f32.mxu0 0.0
      %1392 = vmatmul.mubr.f32.gmra.mxu0 %v254
      %v1393 = vpop.f32.mrf.mxu0
      %v1394 = vadd.f32 %v1233, %v1393
      %v1395 = vpop.f32.mrf.mxu0
      %v1396 = vadd.f32 %v1235, %v1395
      %1397 = vmatprep.mubr.f32.mxu0 0.0
      %1398 = vmatmul.mubr.f32.gmra.mxu0 %v257
      %v1399 = vpop.f32.mrf.mxu0
      %v1400 = vadd.f32 %v1239, %v1399
      %v1401 = vpop.f32.mrf.mxu0
      %v1402 = vadd.f32 %v1241, %v1401
      %1403 = vmatprep.mubr.f32.mxu0 0.0
      %1404 = vmatmul.mubr.f32.gmra.mxu0 %v260
      %v1405 = vpop.f32.mrf.mxu0
      %v1406 = vadd.f32 %v1245, %v1405
      %v1407 = vpop.f32.mrf.mxu0
      %v1408 = vadd.f32 %v1247, %v1407
      %1409 = vmatprep.mubr.f32.mxu0 0.0
      %1410 = vmatmul.mubr.f32.gmra.mxu0 %v263
      %v1411 = vpop.f32.mrf.mxu0
      %v1412 = vadd.f32 %v1251, %v1411
      %v1413 = vpop.f32.mrf.mxu0
      %v1414 = vadd.f32 %v1253, %v1413
      %1415 = vmatprep.mubr.f32.mxu0 0.0
      %1416 = vmatmul.mubr.f32.gmra.mxu0 %v266
      %v1417 = vpop.f32.mrf.mxu0
      %v1418 = vadd.f32 %v1257, %v1417
      %v1419 = vpop.f32.mrf.mxu0
      %v1420 = vadd.f32 %v1259, %v1419
      %1421 = vmatprep.mubr.f32.mxu0 0.0
      %1422 = vmatmul.mubr.f32.gmra.mxu0 %v269
      %v1423 = vpop.f32.mrf.mxu0
      %v1424 = vadd.f32 %v1263, %v1423
      %v1425 = vpop.f32.mrf.mxu0
      %v1426 = vadd.f32 %v1265, %v1425
      %1427 = vmatprep.mubr.f32.mxu0 0.0
      %1428 = vmatmul.mubr.f32.gmra.mxu0 %v272
      %v1429 = vpop.f32.mrf.mxu0
      %v1430 = vadd.f32 %v1269, %v1429
      %v1431 = vpop.f32.mrf.mxu0
      %v1432 = vadd.f32 %v1271, %v1431
      %1433 = vmatprep.mubr.f32.mxu0 0.0
      %1434 = vmatmul.mubr.f32.gmra.mxu0 %v275
      %v1435 = vpop.f32.mrf.mxu0
      %v1436 = vadd.f32 %v1275, %v1435
      %v1437 = vpop.f32.mrf.mxu0
      %v1438 = vadd.f32 %v1277, %v1437
      %1439 = vmatprep.mubr.f32.mxu0 0.0
      %1440 = vmatmul.mubr.f32.gmra.mxu0 %v278
      %v1441 = vpop.f32.mrf.mxu0
      %v1442 = vadd.f32 %v1281, %v1441
      %v1443 = vpop.f32.mrf.mxu0
      %v1444 = vadd.f32 %v1283, %v1443
      %1445 = vmatprep.mubr.f32.mxu0 0.0
      %1446 = vmatmul.mubr.f32.gmra.mxu0 %v281
      %v1447 = vpop.f32.mrf.mxu0
      %v1448 = vadd.f32 %v1287, %v1447
      %v1449 = vpop.f32.mrf.mxu0
      %v1450 = vadd.f32 %v1289, %v1449
      %1451 = vmatprep.mubr.f32.mxu0 0.0
      %1452 = vmatmul.mubr.f32.gmra.mxu0 %v284
      %v1453 = vpop.f32.mrf.mxu0
      %v1454 = vadd.f32 %v1293, %v1453
      %v1455 = vpop.f32.mrf.mxu0
      %v1456 = vadd.f32 %v1295, %v1455
      %1457 = vmatprep.mubr.f32.mxu0 0.0
      %1458 = vmatmul.mubr.f32.gmra.mxu0 %v287
      %v1459 = vpop.f32.mrf.mxu0
      %v1460 = vadd.f32 %v1299, %v1459
      %v1461 = vpop.f32.mrf.mxu0
      %v1462 = vadd.f32 %v1301, %v1461
      %1463 = vmatprep.mubr.f32.mxu0 0.0
      %1464 = vmatmul.mubr.f32.gmra.mxu0 %v290
      %v1465 = vpop.f32.mrf.mxu0
      %v1466 = vadd.f32 %v1305, %v1465
      %v1467 = vpop.f32.mrf.mxu0
      %v1468 = vadd.f32 %v1307, %v1467
      %1469 = vmatprep.mubr.f32.mxu0 0.0
      %1470 = vmatmul.mubr.f32.gmra.mxu0 %v293
      %v1471 = vpop.f32.mrf.mxu0
      %v1472 = vadd.f32 %v1311, %v1471
      %v1473 = vpop.f32.mrf.mxu0
      %v1474 = vadd.f32 %v1313, %v1473
      %1475 = vmatprep.mubr.f32.mxu0 0.0
      %1476 = vmatmul.mubr.f32.gmra.mxu0 %v296
      %v1477 = vpop.f32.mrf.mxu0
      %v1478 = vadd.f32 %v1317, %v1477
      %v1479 = vpop.f32.mrf.mxu0
      %v1480 = vadd.f32 %v1319, %v1479
      %1481 = vmatprep.mubr.f32.mxu0 0.0
      %1482 = vmatmul.mubr.f32.gmra.mxu0 %v299
      %v1483 = vpop.f32.mrf.mxu0
      %v1484 = vadd.f32 %v1323, %v1483
      %v1485 = vpop.f32.mrf.mxu0
      %v1486 = vadd.f32 %v1325, %v1485
      %1487 = vdwg.mxu0
      %1488 = vmatprep.subr.mxu0 %v957
      %1489 = vmatpush1.msra.mxu0 %v956
      %1490 = vmatprep.subr.mxu0 %v953
      %1491 = vmatpush1.msra.mxu0 %v952
      %1492 = vmatprep.subr.mxu0 %v949
      %1493 = vmatpush1.msra.mxu0 %v948
      %1494 = vmatprep.subr.mxu0 %v945
      %1495 = vmatpush1.msra.mxu0 %v944
      %1496 = vmatprep.subr.mxu0 %v941
      %1497 = vmatpush1.msra.mxu0 %v940
      %1498 = vmatprep.subr.mxu0 %v937
      %1499 = vmatpush1.msra.mxu0 %v936
      %1500 = vmatprep.subr.mxu0 %v933
      %1501 = vmatpush1.msra.mxu0 %v932
      %1502 = vmatprep.subr.mxu0 %v929
      %1503 = vmatpush1.msra.mxu0 %v928
      %1504 = vmatprep.subr.mxu0 %v925
      %1505 = vmatpush1.msra.mxu0 %v924
      %1506 = vmatprep.subr.mxu0 %v921
      %1507 = vmatpush1.msra.mxu0 %v920
      %1508 = vmatprep.subr.mxu0 %v917
      %1509 = vmatpush1.msra.mxu0 %v916
      %1510 = vmatprep.subr.mxu0 %v913
      %1511 = vmatpush1.msra.mxu0 %v912
      %1512 = vmatprep.subr.mxu0 %v909
      %1513 = vmatpush1.msra.mxu0 %v908
      %1514 = vmatprep.subr.mxu0 %v905
      %1515 = vmatpush1.msra.mxu0 %v904
      %1516 = vmatprep.subr.mxu0 %v901
      %1517 = vmatpush1.msra.mxu0 %v900
      %1518 = vmatprep.subr.mxu0 %v897
      %1519 = vmatpush1.msra.mxu0 %v896
      %1520 = vmatprep.subr.mxu0 %v1021
      %1521 = vmatpush2.msra.mxu0 %v1020
      %1522 = vmatprep.subr.mxu0 %v1017
      %1523 = vmatpush2.msra.mxu0 %v1016
      %1524 = vmatprep.subr.mxu0 %v1013
      %1525 = vmatpush2.msra.mxu0 %v1012
      %1526 = vmatprep.subr.mxu0 %v1009
      %1527 = vmatpush2.msra.mxu0 %v1008
      %1528 = vmatprep.subr.mxu0 %v1005
      %1529 = vmatpush2.msra.mxu0 %v1004
      %1530 = vmatprep.subr.mxu0 %v1001
      %1531 = vmatpush2.msra.mxu0 %v1000
      %1532 = vmatprep.subr.mxu0 %v997
      %1533 = vmatpush2.msra.mxu0 %v996
      %1534 = vmatprep.subr.mxu0 %v993
      %1535 = vmatpush2.msra.mxu0 %v992
      %1536 = vmatprep.subr.mxu0 %v989
      %1537 = vmatpush2.msra.mxu0 %v988
      %1538 = vmatprep.subr.mxu0 %v985
      %1539 = vmatpush2.msra.mxu0 %v984
      %1540 = vmatprep.subr.mxu0 %v981
      %1541 = vmatpush2.msra.mxu0 %v980
      %1542 = vmatprep.subr.mxu0 %v977
      %1543 = vmatpush2.msra.mxu0 %v976
      %1544 = vmatprep.subr.mxu0 %v973
      %1545 = vmatpush2.msra.mxu0 %v972
      %1546 = vmatprep.subr.mxu0 %v969
      %1547 = vmatpush2.msra.mxu0 %v968
      %1548 = vmatprep.subr.mxu0 %v965
      %1549 = vmatpush2.msra.mxu0 %v964
      %1550 = vmatprep.subr.mxu0 %v961
      %1551 = vmatpush2.msra.mxu0 %v960
      %1552 = vmatprep.mubr.f32.mxu0 %v253
      %1553 = vmatmul.mubr.f32.gmra.mxu0 %v252
      %v1554 = vpop.f32.mrf.mxu0
      %v1555 = vadd.f32 %v1089, %v1554
      %v1556 = vpop.f32.mrf.mxu0
      %v1557 = vadd.f32 %v1089, %v1556
      %1558 = vmatprep.mubr.f32.mxu0 %v256
      %1559 = vmatmul.mubr.f32.gmra.mxu0 %v255
      %v1560 = vpop.f32.mrf.mxu0
      %v1561 = vadd.f32 %v1094, %v1560
      %v1562 = vpop.f32.mrf.mxu0
      %v1563 = vadd.f32 %v1094, %v1562
      %1564 = vmatprep.mubr.f32.mxu0 %v259
      %1565 = vmatmul.mubr.f32.gmra.mxu0 %v258
      %v1566 = vpop.f32.mrf.mxu0
      %v1567 = vadd.f32 %v1099, %v1566
      %v1568 = vpop.f32.mrf.mxu0
      %v1569 = vadd.f32 %v1099, %v1568
      %1570 = vmatprep.mubr.f32.mxu0 %v262
      %1571 = vmatmul.mubr.f32.gmra.mxu0 %v261
      %v1572 = vpop.f32.mrf.mxu0
      %v1573 = vadd.f32 %v1104, %v1572
      %v1574 = vpop.f32.mrf.mxu0
      %v1575 = vadd.f32 %v1104, %v1574
      %1576 = vmatprep.mubr.f32.mxu0 %v265
      %1577 = vmatmul.mubr.f32.gmra.mxu0 %v264
      %v1578 = vpop.f32.mrf.mxu0
      %v1579 = vadd.f32 %v1109, %v1578
      %v1580 = vpop.f32.mrf.mxu0
      %v1581 = vadd.f32 %v1109, %v1580
      %1582 = vmatprep.mubr.f32.mxu0 %v268
      %1583 = vmatmul.mubr.f32.gmra.mxu0 %v267
      %v1584 = vpop.f32.mrf.mxu0
      %v1585 = vadd.f32 %v1114, %v1584
      %v1586 = vpop.f32.mrf.mxu0
      %v1587 = vadd.f32 %v1114, %v1586
      %1588 = vmatprep.mubr.f32.mxu0 %v271
      %1589 = vmatmul.mubr.f32.gmra.mxu0 %v270
      %v1590 = vpop.f32.mrf.mxu0
      %v1591 = vadd.f32 %v1119, %v1590
      %v1592 = vpop.f32.mrf.mxu0
      %v1593 = vadd.f32 %v1119, %v1592
      %1594 = vmatprep.mubr.f32.mxu0 %v274
      %1595 = vmatmul.mubr.f32.gmra.mxu0 %v273
      %v1596 = vpop.f32.mrf.mxu0
      %v1597 = vadd.f32 %v1124, %v1596
      %v1598 = vpop.f32.mrf.mxu0
      %v1599 = vadd.f32 %v1124, %v1598
      %1600 = vmatprep.mubr.f32.mxu0 %v277
      %1601 = vmatmul.mubr.f32.gmra.mxu0 %v276
      %v1602 = vpop.f32.mrf.mxu0
      %v1603 = vadd.f32 %v1129, %v1602
      %v1604 = vpop.f32.mrf.mxu0
      %v1605 = vadd.f32 %v1129, %v1604
      %1606 = vmatprep.mubr.f32.mxu0 %v280
      %1607 = vmatmul.mubr.f32.gmra.mxu0 %v279
      %v1608 = vpop.f32.mrf.mxu0
      %v1609 = vadd.f32 %v1134, %v1608
      %v1610 = vpop.f32.mrf.mxu0
      %v1611 = vadd.f32 %v1134, %v1610
      %1612 = vmatprep.mubr.f32.mxu0 %v283
      %1613 = vmatmul.mubr.f32.gmra.mxu0 %v282
      %v1614 = vpop.f32.mrf.mxu0
      %v1615 = vadd.f32 %v1139, %v1614
      %v1616 = vpop.f32.mrf.mxu0
      %v1617 = vadd.f32 %v1139, %v1616
      %1618 = vmatprep.mubr.f32.mxu0 %v286
      %1619 = vmatmul.mubr.f32.gmra.mxu0 %v285
      %v1620 = vpop.f32.mrf.mxu0
      %v1621 = vadd.f32 %v1144, %v1620
      %v1622 = vpop.f32.mrf.mxu0
      %v1623 = vadd.f32 %v1144, %v1622
      %1624 = vmatprep.mubr.f32.mxu0 %v289
      %1625 = vmatmul.mubr.f32.gmra.mxu0 %v288
      %v1626 = vpop.f32.mrf.mxu0
      %v1627 = vadd.f32 %v1149, %v1626
      %v1628 = vpop.f32.mrf.mxu0
      %v1629 = vadd.f32 %v1149, %v1628
      %1630 = vmatprep.mubr.f32.mxu0 %v292
      %1631 = vmatmul.mubr.f32.gmra.mxu0 %v291
      %v1632 = vpop.f32.mrf.mxu0
      %v1633 = vadd.f32 %v1154, %v1632
      %v1634 = vpop.f32.mrf.mxu0
      %v1635 = vadd.f32 %v1154, %v1634
      %1636 = vmatprep.mubr.f32.mxu0 %v295
      %1637 = vmatmul.mubr.f32.gmra.mxu0 %v294
      %v1638 = vpop.f32.mrf.mxu0
      %v1639 = vadd.f32 %v1159, %v1638
      %v1640 = vpop.f32.mrf.mxu0
      %v1641 = vadd.f32 %v1159, %v1640
      %1642 = vmatprep.mubr.f32.mxu0 %v298
      %1643 = vmatmul.mubr.f32.gmra.mxu0 %v297
      %v1644 = vpop.f32.mrf.mxu0
      %v1645 = vadd.f32 %v1164, %v1644
      %v1646 = vpop.f32.mrf.mxu0
      %v1647 = vadd.f32 %v1164, %v1646
      %1648 = vdwg.mxu0
      %1649 = vmatprep.subr.mxu0 %v1085
      %1650 = vmatpush1.msra.mxu0 %v1084
      %1651 = vmatprep.subr.mxu0 %v1081
      %1652 = vmatpush1.msra.mxu0 %v1080
      %1653 = vmatprep.subr.mxu0 %v1077
      %1654 = vmatpush1.msra.mxu0 %v1076
      %1655 = vmatprep.subr.mxu0 %v1073
      %1656 = vmatpush1.msra.mxu0 %v1072
      %1657 = vmatprep.subr.mxu0 %v1069
      %1658 = vmatpush1.msra.mxu0 %v1068
      %1659 = vmatprep.subr.mxu0 %v1065
      %1660 = vmatpush1.msra.mxu0 %v1064
      %1661 = vmatprep.subr.mxu0 %v1061
      %1662 = vmatpush1.msra.mxu0 %v1060
      %1663 = vmatprep.subr.mxu0 %v1057
      %1664 = vmatpush1.msra.mxu0 %v1056
      %1665 = vmatprep.subr.mxu0 %v1053
      %1666 = vmatpush1.msra.mxu0 %v1052
      %1667 = vmatprep.subr.mxu0 %v1049
      %1668 = vmatpush1.msra.mxu0 %v1048
      %1669 = vmatprep.subr.mxu0 %v1045
      %1670 = vmatpush1.msra.mxu0 %v1044
      %1671 = vmatprep.subr.mxu0 %v1041
      %1672 = vmatpush1.msra.mxu0 %v1040
      %1673 = vmatprep.subr.mxu0 %v1037
      %1674 = vmatpush1.msra.mxu0 %v1036
      %1675 = vmatprep.subr.mxu0 %v1033
      %1676 = vmatpush1.msra.mxu0 %v1032
      %1677 = vmatprep.subr.mxu0 %v1029
      %1678 = vmatpush1.msra.mxu0 %v1028
      %1679 = vmatprep.subr.mxu0 %v1025
      %1680 = vmatpush1.msra.mxu0 %v1024
      %1681 = vmatprep.subr.mxu0 0.0
      %1682 = vmatpush2.msra.mxu0 0.0
      %1683 = vmatprep.subr.mxu0 0.0
      %1684 = vmatpush2.msra.mxu0 0.0
      %1685 = vmatprep.subr.mxu0 0.0
      %1686 = vmatpush2.msra.mxu0 0.0
      %1687 = vmatprep.subr.mxu0 0.0
      %1688 = vmatpush2.msra.mxu0 0.0
      %1689 = vmatprep.subr.mxu0 0.0
      %1690 = vmatpush2.msra.mxu0 0.0
      %1691 = vmatprep.subr.mxu0 0.0
      %1692 = vmatpush2.msra.mxu0 0.0
      %1693 = vmatprep.subr.mxu0 0.0
      %1694 = vmatpush2.msra.mxu0 0.0
      %1695 = vmatprep.subr.mxu0 0.0
      %1696 = vmatpush2.msra.mxu0 0.0
      %1697 = vmatprep.subr.mxu0 0.0
      %1698 = vmatpush2.msra.mxu0 0.0
      %1699 = vmatprep.subr.mxu0 0.0
      %1700 = vmatpush2.msra.mxu0 0.0
      %1701 = vmatprep.subr.mxu0 0.0
      %1702 = vmatpush2.msra.mxu0 0.0
      %1703 = vmatprep.subr.mxu0 0.0
      %1704 = vmatpush2.msra.mxu0 0.0
      %1705 = vmatprep.subr.mxu0 0.0
      %1706 = vmatpush2.msra.mxu0 0.0
      %1707 = vmatprep.subr.mxu0 0.0
      %1708 = vmatpush2.msra.mxu0 0.0
      %1709 = vmatprep.subr.mxu0 0.0
      %1710 = vmatpush2.msra.mxu0 0.0
      %1711 = vmatprep.subr.mxu0 0.0
      %1712 = vmatpush2.msra.mxu0 0.0
      %1713 = vmatprep.mubr.f32.mxu0 0.0
      %1714 = vmatmul.mubr.f32.gmra.mxu0 %v254
      %v1715 = vpop.f32.mrf.mxu0
      %v1716 = vadd.f32 %v1555, %v1715
      %v1717 = vpop.f32.mrf.mxu0
      %v1718 = vadd.f32 %v1557, %v1717
      %1719 = vmatprep.mubr.f32.mxu0 0.0
      %1720 = vmatmul.mubr.f32.gmra.mxu0 %v257
      %v1721 = vpop.f32.mrf.mxu0
      %v1722 = vadd.f32 %v1561, %v1721
      %v1723 = vpop.f32.mrf.mxu0
      %v1724 = vadd.f32 %v1563, %v1723
      %1725 = vmatprep.mubr.f32.mxu0 0.0
      %1726 = vmatmul.mubr.f32.gmra.mxu0 %v260
      %v1727 = vpop.f32.mrf.mxu0
      %v1728 = vadd.f32 %v1567, %v1727
      %v1729 = vpop.f32.mrf.mxu0
      %v1730 = vadd.f32 %v1569, %v1729
      %1731 = vmatprep.mubr.f32.mxu0 0.0
      %1732 = vmatmul.mubr.f32.gmra.mxu0 %v263
      %v1733 = vpop.f32.mrf.mxu0
      %v1734 = vadd.f32 %v1573, %v1733
      %v1735 = vpop.f32.mrf.mxu0
      %v1736 = vadd.f32 %v1575, %v1735
      %1737 = vmatprep.mubr.f32.mxu0 0.0
      %1738 = vmatmul.mubr.f32.gmra.mxu0 %v266
      %v1739 = vpop.f32.mrf.mxu0
      %v1740 = vadd.f32 %v1579, %v1739
      %v1741 = vpop.f32.mrf.mxu0
      %v1742 = vadd.f32 %v1581, %v1741
      %1743 = vmatprep.mubr.f32.mxu0 0.0
      %1744 = vmatmul.mubr.f32.gmra.mxu0 %v269
      %v1745 = vpop.f32.mrf.mxu0
      %v1746 = vadd.f32 %v1585, %v1745
      %v1747 = vpop.f32.mrf.mxu0
      %v1748 = vadd.f32 %v1587, %v1747
      %1749 = vmatprep.mubr.f32.mxu0 0.0
      %1750 = vmatmul.mubr.f32.gmra.mxu0 %v272
      %v1751 = vpop.f32.mrf.mxu0
      %v1752 = vadd.f32 %v1591, %v1751
      %v1753 = vpop.f32.mrf.mxu0
      %v1754 = vadd.f32 %v1593, %v1753
      %1755 = vmatprep.mubr.f32.mxu0 0.0
      %1756 = vmatmul.mubr.f32.gmra.mxu0 %v275
      %v1757 = vpop.f32.mrf.mxu0
      %v1758 = vadd.f32 %v1597, %v1757
      %v1759 = vpop.f32.mrf.mxu0
      %v1760 = vadd.f32 %v1599, %v1759
      %1761 = vmatprep.mubr.f32.mxu0 0.0
      %1762 = vmatmul.mubr.f32.gmra.mxu0 %v278
      %v1763 = vpop.f32.mrf.mxu0
      %v1764 = vadd.f32 %v1603, %v1763
      %v1765 = vpop.f32.mrf.mxu0
      %v1766 = vadd.f32 %v1605, %v1765
      %1767 = vmatprep.mubr.f32.mxu0 0.0
      %1768 = vmatmul.mubr.f32.gmra.mxu0 %v281
      %v1769 = vpop.f32.mrf.mxu0
      %v1770 = vadd.f32 %v1609, %v1769
      %v1771 = vpop.f32.mrf.mxu0
      %v1772 = vadd.f32 %v1611, %v1771
      %1773 = vmatprep.mubr.f32.mxu0 0.0
      %1774 = vmatmul.mubr.f32.gmra.mxu0 %v284
      %v1775 = vpop.f32.mrf.mxu0
      %v1776 = vadd.f32 %v1615, %v1775
      %v1777 = vpop.f32.mrf.mxu0
      %v1778 = vadd.f32 %v1617, %v1777
      %1779 = vmatprep.mubr.f32.mxu0 0.0
      %1780 = vmatmul.mubr.f32.gmra.mxu0 %v287
      %v1781 = vpop.f32.mrf.mxu0
      %v1782 = vadd.f32 %v1621, %v1781
      %v1783 = vpop.f32.mrf.mxu0
      %v1784 = vadd.f32 %v1623, %v1783
      %1785 = vmatprep.mubr.f32.mxu0 0.0
      %1786 = vmatmul.mubr.f32.gmra.mxu0 %v290
      %v1787 = vpop.f32.mrf.mxu0
      %v1788 = vadd.f32 %v1627, %v1787
      %v1789 = vpop.f32.mrf.mxu0
      %v1790 = vadd.f32 %v1629, %v1789
      %1791 = vmatprep.mubr.f32.mxu0 0.0
      %1792 = vmatmul.mubr.f32.gmra.mxu0 %v293
      %v1793 = vpop.f32.mrf.mxu0
      %v1794 = vadd.f32 %v1633, %v1793
      %v1795 = vpop.f32.mrf.mxu0
      %v1796 = vadd.f32 %v1635, %v1795
      %1797 = vmatprep.mubr.f32.mxu0 0.0
      %1798 = vmatmul.mubr.f32.gmra.mxu0 %v296
      %v1799 = vpop.f32.mrf.mxu0
      %v1800 = vadd.f32 %v1639, %v1799
      %v1801 = vpop.f32.mrf.mxu0
      %v1802 = vadd.f32 %v1641, %v1801
      %1803 = vmatprep.mubr.f32.mxu0 0.0
      %1804 = vmatmul.mubr.f32.gmra.mxu0 %v299
      %v1805 = vpop.f32.mrf.mxu0
      %v1806 = vadd.f32 %v1645, %v1805
      %v1807 = vpop.f32.mrf.mxu0
      %v1808 = vadd.f32 %v1647, %v1807
      %1809 = vdwg.mxu0
      %v1810 = vmax.f32 %v1394, 0.0
      %v1811 = vmax.f32 %v1396, 0.0
      %v1812 = vmax.f32 %v1716, 0.0
      %v1813 = vmax.f32 %v1718, 0.0
      %v1814 = vmax.f32 %v1400, 0.0
      %v1815 = vmax.f32 %v1402, 0.0
      %v1816 = vmax.f32 %v1722, 0.0
      %v1817 = vmax.f32 %v1724, 0.0
      %v1818 = vmax.f32 %v1406, 0.0
      %v1819 = vmax.f32 %v1408, 0.0
      %v1820 = vmax.f32 %v1728, 0.0
      %v1821 = vmax.f32 %v1730, 0.0
      %v1822 = vmax.f32 %v1412, 0.0
      %v1823 = vmax.f32 %v1414, 0.0
      %v1824 = vmax.f32 %v1734, 0.0
      %v1825 = vmax.f32 %v1736, 0.0
      %v1826 = vmax.f32 %v1418, 0.0
      %v1827 = vmax.f32 %v1420, 0.0
      %v1828 = vmax.f32 %v1740, 0.0
      %v1829 = vmax.f32 %v1742, 0.0
      %v1830 = vmax.f32 %v1424, 0.0
      %v1831 = vmax.f32 %v1426, 0.0
      %v1832 = vmax.f32 %v1746, 0.0
      %v1833 = vmax.f32 %v1748, 0.0
      %v1834 = vmax.f32 %v1430, 0.0
      %v1835 = vmax.f32 %v1432, 0.0
      %v1836 = vmax.f32 %v1752, 0.0
      %v1837 = vmax.f32 %v1754, 0.0
      %v1838 = vmax.f32 %v1436, 0.0
      %v1839 = vmax.f32 %v1438, 0.0
      %v1840 = vmax.f32 %v1758, 0.0
      %v1841 = vmax.f32 %v1760, 0.0
      %v1842 = vmax.f32 %v1442, 0.0
      %v1843 = vmax.f32 %v1444, 0.0
      %v1844 = vmax.f32 %v1764, 0.0
      %v1845 = vmax.f32 %v1766, 0.0
      %v1846 = vmax.f32 %v1448, 0.0
      %v1847 = vmax.f32 %v1450, 0.0
      %v1848 = vmax.f32 %v1770, 0.0
      %v1849 = vmax.f32 %v1772, 0.0
      %v1850 = vmax.f32 %v1454, 0.0
      %v1851 = vmax.f32 %v1456, 0.0
      %v1852 = vmax.f32 %v1776, 0.0
      %v1853 = vmax.f32 %v1778, 0.0
      %v1854 = vmax.f32 %v1460, 0.0
      %v1855 = vmax.f32 %v1462, 0.0
      %v1856 = vmax.f32 %v1782, 0.0
      %v1857 = vmax.f32 %v1784, 0.0
      %v1858 = vmax.f32 %v1466, 0.0
      %v1859 = vmax.f32 %v1468, 0.0
      %v1860 = vmax.f32 %v1788, 0.0
      %v1861 = vmax.f32 %v1790, 0.0
      %v1862 = vmax.f32 %v1472, 0.0
      %v1863 = vmax.f32 %v1474, 0.0
      %v1864 = vmax.f32 %v1794, 0.0
      %v1865 = vmax.f32 %v1796, 0.0
      %v1866 = vmax.f32 %v1478, 0.0
      %v1867 = vmax.f32 %v1480, 0.0
      %v1868 = vmax.f32 %v1800, 0.0
      %v1869 = vmax.f32 %v1802, 0.0
      %v1870 = vmax.f32 %v1484, 0.0
      %v1871 = vmax.f32 %v1486, 0.0
      %v1872 = vmax.f32 %v1806, 0.0
      %v1873 = vmax.f32 %v1808, 0.0
      %v1874 = vmul.f32 %v1810, %v184
      %v1875 = vmul.f32 %v1811, %v185
      %v1876 = vmul.f32 %v1812, %v186
      %v1877 = vmul.f32 %v1813, %v187
      %v1878 = vmul.f32 %v1814, %v184
      %v1879 = vmul.f32 %v1815, %v185
      %v1880 = vmul.f32 %v1816, %v186
      %v1881 = vmul.f32 %v1817, %v187
      %v1882 = vmul.f32 %v1818, %v184
      %v1883 = vmul.f32 %v1819, %v185
      %v1884 = vmul.f32 %v1820, %v186
      %v1885 = vmul.f32 %v1821, %v187
      %v1886 = vmul.f32 %v1822, %v184
      %v1887 = vmul.f32 %v1823, %v185
      %v1888 = vmul.f32 %v1824, %v186
      %v1889 = vmul.f32 %v1825, %v187
      %v1890 = vmul.f32 %v1826, %v184
      %v1891 = vmul.f32 %v1827, %v185
      %v1892 = vmul.f32 %v1828, %v186
      %v1893 = vmul.f32 %v1829, %v187
      %v1894 = vmul.f32 %v1830, %v184
      %v1895 = vmul.f32 %v1831, %v185
      %v1896 = vmul.f32 %v1832, %v186
      %v1897 = vmul.f32 %v1833, %v187
      %v1898 = vmul.f32 %v1834, %v184
      %v1899 = vmul.f32 %v1835, %v185
      %v1900 = vmul.f32 %v1836, %v186
      %v1901 = vmul.f32 %v1837, %v187
      %v1902 = vmul.f32 %v1838, %v184
      %v1903 = vmul.f32 %v1839, %v185
      %v1904 = vmul.f32 %v1840, %v186
      %v1905 = vmul.f32 %v1841, %v187
      %v1906 = vmul.f32 %v1842, %v184
      %v1907 = vmul.f32 %v1843, %v185
      %v1908 = vmul.f32 %v1844, %v186
      %v1909 = vmul.f32 %v1845, %v187
      %v1910 = vmul.f32 %v1846, %v184
      %v1911 = vmul.f32 %v1847, %v185
      %v1912 = vmul.f32 %v1848, %v186
      %v1913 = vmul.f32 %v1849, %v187
      %v1914 = vmul.f32 %v1850, %v184
      %v1915 = vmul.f32 %v1851, %v185
      %v1916 = vmul.f32 %v1852, %v186
      %v1917 = vmul.f32 %v1853, %v187
      %v1918 = vmul.f32 %v1854, %v184
      %v1919 = vmul.f32 %v1855, %v185
      %v1920 = vmul.f32 %v1856, %v186
      %v1921 = vmul.f32 %v1857, %v187
      %v1922 = vmul.f32 %v1858, %v184
      %v1923 = vmul.f32 %v1859, %v185
      %v1924 = vmul.f32 %v1860, %v186
      %v1925 = vmul.f32 %v1861, %v187
      %v1926 = vmul.f32 %v1862, %v184
      %v1927 = vmul.f32 %v1863, %v185
      %v1928 = vmul.f32 %v1864, %v186
      %v1929 = vmul.f32 %v1865, %v187
      %v1930 = vmul.f32 %v1866, %v184
      %v1931 = vmul.f32 %v1867, %v185
      %v1932 = vmul.f32 %v1868, %v186
      %v1933 = vmul.f32 %v1869, %v187
      %v1934 = vmul.f32 %v1870, %v184
      %v1935 = vmul.f32 %v1871, %v185
      %v1936 = vmul.f32 %v1872, %v186
      %v1937 = vmul.f32 %v1873, %v187
      %s1938 = scalar_lea.vmem %s1, 384
      %v1939 = vld [vmem:[%s1938] sm:$0xff]
      %v1940 = vld [vmem:[%s1938 + $0x8] sm:$0xff]
      %v1941 = vld [vmem:[%s1938 + $0x10] sm:$0xff]
      %v1942 = vld [vmem:[%s1938 + $0x18] sm:$0xff]
      %v1943 = vld [vmem:[%s1938 + $0x20] sm:$0xff]
      %v1944 = vld [vmem:[%s1938 + $0x28] sm:$0xff]
      %v1945 = vld [vmem:[%s1938 + $0x30] sm:$0xff]
      %v1946 = vld [vmem:[%s1938 + $0x38] sm:$0xff]
      %v1947 = vld [vmem:[%s1938 + $0x40] sm:$0xff]
      %v1948 = vld [vmem:[%s1938 + $0x48] sm:$0xff]
      %v1949 = vld [vmem:[%s1938 + $0x50] sm:$0xff]
      %v1950 = vld [vmem:[%s1938 + $0x58] sm:$0xff]
      %v1951 = vld [vmem:[%s1938 + $0x60] sm:$0xff]
      %v1952 = vld [vmem:[%s1938 + $0x68] sm:$0xff]
      %v1953 = vld [vmem:[%s1938 + $0x70] sm:$0xff]
      %v1954 = vld [vmem:[%s1938 + $0x78] sm:$0xff]
      %v1955 = vld [vmem:[%s1938 + $0x80] sm:$0xff]
      %v1956 = vld [vmem:[%s1938 + $0x88] sm:$0xff]
      %v1957 = vld [vmem:[%s1938 + $0x90] sm:$0xff]
      %v1958 = vld [vmem:[%s1938 + $0x98] sm:$0xff]
      %v1959 = vld [vmem:[%s1938 + $0xa0] sm:$0xff]
      %v1960 = vld [vmem:[%s1938 + $0xa8] sm:$0xff]
      %v1961 = vld [vmem:[%s1938 + $0xb0] sm:$0xff]
      %v1962 = vld [vmem:[%s1938 + $0xb8] sm:$0xff]
      %v1963 = vld [vmem:[%s1938 + $0xc0] sm:$0xff]
      %v1964 = vld [vmem:[%s1938 + $0xc8] sm:$0xff]
      %v1965 = vld [vmem:[%s1938 + $0xd0] sm:$0xff]
      %v1966 = vld [vmem:[%s1938 + $0xd8] sm:$0xff]
      %v1967 = vld [vmem:[%s1938 + $0xe0] sm:$0xff]
      %v1968 = vld [vmem:[%s1938 + $0xe8] sm:$0xff]
      %v1969 = vld [vmem:[%s1938 + $0xf0] sm:$0xff]
      %v1970 = vld [vmem:[%s1938 + $0xf8] sm:$0xff]
      %v1971 = vld [vmem:[%s1938 + $0x100] sm:$0xff]
      %v1972 = vld [vmem:[%s1938 + $0x108] sm:$0xff]
      %v1973 = vld [vmem:[%s1938 + $0x110] sm:$0xff]
      %v1974 = vld [vmem:[%s1938 + $0x118] sm:$0xff]
      %v1975 = vld [vmem:[%s1938 + $0x120] sm:$0xff]
      %v1976 = vld [vmem:[%s1938 + $0x128] sm:$0xff]
      %v1977 = vld [vmem:[%s1938 + $0x130] sm:$0xff]
      %v1978 = vld [vmem:[%s1938 + $0x138] sm:$0xff]
      %v1979 = vld [vmem:[%s1938 + $0x140] sm:$0xff]
      %v1980 = vld [vmem:[%s1938 + $0x148] sm:$0xff]
      %v1981 = vld [vmem:[%s1938 + $0x150] sm:$0xff]
      %v1982 = vld [vmem:[%s1938 + $0x158] sm:$0xff]
      %v1983 = vld [vmem:[%s1938 + $0x160] sm:$0xff]
      %v1984 = vld [vmem:[%s1938 + $0x168] sm:$0xff]
      %v1985 = vld [vmem:[%s1938 + $0x170] sm:$0xff]
      %v1986 = vld [vmem:[%s1938 + $0x178] sm:$0xff]
      %v1987 = vld [vmem:[%s2] sm:$0xff]
      %v1988 = vld [vmem:[%s2 + $0x8] sm:$0xff]
      %v1989 = vld [vmem:[%s2 + $0x10] sm:$0xff]
      %v1990 = vld [vmem:[%s2 + $0x18] sm:$0xff]
      %v1991 = vld [vmem:[%s2 + $0x20] sm:$0xff]
      %v1992 = vld [vmem:[%s2 + $0x28] sm:$0xff]
      %v1993 = vld [vmem:[%s2 + $0x30] sm:$0xff]
      %v1994 = vld [vmem:[%s2 + $0x38] sm:$0xff]
      %v1995 = vld [vmem:[%s2 + $0x40] sm:$0xff]
      %v1996 = vld [vmem:[%s2 + $0x48] sm:$0xff]
      %v1997 = vld [vmem:[%s2 + $0x50] sm:$0xff]
      %v1998 = vld [vmem:[%s2 + $0x58] sm:$0xff]
      %v1999 = vld [vmem:[%s2 + $0x60] sm:$0xff]
      %v2000 = vld [vmem:[%s2 + $0x68] sm:$0xff]
      %v2001 = vld [vmem:[%s2 + $0x70] sm:$0xff]
      %v2002 = vld [vmem:[%s2 + $0x78] sm:$0xff]
      %2003 = vrot.lane.b32.xlu0 %v1874, 1
      %v2004 = vpop.permute.xlu0 %2003
      %2005 = vrot.lane.b32.xlu0 %v1878, 1
      %v2006 = vpop.permute.xlu0 %2005
      %2007 = vrot.lane.b32.xlu0 %v1882, 1
      %v2008 = vpop.permute.xlu0 %2007
      %2009 = vrot.lane.b32.xlu0 %v1886, 1
      %v2010 = vpop.permute.xlu0 %2009
      %2011 = vrot.lane.b32.xlu0 %v1890, 1
      %v2012 = vpop.permute.xlu0 %2011
      %2013 = vrot.lane.b32.xlu0 %v1894, 1
      %v2014 = vpop.permute.xlu0 %2013
      %2015 = vrot.lane.b32.xlu0 %v1898, 1
      %v2016 = vpop.permute.xlu0 %2015
      %2017 = vrot.lane.b32.xlu0 %v1902, 1
      %v2018 = vpop.permute.xlu0 %2017
      %2019 = vrot.lane.b32.xlu0 %v1906, 1
      %v2020 = vpop.permute.xlu0 %2019
      %2021 = vrot.lane.b32.xlu0 %v1910, 1
      %v2022 = vpop.permute.xlu0 %2021
      %2023 = vrot.lane.b32.xlu0 %v1914, 1
      %v2024 = vpop.permute.xlu0 %2023
      %2025 = vrot.lane.b32.xlu0 %v1918, 1
      %v2026 = vpop.permute.xlu0 %2025
      %2027 = vrot.lane.b32.xlu0 %v1922, 1
      %v2028 = vpop.permute.xlu0 %2027
      %2029 = vrot.lane.b32.xlu0 %v1926, 1
      %v2030 = vpop.permute.xlu0 %2029
      %2031 = vrot.lane.b32.xlu0 %v1930, 1
      %v2032 = vpop.permute.xlu0 %2031
      %2033 = vrot.lane.b32.xlu0 %v1934, 1
      %v2034 = vpop.permute.xlu0 %2033
      %2035 = vrot.lane.b32.xlu0 %v1875, 1
      %v2036 = vpop.permute.xlu0 %2035
      %2037 = vrot.lane.b32.xlu0 %v1879, 1
      %v2038 = vpop.permute.xlu0 %2037
      %2039 = vrot.lane.b32.xlu0 %v1883, 1
      %v2040 = vpop.permute.xlu0 %2039
      %2041 = vrot.lane.b32.xlu0 %v1887, 1
      %v2042 = vpop.permute.xlu0 %2041
      %2043 = vrot.lane.b32.xlu0 %v1891, 1
      %v2044 = vpop.permute.xlu0 %2043
      %2045 = vrot.lane.b32.xlu0 %v1895, 1
      %v2046 = vpop.permute.xlu0 %2045
      %2047 = vrot.lane.b32.xlu0 %v1899, 1
      %v2048 = vpop.permute.xlu0 %2047
      %2049 = vrot.lane.b32.xlu0 %v1903, 1
      %v2050 = vpop.permute.xlu0 %2049
      %2051 = vrot.lane.b32.xlu0 %v1907, 1
      %v2052 = vpop.permute.xlu0 %2051
      %2053 = vrot.lane.b32.xlu0 %v1911, 1
      %v2054 = vpop.permute.xlu0 %2053
      %2055 = vrot.lane.b32.xlu0 %v1915, 1
      %v2056 = vpop.permute.xlu0 %2055
      %2057 = vrot.lane.b32.xlu0 %v1919, 1
      %v2058 = vpop.permute.xlu0 %2057
      %2059 = vrot.lane.b32.xlu0 %v1923, 1
      %v2060 = vpop.permute.xlu0 %2059
      %2061 = vrot.lane.b32.xlu0 %v1927, 1
      %v2062 = vpop.permute.xlu0 %2061
      %2063 = vrot.lane.b32.xlu0 %v1931, 1
      %v2064 = vpop.permute.xlu0 %2063
      %2065 = vrot.lane.b32.xlu0 %v1935, 1
      %v2066 = vpop.permute.xlu0 %2065
      %2067 = vrot.lane.b32.xlu0 %v1876, 1
      %v2068 = vpop.permute.xlu0 %2067
      %2069 = vrot.lane.b32.xlu0 %v1880, 1
      %v2070 = vpop.permute.xlu0 %2069
      %2071 = vrot.lane.b32.xlu0 %v1884, 1
      %v2072 = vpop.permute.xlu0 %2071
      %2073 = vrot.lane.b32.xlu0 %v1888, 1
      %v2074 = vpop.permute.xlu0 %2073
      %2075 = vrot.lane.b32.xlu0 %v1892, 1
      %v2076 = vpop.permute.xlu0 %2075
      %2077 = vrot.lane.b32.xlu0 %v1896, 1
      %v2078 = vpop.permute.xlu0 %2077
      %2079 = vrot.lane.b32.xlu0 %v1900, 1
      %v2080 = vpop.permute.xlu0 %2079
      %2081 = vrot.lane.b32.xlu0 %v1904, 1
      %v2082 = vpop.permute.xlu0 %2081
      %2083 = vrot.lane.b32.xlu0 %v1908, 1
      %v2084 = vpop.permute.xlu0 %2083
      %2085 = vrot.lane.b32.xlu0 %v1912, 1
      %v2086 = vpop.permute.xlu0 %2085
      %2087 = vrot.lane.b32.xlu0 %v1916, 1
      %v2088 = vpop.permute.xlu0 %2087
      %2089 = vrot.lane.b32.xlu0 %v1920, 1
      %v2090 = vpop.permute.xlu0 %2089
      %2091 = vrot.lane.b32.xlu0 %v1924, 1
      %v2092 = vpop.permute.xlu0 %2091
      %2093 = vrot.lane.b32.xlu0 %v1928, 1
      %v2094 = vpop.permute.xlu0 %2093
      %2095 = vrot.lane.b32.xlu0 %v1932, 1
      %v2096 = vpop.permute.xlu0 %2095
      %2097 = vrot.lane.b32.xlu0 %v1936, 1
      %v2098 = vpop.permute.xlu0 %2097
      %2099 = vrot.lane.b32.xlu0 %v1877, 1
      %v2100 = vpop.permute.xlu0 %2099
      %2101 = vrot.lane.b32.xlu0 %v1881, 1
      %v2102 = vpop.permute.xlu0 %2101
      %2103 = vrot.lane.b32.xlu0 %v1885, 1
      %v2104 = vpop.permute.xlu0 %2103
      %2105 = vrot.lane.b32.xlu0 %v1889, 1
      %v2106 = vpop.permute.xlu0 %2105
      %2107 = vrot.lane.b32.xlu0 %v1893, 1
      %v2108 = vpop.permute.xlu0 %2107
      %2109 = vrot.lane.b32.xlu0 %v1897, 1
      %v2110 = vpop.permute.xlu0 %2109
      %2111 = vrot.lane.b32.xlu0 %v1901, 1
      %v2112 = vpop.permute.xlu0 %2111
      %2113 = vrot.lane.b32.xlu0 %v1905, 1
      %v2114 = vpop.permute.xlu0 %2113
      %2115 = vrot.lane.b32.xlu0 %v1909, 1
      %v2116 = vpop.permute.xlu0 %2115
      %2117 = vrot.lane.b32.xlu0 %v1913, 1
      %v2118 = vpop.permute.xlu0 %2117
      %2119 = vrot.lane.b32.xlu0 %v1917, 1
      %v2120 = vpop.permute.xlu0 %2119
      %2121 = vrot.lane.b32.xlu0 %v1921, 1
      %v2122 = vpop.permute.xlu0 %2121
      %2123 = vrot.lane.b32.xlu0 %v1925, 1
      %v2124 = vpop.permute.xlu0 %2123
      %2125 = vrot.lane.b32.xlu0 %v1929, 1
      %v2126 = vpop.permute.xlu0 %2125
      %2127 = vrot.lane.b32.xlu0 %v1933, 1
      %v2128 = vpop.permute.xlu0 %2127
      %2129 = vrot.lane.b32.xlu0 %v1937, 1
      %v2130 = vpop.permute.xlu0 %2129
      %v2131 = vsel %vm444, %v2068, %v2100
      %v2132 = vsel %vm444, %v2070, %v2102
      %v2133 = vsel %vm444, %v2072, %v2104
      %v2134 = vsel %vm444, %v2074, %v2106
      %v2135 = vsel %vm444, %v2076, %v2108
      %v2136 = vsel %vm444, %v2078, %v2110
      %v2137 = vsel %vm444, %v2080, %v2112
      %v2138 = vsel %vm444, %v2082, %v2114
      %v2139 = vsel %vm444, %v2084, %v2116
      %v2140 = vsel %vm444, %v2086, %v2118
      %v2141 = vsel %vm444, %v2088, %v2120
      %v2142 = vsel %vm444, %v2090, %v2122
      %v2143 = vsel %vm444, %v2092, %v2124
      %v2144 = vsel %vm444, %v2094, %v2126
      %v2145 = vsel %vm444, %v2096, %v2128
      %v2146 = vsel %vm444, %v2098, %v2130
      %v2147 = vsel %vm444, %v2036, %v2068
      %v2148 = vsel %vm444, %v2038, %v2070
      %v2149 = vsel %vm444, %v2040, %v2072
      %v2150 = vsel %vm444, %v2042, %v2074
      %v2151 = vsel %vm444, %v2044, %v2076
      %v2152 = vsel %vm444, %v2046, %v2078
      %v2153 = vsel %vm444, %v2048, %v2080
      %v2154 = vsel %vm444, %v2050, %v2082
      %v2155 = vsel %vm444, %v2052, %v2084
      %v2156 = vsel %vm444, %v2054, %v2086
      %v2157 = vsel %vm444, %v2056, %v2088
      %v2158 = vsel %vm444, %v2058, %v2090
      %v2159 = vsel %vm444, %v2060, %v2092
      %v2160 = vsel %vm444, %v2062, %v2094
      %v2161 = vsel %vm444, %v2064, %v2096
      %v2162 = vsel %vm444, %v2066, %v2098
      %v2163 = vsel %vm444, %v2004, %v2036
      %v2164 = vsel %vm444, %v2006, %v2038
      %v2165 = vsel %vm444, %v2008, %v2040
      %v2166 = vsel %vm444, %v2010, %v2042
      %v2167 = vsel %vm444, %v2012, %v2044
      %v2168 = vsel %vm444, %v2014, %v2046
      %v2169 = vsel %vm444, %v2016, %v2048
      %v2170 = vsel %vm444, %v2018, %v2050
      %v2171 = vsel %vm444, %v2020, %v2052
      %v2172 = vsel %vm444, %v2022, %v2054
      %v2173 = vsel %vm444, %v2024, %v2056
      %v2174 = vsel %vm444, %v2026, %v2058
      %v2175 = vsel %vm444, %v2028, %v2060
      %v2176 = vsel %vm444, %v2030, %v2062
      %v2177 = vsel %vm444, %v2032, %v2064
      %v2178 = vsel %vm444, %v2034, %v2066
      %v2179 = vsel %vm444, %v2100, %v2004
      %v2180 = vsel %vm444, %v2102, %v2006
      %v2181 = vsel %vm444, %v2104, %v2008
      %v2182 = vsel %vm444, %v2106, %v2010
      %v2183 = vsel %vm444, %v2108, %v2012
      %v2184 = vsel %vm444, %v2110, %v2014
      %v2185 = vsel %vm444, %v2112, %v2016
      %v2186 = vsel %vm444, %v2114, %v2018
      %v2187 = vsel %vm444, %v2116, %v2020
      %v2188 = vsel %vm444, %v2118, %v2022
      %v2189 = vsel %vm444, %v2120, %v2024
      %v2190 = vsel %vm444, %v2122, %v2026
      %v2191 = vsel %vm444, %v2124, %v2028
      %v2192 = vsel %vm444, %v2126, %v2030
      %v2193 = vsel %vm444, %v2128, %v2032
      %v2194 = vsel %vm444, %v2130, %v2034
      %2195 = vst [vmem:[#allocation2] sm:$0xff] %v2179
      %2196 = vst [vmem:[#allocation2 + $0x8] sm:$0xff] %v2163
      %2197 = vst [vmem:[#allocation2 + $0x10] sm:$0xff] %v2147
      %2198 = vst [vmem:[#allocation2 + $0x18] sm:$0xff] %v2131
      %2199 = vst [vmem:[#allocation2 + $0x20] sm:$0xff] %v2180
      %2200 = vst [vmem:[#allocation2 + $0x28] sm:$0xff] %v2164
      %2201 = vst [vmem:[#allocation2 + $0x30] sm:$0xff] %v2148
      %2202 = vst [vmem:[#allocation2 + $0x38] sm:$0xff] %v2132
      %2203 = vst [vmem:[#allocation2 + $0x40] sm:$0xff] %v2181
      %2204 = vst [vmem:[#allocation2 + $0x48] sm:$0xff] %v2165
      %2205 = vst [vmem:[#allocation2 + $0x50] sm:$0xff] %v2149
      %2206 = vst [vmem:[#allocation2 + $0x58] sm:$0xff] %v2133
      %2207 = vst [vmem:[#allocation2 + $0x60] sm:$0xff] %v2182
      %2208 = vst [vmem:[#allocation2 + $0x68] sm:$0xff] %v2166
      %2209 = vst [vmem:[#allocation2 + $0x70] sm:$0xff] %v2150
      %2210 = vst [vmem:[#allocation2 + $0x78] sm:$0xff] %v2134
      %2211 = vst [vmem:[#allocation2 + $0x80] sm:$0xff] %v2183
      %2212 = vst [vmem:[#allocation2 + $0x88] sm:$0xff] %v2167
      %2213 = vst [vmem:[#allocation2 + $0x90] sm:$0xff] %v2151
      %2214 = vst [vmem:[#allocation2 + $0x98] sm:$0xff] %v2135
      %2215 = vst [vmem:[#allocation2 + $0xa0] sm:$0xff] %v2184
      %2216 = vst [vmem:[#allocation2 + $0xa8] sm:$0xff] %v2168
      %2217 = vst [vmem:[#allocation2 + $0xb0] sm:$0xff] %v2152
      %2218 = vst [vmem:[#allocation2 + $0xb8] sm:$0xff] %v2136
      %2219 = vst [vmem:[#allocation2 + $0xc0] sm:$0xff] %v2185
      %2220 = vst [vmem:[#allocation2 + $0xc8] sm:$0xff] %v2169
      %2221 = vst [vmem:[#allocation2 + $0xd0] sm:$0xff] %v2153
      %2222 = vst [vmem:[#allocation2 + $0xd8] sm:$0xff] %v2137
      %2223 = vst [vmem:[#allocation2 + $0xe0] sm:$0xff] %v2186
      %2224 = vst [vmem:[#allocation2 + $0xe8] sm:$0xff] %v2170
      %2225 = vst [vmem:[#allocation2 + $0xf0] sm:$0xff] %v2154
      %2226 = vst [vmem:[#allocation2 + $0xf8] sm:$0xff] %v2138
      %2227 = vst [vmem:[#allocation2 + $0x100] sm:$0xff] %v2187
      %2228 = vst [vmem:[#allocation2 + $0x108] sm:$0xff] %v2171
      %2229 = vst [vmem:[#allocation2 + $0x110] sm:$0xff] %v2155
      %2230 = vst [vmem:[#allocation2 + $0x118] sm:$0xff] %v2139
      %2231 = vst [vmem:[#allocation2 + $0x120] sm:$0xff] %v2188
      %2232 = vst [vmem:[#allocation2 + $0x128] sm:$0xff] %v2172
      %2233 = vst [vmem:[#allocation2 + $0x130] sm:$0xff] %v2156
      %2234 = vst [vmem:[#allocation2 + $0x138] sm:$0xff] %v2140
      %2235 = vst [vmem:[#allocation2 + $0x140] sm:$0xff] %v2189
      %2236 = vst [vmem:[#allocation2 + $0x148] sm:$0xff] %v2173
      %2237 = vst [vmem:[#allocation2 + $0x150] sm:$0xff] %v2157
      %2238 = vst [vmem:[#allocation2 + $0x158] sm:$0xff] %v2141
      %2239 = vst [vmem:[#allocation2 + $0x160] sm:$0xff] %v2190
      %2240 = vst [vmem:[#allocation2 + $0x168] sm:$0xff] %v2174
      %2241 = vst [vmem:[#allocation2 + $0x170] sm:$0xff] %v2158
      %2242 = vst [vmem:[#allocation2 + $0x178] sm:$0xff] %v2142
      %2243 = vst [vmem:[#allocation2 + $0x180] sm:$0xff] %v2191
      %2244 = vst [vmem:[#allocation2 + $0x188] sm:$0xff] %v2175
      %2245 = vst [vmem:[#allocation2 + $0x190] sm:$0xff] %v2159
      %2246 = vst [vmem:[#allocation2 + $0x198] sm:$0xff] %v2143
      %2247 = vst [vmem:[#allocation2 + $0x1a0] sm:$0xff] %v2192
      %2248 = vst [vmem:[#allocation2 + $0x1a8] sm:$0xff] %v2176
      %2249 = vst [vmem:[#allocation2 + $0x1b0] sm:$0xff] %v2160
      %2250 = vst [vmem:[#allocation2 + $0x1b8] sm:$0xff] %v2144
      %2251 = vst [vmem:[#allocation2 + $0x1c0] sm:$0xff] %v2193
      %2252 = vst [vmem:[#allocation2 + $0x1c8] sm:$0xff] %v2177
      %2253 = vst [vmem:[#allocation2 + $0x1d0] sm:$0xff] %v2161
      %2254 = vst [vmem:[#allocation2 + $0x1d8] sm:$0xff] %v2145
      %2255 = vst [vmem:[#allocation2 + $0x1e0] sm:$0xff] %v2194
      %2256 = vst [vmem:[#allocation2 + $0x1e8] sm:$0xff] %v2178
      %2257 = vst [vmem:[#allocation2 + $0x1f0] sm:$0xff] %v2162
      %2258 = vst [vmem:[#allocation2 + $0x1f8] sm:$0xff] %v2146
      %2259 = vst [vmem:[#allocation2 + $0x200] sm:$0xff] %v1874
      %2260 = vst [vmem:[#allocation2 + $0x208] sm:$0xff] %v1875
      %2261 = vst [vmem:[#allocation2 + $0x210] sm:$0xff] %v1876
      %2262 = vst [vmem:[#allocation2 + $0x218] sm:$0xff] %v1877
      %2263 = vst [vmem:[#allocation2 + $0x220] sm:$0xff] %v1878
      %2264 = vst [vmem:[#allocation2 + $0x228] sm:$0xff] %v1879
      %2265 = vst [vmem:[#allocation2 + $0x230] sm:$0xff] %v1880
      %2266 = vst [vmem:[#allocation2 + $0x238] sm:$0xff] %v1881
      %2267 = vst [vmem:[#allocation2 + $0x240] sm:$0xff] %v1882
      %2268 = vst [vmem:[#allocation2 + $0x248] sm:$0xff] %v1883
      %2269 = vst [vmem:[#allocation2 + $0x250] sm:$0xff] %v1884
      %2270 = vst [vmem:[#allocation2 + $0x258] sm:$0xff] %v1885
      %2271 = vst [vmem:[#allocation2 + $0x260] sm:$0xff] %v1886
      %2272 = vst [vmem:[#allocation2 + $0x268] sm:$0xff] %v1887
      %2273 = vst [vmem:[#allocation2 + $0x270] sm:$0xff] %v1888
      %2274 = vst [vmem:[#allocation2 + $0x278] sm:$0xff] %v1889
      %2275 = vst [vmem:[#allocation2 + $0x280] sm:$0xff] %v1890
      %2276 = vst [vmem:[#allocation2 + $0x288] sm:$0xff] %v1891
      %2277 = vst [vmem:[#allocation2 + $0x290] sm:$0xff] %v1892
      %2278 = vst [vmem:[#allocation2 + $0x298] sm:$0xff] %v1893
      %2279 = vst [vmem:[#allocation2 + $0x2a0] sm:$0xff] %v1894
      %2280 = vst [vmem:[#allocation2 + $0x2a8] sm:$0xff] %v1895
      %2281 = vst [vmem:[#allocation2 + $0x2b0] sm:$0xff] %v1896
      %2282 = vst [vmem:[#allocation2 + $0x2b8] sm:$0xff] %v1897
      %2283 = vst [vmem:[#allocation2 + $0x2c0] sm:$0xff] %v1898
      %2284 = vst [vmem:[#allocation2 + $0x2c8] sm:$0xff] %v1899
      %2285 = vst [vmem:[#allocation2 + $0x2d0] sm:$0xff] %v1900
      %2286 = vst [vmem:[#allocation2 + $0x2d8] sm:$0xff] %v1901
      %2287 = vst [vmem:[#allocation2 + $0x2e0] sm:$0xff] %v1902
      %2288 = vst [vmem:[#allocation2 + $0x2e8] sm:$0xff] %v1903
      %2289 = vst [vmem:[#allocation2 + $0x2f0] sm:$0xff] %v1904
      %2290 = vst [vmem:[#allocation2 + $0x2f8] sm:$0xff] %v1905
      %2291 = vst [vmem:[#allocation2 + $0x300] sm:$0xff] %v1906
      %2292 = vst [vmem:[#allocation2 + $0x308] sm:$0xff] %v1907
      %2293 = vst [vmem:[#allocation2 + $0x310] sm:$0xff] %v1908
      %2294 = vst [vmem:[#allocation2 + $0x318] sm:$0xff] %v1909
      %2295 = vst [vmem:[#allocation2 + $0x320] sm:$0xff] %v1910
      %2296 = vst [vmem:[#allocation2 + $0x328] sm:$0xff] %v1911
      %2297 = vst [vmem:[#allocation2 + $0x330] sm:$0xff] %v1912
      %2298 = vst [vmem:[#allocation2 + $0x338] sm:$0xff] %v1913
      %2299 = vst [vmem:[#allocation2 + $0x340] sm:$0xff] %v1914
      %2300 = vst [vmem:[#allocation2 + $0x348] sm:$0xff] %v1915
      %2301 = vst [vmem:[#allocation2 + $0x350] sm:$0xff] %v1916
      %2302 = vst [vmem:[#allocation2 + $0x358] sm:$0xff] %v1917
      %2303 = vst [vmem:[#allocation2 + $0x360] sm:$0xff] %v1918
      %2304 = vst [vmem:[#allocation2 + $0x368] sm:$0xff] %v1919
      %2305 = vst [vmem:[#allocation2 + $0x370] sm:$0xff] %v1920
      %2306 = vst [vmem:[#allocation2 + $0x378] sm:$0xff] %v1921
      %2307 = vst [vmem:[#allocation2 + $0x380] sm:$0xff] %v1922
      %2308 = vst [vmem:[#allocation2 + $0x388] sm:$0xff] %v1923
      %2309 = vst [vmem:[#allocation2 + $0x390] sm:$0xff] %v1924
      %2310 = vst [vmem:[#allocation2 + $0x398] sm:$0xff] %v1925
      %2311 = vst [vmem:[#allocation2 + $0x3a0] sm:$0xff] %v1926
      %2312 = vst [vmem:[#allocation2 + $0x3a8] sm:$0xff] %v1927
      %2313 = vst [vmem:[#allocation2 + $0x3b0] sm:$0xff] %v1928
      %2314 = vst [vmem:[#allocation2 + $0x3b8] sm:$0xff] %v1929
      %2315 = vst [vmem:[#allocation2 + $0x3c0] sm:$0xff] %v1930
      %2316 = vst [vmem:[#allocation2 + $0x3c8] sm:$0xff] %v1931
      %2317 = vst [vmem:[#allocation2 + $0x3d0] sm:$0xff] %v1932
      %2318 = vst [vmem:[#allocation2 + $0x3d8] sm:$0xff] %v1933
      %2319 = vst [vmem:[#allocation2 + $0x3e0] sm:$0xff] %v1934
      %2320 = vst [vmem:[#allocation2 + $0x3e8] sm:$0xff] %v1935
      %2321 = vst [vmem:[#allocation2 + $0x3f0] sm:$0xff] %v1936
      %2322 = vst [vmem:[#allocation2 + $0x3f8] sm:$0xff] %v1937
      %2323 = vrot.lane.b32.xlu0 %v1874, 127
      %v2324 = vpop.permute.xlu0 %2323
      %2325 = vrot.lane.b32.xlu0 %v1878, 127
      %v2326 = vpop.permute.xlu0 %2325
      %2327 = vrot.lane.b32.xlu0 %v1882, 127
      %v2328 = vpop.permute.xlu0 %2327
      %2329 = vrot.lane.b32.xlu0 %v1886, 127
      %v2330 = vpop.permute.xlu0 %2329
      %2331 = vrot.lane.b32.xlu0 %v1890, 127
      %v2332 = vpop.permute.xlu0 %2331
      %2333 = vrot.lane.b32.xlu0 %v1894, 127
      %v2334 = vpop.permute.xlu0 %2333
      %2335 = vrot.lane.b32.xlu0 %v1898, 127
      %v2336 = vpop.permute.xlu0 %2335
      %2337 = vrot.lane.b32.xlu0 %v1902, 127
      %v2338 = vpop.permute.xlu0 %2337
      %2339 = vrot.lane.b32.xlu0 %v1906, 127
      %v2340 = vpop.permute.xlu0 %2339
      %2341 = vrot.lane.b32.xlu0 %v1910, 127
      %v2342 = vpop.permute.xlu0 %2341
      %2343 = vrot.lane.b32.xlu0 %v1914, 127
      %v2344 = vpop.permute.xlu0 %2343
      %2345 = vrot.lane.b32.xlu0 %v1918, 127
      %v2346 = vpop.permute.xlu0 %2345
      %2347 = vrot.lane.b32.xlu0 %v1922, 127
      %v2348 = vpop.permute.xlu0 %2347
      %2349 = vrot.lane.b32.xlu0 %v1926, 127
      %v2350 = vpop.permute.xlu0 %2349
      %2351 = vrot.lane.b32.xlu0 %v1930, 127
      %v2352 = vpop.permute.xlu0 %2351
      %2353 = vrot.lane.b32.xlu0 %v1934, 127
      %v2354 = vpop.permute.xlu0 %2353
      %2355 = vrot.lane.b32.xlu0 %v1875, 127
      %v2356 = vpop.permute.xlu0 %2355
      %2357 = vrot.lane.b32.xlu0 %v1879, 127
      %v2358 = vpop.permute.xlu0 %2357
      %2359 = vrot.lane.b32.xlu0 %v1883, 127
      %v2360 = vpop.permute.xlu0 %2359
      %2361 = vrot.lane.b32.xlu0 %v1887, 127
      %v2362 = vpop.permute.xlu0 %2361
      %2363 = vrot.lane.b32.xlu0 %v1891, 127
      %v2364 = vpop.permute.xlu0 %2363
      %2365 = vrot.lane.b32.xlu0 %v1895, 127
      %v2366 = vpop.permute.xlu0 %2365
      %2367 = vrot.lane.b32.xlu0 %v1899, 127
      %v2368 = vpop.permute.xlu0 %2367
      %2369 = vrot.lane.b32.xlu0 %v1903, 127
      %v2370 = vpop.permute.xlu0 %2369
      %2371 = vrot.lane.b32.xlu0 %v1907, 127
      %v2372 = vpop.permute.xlu0 %2371
      %2373 = vrot.lane.b32.xlu0 %v1911, 127
      %v2374 = vpop.permute.xlu0 %2373
      %2375 = vrot.lane.b32.xlu0 %v1915, 127
      %v2376 = vpop.permute.xlu0 %2375
      %2377 = vrot.lane.b32.xlu0 %v1919, 127
      %v2378 = vpop.permute.xlu0 %2377
      %2379 = vrot.lane.b32.xlu0 %v1923, 127
      %v2380 = vpop.permute.xlu0 %2379
      %2381 = vrot.lane.b32.xlu0 %v1927, 127
      %v2382 = vpop.permute.xlu0 %2381
      %2383 = vrot.lane.b32.xlu0 %v1931, 127
      %v2384 = vpop.permute.xlu0 %2383
      %2385 = vrot.lane.b32.xlu0 %v1935, 127
      %v2386 = vpop.permute.xlu0 %2385
      %2387 = vrot.lane.b32.xlu0 %v1876, 127
      %v2388 = vpop.permute.xlu0 %2387
      %2389 = vrot.lane.b32.xlu0 %v1880, 127
      %v2390 = vpop.permute.xlu0 %2389
      %2391 = vrot.lane.b32.xlu0 %v1884, 127
      %v2392 = vpop.permute.xlu0 %2391
      %2393 = vrot.lane.b32.xlu0 %v1888, 127
      %v2394 = vpop.permute.xlu0 %2393
      %2395 = vrot.lane.b32.xlu0 %v1892, 127
      %v2396 = vpop.permute.xlu0 %2395
      %2397 = vrot.lane.b32.xlu0 %v1896, 127
      %v2398 = vpop.permute.xlu0 %2397
      %2399 = vrot.lane.b32.xlu0 %v1900, 127
      %v2400 = vpop.permute.xlu0 %2399
      %2401 = vrot.lane.b32.xlu0 %v1904, 127
      %v2402 = vpop.permute.xlu0 %2401
      %2403 = vrot.lane.b32.xlu0 %v1908, 127
      %v2404 = vpop.permute.xlu0 %2403
      %2405 = vrot.lane.b32.xlu0 %v1912, 127
      %v2406 = vpop.permute.xlu0 %2405
      %2407 = vrot.lane.b32.xlu0 %v1916, 127
      %v2408 = vpop.permute.xlu0 %2407
      %2409 = vrot.lane.b32.xlu0 %v1920, 127
      %v2410 = vpop.permute.xlu0 %2409
      %2411 = vrot.lane.b32.xlu0 %v1924, 127
      %v2412 = vpop.permute.xlu0 %2411
      %2413 = vrot.lane.b32.xlu0 %v1928, 127
      %v2414 = vpop.permute.xlu0 %2413
      %2415 = vrot.lane.b32.xlu0 %v1932, 127
      %v2416 = vpop.permute.xlu0 %2415
      %2417 = vrot.lane.b32.xlu0 %v1936, 127
      %v2418 = vpop.permute.xlu0 %2417
      %2419 = vrot.lane.b32.xlu0 %v1877, 127
      %v2420 = vpop.permute.xlu0 %2419
      %2421 = vrot.lane.b32.xlu0 %v1881, 127
      %v2422 = vpop.permute.xlu0 %2421
      %2423 = vrot.lane.b32.xlu0 %v1885, 127
      %v2424 = vpop.permute.xlu0 %2423
      %2425 = vrot.lane.b32.xlu0 %v1889, 127
      %v2426 = vpop.permute.xlu0 %2425
      %2427 = vrot.lane.b32.xlu0 %v1893, 127
      %v2428 = vpop.permute.xlu0 %2427
      %2429 = vrot.lane.b32.xlu0 %v1897, 127
      %v2430 = vpop.permute.xlu0 %2429
      %2431 = vrot.lane.b32.xlu0 %v1901, 127
      %v2432 = vpop.permute.xlu0 %2431
      %2433 = vrot.lane.b32.xlu0 %v1905, 127
      %v2434 = vpop.permute.xlu0 %2433
      %2435 = vrot.lane.b32.xlu0 %v1909, 127
      %v2436 = vpop.permute.xlu0 %2435
      %2437 = vrot.lane.b32.xlu0 %v1913, 127
      %v2438 = vpop.permute.xlu0 %2437
      %2439 = vrot.lane.b32.xlu0 %v1917, 127
      %v2440 = vpop.permute.xlu0 %2439
      %2441 = vrot.lane.b32.xlu0 %v1921, 127
      %v2442 = vpop.permute.xlu0 %2441
      %2443 = vrot.lane.b32.xlu0 %v1925, 127
      %v2444 = vpop.permute.xlu0 %2443
      %2445 = vrot.lane.b32.xlu0 %v1929, 127
      %v2446 = vpop.permute.xlu0 %2445
      %2447 = vrot.lane.b32.xlu0 %v1933, 127
      %v2448 = vpop.permute.xlu0 %2447
      %2449 = vrot.lane.b32.xlu0 %v1937, 127
      %v2450 = vpop.permute.xlu0 %2449
      %v2451 = vsel %vm765, %v2388, %v2420
      %v2452 = vsel %vm765, %v2390, %v2422
      %v2453 = vsel %vm765, %v2392, %v2424
      %v2454 = vsel %vm765, %v2394, %v2426
      %v2455 = vsel %vm765, %v2396, %v2428
      %v2456 = vsel %vm765, %v2398, %v2430
      %v2457 = vsel %vm765, %v2400, %v2432
      %v2458 = vsel %vm765, %v2402, %v2434
      %v2459 = vsel %vm765, %v2404, %v2436
      %v2460 = vsel %vm765, %v2406, %v2438
      %v2461 = vsel %vm765, %v2408, %v2440
      %v2462 = vsel %vm765, %v2410, %v2442
      %v2463 = vsel %vm765, %v2412, %v2444
      %v2464 = vsel %vm765, %v2414, %v2446
      %v2465 = vsel %vm765, %v2416, %v2448
      %v2466 = vsel %vm765, %v2418, %v2450
      %v2467 = vsel %vm765, %v2356, %v2388
      %v2468 = vsel %vm765, %v2358, %v2390
      %v2469 = vsel %vm765, %v2360, %v2392
      %v2470 = vsel %vm765, %v2362, %v2394
      %v2471 = vsel %vm765, %v2364, %v2396
      %v2472 = vsel %vm765, %v2366, %v2398
      %v2473 = vsel %vm765, %v2368, %v2400
      %v2474 = vsel %vm765, %v2370, %v2402
      %v2475 = vsel %vm765, %v2372, %v2404
      %v2476 = vsel %vm765, %v2374, %v2406
      %v2477 = vsel %vm765, %v2376, %v2408
      %v2478 = vsel %vm765, %v2378, %v2410
      %v2479 = vsel %vm765, %v2380, %v2412
      %v2480 = vsel %vm765, %v2382, %v2414
      %v2481 = vsel %vm765, %v2384, %v2416
      %v2482 = vsel %vm765, %v2386, %v2418
      %v2483 = vsel %vm765, %v2324, %v2356
      %v2484 = vsel %vm765, %v2326, %v2358
      %v2485 = vsel %vm765, %v2328, %v2360
      %v2486 = vsel %vm765, %v2330, %v2362
      %v2487 = vsel %vm765, %v2332, %v2364
      %v2488 = vsel %vm765, %v2334, %v2366
      %v2489 = vsel %vm765, %v2336, %v2368
      %v2490 = vsel %vm765, %v2338, %v2370
      %v2491 = vsel %vm765, %v2340, %v2372
      %v2492 = vsel %vm765, %v2342, %v2374
      %v2493 = vsel %vm765, %v2344, %v2376
      %v2494 = vsel %vm765, %v2346, %v2378
      %v2495 = vsel %vm765, %v2348, %v2380
      %v2496 = vsel %vm765, %v2350, %v2382
      %v2497 = vsel %vm765, %v2352, %v2384
      %v2498 = vsel %vm765, %v2354, %v2386
      %v2499 = vsel %vm765, %v2420, %v2324
      %v2500 = vsel %vm765, %v2422, %v2326
      %v2501 = vsel %vm765, %v2424, %v2328
      %v2502 = vsel %vm765, %v2426, %v2330
      %v2503 = vsel %vm765, %v2428, %v2332
      %v2504 = vsel %vm765, %v2430, %v2334
      %v2505 = vsel %vm765, %v2432, %v2336
      %v2506 = vsel %vm765, %v2434, %v2338
      %v2507 = vsel %vm765, %v2436, %v2340
      %v2508 = vsel %vm765, %v2438, %v2342
      %v2509 = vsel %vm765, %v2440, %v2344
      %v2510 = vsel %vm765, %v2442, %v2346
      %v2511 = vsel %vm765, %v2444, %v2348
      %v2512 = vsel %vm765, %v2446, %v2350
      %v2513 = vsel %vm765, %v2448, %v2352
      %v2514 = vsel %vm765, %v2450, %v2354
      %2515 = vst [vmem:[#allocation2 + $0x400] sm:$0xff] %v2483
      %2516 = vst [vmem:[#allocation2 + $0x408] sm:$0xff] %v2467
      %2517 = vst [vmem:[#allocation2 + $0x410] sm:$0xff] %v2451
      %2518 = vst [vmem:[#allocation2 + $0x418] sm:$0xff] %v2499
      %2519 = vst [vmem:[#allocation2 + $0x420] sm:$0xff] %v2484
      %2520 = vst [vmem:[#allocation2 + $0x428] sm:$0xff] %v2468
      %2521 = vst [vmem:[#allocation2 + $0x430] sm:$0xff] %v2452
      %2522 = vst [vmem:[#allocation2 + $0x438] sm:$0xff] %v2500
      %2523 = vst [vmem:[#allocation2 + $0x440] sm:$0xff] %v2485
      %2524 = vst [vmem:[#allocation2 + $0x448] sm:$0xff] %v2469
      %2525 = vst [vmem:[#allocation2 + $0x450] sm:$0xff] %v2453
      %2526 = vst [vmem:[#allocation2 + $0x458] sm:$0xff] %v2501
      %2527 = vst [vmem:[#allocation2 + $0x460] sm:$0xff] %v2486
      %2528 = vst [vmem:[#allocation2 + $0x468] sm:$0xff] %v2470
      %2529 = vst [vmem:[#allocation2 + $0x470] sm:$0xff] %v2454
      %2530 = vst [vmem:[#allocation2 + $0x478] sm:$0xff] %v2502
      %2531 = vst [vmem:[#allocation2 + $0x480] sm:$0xff] %v2487
      %2532 = vst [vmem:[#allocation2 + $0x488] sm:$0xff] %v2471
      %2533 = vst [vmem:[#allocation2 + $0x490] sm:$0xff] %v2455
      %2534 = vst [vmem:[#allocation2 + $0x498] sm:$0xff] %v2503
      %2535 = vst [vmem:[#allocation2 + $0x4a0] sm:$0xff] %v2488
      %2536 = vst [vmem:[#allocation2 + $0x4a8] sm:$0xff] %v2472
      %2537 = vst [vmem:[#allocation2 + $0x4b0] sm:$0xff] %v2456
      %2538 = vst [vmem:[#allocation2 + $0x4b8] sm:$0xff] %v2504
      %2539 = vst [vmem:[#allocation2 + $0x4c0] sm:$0xff] %v2489
      %2540 = vst [vmem:[#allocation2 + $0x4c8] sm:$0xff] %v2473
      %2541 = vst [vmem:[#allocation2 + $0x4d0] sm:$0xff] %v2457
      %2542 = vst [vmem:[#allocation2 + $0x4d8] sm:$0xff] %v2505
      %2543 = vst [vmem:[#allocation2 + $0x4e0] sm:$0xff] %v2490
      %2544 = vst [vmem:[#allocation2 + $0x4e8] sm:$0xff] %v2474
      %2545 = vst [vmem:[#allocation2 + $0x4f0] sm:$0xff] %v2458
      %2546 = vst [vmem:[#allocation2 + $0x4f8] sm:$0xff] %v2506
      %2547 = vst [vmem:[#allocation2 + $0x500] sm:$0xff] %v2491
      %2548 = vst [vmem:[#allocation2 + $0x508] sm:$0xff] %v2475
      %2549 = vst [vmem:[#allocation2 + $0x510] sm:$0xff] %v2459
      %2550 = vst [vmem:[#allocation2 + $0x518] sm:$0xff] %v2507
      %2551 = vst [vmem:[#allocation2 + $0x520] sm:$0xff] %v2492
      %2552 = vst [vmem:[#allocation2 + $0x528] sm:$0xff] %v2476
      %2553 = vst [vmem:[#allocation2 + $0x530] sm:$0xff] %v2460
      %2554 = vst [vmem:[#allocation2 + $0x538] sm:$0xff] %v2508
      %2555 = vst [vmem:[#allocation2 + $0x540] sm:$0xff] %v2493
      %2556 = vst [vmem:[#allocation2 + $0x548] sm:$0xff] %v2477
      %2557 = vst [vmem:[#allocation2 + $0x550] sm:$0xff] %v2461
      %2558 = vst [vmem:[#allocation2 + $0x558] sm:$0xff] %v2509
      %2559 = vst [vmem:[#allocation2 + $0x560] sm:$0xff] %v2494
      %2560 = vst [vmem:[#allocation2 + $0x568] sm:$0xff] %v2478
      %2561 = vst [vmem:[#allocation2 + $0x570] sm:$0xff] %v2462
      %2562 = vst [vmem:[#allocation2 + $0x578] sm:$0xff] %v2510
      %2563 = vst [vmem:[#allocation2 + $0x580] sm:$0xff] %v2495
      %2564 = vst [vmem:[#allocation2 + $0x588] sm:$0xff] %v2479
      %2565 = vst [vmem:[#allocation2 + $0x590] sm:$0xff] %v2463
      %2566 = vst [vmem:[#allocation2 + $0x598] sm:$0xff] %v2511
      %2567 = vst [vmem:[#allocation2 + $0x5a0] sm:$0xff] %v2496
      %2568 = vst [vmem:[#allocation2 + $0x5a8] sm:$0xff] %v2480
      %2569 = vst [vmem:[#allocation2 + $0x5b0] sm:$0xff] %v2464
      %2570 = vst [vmem:[#allocation2 + $0x5b8] sm:$0xff] %v2512
      %2571 = vst [vmem:[#allocation2 + $0x5c0] sm:$0xff] %v2497
      %2572 = vst [vmem:[#allocation2 + $0x5c8] sm:$0xff] %v2481
      %2573 = vst [vmem:[#allocation2 + $0x5d0] sm:$0xff] %v2465
      %2574 = vst [vmem:[#allocation2 + $0x5d8] sm:$0xff] %v2513
      %2575 = vst [vmem:[#allocation2 + $0x5e0] sm:$0xff] %v2498
      %2576 = vst [vmem:[#allocation2 + $0x5e8] sm:$0xff] %v2482
      %2577 = vst [vmem:[#allocation2 + $0x5f0] sm:$0xff] %v2466
      %2578 = vst [vmem:[#allocation2 + $0x5f8] sm:$0xff] %v2514
      %v2579 = vld [vmem:[#allocation2] sm:$0xff]
      %v2580 = vld [vmem:[#allocation2 + $0x8] sm:$0xff]
      %v2581 = vld [vmem:[#allocation2 + $0x10] sm:$0xff]
      %v2582 = vld [vmem:[#allocation2 + $0x18] sm:$0xff]
      %v2583 = vld [vmem:[#allocation2 + $0x20] sm:$0xff]
      %v2584 = vld [vmem:[#allocation2 + $0x28] sm:$0xff]
      %v2585 = vld [vmem:[#allocation2 + $0x30] sm:$0xff]
      %v2586 = vld [vmem:[#allocation2 + $0x38] sm:$0xff]
      %v2587 = vld [vmem:[#allocation2 + $0x40] sm:$0xff]
      %v2588 = vld [vmem:[#allocation2 + $0x48] sm:$0xff]
      %v2589 = vld [vmem:[#allocation2 + $0x50] sm:$0xff]
      %v2590 = vld [vmem:[#allocation2 + $0x58] sm:$0xff]
      %v2591 = vld [vmem:[#allocation2 + $0x60] sm:$0xff]
      %v2592 = vld [vmem:[#allocation2 + $0x68] sm:$0xff]
      %v2593 = vld [vmem:[#allocation2 + $0x70] sm:$0xff]
      %v2594 = vld [vmem:[#allocation2 + $0x78] sm:$0xff]
      %v2595 = vld [vmem:[#allocation2 + $0x80] sm:$0xff]
      %v2596 = vld [vmem:[#allocation2 + $0x88] sm:$0xff]
      %v2597 = vld [vmem:[#allocation2 + $0x90] sm:$0xff]
      %v2598 = vld [vmem:[#allocation2 + $0x98] sm:$0xff]
      %v2599 = vld [vmem:[#allocation2 + $0xa0] sm:$0xff]
      %v2600 = vld [vmem:[#allocation2 + $0xa8] sm:$0xff]
      %v2601 = vld [vmem:[#allocation2 + $0xb0] sm:$0xff]
      %v2602 = vld [vmem:[#allocation2 + $0xb8] sm:$0xff]
      %v2603 = vld [vmem:[#allocation2 + $0xc0] sm:$0xff]
      %v2604 = vld [vmem:[#allocation2 + $0xc8] sm:$0xff]
      %v2605 = vld [vmem:[#allocation2 + $0xd0] sm:$0xff]
      %v2606 = vld [vmem:[#allocation2 + $0xd8] sm:$0xff]
      %v2607 = vld [vmem:[#allocation2 + $0xe0] sm:$0xff]
      %v2608 = vld [vmem:[#allocation2 + $0xe8] sm:$0xff]
      %v2609 = vld [vmem:[#allocation2 + $0xf0] sm:$0xff]
      %v2610 = vld [vmem:[#allocation2 + $0xf8] sm:$0xff]
      %v2611 = vld [vmem:[#allocation2 + $0x100] sm:$0xff]
      %v2612 = vld [vmem:[#allocation2 + $0x108] sm:$0xff]
      %v2613 = vld [vmem:[#allocation2 + $0x110] sm:$0xff]
      %v2614 = vld [vmem:[#allocation2 + $0x118] sm:$0xff]
      %v2615 = vld [vmem:[#allocation2 + $0x120] sm:$0xff]
      %v2616 = vld [vmem:[#allocation2 + $0x128] sm:$0xff]
      %v2617 = vld [vmem:[#allocation2 + $0x130] sm:$0xff]
      %v2618 = vld [vmem:[#allocation2 + $0x138] sm:$0xff]
      %v2619 = vld [vmem:[#allocation2 + $0x140] sm:$0xff]
      %v2620 = vld [vmem:[#allocation2 + $0x148] sm:$0xff]
      %v2621 = vld [vmem:[#allocation2 + $0x150] sm:$0xff]
      %v2622 = vld [vmem:[#allocation2 + $0x158] sm:$0xff]
      %v2623 = vld [vmem:[#allocation2 + $0x160] sm:$0xff]
      %v2624 = vld [vmem:[#allocation2 + $0x168] sm:$0xff]
      %v2625 = vld [vmem:[#allocation2 + $0x170] sm:$0xff]
      %v2626 = vld [vmem:[#allocation2 + $0x178] sm:$0xff]
      %v2627 = vld [vmem:[#allocation2 + $0x180] sm:$0xff]
      %v2628 = vld [vmem:[#allocation2 + $0x188] sm:$0xff]
      %v2629 = vld [vmem:[#allocation2 + $0x190] sm:$0xff]
      %v2630 = vld [vmem:[#allocation2 + $0x198] sm:$0xff]
      %v2631 = vld [vmem:[#allocation2 + $0x1a0] sm:$0xff]
      %v2632 = vld [vmem:[#allocation2 + $0x1a8] sm:$0xff]
      %v2633 = vld [vmem:[#allocation2 + $0x1b0] sm:$0xff]
      %v2634 = vld [vmem:[#allocation2 + $0x1b8] sm:$0xff]
      %v2635 = vld [vmem:[#allocation2 + $0x1c0] sm:$0xff]
      %v2636 = vld [vmem:[#allocation2 + $0x1c8] sm:$0xff]
      %v2637 = vld [vmem:[#allocation2 + $0x1d0] sm:$0xff]
      %v2638 = vld [vmem:[#allocation2 + $0x1d8] sm:$0xff]
      %v2639 = vld [vmem:[#allocation2 + $0x1e0] sm:$0xff]
      %v2640 = vld [vmem:[#allocation2 + $0x1e8] sm:$0xff]
      %v2641 = vld [vmem:[#allocation2 + $0x1f0] sm:$0xff]
      %v2642 = vld [vmem:[#allocation2 + $0x1f8] sm:$0xff]
      %v2643 = vld [vmem:[#allocation2 + $0x200] sm:$0xff]
      %v2644 = vld [vmem:[#allocation2 + $0x208] sm:$0xff]
      %v2645 = vld [vmem:[#allocation2 + $0x210] sm:$0xff]
      %v2646 = vld [vmem:[#allocation2 + $0x218] sm:$0xff]
      %v2647 = vld [vmem:[#allocation2 + $0x220] sm:$0xff]
      %v2648 = vld [vmem:[#allocation2 + $0x228] sm:$0xff]
      %v2649 = vld [vmem:[#allocation2 + $0x230] sm:$0xff]
      %v2650 = vld [vmem:[#allocation2 + $0x238] sm:$0xff]
      %v2651 = vld [vmem:[#allocation2 + $0x240] sm:$0xff]
      %v2652 = vld [vmem:[#allocation2 + $0x248] sm:$0xff]
      %v2653 = vld [vmem:[#allocation2 + $0x250] sm:$0xff]
      %v2654 = vld [vmem:[#allocation2 + $0x258] sm:$0xff]
      %v2655 = vld [vmem:[#allocation2 + $0x260] sm:$0xff]
      %v2656 = vld [vmem:[#allocation2 + $0x268] sm:$0xff]
      %v2657 = vld [vmem:[#allocation2 + $0x270] sm:$0xff]
      %v2658 = vld [vmem:[#allocation2 + $0x278] sm:$0xff]
      %v2659 = vld [vmem:[#allocation2 + $0x280] sm:$0xff]
      %v2660 = vld [vmem:[#allocation2 + $0x288] sm:$0xff]
      %v2661 = vld [vmem:[#allocation2 + $0x290] sm:$0xff]
      %v2662 = vld [vmem:[#allocation2 + $0x298] sm:$0xff]
      %v2663 = vld [vmem:[#allocation2 + $0x2a0] sm:$0xff]
      %v2664 = vld [vmem:[#allocation2 + $0x2a8] sm:$0xff]
      %v2665 = vld [vmem:[#allocation2 + $0x2b0] sm:$0xff]
      %v2666 = vld [vmem:[#allocation2 + $0x2b8] sm:$0xff]
      %v2667 = vld [vmem:[#allocation2 + $0x2c0] sm:$0xff]
      %v2668 = vld [vmem:[#allocation2 + $0x2c8] sm:$0xff]
      %v2669 = vld [vmem:[#allocation2 + $0x2d0] sm:$0xff]
      %v2670 = vld [vmem:[#allocation2 + $0x2d8] sm:$0xff]
      %v2671 = vld [vmem:[#allocation2 + $0x2e0] sm:$0xff]
      %v2672 = vld [vmem:[#allocation2 + $0x2e8] sm:$0xff]
      %v2673 = vld [vmem:[#allocation2 + $0x2f0] sm:$0xff]
      %v2674 = vld [vmem:[#allocation2 + $0x2f8] sm:$0xff]
      %v2675 = vld [vmem:[#allocation2 + $0x300] sm:$0xff]
      %v2676 = vld [vmem:[#allocation2 + $0x308] sm:$0xff]
      %v2677 = vld [vmem:[#allocation2 + $0x310] sm:$0xff]
      %v2678 = vld [vmem:[#allocation2 + $0x318] sm:$0xff]
      %v2679 = vld [vmem:[#allocation2 + $0x320] sm:$0xff]
      %v2680 = vld [vmem:[#allocation2 + $0x328] sm:$0xff]
      %v2681 = vld [vmem:[#allocation2 + $0x330] sm:$0xff]
      %v2682 = vld [vmem:[#allocation2 + $0x338] sm:$0xff]
      %v2683 = vld [vmem:[#allocation2 + $0x340] sm:$0xff]
      %v2684 = vld [vmem:[#allocation2 + $0x348] sm:$0xff]
      %v2685 = vld [vmem:[#allocation2 + $0x350] sm:$0xff]
      %v2686 = vld [vmem:[#allocation2 + $0x358] sm:$0xff]
      %v2687 = vld [vmem:[#allocation2 + $0x360] sm:$0xff]
      %v2688 = vld [vmem:[#allocation2 + $0x368] sm:$0xff]
      %v2689 = vld [vmem:[#allocation2 + $0x370] sm:$0xff]
      %v2690 = vld [vmem:[#allocation2 + $0x378] sm:$0xff]
      %v2691 = vld [vmem:[#allocation2 + $0x380] sm:$0xff]
      %v2692 = vld [vmem:[#allocation2 + $0x388] sm:$0xff]
      %v2693 = vld [vmem:[#allocation2 + $0x390] sm:$0xff]
      %v2694 = vld [vmem:[#allocation2 + $0x398] sm:$0xff]
      %v2695 = vld [vmem:[#allocation2 + $0x3a0] sm:$0xff]
      %v2696 = vld [vmem:[#allocation2 + $0x3a8] sm:$0xff]
      %v2697 = vld [vmem:[#allocation2 + $0x3b0] sm:$0xff]
      %v2698 = vld [vmem:[#allocation2 + $0x3b8] sm:$0xff]
      %v2699 = vld [vmem:[#allocation2 + $0x3c0] sm:$0xff]
      %v2700 = vld [vmem:[#allocation2 + $0x3c8] sm:$0xff]
      %v2701 = vld [vmem:[#allocation2 + $0x3d0] sm:$0xff]
      %v2702 = vld [vmem:[#allocation2 + $0x3d8] sm:$0xff]
      %v2703 = vld [vmem:[#allocation2 + $0x3e0] sm:$0xff]
      %v2704 = vld [vmem:[#allocation2 + $0x3e8] sm:$0xff]
      %v2705 = vld [vmem:[#allocation2 + $0x3f0] sm:$0xff]
      %v2706 = vld [vmem:[#allocation2 + $0x3f8] sm:$0xff]
      %v2707 = vld [vmem:[#allocation2 + $0x400] sm:$0xff]
      %v2708 = vld [vmem:[#allocation2 + $0x408] sm:$0xff]
      %v2709 = vld [vmem:[#allocation2 + $0x410] sm:$0xff]
      %v2710 = vld [vmem:[#allocation2 + $0x418] sm:$0xff]
      %v2711 = vld [vmem:[#allocation2 + $0x420] sm:$0xff]
      %v2712 = vld [vmem:[#allocation2 + $0x428] sm:$0xff]
      %v2713 = vld [vmem:[#allocation2 + $0x430] sm:$0xff]
      %v2714 = vld [vmem:[#allocation2 + $0x438] sm:$0xff]
      %v2715 = vld [vmem:[#allocation2 + $0x440] sm:$0xff]
      %v2716 = vld [vmem:[#allocation2 + $0x448] sm:$0xff]
      %v2717 = vld [vmem:[#allocation2 + $0x450] sm:$0xff]
      %v2718 = vld [vmem:[#allocation2 + $0x458] sm:$0xff]
      %v2719 = vld [vmem:[#allocation2 + $0x460] sm:$0xff]
      %v2720 = vld [vmem:[#allocation2 + $0x468] sm:$0xff]
      %v2721 = vld [vmem:[#allocation2 + $0x470] sm:$0xff]
      %v2722 = vld [vmem:[#allocation2 + $0x478] sm:$0xff]
      %v2723 = vld [vmem:[#allocation2 + $0x480] sm:$0xff]
      %v2724 = vld [vmem:[#allocation2 + $0x488] sm:$0xff]
      %v2725 = vld [vmem:[#allocation2 + $0x490] sm:$0xff]
      %v2726 = vld [vmem:[#allocation2 + $0x498] sm:$0xff]
      %v2727 = vld [vmem:[#allocation2 + $0x4a0] sm:$0xff]
      %v2728 = vld [vmem:[#allocation2 + $0x4a8] sm:$0xff]
      %v2729 = vld [vmem:[#allocation2 + $0x4b0] sm:$0xff]
      %v2730 = vld [vmem:[#allocation2 + $0x4b8] sm:$0xff]
      %v2731 = vld [vmem:[#allocation2 + $0x4c0] sm:$0xff]
      %v2732 = vld [vmem:[#allocation2 + $0x4c8] sm:$0xff]
      %v2733 = vld [vmem:[#allocation2 + $0x4d0] sm:$0xff]
      %v2734 = vld [vmem:[#allocation2 + $0x4d8] sm:$0xff]
      %v2735 = vld [vmem:[#allocation2 + $0x4e0] sm:$0xff]
      %v2736 = vld [vmem:[#allocation2 + $0x4e8] sm:$0xff]
      %v2737 = vld [vmem:[#allocation2 + $0x4f0] sm:$0xff]
      %v2738 = vld [vmem:[#allocation2 + $0x4f8] sm:$0xff]
      %v2739 = vld [vmem:[#allocation2 + $0x500] sm:$0xff]
      %v2740 = vld [vmem:[#allocation2 + $0x508] sm:$0xff]
      %v2741 = vld [vmem:[#allocation2 + $0x510] sm:$0xff]
      %v2742 = vld [vmem:[#allocation2 + $0x518] sm:$0xff]
      %v2743 = vld [vmem:[#allocation2 + $0x520] sm:$0xff]
      %v2744 = vld [vmem:[#allocation2 + $0x528] sm:$0xff]
      %v2745 = vld [vmem:[#allocation2 + $0x530] sm:$0xff]
      %v2746 = vld [vmem:[#allocation2 + $0x538] sm:$0xff]
      %v2747 = vld [vmem:[#allocation2 + $0x540] sm:$0xff]
      %v2748 = vld [vmem:[#allocation2 + $0x548] sm:$0xff]
      %v2749 = vld [vmem:[#allocation2 + $0x550] sm:$0xff]
      %v2750 = vld [vmem:[#allocation2 + $0x558] sm:$0xff]
      %v2751 = vld [vmem:[#allocation2 + $0x560] sm:$0xff]
      %v2752 = vld [vmem:[#allocation2 + $0x568] sm:$0xff]
      %v2753 = vld [vmem:[#allocation2 + $0x570] sm:$0xff]
      %v2754 = vld [vmem:[#allocation2 + $0x578] sm:$0xff]
      %v2755 = vld [vmem:[#allocation2 + $0x580] sm:$0xff]
      %v2756 = vld [vmem:[#allocation2 + $0x588] sm:$0xff]
      %v2757 = vld [vmem:[#allocation2 + $0x590] sm:$0xff]
      %v2758 = vld [vmem:[#allocation2 + $0x598] sm:$0xff]
      %v2759 = vld [vmem:[#allocation2 + $0x5a0] sm:$0xff]
      %v2760 = vld [vmem:[#allocation2 + $0x5a8] sm:$0xff]
      %v2761 = vld [vmem:[#allocation2 + $0x5b0] sm:$0xff]
      %v2762 = vld [vmem:[#allocation2 + $0x5b8] sm:$0xff]
      %v2763 = vld [vmem:[#allocation2 + $0x5c0] sm:$0xff]
      %v2764 = vld [vmem:[#allocation2 + $0x5c8] sm:$0xff]
      %v2765 = vld [vmem:[#allocation2 + $0x5d0] sm:$0xff]
      %v2766 = vld [vmem:[#allocation2 + $0x5d8] sm:$0xff]
      %v2767 = vld [vmem:[#allocation2 + $0x5e0] sm:$0xff]
      %v2768 = vld [vmem:[#allocation2 + $0x5e8] sm:$0xff]
      %v2769 = vld [vmem:[#allocation2 + $0x5f0] sm:$0xff]
      %v2770 = vld [vmem:[#allocation2 + $0x5f8] sm:$0xff]
      %2772 = vset.pattern.permute.xlu0 1
      %2773 = vperm.xlu0 %2772, %v1987
      %v2774 = vpop.permute.xlu0 %2773
      %2777 = vset.pattern.permute.xlu0 1
      %2778 = vperm.xlu0 %2777, %v1988
      %v2779 = vpop.permute.xlu0 %2778
      %2782 = vset.pattern.permute.xlu0 1
      %2783 = vperm.xlu0 %2782, %v1989
      %v2784 = vpop.permute.xlu0 %2783
      %2787 = vset.pattern.permute.xlu0 1
      %2788 = vperm.xlu0 %2787, %v1990
      %v2789 = vpop.permute.xlu0 %2788
      %2792 = vset.pattern.permute.xlu0 1
      %2793 = vperm.xlu0 %2792, %v1991
      %v2794 = vpop.permute.xlu0 %2793
      %2797 = vset.pattern.permute.xlu0 1
      %2798 = vperm.xlu0 %2797, %v1992
      %v2799 = vpop.permute.xlu0 %2798
      %2802 = vset.pattern.permute.xlu0 1
      %2803 = vperm.xlu0 %2802, %v1993
      %v2804 = vpop.permute.xlu0 %2803
      %2807 = vset.pattern.permute.xlu0 1
      %2808 = vperm.xlu0 %2807, %v1994
      %v2809 = vpop.permute.xlu0 %2808
      %2812 = vset.pattern.permute.xlu0 1
      %2813 = vperm.xlu0 %2812, %v1995
      %v2814 = vpop.permute.xlu0 %2813
      %2817 = vset.pattern.permute.xlu0 1
      %2818 = vperm.xlu0 %2817, %v1996
      %v2819 = vpop.permute.xlu0 %2818
      %2822 = vset.pattern.permute.xlu0 1
      %2823 = vperm.xlu0 %2822, %v1997
      %v2824 = vpop.permute.xlu0 %2823
      %2827 = vset.pattern.permute.xlu0 1
      %2828 = vperm.xlu0 %2827, %v1998
      %v2829 = vpop.permute.xlu0 %2828
      %2832 = vset.pattern.permute.xlu0 1
      %2833 = vperm.xlu0 %2832, %v1999
      %v2834 = vpop.permute.xlu0 %2833
      %2837 = vset.pattern.permute.xlu0 1
      %2838 = vperm.xlu0 %2837, %v2000
      %v2839 = vpop.permute.xlu0 %2838
      %2842 = vset.pattern.permute.xlu0 1
      %2843 = vperm.xlu0 %2842, %v2001
      %v2844 = vpop.permute.xlu0 %2843
      %2847 = vset.pattern.permute.xlu0 1
      %2848 = vperm.xlu0 %2847, %v2002
      %v2849 = vpop.permute.xlu0 %2848
      %2851 = vmatprep.subr.mxu0 %v2640
      %2852 = vmatpush1.msra.mxu0 %v2639
      %2853 = vmatprep.subr.mxu0 %v2636
      %2854 = vmatpush1.msra.mxu0 %v2635
      %2855 = vmatprep.subr.mxu0 %v2632
      %2856 = vmatpush1.msra.mxu0 %v2631
      %2857 = vmatprep.subr.mxu0 %v2628
      %2858 = vmatpush1.msra.mxu0 %v2627
      %2859 = vmatprep.subr.mxu0 %v2624
      %2860 = vmatpush1.msra.mxu0 %v2623
      %2861 = vmatprep.subr.mxu0 %v2620
      %2862 = vmatpush1.msra.mxu0 %v2619
      %2863 = vmatprep.subr.mxu0 %v2616
      %2864 = vmatpush1.msra.mxu0 %v2615
      %2865 = vmatprep.subr.mxu0 %v2612
      %2866 = vmatpush1.msra.mxu0 %v2611
      %2867 = vmatprep.subr.mxu0 %v2608
      %2868 = vmatpush1.msra.mxu0 %v2607
      %2869 = vmatprep.subr.mxu0 %v2604
      %2870 = vmatpush1.msra.mxu0 %v2603
      %2871 = vmatprep.subr.mxu0 %v2600
      %2872 = vmatpush1.msra.mxu0 %v2599
      %2873 = vmatprep.subr.mxu0 %v2596
      %2874 = vmatpush1.msra.mxu0 %v2595
      %2875 = vmatprep.subr.mxu0 %v2592
      %2876 = vmatpush1.msra.mxu0 %v2591
      %2877 = vmatprep.subr.mxu0 %v2588
      %2878 = vmatpush1.msra.mxu0 %v2587
      %2879 = vmatprep.subr.mxu0 %v2584
      %2880 = vmatpush1.msra.mxu0 %v2583
      %2881 = vmatprep.subr.mxu0 %v2580
      %2882 = vmatpush1.msra.mxu0 %v2579
      %2883 = vmatprep.subr.mxu0 %v2704
      %2884 = vmatpush2.msra.mxu0 %v2703
      %2885 = vmatprep.subr.mxu0 %v2700
      %2886 = vmatpush2.msra.mxu0 %v2699
      %2887 = vmatprep.subr.mxu0 %v2696
      %2888 = vmatpush2.msra.mxu0 %v2695
      %2889 = vmatprep.subr.mxu0 %v2692
      %2890 = vmatpush2.msra.mxu0 %v2691
      %2891 = vmatprep.subr.mxu0 %v2688
      %2892 = vmatpush2.msra.mxu0 %v2687
      %2893 = vmatprep.subr.mxu0 %v2684
      %2894 = vmatpush2.msra.mxu0 %v2683
      %2895 = vmatprep.subr.mxu0 %v2680
      %2896 = vmatpush2.msra.mxu0 %v2679
      %2897 = vmatprep.subr.mxu0 %v2676
      %2898 = vmatpush2.msra.mxu0 %v2675
      %2899 = vmatprep.subr.mxu0 %v2672
      %2900 = vmatpush2.msra.mxu0 %v2671
      %2901 = vmatprep.subr.mxu0 %v2668
      %2902 = vmatpush2.msra.mxu0 %v2667
      %2903 = vmatprep.subr.mxu0 %v2664
      %2904 = vmatpush2.msra.mxu0 %v2663
      %2905 = vmatprep.subr.mxu0 %v2660
      %2906 = vmatpush2.msra.mxu0 %v2659
      %2907 = vmatprep.subr.mxu0 %v2656
      %2908 = vmatpush2.msra.mxu0 %v2655
      %2909 = vmatprep.subr.mxu0 %v2652
      %2910 = vmatpush2.msra.mxu0 %v2651
      %2911 = vmatprep.subr.mxu0 %v2648
      %2912 = vmatpush2.msra.mxu0 %v2647
      %2913 = vmatprep.subr.mxu0 %v2644
      %2914 = vmatpush2.msra.mxu0 %v2643
      %2915 = vmatprep.mubr.f32.mxu0 %v1940
      %2916 = vmatmul.mubr.f32.gmra.mxu0 %v1939
      %v2917 = vpop.f32.mrf.mxu0
      %v2918 = vadd.f32 %v2774, %v2917
      %v2919 = vpop.f32.mrf.mxu0
      %v2920 = vadd.f32 %v2774, %v2919
      %2921 = vmatprep.mubr.f32.mxu0 %v1943
      %2922 = vmatmul.mubr.f32.gmra.mxu0 %v1942
      %v2923 = vpop.f32.mrf.mxu0
      %v2924 = vadd.f32 %v2779, %v2923
      %v2925 = vpop.f32.mrf.mxu0
      %v2926 = vadd.f32 %v2779, %v2925
      %2927 = vmatprep.mubr.f32.mxu0 %v1946
      %2928 = vmatmul.mubr.f32.gmra.mxu0 %v1945
      %v2929 = vpop.f32.mrf.mxu0
      %v2930 = vadd.f32 %v2784, %v2929
      %v2931 = vpop.f32.mrf.mxu0
      %v2932 = vadd.f32 %v2784, %v2931
      %2933 = vmatprep.mubr.f32.mxu0 %v1949
      %2934 = vmatmul.mubr.f32.gmra.mxu0 %v1948
      %v2935 = vpop.f32.mrf.mxu0
      %v2936 = vadd.f32 %v2789, %v2935
      %v2937 = vpop.f32.mrf.mxu0
      %v2938 = vadd.f32 %v2789, %v2937
      %2939 = vmatprep.mubr.f32.mxu0 %v1952
      %2940 = vmatmul.mubr.f32.gmra.mxu0 %v1951
      %v2941 = vpop.f32.mrf.mxu0
      %v2942 = vadd.f32 %v2794, %v2941
      %v2943 = vpop.f32.mrf.mxu0
      %v2944 = vadd.f32 %v2794, %v2943
      %2945 = vmatprep.mubr.f32.mxu0 %v1955
      %2946 = vmatmul.mubr.f32.gmra.mxu0 %v1954
      %v2947 = vpop.f32.mrf.mxu0
      %v2948 = vadd.f32 %v2799, %v2947
      %v2949 = vpop.f32.mrf.mxu0
      %v2950 = vadd.f32 %v2799, %v2949
      %2951 = vmatprep.mubr.f32.mxu0 %v1958
      %2952 = vmatmul.mubr.f32.gmra.mxu0 %v1957
      %v2953 = vpop.f32.mrf.mxu0
      %v2954 = vadd.f32 %v2804, %v2953
      %v2955 = vpop.f32.mrf.mxu0
      %v2956 = vadd.f32 %v2804, %v2955
      %2957 = vmatprep.mubr.f32.mxu0 %v1961
      %2958 = vmatmul.mubr.f32.gmra.mxu0 %v1960
      %v2959 = vpop.f32.mrf.mxu0
      %v2960 = vadd.f32 %v2809, %v2959
      %v2961 = vpop.f32.mrf.mxu0
      %v2962 = vadd.f32 %v2809, %v2961
      %2963 = vmatprep.mubr.f32.mxu0 %v1964
      %2964 = vmatmul.mubr.f32.gmra.mxu0 %v1963
      %v2965 = vpop.f32.mrf.mxu0
      %v2966 = vadd.f32 %v2814, %v2965
      %v2967 = vpop.f32.mrf.mxu0
      %v2968 = vadd.f32 %v2814, %v2967
      %2969 = vmatprep.mubr.f32.mxu0 %v1967
      %2970 = vmatmul.mubr.f32.gmra.mxu0 %v1966
      %v2971 = vpop.f32.mrf.mxu0
      %v2972 = vadd.f32 %v2819, %v2971
      %v2973 = vpop.f32.mrf.mxu0
      %v2974 = vadd.f32 %v2819, %v2973
      %2975 = vmatprep.mubr.f32.mxu0 %v1970
      %2976 = vmatmul.mubr.f32.gmra.mxu0 %v1969
      %v2977 = vpop.f32.mrf.mxu0
      %v2978 = vadd.f32 %v2824, %v2977
      %v2979 = vpop.f32.mrf.mxu0
      %v2980 = vadd.f32 %v2824, %v2979
      %2981 = vmatprep.mubr.f32.mxu0 %v1973
      %2982 = vmatmul.mubr.f32.gmra.mxu0 %v1972
      %v2983 = vpop.f32.mrf.mxu0
      %v2984 = vadd.f32 %v2829, %v2983
      %v2985 = vpop.f32.mrf.mxu0
      %v2986 = vadd.f32 %v2829, %v2985
      %2987 = vmatprep.mubr.f32.mxu0 %v1976
      %2988 = vmatmul.mubr.f32.gmra.mxu0 %v1975
      %v2989 = vpop.f32.mrf.mxu0
      %v2990 = vadd.f32 %v2834, %v2989
      %v2991 = vpop.f32.mrf.mxu0
      %v2992 = vadd.f32 %v2834, %v2991
      %2993 = vmatprep.mubr.f32.mxu0 %v1979
      %2994 = vmatmul.mubr.f32.gmra.mxu0 %v1978
      %v2995 = vpop.f32.mrf.mxu0
      %v2996 = vadd.f32 %v2839, %v2995
      %v2997 = vpop.f32.mrf.mxu0
      %v2998 = vadd.f32 %v2839, %v2997
      %2999 = vmatprep.mubr.f32.mxu0 %v1982
      %3000 = vmatmul.mubr.f32.gmra.mxu0 %v1981
      %v3001 = vpop.f32.mrf.mxu0
      %v3002 = vadd.f32 %v2844, %v3001
      %v3003 = vpop.f32.mrf.mxu0
      %v3004 = vadd.f32 %v2844, %v3003
      %3005 = vmatprep.mubr.f32.mxu0 %v1985
      %3006 = vmatmul.mubr.f32.gmra.mxu0 %v1984
      %v3007 = vpop.f32.mrf.mxu0
      %v3008 = vadd.f32 %v2849, %v3007
      %v3009 = vpop.f32.mrf.mxu0
      %v3010 = vadd.f32 %v2849, %v3009
      %3011 = vdwg.mxu0
      %3012 = vmatprep.subr.mxu0 %v2768
      %3013 = vmatpush1.msra.mxu0 %v2767
      %3014 = vmatprep.subr.mxu0 %v2764
      %3015 = vmatpush1.msra.mxu0 %v2763
      %3016 = vmatprep.subr.mxu0 %v2760
      %3017 = vmatpush1.msra.mxu0 %v2759
      %3018 = vmatprep.subr.mxu0 %v2756
      %3019 = vmatpush1.msra.mxu0 %v2755
      %3020 = vmatprep.subr.mxu0 %v2752
      %3021 = vmatpush1.msra.mxu0 %v2751
      %3022 = vmatprep.subr.mxu0 %v2748
      %3023 = vmatpush1.msra.mxu0 %v2747
      %3024 = vmatprep.subr.mxu0 %v2744
      %3025 = vmatpush1.msra.mxu0 %v2743
      %3026 = vmatprep.subr.mxu0 %v2740
      %3027 = vmatpush1.msra.mxu0 %v2739
      %3028 = vmatprep.subr.mxu0 %v2736
      %3029 = vmatpush1.msra.mxu0 %v2735
      %3030 = vmatprep.subr.mxu0 %v2732
      %3031 = vmatpush1.msra.mxu0 %v2731
      %3032 = vmatprep.subr.mxu0 %v2728
      %3033 = vmatpush1.msra.mxu0 %v2727
      %3034 = vmatprep.subr.mxu0 %v2724
      %3035 = vmatpush1.msra.mxu0 %v2723
      %3036 = vmatprep.subr.mxu0 %v2720
      %3037 = vmatpush1.msra.mxu0 %v2719
      %3038 = vmatprep.subr.mxu0 %v2716
      %3039 = vmatpush1.msra.mxu0 %v2715
      %3040 = vmatprep.subr.mxu0 %v2712
      %3041 = vmatpush1.msra.mxu0 %v2711
      %3042 = vmatprep.subr.mxu0 %v2708
      %3043 = vmatpush1.msra.mxu0 %v2707
      %3044 = vmatprep.subr.mxu0 0.0
      %3045 = vmatpush2.msra.mxu0 0.0
      %3046 = vmatprep.subr.mxu0 0.0
      %3047 = vmatpush2.msra.mxu0 0.0
      %3048 = vmatprep.subr.mxu0 0.0
      %3049 = vmatpush2.msra.mxu0 0.0
      %3050 = vmatprep.subr.mxu0 0.0
      %3051 = vmatpush2.msra.mxu0 0.0
      %3052 = vmatprep.subr.mxu0 0.0
      %3053 = vmatpush2.msra.mxu0 0.0
      %3054 = vmatprep.subr.mxu0 0.0
      %3055 = vmatpush2.msra.mxu0 0.0
      %3056 = vmatprep.subr.mxu0 0.0
      %3057 = vmatpush2.msra.mxu0 0.0
      %3058 = vmatprep.subr.mxu0 0.0
      %3059 = vmatpush2.msra.mxu0 0.0
      %3060 = vmatprep.subr.mxu0 0.0
      %3061 = vmatpush2.msra.mxu0 0.0
      %3062 = vmatprep.subr.mxu0 0.0
      %3063 = vmatpush2.msra.mxu0 0.0
      %3064 = vmatprep.subr.mxu0 0.0
      %3065 = vmatpush2.msra.mxu0 0.0
      %3066 = vmatprep.subr.mxu0 0.0
      %3067 = vmatpush2.msra.mxu0 0.0
      %3068 = vmatprep.subr.mxu0 0.0
      %3069 = vmatpush2.msra.mxu0 0.0
      %3070 = vmatprep.subr.mxu0 0.0
      %3071 = vmatpush2.msra.mxu0 0.0
      %3072 = vmatprep.subr.mxu0 0.0
      %3073 = vmatpush2.msra.mxu0 0.0
      %3074 = vmatprep.subr.mxu0 0.0
      %3075 = vmatpush2.msra.mxu0 0.0
      %3076 = vmatprep.mubr.f32.mxu0 0.0
      %3077 = vmatmul.mubr.f32.gmra.mxu0 %v1941
      %v3078 = vpop.f32.mrf.mxu0
      %v3079 = vadd.f32 %v2918, %v3078
      %v3080 = vpop.f32.mrf.mxu0
      %v3081 = vadd.f32 %v2920, %v3080
      %3082 = vmatprep.mubr.f32.mxu0 0.0
      %3083 = vmatmul.mubr.f32.gmra.mxu0 %v1944
      %v3084 = vpop.f32.mrf.mxu0
      %v3085 = vadd.f32 %v2924, %v3084
      %v3086 = vpop.f32.mrf.mxu0
      %v3087 = vadd.f32 %v2926, %v3086
      %3088 = vmatprep.mubr.f32.mxu0 0.0
      %3089 = vmatmul.mubr.f32.gmra.mxu0 %v1947
      %v3090 = vpop.f32.mrf.mxu0
      %v3091 = vadd.f32 %v2930, %v3090
      %v3092 = vpop.f32.mrf.mxu0
      %v3093 = vadd.f32 %v2932, %v3092
      %3094 = vmatprep.mubr.f32.mxu0 0.0
      %3095 = vmatmul.mubr.f32.gmra.mxu0 %v1950
      %v3096 = vpop.f32.mrf.mxu0
      %v3097 = vadd.f32 %v2936, %v3096
      %v3098 = vpop.f32.mrf.mxu0
      %v3099 = vadd.f32 %v2938, %v3098
      %3100 = vmatprep.mubr.f32.mxu0 0.0
      %3101 = vmatmul.mubr.f32.gmra.mxu0 %v1953
      %v3102 = vpop.f32.mrf.mxu0
      %v3103 = vadd.f32 %v2942, %v3102
      %v3104 = vpop.f32.mrf.mxu0
      %v3105 = vadd.f32 %v2944, %v3104
      %3106 = vmatprep.mubr.f32.mxu0 0.0
      %3107 = vmatmul.mubr.f32.gmra.mxu0 %v1956
      %v3108 = vpop.f32.mrf.mxu0
      %v3109 = vadd.f32 %v2948, %v3108
      %v3110 = vpop.f32.mrf.mxu0
      %v3111 = vadd.f32 %v2950, %v3110
      %3112 = vmatprep.mubr.f32.mxu0 0.0
      %3113 = vmatmul.mubr.f32.gmra.mxu0 %v1959
      %v3114 = vpop.f32.mrf.mxu0
      %v3115 = vadd.f32 %v2954, %v3114
      %v3116 = vpop.f32.mrf.mxu0
      %v3117 = vadd.f32 %v2956, %v3116
      %3118 = vmatprep.mubr.f32.mxu0 0.0
      %3119 = vmatmul.mubr.f32.gmra.mxu0 %v1962
      %v3120 = vpop.f32.mrf.mxu0
      %v3121 = vadd.f32 %v2960, %v3120
      %v3122 = vpop.f32.mrf.mxu0
      %v3123 = vadd.f32 %v2962, %v3122
      %3124 = vmatprep.mubr.f32.mxu0 0.0
      %3125 = vmatmul.mubr.f32.gmra.mxu0 %v1965
      %v3126 = vpop.f32.mrf.mxu0
      %v3127 = vadd.f32 %v2966, %v3126
      %v3128 = vpop.f32.mrf.mxu0
      %v3129 = vadd.f32 %v2968, %v3128
      %3130 = vmatprep.mubr.f32.mxu0 0.0
      %3131 = vmatmul.mubr.f32.gmra.mxu0 %v1968
      %v3132 = vpop.f32.mrf.mxu0
      %v3133 = vadd.f32 %v2972, %v3132
      %v3134 = vpop.f32.mrf.mxu0
      %v3135 = vadd.f32 %v2974, %v3134
      %3136 = vmatprep.mubr.f32.mxu0 0.0
      %3137 = vmatmul.mubr.f32.gmra.mxu0 %v1971
      %v3138 = vpop.f32.mrf.mxu0
      %v3139 = vadd.f32 %v2978, %v3138
      %v3140 = vpop.f32.mrf.mxu0
      %v3141 = vadd.f32 %v2980, %v3140
      %3142 = vmatprep.mubr.f32.mxu0 0.0
      %3143 = vmatmul.mubr.f32.gmra.mxu0 %v1974
      %v3144 = vpop.f32.mrf.mxu0
      %v3145 = vadd.f32 %v2984, %v3144
      %v3146 = vpop.f32.mrf.mxu0
      %v3147 = vadd.f32 %v2986, %v3146
      %3148 = vmatprep.mubr.f32.mxu0 0.0
      %3149 = vmatmul.mubr.f32.gmra.mxu0 %v1977
      %v3150 = vpop.f32.mrf.mxu0
      %v3151 = vadd.f32 %v2990, %v3150
      %v3152 = vpop.f32.mrf.mxu0
      %v3153 = vadd.f32 %v2992, %v3152
      %3154 = vmatprep.mubr.f32.mxu0 0.0
      %3155 = vmatmul.mubr.f32.gmra.mxu0 %v1980
      %v3156 = vpop.f32.mrf.mxu0
      %v3157 = vadd.f32 %v2996, %v3156
      %v3158 = vpop.f32.mrf.mxu0
      %v3159 = vadd.f32 %v2998, %v3158
      %3160 = vmatprep.mubr.f32.mxu0 0.0
      %3161 = vmatmul.mubr.f32.gmra.mxu0 %v1983
      %v3162 = vpop.f32.mrf.mxu0
      %v3163 = vadd.f32 %v3002, %v3162
      %v3164 = vpop.f32.mrf.mxu0
      %v3165 = vadd.f32 %v3004, %v3164
      %3166 = vmatprep.mubr.f32.mxu0 0.0
      %3167 = vmatmul.mubr.f32.gmra.mxu0 %v1986
      %v3168 = vpop.f32.mrf.mxu0
      %v3169 = vadd.f32 %v3008, %v3168
      %v3170 = vpop.f32.mrf.mxu0
      %v3171 = vadd.f32 %v3010, %v3170
      %3172 = vdwg.mxu0
      %3173 = vmatprep.subr.mxu0 %v2642
      %3174 = vmatpush1.msra.mxu0 %v2641
      %3175 = vmatprep.subr.mxu0 %v2638
      %3176 = vmatpush1.msra.mxu0 %v2637
      %3177 = vmatprep.subr.mxu0 %v2634
      %3178 = vmatpush1.msra.mxu0 %v2633
      %3179 = vmatprep.subr.mxu0 %v2630
      %3180 = vmatpush1.msra.mxu0 %v2629
      %3181 = vmatprep.subr.mxu0 %v2626
      %3182 = vmatpush1.msra.mxu0 %v2625
      %3183 = vmatprep.subr.mxu0 %v2622
      %3184 = vmatpush1.msra.mxu0 %v2621
      %3185 = vmatprep.subr.mxu0 %v2618
      %3186 = vmatpush1.msra.mxu0 %v2617
      %3187 = vmatprep.subr.mxu0 %v2614
      %3188 = vmatpush1.msra.mxu0 %v2613
      %3189 = vmatprep.subr.mxu0 %v2610
      %3190 = vmatpush1.msra.mxu0 %v2609
      %3191 = vmatprep.subr.mxu0 %v2606
      %3192 = vmatpush1.msra.mxu0 %v2605
      %3193 = vmatprep.subr.mxu0 %v2602
      %3194 = vmatpush1.msra.mxu0 %v2601
      %3195 = vmatprep.subr.mxu0 %v2598
      %3196 = vmatpush1.msra.mxu0 %v2597
      %3197 = vmatprep.subr.mxu0 %v2594
      %3198 = vmatpush1.msra.mxu0 %v2593
      %3199 = vmatprep.subr.mxu0 %v2590
      %3200 = vmatpush1.msra.mxu0 %v2589
      %3201 = vmatprep.subr.mxu0 %v2586
      %3202 = vmatpush1.msra.mxu0 %v2585
      %3203 = vmatprep.subr.mxu0 %v2582
      %3204 = vmatpush1.msra.mxu0 %v2581
      %3205 = vmatprep.subr.mxu0 %v2706
      %3206 = vmatpush2.msra.mxu0 %v2705
      %3207 = vmatprep.subr.mxu0 %v2702
      %3208 = vmatpush2.msra.mxu0 %v2701
      %3209 = vmatprep.subr.mxu0 %v2698
      %3210 = vmatpush2.msra.mxu0 %v2697
      %3211 = vmatprep.subr.mxu0 %v2694
      %3212 = vmatpush2.msra.mxu0 %v2693
      %3213 = vmatprep.subr.mxu0 %v2690
      %3214 = vmatpush2.msra.mxu0 %v2689
      %3215 = vmatprep.subr.mxu0 %v2686
      %3216 = vmatpush2.msra.mxu0 %v2685
      %3217 = vmatprep.subr.mxu0 %v2682
      %3218 = vmatpush2.msra.mxu0 %v2681
      %3219 = vmatprep.subr.mxu0 %v2678
      %3220 = vmatpush2.msra.mxu0 %v2677
      %3221 = vmatprep.subr.mxu0 %v2674
      %3222 = vmatpush2.msra.mxu0 %v2673
      %3223 = vmatprep.subr.mxu0 %v2670
      %3224 = vmatpush2.msra.mxu0 %v2669
      %3225 = vmatprep.subr.mxu0 %v2666
      %3226 = vmatpush2.msra.mxu0 %v2665
      %3227 = vmatprep.subr.mxu0 %v2662
      %3228 = vmatpush2.msra.mxu0 %v2661
      %3229 = vmatprep.subr.mxu0 %v2658
      %3230 = vmatpush2.msra.mxu0 %v2657
      %3231 = vmatprep.subr.mxu0 %v2654
      %3232 = vmatpush2.msra.mxu0 %v2653
      %3233 = vmatprep.subr.mxu0 %v2650
      %3234 = vmatpush2.msra.mxu0 %v2649
      %3235 = vmatprep.subr.mxu0 %v2646
      %3236 = vmatpush2.msra.mxu0 %v2645
      %3237 = vmatprep.mubr.f32.mxu0 %v1940
      %3238 = vmatmul.mubr.f32.gmra.mxu0 %v1939
      %v3239 = vpop.f32.mrf.mxu0
      %v3240 = vadd.f32 %v2774, %v3239
      %v3241 = vpop.f32.mrf.mxu0
      %v3242 = vadd.f32 %v2774, %v3241
      %3243 = vmatprep.mubr.f32.mxu0 %v1943
      %3244 = vmatmul.mubr.f32.gmra.mxu0 %v1942
      %v3245 = vpop.f32.mrf.mxu0
      %v3246 = vadd.f32 %v2779, %v3245
      %v3247 = vpop.f32.mrf.mxu0
      %v3248 = vadd.f32 %v2779, %v3247
      %3249 = vmatprep.mubr.f32.mxu0 %v1946
      %3250 = vmatmul.mubr.f32.gmra.mxu0 %v1945
      %v3251 = vpop.f32.mrf.mxu0
      %v3252 = vadd.f32 %v2784, %v3251
      %v3253 = vpop.f32.mrf.mxu0
      %v3254 = vadd.f32 %v2784, %v3253
      %3255 = vmatprep.mubr.f32.mxu0 %v1949
      %3256 = vmatmul.mubr.f32.gmra.mxu0 %v1948
      %v3257 = vpop.f32.mrf.mxu0
      %v3258 = vadd.f32 %v2789, %v3257
      %v3259 = vpop.f32.mrf.mxu0
      %v3260 = vadd.f32 %v2789, %v3259
      %3261 = vmatprep.mubr.f32.mxu0 %v1952
      %3262 = vmatmul.mubr.f32.gmra.mxu0 %v1951
      %v3263 = vpop.f32.mrf.mxu0
      %v3264 = vadd.f32 %v2794, %v3263
      %v3265 = vpop.f32.mrf.mxu0
      %v3266 = vadd.f32 %v2794, %v3265
      %3267 = vmatprep.mubr.f32.mxu0 %v1955
      %3268 = vmatmul.mubr.f32.gmra.mxu0 %v1954
      %v3269 = vpop.f32.mrf.mxu0
      %v3270 = vadd.f32 %v2799, %v3269
      %v3271 = vpop.f32.mrf.mxu0
      %v3272 = vadd.f32 %v2799, %v3271
      %3273 = vmatprep.mubr.f32.mxu0 %v1958
      %3274 = vmatmul.mubr.f32.gmra.mxu0 %v1957
      %v3275 = vpop.f32.mrf.mxu0
      %v3276 = vadd.f32 %v2804, %v3275
      %v3277 = vpop.f32.mrf.mxu0
      %v3278 = vadd.f32 %v2804, %v3277
      %3279 = vmatprep.mubr.f32.mxu0 %v1961
      %3280 = vmatmul.mubr.f32.gmra.mxu0 %v1960
      %v3281 = vpop.f32.mrf.mxu0
      %v3282 = vadd.f32 %v2809, %v3281
      %v3283 = vpop.f32.mrf.mxu0
      %v3284 = vadd.f32 %v2809, %v3283
      %3285 = vmatprep.mubr.f32.mxu0 %v1964
      %3286 = vmatmul.mubr.f32.gmra.mxu0 %v1963
      %v3287 = vpop.f32.mrf.mxu0
      %v3288 = vadd.f32 %v2814, %v3287
      %v3289 = vpop.f32.mrf.mxu0
      %v3290 = vadd.f32 %v2814, %v3289
      %3291 = vmatprep.mubr.f32.mxu0 %v1967
      %3292 = vmatmul.mubr.f32.gmra.mxu0 %v1966
      %v3293 = vpop.f32.mrf.mxu0
      %v3294 = vadd.f32 %v2819, %v3293
      %v3295 = vpop.f32.mrf.mxu0
      %v3296 = vadd.f32 %v2819, %v3295
      %3297 = vmatprep.mubr.f32.mxu0 %v1970
      %3298 = vmatmul.mubr.f32.gmra.mxu0 %v1969
      %v3299 = vpop.f32.mrf.mxu0
      %v3300 = vadd.f32 %v2824, %v3299
      %v3301 = vpop.f32.mrf.mxu0
      %v3302 = vadd.f32 %v2824, %v3301
      %3303 = vmatprep.mubr.f32.mxu0 %v1973
      %3304 = vmatmul.mubr.f32.gmra.mxu0 %v1972
      %v3305 = vpop.f32.mrf.mxu0
      %v3306 = vadd.f32 %v2829, %v3305
      %v3307 = vpop.f32.mrf.mxu0
      %v3308 = vadd.f32 %v2829, %v3307
      %3309 = vmatprep.mubr.f32.mxu0 %v1976
      %3310 = vmatmul.mubr.f32.gmra.mxu0 %v1975
      %v3311 = vpop.f32.mrf.mxu0
      %v3312 = vadd.f32 %v2834, %v3311
      %v3313 = vpop.f32.mrf.mxu0
      %v3314 = vadd.f32 %v2834, %v3313
      %3315 = vmatprep.mubr.f32.mxu0 %v1979
      %3316 = vmatmul.mubr.f32.gmra.mxu0 %v1978
      %v3317 = vpop.f32.mrf.mxu0
      %v3318 = vadd.f32 %v2839, %v3317
      %v3319 = vpop.f32.mrf.mxu0
      %v3320 = vadd.f32 %v2839, %v3319
      %3321 = vmatprep.mubr.f32.mxu0 %v1982
      %3322 = vmatmul.mubr.f32.gmra.mxu0 %v1981
      %v3323 = vpop.f32.mrf.mxu0
      %v3324 = vadd.f32 %v2844, %v3323
      %v3325 = vpop.f32.mrf.mxu0
      %v3326 = vadd.f32 %v2844, %v3325
      %3327 = vmatprep.mubr.f32.mxu0 %v1985
      %3328 = vmatmul.mubr.f32.gmra.mxu0 %v1984
      %v3329 = vpop.f32.mrf.mxu0
      %v3330 = vadd.f32 %v2849, %v3329
      %v3331 = vpop.f32.mrf.mxu0
      %v3332 = vadd.f32 %v2849, %v3331
      %3333 = vdwg.mxu0
      %3334 = vmatprep.subr.mxu0 %v2770
      %3335 = vmatpush1.msra.mxu0 %v2769
      %3336 = vmatprep.subr.mxu0 %v2766
      %3337 = vmatpush1.msra.mxu0 %v2765
      %3338 = vmatprep.subr.mxu0 %v2762
      %3339 = vmatpush1.msra.mxu0 %v2761
      %3340 = vmatprep.subr.mxu0 %v2758
      %3341 = vmatpush1.msra.mxu0 %v2757
      %3342 = vmatprep.subr.mxu0 %v2754
      %3343 = vmatpush1.msra.mxu0 %v2753
      %3344 = vmatprep.subr.mxu0 %v2750
      %3345 = vmatpush1.msra.mxu0 %v2749
      %3346 = vmatprep.subr.mxu0 %v2746
      %3347 = vmatpush1.msra.mxu0 %v2745
      %3348 = vmatprep.subr.mxu0 %v2742
      %3349 = vmatpush1.msra.mxu0 %v2741
      %3350 = vmatprep.subr.mxu0 %v2738
      %3351 = vmatpush1.msra.mxu0 %v2737
      %3352 = vmatprep.subr.mxu0 %v2734
      %3353 = vmatpush1.msra.mxu0 %v2733
      %3354 = vmatprep.subr.mxu0 %v2730
      %3355 = vmatpush1.msra.mxu0 %v2729
      %3356 = vmatprep.subr.mxu0 %v2726
      %3357 = vmatpush1.msra.mxu0 %v2725
      %3358 = vmatprep.subr.mxu0 %v2722
      %3359 = vmatpush1.msra.mxu0 %v2721
      %3360 = vmatprep.subr.mxu0 %v2718
      %3361 = vmatpush1.msra.mxu0 %v2717
      %3362 = vmatprep.subr.mxu0 %v2714
      %3363 = vmatpush1.msra.mxu0 %v2713
      %3364 = vmatprep.subr.mxu0 %v2710
      %3365 = vmatpush1.msra.mxu0 %v2709
      %3366 = vmatprep.subr.mxu0 0.0
      %3367 = vmatpush2.msra.mxu0 0.0
      %3368 = vmatprep.subr.mxu0 0.0
      %3369 = vmatpush2.msra.mxu0 0.0
      %3370 = vmatprep.subr.mxu0 0.0
      %3371 = vmatpush2.msra.mxu0 0.0
      %3372 = vmatprep.subr.mxu0 0.0
      %3373 = vmatpush2.msra.mxu0 0.0
      %3374 = vmatprep.subr.mxu0 0.0
      %3375 = vmatpush2.msra.mxu0 0.0
      %3376 = vmatprep.subr.mxu0 0.0
      %3377 = vmatpush2.msra.mxu0 0.0
      %3378 = vmatprep.subr.mxu0 0.0
      %3379 = vmatpush2.msra.mxu0 0.0
      %3380 = vmatprep.subr.mxu0 0.0
      %3381 = vmatpush2.msra.mxu0 0.0
      %3382 = vmatprep.subr.mxu0 0.0
      %3383 = vmatpush2.msra.mxu0 0.0
      %3384 = vmatprep.subr.mxu0 0.0
      %3385 = vmatpush2.msra.mxu0 0.0
      %3386 = vmatprep.subr.mxu0 0.0
      %3387 = vmatpush2.msra.mxu0 0.0
      %3388 = vmatprep.subr.mxu0 0.0
      %3389 = vmatpush2.msra.mxu0 0.0
      %3390 = vmatprep.subr.mxu0 0.0
      %3391 = vmatpush2.msra.mxu0 0.0
      %3392 = vmatprep.subr.mxu0 0.0
      %3393 = vmatpush2.msra.mxu0 0.0
      %3394 = vmatprep.subr.mxu0 0.0
      %3395 = vmatpush2.msra.mxu0 0.0
      %3396 = vmatprep.subr.mxu0 0.0
      %3397 = vmatpush2.msra.mxu0 0.0
      %3398 = vmatprep.mubr.f32.mxu0 0.0
      %3399 = vmatmul.mubr.f32.gmra.mxu0 %v1941
      %v3400 = vpop.f32.mrf.mxu0
      %v3401 = vadd.f32 %v3240, %v3400
      %v3402 = vpop.f32.mrf.mxu0
      %v3403 = vadd.f32 %v3242, %v3402
      %3404 = vmatprep.mubr.f32.mxu0 0.0
      %3405 = vmatmul.mubr.f32.gmra.mxu0 %v1944
      %v3406 = vpop.f32.mrf.mxu0
      %v3407 = vadd.f32 %v3246, %v3406
      %v3408 = vpop.f32.mrf.mxu0
      %v3409 = vadd.f32 %v3248, %v3408
      %3410 = vmatprep.mubr.f32.mxu0 0.0
      %3411 = vmatmul.mubr.f32.gmra.mxu0 %v1947
      %v3412 = vpop.f32.mrf.mxu0
      %v3413 = vadd.f32 %v3252, %v3412
      %v3414 = vpop.f32.mrf.mxu0
      %v3415 = vadd.f32 %v3254, %v3414
      %3416 = vmatprep.mubr.f32.mxu0 0.0
      %3417 = vmatmul.mubr.f32.gmra.mxu0 %v1950
      %v3418 = vpop.f32.mrf.mxu0
      %v3419 = vadd.f32 %v3258, %v3418
      %v3420 = vpop.f32.mrf.mxu0
      %v3421 = vadd.f32 %v3260, %v3420
      %3422 = vmatprep.mubr.f32.mxu0 0.0
      %3423 = vmatmul.mubr.f32.gmra.mxu0 %v1953
      %v3424 = vpop.f32.mrf.mxu0
      %v3425 = vadd.f32 %v3264, %v3424
      %v3426 = vpop.f32.mrf.mxu0
      %v3427 = vadd.f32 %v3266, %v3426
      %3428 = vmatprep.mubr.f32.mxu0 0.0
      %3429 = vmatmul.mubr.f32.gmra.mxu0 %v1956
      %v3430 = vpop.f32.mrf.mxu0
      %v3431 = vadd.f32 %v3270, %v3430
      %v3432 = vpop.f32.mrf.mxu0
      %v3433 = vadd.f32 %v3272, %v3432
      %3434 = vmatprep.mubr.f32.mxu0 0.0
      %3435 = vmatmul.mubr.f32.gmra.mxu0 %v1959
      %v3436 = vpop.f32.mrf.mxu0
      %v3437 = vadd.f32 %v3276, %v3436
      %v3438 = vpop.f32.mrf.mxu0
      %v3439 = vadd.f32 %v3278, %v3438
      %3440 = vmatprep.mubr.f32.mxu0 0.0
      %3441 = vmatmul.mubr.f32.gmra.mxu0 %v1962
      %v3442 = vpop.f32.mrf.mxu0
      %v3443 = vadd.f32 %v3282, %v3442
      %v3444 = vpop.f32.mrf.mxu0
      %v3445 = vadd.f32 %v3284, %v3444
      %3446 = vmatprep.mubr.f32.mxu0 0.0
      %3447 = vmatmul.mubr.f32.gmra.mxu0 %v1965
      %v3448 = vpop.f32.mrf.mxu0
      %v3449 = vadd.f32 %v3288, %v3448
      %v3450 = vpop.f32.mrf.mxu0
      %v3451 = vadd.f32 %v3290, %v3450
      %3452 = vmatprep.mubr.f32.mxu0 0.0
      %3453 = vmatmul.mubr.f32.gmra.mxu0 %v1968
      %v3454 = vpop.f32.mrf.mxu0
      %v3455 = vadd.f32 %v3294, %v3454
      %v3456 = vpop.f32.mrf.mxu0
      %v3457 = vadd.f32 %v3296, %v3456
      %3458 = vmatprep.mubr.f32.mxu0 0.0
      %3459 = vmatmul.mubr.f32.gmra.mxu0 %v1971
      %v3460 = vpop.f32.mrf.mxu0
      %v3461 = vadd.f32 %v3300, %v3460
      %v3462 = vpop.f32.mrf.mxu0
      %v3463 = vadd.f32 %v3302, %v3462
      %3464 = vmatprep.mubr.f32.mxu0 0.0
      %3465 = vmatmul.mubr.f32.gmra.mxu0 %v1974
      %v3466 = vpop.f32.mrf.mxu0
      %v3467 = vadd.f32 %v3306, %v3466
      %v3468 = vpop.f32.mrf.mxu0
      %v3469 = vadd.f32 %v3308, %v3468
      %3470 = vmatprep.mubr.f32.mxu0 0.0
      %3471 = vmatmul.mubr.f32.gmra.mxu0 %v1977
      %v3472 = vpop.f32.mrf.mxu0
      %v3473 = vadd.f32 %v3312, %v3472
      %v3474 = vpop.f32.mrf.mxu0
      %v3475 = vadd.f32 %v3314, %v3474
      %3476 = vmatprep.mubr.f32.mxu0 0.0
      %3477 = vmatmul.mubr.f32.gmra.mxu0 %v1980
      %v3478 = vpop.f32.mrf.mxu0
      %v3479 = vadd.f32 %v3318, %v3478
      %v3480 = vpop.f32.mrf.mxu0
      %v3481 = vadd.f32 %v3320, %v3480
      %3482 = vmatprep.mubr.f32.mxu0 0.0
      %3483 = vmatmul.mubr.f32.gmra.mxu0 %v1983
      %v3484 = vpop.f32.mrf.mxu0
      %v3485 = vadd.f32 %v3324, %v3484
      %v3486 = vpop.f32.mrf.mxu0
      %v3487 = vadd.f32 %v3326, %v3486
      %3488 = vmatprep.mubr.f32.mxu0 0.0
      %3489 = vmatmul.mubr.f32.gmra.mxu0 %v1986
      %v3490 = vpop.f32.mrf.mxu0
      %v3491 = vadd.f32 %v3330, %v3490
      %v3492 = vpop.f32.mrf.mxu0
      %v3493 = vadd.f32 %v3332, %v3492
      %3494 = vdwg.mxu0
      %v3495 = vadd.f32 %v188, %v3079
      %v3496 = vadd.f32 %v189, %v3081
      %v3497 = vadd.f32 %v190, %v3401
      %v3498 = vadd.f32 %v191, %v3403
      %v3499 = vadd.f32 %v192, %v3085
      %v3500 = vadd.f32 %v193, %v3087
      %v3501 = vadd.f32 %v194, %v3407
      %v3502 = vadd.f32 %v195, %v3409
      %v3503 = vadd.f32 %v196, %v3091
      %v3504 = vadd.f32 %v197, %v3093
      %v3505 = vadd.f32 %v198, %v3413
      %v3506 = vadd.f32 %v199, %v3415
      %v3507 = vadd.f32 %v200, %v3097
      %v3508 = vadd.f32 %v201, %v3099
      %v3509 = vadd.f32 %v202, %v3419
      %v3510 = vadd.f32 %v203, %v3421
      %v3511 = vadd.f32 %v204, %v3103
      %v3512 = vadd.f32 %v205, %v3105
      %v3513 = vadd.f32 %v206, %v3425
      %v3514 = vadd.f32 %v207, %v3427
      %v3515 = vadd.f32 %v208, %v3109
      %v3516 = vadd.f32 %v209, %v3111
      %v3517 = vadd.f32 %v210, %v3431
      %v3518 = vadd.f32 %v211, %v3433
      %v3519 = vadd.f32 %v212, %v3115
      %v3520 = vadd.f32 %v213, %v3117
      %v3521 = vadd.f32 %v214, %v3437
      %v3522 = vadd.f32 %v215, %v3439
      %v3523 = vadd.f32 %v216, %v3121
      %v3524 = vadd.f32 %v217, %v3123
      %v3525 = vadd.f32 %v218, %v3443
      %v3526 = vadd.f32 %v219, %v3445
      %v3527 = vadd.f32 %v220, %v3127
      %v3528 = vadd.f32 %v221, %v3129
      %v3529 = vadd.f32 %v222, %v3449
      %v3530 = vadd.f32 %v223, %v3451
      %v3531 = vadd.f32 %v224, %v3133
      %v3532 = vadd.f32 %v225, %v3135
      %v3533 = vadd.f32 %v226, %v3455
      %v3534 = vadd.f32 %v227, %v3457
      %v3535 = vadd.f32 %v228, %v3139
      %v3536 = vadd.f32 %v229, %v3141
      %v3537 = vadd.f32 %v230, %v3461
      %v3538 = vadd.f32 %v231, %v3463
      %v3539 = vadd.f32 %v232, %v3145
      %v3540 = vadd.f32 %v233, %v3147
      %v3541 = vadd.f32 %v234, %v3467
      %v3542 = vadd.f32 %v235, %v3469
      %v3543 = vadd.f32 %v236, %v3151
      %v3544 = vadd.f32 %v237, %v3153
      %v3545 = vadd.f32 %v238, %v3473
      %v3546 = vadd.f32 %v239, %v3475
      %v3547 = vadd.f32 %v240, %v3157
      %v3548 = vadd.f32 %v241, %v3159
      %v3549 = vadd.f32 %v242, %v3479
      %v3550 = vadd.f32 %v243, %v3481
      %v3551 = vadd.f32 %v244, %v3163
      %v3552 = vadd.f32 %v245, %v3165
      %v3553 = vadd.f32 %v246, %v3485
      %v3554 = vadd.f32 %v247, %v3487
      %v3555 = vadd.f32 %v248, %v3169
      %v3556 = vadd.f32 %v249, %v3171
      %v3557 = vadd.f32 %v250, %v3491
      %v3558 = vadd.f32 %v251, %v3493
      %v3559 = vmax.f32 %v3495, 0.0
      %v3560 = vmax.f32 %v3496, 0.0
      %v3561 = vmax.f32 %v3497, 0.0
      %v3562 = vmax.f32 %v3498, 0.0
      %v3563 = vmax.f32 %v3499, 0.0
      %v3564 = vmax.f32 %v3500, 0.0
      %v3565 = vmax.f32 %v3501, 0.0
      %v3566 = vmax.f32 %v3502, 0.0
      %v3567 = vmax.f32 %v3503, 0.0
      %v3568 = vmax.f32 %v3504, 0.0
      %v3569 = vmax.f32 %v3505, 0.0
      %v3570 = vmax.f32 %v3506, 0.0
      %v3571 = vmax.f32 %v3507, 0.0
      %v3572 = vmax.f32 %v3508, 0.0
      %v3573 = vmax.f32 %v3509, 0.0
      %v3574 = vmax.f32 %v3510, 0.0
      %v3575 = vmax.f32 %v3511, 0.0
      %v3576 = vmax.f32 %v3512, 0.0
      %v3577 = vmax.f32 %v3513, 0.0
      %v3578 = vmax.f32 %v3514, 0.0
      %v3579 = vmax.f32 %v3515, 0.0
      %v3580 = vmax.f32 %v3516, 0.0
      %v3581 = vmax.f32 %v3517, 0.0
      %v3582 = vmax.f32 %v3518, 0.0
      %v3583 = vmax.f32 %v3519, 0.0
      %v3584 = vmax.f32 %v3520, 0.0
      %v3585 = vmax.f32 %v3521, 0.0
      %v3586 = vmax.f32 %v3522, 0.0
      %v3587 = vmax.f32 %v3523, 0.0
      %v3588 = vmax.f32 %v3524, 0.0
      %v3589 = vmax.f32 %v3525, 0.0
      %v3590 = vmax.f32 %v3526, 0.0
      %v3591 = vmax.f32 %v3527, 0.0
      %v3592 = vmax.f32 %v3528, 0.0
      %v3593 = vmax.f32 %v3529, 0.0
      %v3594 = vmax.f32 %v3530, 0.0
      %v3595 = vmax.f32 %v3531, 0.0
      %v3596 = vmax.f32 %v3532, 0.0
      %v3597 = vmax.f32 %v3533, 0.0
      %v3598 = vmax.f32 %v3534, 0.0
      %v3599 = vmax.f32 %v3535, 0.0
      %v3600 = vmax.f32 %v3536, 0.0
      %v3601 = vmax.f32 %v3537, 0.0
      %v3602 = vmax.f32 %v3538, 0.0
      %v3603 = vmax.f32 %v3539, 0.0
      %v3604 = vmax.f32 %v3540, 0.0
      %v3605 = vmax.f32 %v3541, 0.0
      %v3606 = vmax.f32 %v3542, 0.0
      %v3607 = vmax.f32 %v3543, 0.0
      %v3608 = vmax.f32 %v3544, 0.0
      %v3609 = vmax.f32 %v3545, 0.0
      %v3610 = vmax.f32 %v3546, 0.0
      %v3611 = vmax.f32 %v3547, 0.0
      %v3612 = vmax.f32 %v3548, 0.0
      %v3613 = vmax.f32 %v3549, 0.0
      %v3614 = vmax.f32 %v3550, 0.0
      %v3615 = vmax.f32 %v3551, 0.0
      %v3616 = vmax.f32 %v3552, 0.0
      %v3617 = vmax.f32 %v3553, 0.0
      %v3618 = vmax.f32 %v3554, 0.0
      %v3619 = vmax.f32 %v3555, 0.0
      %v3620 = vmax.f32 %v3556, 0.0
      %v3621 = vmax.f32 %v3557, 0.0
      %v3622 = vmax.f32 %v3558, 0.0
      %v3623 = vmul.f32 %v3559, %v184
      %v3624 = vmul.f32 %v3560, %v185
      %v3625 = vmul.f32 %v3561, %v186
      %v3626 = vmul.f32 %v3562, %v187
      %v3627 = vmul.f32 %v3563, %v184
      %v3628 = vmul.f32 %v3564, %v185
      %v3629 = vmul.f32 %v3565, %v186
      %v3630 = vmul.f32 %v3566, %v187
      %v3631 = vmul.f32 %v3567, %v184
      %v3632 = vmul.f32 %v3568, %v185
      %v3633 = vmul.f32 %v3569, %v186
      %v3634 = vmul.f32 %v3570, %v187
      %v3635 = vmul.f32 %v3571, %v184
      %v3636 = vmul.f32 %v3572, %v185
      %v3637 = vmul.f32 %v3573, %v186
      %v3638 = vmul.f32 %v3574, %v187
      %v3639 = vmul.f32 %v3575, %v184
      %v3640 = vmul.f32 %v3576, %v185
      %v3641 = vmul.f32 %v3577, %v186
      %v3642 = vmul.f32 %v3578, %v187
      %v3643 = vmul.f32 %v3579, %v184
      %v3644 = vmul.f32 %v3580, %v185
      %v3645 = vmul.f32 %v3581, %v186
      %v3646 = vmul.f32 %v3582, %v187
      %v3647 = vmul.f32 %v3583, %v184
      %v3648 = vmul.f32 %v3584, %v185
      %v3649 = vmul.f32 %v3585, %v186
      %v3650 = vmul.f32 %v3586, %v187
      %v3651 = vmul.f32 %v3587, %v184
      %v3652 = vmul.f32 %v3588, %v185
      %v3653 = vmul.f32 %v3589, %v186
      %v3654 = vmul.f32 %v3590, %v187
      %v3655 = vmul.f32 %v3591, %v184
      %v3656 = vmul.f32 %v3592, %v185
      %v3657 = vmul.f32 %v3593, %v186
      %v3658 = vmul.f32 %v3594, %v187
      %v3659 = vmul.f32 %v3595, %v184
      %v3660 = vmul.f32 %v3596, %v185
      %v3661 = vmul.f32 %v3597, %v186
      %v3662 = vmul.f32 %v3598, %v187
      %v3663 = vmul.f32 %v3599, %v184
      %v3664 = vmul.f32 %v3600, %v185
      %v3665 = vmul.f32 %v3601, %v186
      %v3666 = vmul.f32 %v3602, %v187
      %v3667 = vmul.f32 %v3603, %v184
      %v3668 = vmul.f32 %v3604, %v185
      %v3669 = vmul.f32 %v3605, %v186
      %v3670 = vmul.f32 %v3606, %v187
      %v3671 = vmul.f32 %v3607, %v184
      %v3672 = vmul.f32 %v3608, %v185
      %v3673 = vmul.f32 %v3609, %v186
      %v3674 = vmul.f32 %v3610, %v187
      %v3675 = vmul.f32 %v3611, %v184
      %v3676 = vmul.f32 %v3612, %v185
      %v3677 = vmul.f32 %v3613, %v186
      %v3678 = vmul.f32 %v3614, %v187
      %v3679 = vmul.f32 %v3615, %v184
      %v3680 = vmul.f32 %v3616, %v185
      %v3681 = vmul.f32 %v3617, %v186
      %v3682 = vmul.f32 %v3618, %v187
      %v3683 = vmul.f32 %v3619, %v184
      %v3684 = vmul.f32 %v3620, %v185
      %v3685 = vmul.f32 %v3621, %v186
      %v3686 = vmul.f32 %v3622, %v187
      %s3687 = scalar_lea.vmem %s1, 768
      %v3688 = vld [vmem:[%s3687] sm:$0xff]
      %v3689 = vld [vmem:[%s3687 + $0x8] sm:$0xff]
      %v3690 = vld [vmem:[%s3687 + $0x10] sm:$0xff]
      %v3691 = vld [vmem:[%s3687 + $0x18] sm:$0xff]
      %v3692 = vld [vmem:[%s3687 + $0x20] sm:$0xff]
      %v3693 = vld [vmem:[%s3687 + $0x28] sm:$0xff]
      %v3694 = vld [vmem:[%s3687 + $0x30] sm:$0xff]
      %v3695 = vld [vmem:[%s3687 + $0x38] sm:$0xff]
      %v3696 = vld [vmem:[%s3687 + $0x40] sm:$0xff]
      %v3697 = vld [vmem:[%s3687 + $0x48] sm:$0xff]
      %v3698 = vld [vmem:[%s3687 + $0x50] sm:$0xff]
      %v3699 = vld [vmem:[%s3687 + $0x58] sm:$0xff]
      %v3700 = vld [vmem:[%s3687 + $0x60] sm:$0xff]
      %v3701 = vld [vmem:[%s3687 + $0x68] sm:$0xff]
      %v3702 = vld [vmem:[%s3687 + $0x70] sm:$0xff]
      %v3703 = vld [vmem:[%s3687 + $0x78] sm:$0xff]
      %v3704 = vld [vmem:[%s3687 + $0x80] sm:$0xff]
      %v3705 = vld [vmem:[%s3687 + $0x88] sm:$0xff]
      %v3706 = vld [vmem:[%s3687 + $0x90] sm:$0xff]
      %v3707 = vld [vmem:[%s3687 + $0x98] sm:$0xff]
      %v3708 = vld [vmem:[%s3687 + $0xa0] sm:$0xff]
      %v3709 = vld [vmem:[%s3687 + $0xa8] sm:$0xff]
      %v3710 = vld [vmem:[%s3687 + $0xb0] sm:$0xff]
      %v3711 = vld [vmem:[%s3687 + $0xb8] sm:$0xff]
      %v3712 = vld [vmem:[%s3687 + $0xc0] sm:$0xff]
      %v3713 = vld [vmem:[%s3687 + $0xc8] sm:$0xff]
      %v3714 = vld [vmem:[%s3687 + $0xd0] sm:$0xff]
      %v3715 = vld [vmem:[%s3687 + $0xd8] sm:$0xff]
      %v3716 = vld [vmem:[%s3687 + $0xe0] sm:$0xff]
      %v3717 = vld [vmem:[%s3687 + $0xe8] sm:$0xff]
      %v3718 = vld [vmem:[%s3687 + $0xf0] sm:$0xff]
      %v3719 = vld [vmem:[%s3687 + $0xf8] sm:$0xff]
      %v3720 = vld [vmem:[%s3687 + $0x100] sm:$0xff]
      %v3721 = vld [vmem:[%s3687 + $0x108] sm:$0xff]
      %v3722 = vld [vmem:[%s3687 + $0x110] sm:$0xff]
      %v3723 = vld [vmem:[%s3687 + $0x118] sm:$0xff]
      %v3724 = vld [vmem:[%s3687 + $0x120] sm:$0xff]
      %v3725 = vld [vmem:[%s3687 + $0x128] sm:$0xff]
      %v3726 = vld [vmem:[%s3687 + $0x130] sm:$0xff]
      %v3727 = vld [vmem:[%s3687 + $0x138] sm:$0xff]
      %v3728 = vld [vmem:[%s3687 + $0x140] sm:$0xff]
      %v3729 = vld [vmem:[%s3687 + $0x148] sm:$0xff]
      %v3730 = vld [vmem:[%s3687 + $0x150] sm:$0xff]
      %v3731 = vld [vmem:[%s3687 + $0x158] sm:$0xff]
      %v3732 = vld [vmem:[%s3687 + $0x160] sm:$0xff]
      %v3733 = vld [vmem:[%s3687 + $0x168] sm:$0xff]
      %v3734 = vld [vmem:[%s3687 + $0x170] sm:$0xff]
      %v3735 = vld [vmem:[%s3687 + $0x178] sm:$0xff]
      %v3736 = vld [vmem:[%s2] sm:$0xff]
      %v3737 = vld [vmem:[%s2 + $0x8] sm:$0xff]
      %v3738 = vld [vmem:[%s2 + $0x10] sm:$0xff]
      %v3739 = vld [vmem:[%s2 + $0x18] sm:$0xff]
      %v3740 = vld [vmem:[%s2 + $0x20] sm:$0xff]
      %v3741 = vld [vmem:[%s2 + $0x28] sm:$0xff]
      %v3742 = vld [vmem:[%s2 + $0x30] sm:$0xff]
      %v3743 = vld [vmem:[%s2 + $0x38] sm:$0xff]
      %v3744 = vld [vmem:[%s2 + $0x40] sm:$0xff]
      %v3745 = vld [vmem:[%s2 + $0x48] sm:$0xff]
      %v3746 = vld [vmem:[%s2 + $0x50] sm:$0xff]
      %v3747 = vld [vmem:[%s2 + $0x58] sm:$0xff]
      %v3748 = vld [vmem:[%s2 + $0x60] sm:$0xff]
      %v3749 = vld [vmem:[%s2 + $0x68] sm:$0xff]
      %v3750 = vld [vmem:[%s2 + $0x70] sm:$0xff]
      %v3751 = vld [vmem:[%s2 + $0x78] sm:$0xff]
      %3752 = vrot.lane.b32.xlu0 %v3623, 1
      %v3753 = vpop.permute.xlu0 %3752
      %3754 = vrot.lane.b32.xlu0 %v3627, 1
      %v3755 = vpop.permute.xlu0 %3754
      %3756 = vrot.lane.b32.xlu0 %v3631, 1
      %v3757 = vpop.permute.xlu0 %3756
      %3758 = vrot.lane.b32.xlu0 %v3635, 1
      %v3759 = vpop.permute.xlu0 %3758
      %3760 = vrot.lane.b32.xlu0 %v3639, 1
      %v3761 = vpop.permute.xlu0 %3760
      %3762 = vrot.lane.b32.xlu0 %v3643, 1
      %v3763 = vpop.permute.xlu0 %3762
      %3764 = vrot.lane.b32.xlu0 %v3647, 1
      %v3765 = vpop.permute.xlu0 %3764
      %3766 = vrot.lane.b32.xlu0 %v3651, 1
      %v3767 = vpop.permute.xlu0 %3766
      %3768 = vrot.lane.b32.xlu0 %v3655, 1
      %v3769 = vpop.permute.xlu0 %3768
      %3770 = vrot.lane.b32.xlu0 %v3659, 1
      %v3771 = vpop.permute.xlu0 %3770
      %3772 = vrot.lane.b32.xlu0 %v3663, 1
      %v3773 = vpop.permute.xlu0 %3772
      %3774 = vrot.lane.b32.xlu0 %v3667, 1
      %v3775 = vpop.permute.xlu0 %3774
      %3776 = vrot.lane.b32.xlu0 %v3671, 1
      %v3777 = vpop.permute.xlu0 %3776
      %3778 = vrot.lane.b32.xlu0 %v3675, 1
      %v3779 = vpop.permute.xlu0 %3778
      %3780 = vrot.lane.b32.xlu0 %v3679, 1
      %v3781 = vpop.permute.xlu0 %3780
      %3782 = vrot.lane.b32.xlu0 %v3683, 1
      %v3783 = vpop.permute.xlu0 %3782
      %3784 = vrot.lane.b32.xlu0 %v3624, 1
      %v3785 = vpop.permute.xlu0 %3784
      %3786 = vrot.lane.b32.xlu0 %v3628, 1
      %v3787 = vpop.permute.xlu0 %3786
      %3788 = vrot.lane.b32.xlu0 %v3632, 1
      %v3789 = vpop.permute.xlu0 %3788
      %3790 = vrot.lane.b32.xlu0 %v3636, 1
      %v3791 = vpop.permute.xlu0 %3790
      %3792 = vrot.lane.b32.xlu0 %v3640, 1
      %v3793 = vpop.permute.xlu0 %3792
      %3794 = vrot.lane.b32.xlu0 %v3644, 1
      %v3795 = vpop.permute.xlu0 %3794
      %3796 = vrot.lane.b32.xlu0 %v3648, 1
      %v3797 = vpop.permute.xlu0 %3796
      %3798 = vrot.lane.b32.xlu0 %v3652, 1
      %v3799 = vpop.permute.xlu0 %3798
      %3800 = vrot.lane.b32.xlu0 %v3656, 1
      %v3801 = vpop.permute.xlu0 %3800
      %3802 = vrot.lane.b32.xlu0 %v3660, 1
      %v3803 = vpop.permute.xlu0 %3802
      %3804 = vrot.lane.b32.xlu0 %v3664, 1
      %v3805 = vpop.permute.xlu0 %3804
      %3806 = vrot.lane.b32.xlu0 %v3668, 1
      %v3807 = vpop.permute.xlu0 %3806
      %3808 = vrot.lane.b32.xlu0 %v3672, 1
      %v3809 = vpop.permute.xlu0 %3808
      %3810 = vrot.lane.b32.xlu0 %v3676, 1
      %v3811 = vpop.permute.xlu0 %3810
      %3812 = vrot.lane.b32.xlu0 %v3680, 1
      %v3813 = vpop.permute.xlu0 %3812
      %3814 = vrot.lane.b32.xlu0 %v3684, 1
      %v3815 = vpop.permute.xlu0 %3814
      %3816 = vrot.lane.b32.xlu0 %v3625, 1
      %v3817 = vpop.permute.xlu0 %3816
      %3818 = vrot.lane.b32.xlu0 %v3629, 1
      %v3819 = vpop.permute.xlu0 %3818
      %3820 = vrot.lane.b32.xlu0 %v3633, 1
      %v3821 = vpop.permute.xlu0 %3820
      %3822 = vrot.lane.b32.xlu0 %v3637, 1
      %v3823 = vpop.permute.xlu0 %3822
      %3824 = vrot.lane.b32.xlu0 %v3641, 1
      %v3825 = vpop.permute.xlu0 %3824
      %3826 = vrot.lane.b32.xlu0 %v3645, 1
      %v3827 = vpop.permute.xlu0 %3826
      %3828 = vrot.lane.b32.xlu0 %v3649, 1
      %v3829 = vpop.permute.xlu0 %3828
      %3830 = vrot.lane.b32.xlu0 %v3653, 1
      %v3831 = vpop.permute.xlu0 %3830
      %3832 = vrot.lane.b32.xlu0 %v3657, 1
      %v3833 = vpop.permute.xlu0 %3832
      %3834 = vrot.lane.b32.xlu0 %v3661, 1
      %v3835 = vpop.permute.xlu0 %3834
      %3836 = vrot.lane.b32.xlu0 %v3665, 1
      %v3837 = vpop.permute.xlu0 %3836
      %3838 = vrot.lane.b32.xlu0 %v3669, 1
      %v3839 = vpop.permute.xlu0 %3838
      %3840 = vrot.lane.b32.xlu0 %v3673, 1
      %v3841 = vpop.permute.xlu0 %3840
      %3842 = vrot.lane.b32.xlu0 %v3677, 1
      %v3843 = vpop.permute.xlu0 %3842
      %3844 = vrot.lane.b32.xlu0 %v3681, 1
      %v3845 = vpop.permute.xlu0 %3844
      %3846 = vrot.lane.b32.xlu0 %v3685, 1
      %v3847 = vpop.permute.xlu0 %3846
      %3848 = vrot.lane.b32.xlu0 %v3626, 1
      %v3849 = vpop.permute.xlu0 %3848
      %3850 = vrot.lane.b32.xlu0 %v3630, 1
      %v3851 = vpop.permute.xlu0 %3850
      %3852 = vrot.lane.b32.xlu0 %v3634, 1
      %v3853 = vpop.permute.xlu0 %3852
      %3854 = vrot.lane.b32.xlu0 %v3638, 1
      %v3855 = vpop.permute.xlu0 %3854
      %3856 = vrot.lane.b32.xlu0 %v3642, 1
      %v3857 = vpop.permute.xlu0 %3856
      %3858 = vrot.lane.b32.xlu0 %v3646, 1
      %v3859 = vpop.permute.xlu0 %3858
      %3860 = vrot.lane.b32.xlu0 %v3650, 1
      %v3861 = vpop.permute.xlu0 %3860
      %3862 = vrot.lane.b32.xlu0 %v3654, 1
      %v3863 = vpop.permute.xlu0 %3862
      %3864 = vrot.lane.b32.xlu0 %v3658, 1
      %v3865 = vpop.permute.xlu0 %3864
      %3866 = vrot.lane.b32.xlu0 %v3662, 1
      %v3867 = vpop.permute.xlu0 %3866
      %3868 = vrot.lane.b32.xlu0 %v3666, 1
      %v3869 = vpop.permute.xlu0 %3868
      %3870 = vrot.lane.b32.xlu0 %v3670, 1
      %v3871 = vpop.permute.xlu0 %3870
      %3872 = vrot.lane.b32.xlu0 %v3674, 1
      %v3873 = vpop.permute.xlu0 %3872
      %3874 = vrot.lane.b32.xlu0 %v3678, 1
      %v3875 = vpop.permute.xlu0 %3874
      %3876 = vrot.lane.b32.xlu0 %v3682, 1
      %v3877 = vpop.permute.xlu0 %3876
      %3878 = vrot.lane.b32.xlu0 %v3686, 1
      %v3879 = vpop.permute.xlu0 %3878
      %v3880 = vsel %vm444, %v3817, %v3849
      %v3881 = vsel %vm444, %v3819, %v3851
      %v3882 = vsel %vm444, %v3821, %v3853
      %v3883 = vsel %vm444, %v3823, %v3855
      %v3884 = vsel %vm444, %v3825, %v3857
      %v3885 = vsel %vm444, %v3827, %v3859
      %v3886 = vsel %vm444, %v3829, %v3861
      %v3887 = vsel %vm444, %v3831, %v3863
      %v3888 = vsel %vm444, %v3833, %v3865
      %v3889 = vsel %vm444, %v3835, %v3867
      %v3890 = vsel %vm444, %v3837, %v3869
      %v3891 = vsel %vm444, %v3839, %v3871
      %v3892 = vsel %vm444, %v3841, %v3873
      %v3893 = vsel %vm444, %v3843, %v3875
      %v3894 = vsel %vm444, %v3845, %v3877
      %v3895 = vsel %vm444, %v3847, %v3879
      %v3896 = vsel %vm444, %v3785, %v3817
      %v3897 = vsel %vm444, %v3787, %v3819
      %v3898 = vsel %vm444, %v3789, %v3821
      %v3899 = vsel %vm444, %v3791, %v3823
      %v3900 = vsel %vm444, %v3793, %v3825
      %v3901 = vsel %vm444, %v3795, %v3827
      %v3902 = vsel %vm444, %v3797, %v3829
      %v3903 = vsel %vm444, %v3799, %v3831
      %v3904 = vsel %vm444, %v3801, %v3833
      %v3905 = vsel %vm444, %v3803, %v3835
      %v3906 = vsel %vm444, %v3805, %v3837
      %v3907 = vsel %vm444, %v3807, %v3839
      %v3908 = vsel %vm444, %v3809, %v3841
      %v3909 = vsel %vm444, %v3811, %v3843
      %v3910 = vsel %vm444, %v3813, %v3845
      %v3911 = vsel %vm444, %v3815, %v3847
      %v3912 = vsel %vm444, %v3753, %v3785
      %v3913 = vsel %vm444, %v3755, %v3787
      %v3914 = vsel %vm444, %v3757, %v3789
      %v3915 = vsel %vm444, %v3759, %v3791
      %v3916 = vsel %vm444, %v3761, %v3793
      %v3917 = vsel %vm444, %v3763, %v3795
      %v3918 = vsel %vm444, %v3765, %v3797
      %v3919 = vsel %vm444, %v3767, %v3799
      %v3920 = vsel %vm444, %v3769, %v3801
      %v3921 = vsel %vm444, %v3771, %v3803
      %v3922 = vsel %vm444, %v3773, %v3805
      %v3923 = vsel %vm444, %v3775, %v3807
      %v3924 = vsel %vm444, %v3777, %v3809
      %v3925 = vsel %vm444, %v3779, %v3811
      %v3926 = vsel %vm444, %v3781, %v3813
      %v3927 = vsel %vm444, %v3783, %v3815
      %v3928 = vsel %vm444, %v3849, %v3753
      %v3929 = vsel %vm444, %v3851, %v3755
      %v3930 = vsel %vm444, %v3853, %v3757
      %v3931 = vsel %vm444, %v3855, %v3759
      %v3932 = vsel %vm444, %v3857, %v3761
      %v3933 = vsel %vm444, %v3859, %v3763
      %v3934 = vsel %vm444, %v3861, %v3765
      %v3935 = vsel %vm444, %v3863, %v3767
      %v3936 = vsel %vm444, %v3865, %v3769
      %v3937 = vsel %vm444, %v3867, %v3771
      %v3938 = vsel %vm444, %v3869, %v3773
      %v3939 = vsel %vm444, %v3871, %v3775
      %v3940 = vsel %vm444, %v3873, %v3777
      %v3941 = vsel %vm444, %v3875, %v3779
      %v3942 = vsel %vm444, %v3877, %v3781
      %v3943 = vsel %vm444, %v3879, %v3783
      %3944 = vst [vmem:[#allocation2] sm:$0xff] %v3928
      %3945 = vst [vmem:[#allocation2 + $0x8] sm:$0xff] %v3912
      %3946 = vst [vmem:[#allocation2 + $0x10] sm:$0xff] %v3896
      %3947 = vst [vmem:[#allocation2 + $0x18] sm:$0xff] %v3880
      %3948 = vst [vmem:[#allocation2 + $0x20] sm:$0xff] %v3929
      %3949 = vst [vmem:[#allocation2 + $0x28] sm:$0xff] %v3913
      %3950 = vst [vmem:[#allocation2 + $0x30] sm:$0xff] %v3897
      %3951 = vst [vmem:[#allocation2 + $0x38] sm:$0xff] %v3881
      %3952 = vst [vmem:[#allocation2 + $0x40] sm:$0xff] %v3930
      %3953 = vst [vmem:[#allocation2 + $0x48] sm:$0xff] %v3914
      %3954 = vst [vmem:[#allocation2 + $0x50] sm:$0xff] %v3898
      %3955 = vst [vmem:[#allocation2 + $0x58] sm:$0xff] %v3882
      %3956 = vst [vmem:[#allocation2 + $0x60] sm:$0xff] %v3931
      %3957 = vst [vmem:[#allocation2 + $0x68] sm:$0xff] %v3915
      %3958 = vst [vmem:[#allocation2 + $0x70] sm:$0xff] %v3899
      %3959 = vst [vmem:[#allocation2 + $0x78] sm:$0xff] %v3883
      %3960 = vst [vmem:[#allocation2 + $0x80] sm:$0xff] %v3932
      %3961 = vst [vmem:[#allocation2 + $0x88] sm:$0xff] %v3916
      %3962 = vst [vmem:[#allocation2 + $0x90] sm:$0xff] %v3900
      %3963 = vst [vmem:[#allocation2 + $0x98] sm:$0xff] %v3884
      %3964 = vst [vmem:[#allocation2 + $0xa0] sm:$0xff] %v3933
      %3965 = vst [vmem:[#allocation2 + $0xa8] sm:$0xff] %v3917
      %3966 = vst [vmem:[#allocation2 + $0xb0] sm:$0xff] %v3901
      %3967 = vst [vmem:[#allocation2 + $0xb8] sm:$0xff] %v3885
      %3968 = vst [vmem:[#allocation2 + $0xc0] sm:$0xff] %v3934
      %3969 = vst [vmem:[#allocation2 + $0xc8] sm:$0xff] %v3918
      %3970 = vst [vmem:[#allocation2 + $0xd0] sm:$0xff] %v3902
      %3971 = vst [vmem:[#allocation2 + $0xd8] sm:$0xff] %v3886
      %3972 = vst [vmem:[#allocation2 + $0xe0] sm:$0xff] %v3935
      %3973 = vst [vmem:[#allocation2 + $0xe8] sm:$0xff] %v3919
      %3974 = vst [vmem:[#allocation2 + $0xf0] sm:$0xff] %v3903
      %3975 = vst [vmem:[#allocation2 + $0xf8] sm:$0xff] %v3887
      %3976 = vst [vmem:[#allocation2 + $0x100] sm:$0xff] %v3936
      %3977 = vst [vmem:[#allocation2 + $0x108] sm:$0xff] %v3920
      %3978 = vst [vmem:[#allocation2 + $0x110] sm:$0xff] %v3904
      %3979 = vst [vmem:[#allocation2 + $0x118] sm:$0xff] %v3888
      %3980 = vst [vmem:[#allocation2 + $0x120] sm:$0xff] %v3937
      %3981 = vst [vmem:[#allocation2 + $0x128] sm:$0xff] %v3921
      %3982 = vst [vmem:[#allocation2 + $0x130] sm:$0xff] %v3905
      %3983 = vst [vmem:[#allocation2 + $0x138] sm:$0xff] %v3889
      %3984 = vst [vmem:[#allocation2 + $0x140] sm:$0xff] %v3938
      %3985 = vst [vmem:[#allocation2 + $0x148] sm:$0xff] %v3922
      %3986 = vst [vmem:[#allocation2 + $0x150] sm:$0xff] %v3906
      %3987 = vst [vmem:[#allocation2 + $0x158] sm:$0xff] %v3890
      %3988 = vst [vmem:[#allocation2 + $0x160] sm:$0xff] %v3939
      %3989 = vst [vmem:[#allocation2 + $0x168] sm:$0xff] %v3923
      %3990 = vst [vmem:[#allocation2 + $0x170] sm:$0xff] %v3907
      %3991 = vst [vmem:[#allocation2 + $0x178] sm:$0xff] %v3891
      %3992 = vst [vmem:[#allocation2 + $0x180] sm:$0xff] %v3940
      %3993 = vst [vmem:[#allocation2 + $0x188] sm:$0xff] %v3924
      %3994 = vst [vmem:[#allocation2 + $0x190] sm:$0xff] %v3908
      %3995 = vst [vmem:[#allocation2 + $0x198] sm:$0xff] %v3892
      %3996 = vst [vmem:[#allocation2 + $0x1a0] sm:$0xff] %v3941
      %3997 = vst [vmem:[#allocation2 + $0x1a8] sm:$0xff] %v3925
      %3998 = vst [vmem:[#allocation2 + $0x1b0] sm:$0xff] %v3909
      %3999 = vst [vmem:[#allocation2 + $0x1b8] sm:$0xff] %v3893
      %4000 = vst [vmem:[#allocation2 + $0x1c0] sm:$0xff] %v3942
      %4001 = vst [vmem:[#allocation2 + $0x1c8] sm:$0xff] %v3926
      %4002 = vst [vmem:[#allocation2 + $0x1d0] sm:$0xff] %v3910
      %4003 = vst [vmem:[#allocation2 + $0x1d8] sm:$0xff] %v3894
      %4004 = vst [vmem:[#allocation2 + $0x1e0] sm:$0xff] %v3943
      %4005 = vst [vmem:[#allocation2 + $0x1e8] sm:$0xff] %v3927
      %4006 = vst [vmem:[#allocation2 + $0x1f0] sm:$0xff] %v3911
      %4007 = vst [vmem:[#allocation2 + $0x1f8] sm:$0xff] %v3895
      %4008 = vst [vmem:[#allocation2 + $0x200] sm:$0xff] %v3623
      %4009 = vst [vmem:[#allocation2 + $0x208] sm:$0xff] %v3624
      %4010 = vst [vmem:[#allocation2 + $0x210] sm:$0xff] %v3625
      %4011 = vst [vmem:[#allocation2 + $0x218] sm:$0xff] %v3626
      %4012 = vst [vmem:[#allocation2 + $0x220] sm:$0xff] %v3627
      %4013 = vst [vmem:[#allocation2 + $0x228] sm:$0xff] %v3628
      %4014 = vst [vmem:[#allocation2 + $0x230] sm:$0xff] %v3629
      %4015 = vst [vmem:[#allocation2 + $0x238] sm:$0xff] %v3630
      %4016 = vst [vmem:[#allocation2 + $0x240] sm:$0xff] %v3631
      %4017 = vst [vmem:[#allocation2 + $0x248] sm:$0xff] %v3632
      %4018 = vst [vmem:[#allocation2 + $0x250] sm:$0xff] %v3633
      %4019 = vst [vmem:[#allocation2 + $0x258] sm:$0xff] %v3634
      %4020 = vst [vmem:[#allocation2 + $0x260] sm:$0xff] %v3635
      %4021 = vst [vmem:[#allocation2 + $0x268] sm:$0xff] %v3636
      %4022 = vst [vmem:[#allocation2 + $0x270] sm:$0xff] %v3637
      %4023 = vst [vmem:[#allocation2 + $0x278] sm:$0xff] %v3638
      %4024 = vst [vmem:[#allocation2 + $0x280] sm:$0xff] %v3639
      %4025 = vst [vmem:[#allocation2 + $0x288] sm:$0xff] %v3640
      %4026 = vst [vmem:[#allocation2 + $0x290] sm:$0xff] %v3641
      %4027 = vst [vmem:[#allocation2 + $0x298] sm:$0xff] %v3642
      %4028 = vst [vmem:[#allocation2 + $0x2a0] sm:$0xff] %v3643
      %4029 = vst [vmem:[#allocation2 + $0x2a8] sm:$0xff] %v3644
      %4030 = vst [vmem:[#allocation2 + $0x2b0] sm:$0xff] %v3645
      %4031 = vst [vmem:[#allocation2 + $0x2b8] sm:$0xff] %v3646
      %4032 = vst [vmem:[#allocation2 + $0x2c0] sm:$0xff] %v3647
      %4033 = vst [vmem:[#allocation2 + $0x2c8] sm:$0xff] %v3648
      %4034 = vst [vmem:[#allocation2 + $0x2d0] sm:$0xff] %v3649
      %4035 = vst [vmem:[#allocation2 + $0x2d8] sm:$0xff] %v3650
      %4036 = vst [vmem:[#allocation2 + $0x2e0] sm:$0xff] %v3651
      %4037 = vst [vmem:[#allocation2 + $0x2e8] sm:$0xff] %v3652
      %4038 = vst [vmem:[#allocation2 + $0x2f0] sm:$0xff] %v3653
      %4039 = vst [vmem:[#allocation2 + $0x2f8] sm:$0xff] %v3654
      %4040 = vst [vmem:[#allocation2 + $0x300] sm:$0xff] %v3655
      %4041 = vst [vmem:[#allocation2 + $0x308] sm:$0xff] %v3656
      %4042 = vst [vmem:[#allocation2 + $0x310] sm:$0xff] %v3657
      %4043 = vst [vmem:[#allocation2 + $0x318] sm:$0xff] %v3658
      %4044 = vst [vmem:[#allocation2 + $0x320] sm:$0xff] %v3659
      %4045 = vst [vmem:[#allocation2 + $0x328] sm:$0xff] %v3660
      %4046 = vst [vmem:[#allocation2 + $0x330] sm:$0xff] %v3661
      %4047 = vst [vmem:[#allocation2 + $0x338] sm:$0xff] %v3662
      %4048 = vst [vmem:[#allocation2 + $0x340] sm:$0xff] %v3663
      %4049 = vst [vmem:[#allocation2 + $0x348] sm:$0xff] %v3664
      %4050 = vst [vmem:[#allocation2 + $0x350] sm:$0xff] %v3665
      %4051 = vst [vmem:[#allocation2 + $0x358] sm:$0xff] %v3666
      %4052 = vst [vmem:[#allocation2 + $0x360] sm:$0xff] %v3667
      %4053 = vst [vmem:[#allocation2 + $0x368] sm:$0xff] %v3668
      %4054 = vst [vmem:[#allocation2 + $0x370] sm:$0xff] %v3669
      %4055 = vst [vmem:[#allocation2 + $0x378] sm:$0xff] %v3670
      %4056 = vst [vmem:[#allocation2 + $0x380] sm:$0xff] %v3671
      %4057 = vst [vmem:[#allocation2 + $0x388] sm:$0xff] %v3672
      %4058 = vst [vmem:[#allocation2 + $0x390] sm:$0xff] %v3673
      %4059 = vst [vmem:[#allocation2 + $0x398] sm:$0xff] %v3674
      %4060 = vst [vmem:[#allocation2 + $0x3a0] sm:$0xff] %v3675
      %4061 = vst [vmem:[#allocation2 + $0x3a8] sm:$0xff] %v3676
      %4062 = vst [vmem:[#allocation2 + $0x3b0] sm:$0xff] %v3677
      %4063 = vst [vmem:[#allocation2 + $0x3b8] sm:$0xff] %v3678
      %4064 = vst [vmem:[#allocation2 + $0x3c0] sm:$0xff] %v3679
      %4065 = vst [vmem:[#allocation2 + $0x3c8] sm:$0xff] %v3680
      %4066 = vst [vmem:[#allocation2 + $0x3d0] sm:$0xff] %v3681
      %4067 = vst [vmem:[#allocation2 + $0x3d8] sm:$0xff] %v3682
      %4068 = vst [vmem:[#allocation2 + $0x3e0] sm:$0xff] %v3683
      %4069 = vst [vmem:[#allocation2 + $0x3e8] sm:$0xff] %v3684
      %4070 = vst [vmem:[#allocation2 + $0x3f0] sm:$0xff] %v3685
      %4071 = vst [vmem:[#allocation2 + $0x3f8] sm:$0xff] %v3686
      %4072 = vrot.lane.b32.xlu0 %v3623, 127
      %v4073 = vpop.permute.xlu0 %4072
      %4074 = vrot.lane.b32.xlu0 %v3627, 127
      %v4075 = vpop.permute.xlu0 %4074
      %4076 = vrot.lane.b32.xlu0 %v3631, 127
      %v4077 = vpop.permute.xlu0 %4076
      %4078 = vrot.lane.b32.xlu0 %v3635, 127
      %v4079 = vpop.permute.xlu0 %4078
      %4080 = vrot.lane.b32.xlu0 %v3639, 127
      %v4081 = vpop.permute.xlu0 %4080
      %4082 = vrot.lane.b32.xlu0 %v3643, 127
      %v4083 = vpop.permute.xlu0 %4082
      %4084 = vrot.lane.b32.xlu0 %v3647, 127
      %v4085 = vpop.permute.xlu0 %4084
      %4086 = vrot.lane.b32.xlu0 %v3651, 127
      %v4087 = vpop.permute.xlu0 %4086
      %4088 = vrot.lane.b32.xlu0 %v3655, 127
      %v4089 = vpop.permute.xlu0 %4088
      %4090 = vrot.lane.b32.xlu0 %v3659, 127
      %v4091 = vpop.permute.xlu0 %4090
      %4092 = vrot.lane.b32.xlu0 %v3663, 127
      %v4093 = vpop.permute.xlu0 %4092
      %4094 = vrot.lane.b32.xlu0 %v3667, 127
      %v4095 = vpop.permute.xlu0 %4094
      %4096 = vrot.lane.b32.xlu0 %v3671, 127
      %v4097 = vpop.permute.xlu0 %4096
      %4098 = vrot.lane.b32.xlu0 %v3675, 127
      %v4099 = vpop.permute.xlu0 %4098
      %4100 = vrot.lane.b32.xlu0 %v3679, 127
      %v4101 = vpop.permute.xlu0 %4100
      %4102 = vrot.lane.b32.xlu0 %v3683, 127
      %v4103 = vpop.permute.xlu0 %4102
      %4104 = vrot.lane.b32.xlu0 %v3624, 127
      %v4105 = vpop.permute.xlu0 %4104
      %4106 = vrot.lane.b32.xlu0 %v3628, 127
      %v4107 = vpop.permute.xlu0 %4106
      %4108 = vrot.lane.b32.xlu0 %v3632, 127
      %v4109 = vpop.permute.xlu0 %4108
      %4110 = vrot.lane.b32.xlu0 %v3636, 127
      %v4111 = vpop.permute.xlu0 %4110
      %4112 = vrot.lane.b32.xlu0 %v3640, 127
      %v4113 = vpop.permute.xlu0 %4112
      %4114 = vrot.lane.b32.xlu0 %v3644, 127
      %v4115 = vpop.permute.xlu0 %4114
      %4116 = vrot.lane.b32.xlu0 %v3648, 127
      %v4117 = vpop.permute.xlu0 %4116
      %4118 = vrot.lane.b32.xlu0 %v3652, 127
      %v4119 = vpop.permute.xlu0 %4118
      %4120 = vrot.lane.b32.xlu0 %v3656, 127
      %v4121 = vpop.permute.xlu0 %4120
      %4122 = vrot.lane.b32.xlu0 %v3660, 127
      %v4123 = vpop.permute.xlu0 %4122
      %4124 = vrot.lane.b32.xlu0 %v3664, 127
      %v4125 = vpop.permute.xlu0 %4124
      %4126 = vrot.lane.b32.xlu0 %v3668, 127
      %v4127 = vpop.permute.xlu0 %4126
      %4128 = vrot.lane.b32.xlu0 %v3672, 127
      %v4129 = vpop.permute.xlu0 %4128
      %4130 = vrot.lane.b32.xlu0 %v3676, 127
      %v4131 = vpop.permute.xlu0 %4130
      %4132 = vrot.lane.b32.xlu0 %v3680, 127
      %v4133 = vpop.permute.xlu0 %4132
      %4134 = vrot.lane.b32.xlu0 %v3684, 127
      %v4135 = vpop.permute.xlu0 %4134
      %4136 = vrot.lane.b32.xlu0 %v3625, 127
      %v4137 = vpop.permute.xlu0 %4136
      %4138 = vrot.lane.b32.xlu0 %v3629, 127
      %v4139 = vpop.permute.xlu0 %4138
      %4140 = vrot.lane.b32.xlu0 %v3633, 127
      %v4141 = vpop.permute.xlu0 %4140
      %4142 = vrot.lane.b32.xlu0 %v3637, 127
      %v4143 = vpop.permute.xlu0 %4142
      %4144 = vrot.lane.b32.xlu0 %v3641, 127
      %v4145 = vpop.permute.xlu0 %4144
      %4146 = vrot.lane.b32.xlu0 %v3645, 127
      %v4147 = vpop.permute.xlu0 %4146
      %4148 = vrot.lane.b32.xlu0 %v3649, 127
      %v4149 = vpop.permute.xlu0 %4148
      %4150 = vrot.lane.b32.xlu0 %v3653, 127
      %v4151 = vpop.permute.xlu0 %4150
      %4152 = vrot.lane.b32.xlu0 %v3657, 127
      %v4153 = vpop.permute.xlu0 %4152
      %4154 = vrot.lane.b32.xlu0 %v3661, 127
      %v4155 = vpop.permute.xlu0 %4154
      %4156 = vrot.lane.b32.xlu0 %v3665, 127
      %v4157 = vpop.permute.xlu0 %4156
      %4158 = vrot.lane.b32.xlu0 %v3669, 127
      %v4159 = vpop.permute.xlu0 %4158
      %4160 = vrot.lane.b32.xlu0 %v3673, 127
      %v4161 = vpop.permute.xlu0 %4160
      %4162 = vrot.lane.b32.xlu0 %v3677, 127
      %v4163 = vpop.permute.xlu0 %4162
      %4164 = vrot.lane.b32.xlu0 %v3681, 127
      %v4165 = vpop.permute.xlu0 %4164
      %4166 = vrot.lane.b32.xlu0 %v3685, 127
      %v4167 = vpop.permute.xlu0 %4166
      %4168 = vrot.lane.b32.xlu0 %v3626, 127
      %v4169 = vpop.permute.xlu0 %4168
      %4170 = vrot.lane.b32.xlu0 %v3630, 127
      %v4171 = vpop.permute.xlu0 %4170
      %4172 = vrot.lane.b32.xlu0 %v3634, 127
      %v4173 = vpop.permute.xlu0 %4172
      %4174 = vrot.lane.b32.xlu0 %v3638, 127
      %v4175 = vpop.permute.xlu0 %4174
      %4176 = vrot.lane.b32.xlu0 %v3642, 127
      %v4177 = vpop.permute.xlu0 %4176
      %4178 = vrot.lane.b32.xlu0 %v3646, 127
      %v4179 = vpop.permute.xlu0 %4178
      %4180 = vrot.lane.b32.xlu0 %v3650, 127
      %v4181 = vpop.permute.xlu0 %4180
      %4182 = vrot.lane.b32.xlu0 %v3654, 127
      %v4183 = vpop.permute.xlu0 %4182
      %4184 = vrot.lane.b32.xlu0 %v3658, 127
      %v4185 = vpop.permute.xlu0 %4184
      %4186 = vrot.lane.b32.xlu0 %v3662, 127
      %v4187 = vpop.permute.xlu0 %4186
      %4188 = vrot.lane.b32.xlu0 %v3666, 127
      %v4189 = vpop.permute.xlu0 %4188
      %4190 = vrot.lane.b32.xlu0 %v3670, 127
      %v4191 = vpop.permute.xlu0 %4190
      %4192 = vrot.lane.b32.xlu0 %v3674, 127
      %v4193 = vpop.permute.xlu0 %4192
      %4194 = vrot.lane.b32.xlu0 %v3678, 127
      %v4195 = vpop.permute.xlu0 %4194
      %4196 = vrot.lane.b32.xlu0 %v3682, 127
      %v4197 = vpop.permute.xlu0 %4196
      %4198 = vrot.lane.b32.xlu0 %v3686, 127
      %v4199 = vpop.permute.xlu0 %4198
      %v4200 = vsel %vm765, %v4137, %v4169
      %v4201 = vsel %vm765, %v4139, %v4171
      %v4202 = vsel %vm765, %v4141, %v4173
      %v4203 = vsel %vm765, %v4143, %v4175
      %v4204 = vsel %vm765, %v4145, %v4177
      %v4205 = vsel %vm765, %v4147, %v4179
      %v4206 = vsel %vm765, %v4149, %v4181
      %v4207 = vsel %vm765, %v4151, %v4183
      %v4208 = vsel %vm765, %v4153, %v4185
      %v4209 = vsel %vm765, %v4155, %v4187
      %v4210 = vsel %vm765, %v4157, %v4189
      %v4211 = vsel %vm765, %v4159, %v4191
      %v4212 = vsel %vm765, %v4161, %v4193
      %v4213 = vsel %vm765, %v4163, %v4195
      %v4214 = vsel %vm765, %v4165, %v4197
      %v4215 = vsel %vm765, %v4167, %v4199
      %v4216 = vsel %vm765, %v4105, %v4137
      %v4217 = vsel %vm765, %v4107, %v4139
      %v4218 = vsel %vm765, %v4109, %v4141
      %v4219 = vsel %vm765, %v4111, %v4143
      %v4220 = vsel %vm765, %v4113, %v4145
      %v4221 = vsel %vm765, %v4115, %v4147
      %v4222 = vsel %vm765, %v4117, %v4149
      %v4223 = vsel %vm765, %v4119, %v4151
      %v4224 = vsel %vm765, %v4121, %v4153
      %v4225 = vsel %vm765, %v4123, %v4155
      %v4226 = vsel %vm765, %v4125, %v4157
      %v4227 = vsel %vm765, %v4127, %v4159
      %v4228 = vsel %vm765, %v4129, %v4161
      %v4229 = vsel %vm765, %v4131, %v4163
      %v4230 = vsel %vm765, %v4133, %v4165
      %v4231 = vsel %vm765, %v4135, %v4167
      %v4232 = vsel %vm765, %v4073, %v4105
      %v4233 = vsel %vm765, %v4075, %v4107
      %v4234 = vsel %vm765, %v4077, %v4109
      %v4235 = vsel %vm765, %v4079, %v4111
      %v4236 = vsel %vm765, %v4081, %v4113
      %v4237 = vsel %vm765, %v4083, %v4115
      %v4238 = vsel %vm765, %v4085, %v4117
      %v4239 = vsel %vm765, %v4087, %v4119
      %v4240 = vsel %vm765, %v4089, %v4121
      %v4241 = vsel %vm765, %v4091, %v4123
      %v4242 = vsel %vm765, %v4093, %v4125
      %v4243 = vsel %vm765, %v4095, %v4127
      %v4244 = vsel %vm765, %v4097, %v4129
      %v4245 = vsel %vm765, %v4099, %v4131
      %v4246 = vsel %vm765, %v4101, %v4133
      %v4247 = vsel %vm765, %v4103, %v4135
      %v4248 = vsel %vm765, %v4169, %v4073
      %v4249 = vsel %vm765, %v4171, %v4075
      %v4250 = vsel %vm765, %v4173, %v4077
      %v4251 = vsel %vm765, %v4175, %v4079
      %v4252 = vsel %vm765, %v4177, %v4081
      %v4253 = vsel %vm765, %v4179, %v4083
      %v4254 = vsel %vm765, %v4181, %v4085
      %v4255 = vsel %vm765, %v4183, %v4087
      %v4256 = vsel %vm765, %v4185, %v4089
      %v4257 = vsel %vm765, %v4187, %v4091
      %v4258 = vsel %vm765, %v4189, %v4093
      %v4259 = vsel %vm765, %v4191, %v4095
      %v4260 = vsel %vm765, %v4193, %v4097
      %v4261 = vsel %vm765, %v4195, %v4099
      %v4262 = vsel %vm765, %v4197, %v4101
      %v4263 = vsel %vm765, %v4199, %v4103
      %4264 = vst [vmem:[#allocation2 + $0x400] sm:$0xff] %v4232
      %4265 = vst [vmem:[#allocation2 + $0x408] sm:$0xff] %v4216
      %4266 = vst [vmem:[#allocation2 + $0x410] sm:$0xff] %v4200
      %4267 = vst [vmem:[#allocation2 + $0x418] sm:$0xff] %v4248
      %4268 = vst [vmem:[#allocation2 + $0x420] sm:$0xff] %v4233
      %4269 = vst [vmem:[#allocation2 + $0x428] sm:$0xff] %v4217
      %4270 = vst [vmem:[#allocation2 + $0x430] sm:$0xff] %v4201
      %4271 = vst [vmem:[#allocation2 + $0x438] sm:$0xff] %v4249
      %4272 = vst [vmem:[#allocation2 + $0x440] sm:$0xff] %v4234
      %4273 = vst [vmem:[#allocation2 + $0x448] sm:$0xff] %v4218
      %4274 = vst [vmem:[#allocation2 + $0x450] sm:$0xff] %v4202
      %4275 = vst [vmem:[#allocation2 + $0x458] sm:$0xff] %v4250
      %4276 = vst [vmem:[#allocation2 + $0x460] sm:$0xff] %v4235
      %4277 = vst [vmem:[#allocation2 + $0x468] sm:$0xff] %v4219
      %4278 = vst [vmem:[#allocation2 + $0x470] sm:$0xff] %v4203
      %4279 = vst [vmem:[#allocation2 + $0x478] sm:$0xff] %v4251
      %4280 = vst [vmem:[#allocation2 + $0x480] sm:$0xff] %v4236
      %4281 = vst [vmem:[#allocation2 + $0x488] sm:$0xff] %v4220
      %4282 = vst [vmem:[#allocation2 + $0x490] sm:$0xff] %v4204
      %4283 = vst [vmem:[#allocation2 + $0x498] sm:$0xff] %v4252
      %4284 = vst [vmem:[#allocation2 + $0x4a0] sm:$0xff] %v4237
      %4285 = vst [vmem:[#allocation2 + $0x4a8] sm:$0xff] %v4221
      %4286 = vst [vmem:[#allocation2 + $0x4b0] sm:$0xff] %v4205
      %4287 = vst [vmem:[#allocation2 + $0x4b8] sm:$0xff] %v4253
      %4288 = vst [vmem:[#allocation2 + $0x4c0] sm:$0xff] %v4238
      %4289 = vst [vmem:[#allocation2 + $0x4c8] sm:$0xff] %v4222
      %4290 = vst [vmem:[#allocation2 + $0x4d0] sm:$0xff] %v4206
      %4291 = vst [vmem:[#allocation2 + $0x4d8] sm:$0xff] %v4254
      %4292 = vst [vmem:[#allocation2 + $0x4e0] sm:$0xff] %v4239
      %4293 = vst [vmem:[#allocation2 + $0x4e8] sm:$0xff] %v4223
      %4294 = vst [vmem:[#allocation2 + $0x4f0] sm:$0xff] %v4207
      %4295 = vst [vmem:[#allocation2 + $0x4f8] sm:$0xff] %v4255
      %4296 = vst [vmem:[#allocation2 + $0x500] sm:$0xff] %v4240
      %4297 = vst [vmem:[#allocation2 + $0x508] sm:$0xff] %v4224
      %4298 = vst [vmem:[#allocation2 + $0x510] sm:$0xff] %v4208
      %4299 = vst [vmem:[#allocation2 + $0x518] sm:$0xff] %v4256
      %4300 = vst [vmem:[#allocation2 + $0x520] sm:$0xff] %v4241
      %4301 = vst [vmem:[#allocation2 + $0x528] sm:$0xff] %v4225
      %4302 = vst [vmem:[#allocation2 + $0x530] sm:$0xff] %v4209
      %4303 = vst [vmem:[#allocation2 + $0x538] sm:$0xff] %v4257
      %4304 = vst [vmem:[#allocation2 + $0x540] sm:$0xff] %v4242
      %4305 = vst [vmem:[#allocation2 + $0x548] sm:$0xff] %v4226
      %4306 = vst [vmem:[#allocation2 + $0x550] sm:$0xff] %v4210
      %4307 = vst [vmem:[#allocation2 + $0x558] sm:$0xff] %v4258
      %4308 = vst [vmem:[#allocation2 + $0x560] sm:$0xff] %v4243
      %4309 = vst [vmem:[#allocation2 + $0x568] sm:$0xff] %v4227
      %4310 = vst [vmem:[#allocation2 + $0x570] sm:$0xff] %v4211
      %4311 = vst [vmem:[#allocation2 + $0x578] sm:$0xff] %v4259
      %4312 = vst [vmem:[#allocation2 + $0x580] sm:$0xff] %v4244
      %4313 = vst [vmem:[#allocation2 + $0x588] sm:$0xff] %v4228
      %4314 = vst [vmem:[#allocation2 + $0x590] sm:$0xff] %v4212
      %4315 = vst [vmem:[#allocation2 + $0x598] sm:$0xff] %v4260
      %4316 = vst [vmem:[#allocation2 + $0x5a0] sm:$0xff] %v4245
      %4317 = vst [vmem:[#allocation2 + $0x5a8] sm:$0xff] %v4229
      %4318 = vst [vmem:[#allocation2 + $0x5b0] sm:$0xff] %v4213
      %4319 = vst [vmem:[#allocation2 + $0x5b8] sm:$0xff] %v4261
      %4320 = vst [vmem:[#allocation2 + $0x5c0] sm:$0xff] %v4246
      %4321 = vst [vmem:[#allocation2 + $0x5c8] sm:$0xff] %v4230
      %4322 = vst [vmem:[#allocation2 + $0x5d0] sm:$0xff] %v4214
      %4323 = vst [vmem:[#allocation2 + $0x5d8] sm:$0xff] %v4262
      %4324 = vst [vmem:[#allocation2 + $0x5e0] sm:$0xff] %v4247
      %4325 = vst [vmem:[#allocation2 + $0x5e8] sm:$0xff] %v4231
      %4326 = vst [vmem:[#allocation2 + $0x5f0] sm:$0xff] %v4215
      %4327 = vst [vmem:[#allocation2 + $0x5f8] sm:$0xff] %v4263
      %v4328 = vld [vmem:[#allocation2] sm:$0xff]
      %v4329 = vld [vmem:[#allocation2 + $0x8] sm:$0xff]
      %v4330 = vld [vmem:[#allocation2 + $0x10] sm:$0xff]
      %v4331 = vld [vmem:[#allocation2 + $0x18] sm:$0xff]
      %v4332 = vld [vmem:[#allocation2 + $0x20] sm:$0xff]
      %v4333 = vld [vmem:[#allocation2 + $0x28] sm:$0xff]
      %v4334 = vld [vmem:[#allocation2 + $0x30] sm:$0xff]
      %v4335 = vld [vmem:[#allocation2 + $0x38] sm:$0xff]
      %v4336 = vld [vmem:[#allocation2 + $0x40] sm:$0xff]
      %v4337 = vld [vmem:[#allocation2 + $0x48] sm:$0xff]
      %v4338 = vld [vmem:[#allocation2 + $0x50] sm:$0xff]
      %v4339 = vld [vmem:[#allocation2 + $0x58] sm:$0xff]
      %v4340 = vld [vmem:[#allocation2 + $0x60] sm:$0xff]
      %v4341 = vld [vmem:[#allocation2 + $0x68] sm:$0xff]
      %v4342 = vld [vmem:[#allocation2 + $0x70] sm:$0xff]
      %v4343 = vld [vmem:[#allocation2 + $0x78] sm:$0xff]
      %v4344 = vld [vmem:[#allocation2 + $0x80] sm:$0xff]
      %v4345 = vld [vmem:[#allocation2 + $0x88] sm:$0xff]
      %v4346 = vld [vmem:[#allocation2 + $0x90] sm:$0xff]
      %v4347 = vld [vmem:[#allocation2 + $0x98] sm:$0xff]
      %v4348 = vld [vmem:[#allocation2 + $0xa0] sm:$0xff]
      %v4349 = vld [vmem:[#allocation2 + $0xa8] sm:$0xff]
      %v4350 = vld [vmem:[#allocation2 + $0xb0] sm:$0xff]
      %v4351 = vld [vmem:[#allocation2 + $0xb8] sm:$0xff]
      %v4352 = vld [vmem:[#allocation2 + $0xc0] sm:$0xff]
      %v4353 = vld [vmem:[#allocation2 + $0xc8] sm:$0xff]
      %v4354 = vld [vmem:[#allocation2 + $0xd0] sm:$0xff]
      %v4355 = vld [vmem:[#allocation2 + $0xd8] sm:$0xff]
      %v4356 = vld [vmem:[#allocation2 + $0xe0] sm:$0xff]
      %v4357 = vld [vmem:[#allocation2 + $0xe8] sm:$0xff]
      %v4358 = vld [vmem:[#allocation2 + $0xf0] sm:$0xff]
      %v4359 = vld [vmem:[#allocation2 + $0xf8] sm:$0xff]
      %v4360 = vld [vmem:[#allocation2 + $0x100] sm:$0xff]
      %v4361 = vld [vmem:[#allocation2 + $0x108] sm:$0xff]
      %v4362 = vld [vmem:[#allocation2 + $0x110] sm:$0xff]
      %v4363 = vld [vmem:[#allocation2 + $0x118] sm:$0xff]
      %v4364 = vld [vmem:[#allocation2 + $0x120] sm:$0xff]
      %v4365 = vld [vmem:[#allocation2 + $0x128] sm:$0xff]
      %v4366 = vld [vmem:[#allocation2 + $0x130] sm:$0xff]
      %v4367 = vld [vmem:[#allocation2 + $0x138] sm:$0xff]
      %v4368 = vld [vmem:[#allocation2 + $0x140] sm:$0xff]
      %v4369 = vld [vmem:[#allocation2 + $0x148] sm:$0xff]
      %v4370 = vld [vmem:[#allocation2 + $0x150] sm:$0xff]
      %v4371 = vld [vmem:[#allocation2 + $0x158] sm:$0xff]
      %v4372 = vld [vmem:[#allocation2 + $0x160] sm:$0xff]
      %v4373 = vld [vmem:[#allocation2 + $0x168] sm:$0xff]
      %v4374 = vld [vmem:[#allocation2 + $0x170] sm:$0xff]
      %v4375 = vld [vmem:[#allocation2 + $0x178] sm:$0xff]
      %v4376 = vld [vmem:[#allocation2 + $0x180] sm:$0xff]
      %v4377 = vld [vmem:[#allocation2 + $0x188] sm:$0xff]
      %v4378 = vld [vmem:[#allocation2 + $0x190] sm:$0xff]
      %v4379 = vld [vmem:[#allocation2 + $0x198] sm:$0xff]
      %v4380 = vld [vmem:[#allocation2 + $0x1a0] sm:$0xff]
      %v4381 = vld [vmem:[#allocation2 + $0x1a8] sm:$0xff]
      %v4382 = vld [vmem:[#allocation2 + $0x1b0] sm:$0xff]
      %v4383 = vld [vmem:[#allocation2 + $0x1b8] sm:$0xff]
      %v4384 = vld [vmem:[#allocation2 + $0x1c0] sm:$0xff]
      %v4385 = vld [vmem:[#allocation2 + $0x1c8] sm:$0xff]
      %v4386 = vld [vmem:[#allocation2 + $0x1d0] sm:$0xff]
      %v4387 = vld [vmem:[#allocation2 + $0x1d8] sm:$0xff]
      %v4388 = vld [vmem:[#allocation2 + $0x1e0] sm:$0xff]
      %v4389 = vld [vmem:[#allocation2 + $0x1e8] sm:$0xff]
      %v4390 = vld [vmem:[#allocation2 + $0x1f0] sm:$0xff]
      %v4391 = vld [vmem:[#allocation2 + $0x1f8] sm:$0xff]
      %v4392 = vld [vmem:[#allocation2 + $0x200] sm:$0xff]
      %v4393 = vld [vmem:[#allocation2 + $0x208] sm:$0xff]
      %v4394 = vld [vmem:[#allocation2 + $0x210] sm:$0xff]
      %v4395 = vld [vmem:[#allocation2 + $0x218] sm:$0xff]
      %v4396 = vld [vmem:[#allocation2 + $0x220] sm:$0xff]
      %v4397 = vld [vmem:[#allocation2 + $0x228] sm:$0xff]
      %v4398 = vld [vmem:[#allocation2 + $0x230] sm:$0xff]
      %v4399 = vld [vmem:[#allocation2 + $0x238] sm:$0xff]
      %v4400 = vld [vmem:[#allocation2 + $0x240] sm:$0xff]
      %v4401 = vld [vmem:[#allocation2 + $0x248] sm:$0xff]
      %v4402 = vld [vmem:[#allocation2 + $0x250] sm:$0xff]
      %v4403 = vld [vmem:[#allocation2 + $0x258] sm:$0xff]
      %v4404 = vld [vmem:[#allocation2 + $0x260] sm:$0xff]
      %v4405 = vld [vmem:[#allocation2 + $0x268] sm:$0xff]
      %v4406 = vld [vmem:[#allocation2 + $0x270] sm:$0xff]
      %v4407 = vld [vmem:[#allocation2 + $0x278] sm:$0xff]
      %v4408 = vld [vmem:[#allocation2 + $0x280] sm:$0xff]
      %v4409 = vld [vmem:[#allocation2 + $0x288] sm:$0xff]
      %v4410 = vld [vmem:[#allocation2 + $0x290] sm:$0xff]
      %v4411 = vld [vmem:[#allocation2 + $0x298] sm:$0xff]
      %v4412 = vld [vmem:[#allocation2 + $0x2a0] sm:$0xff]
      %v4413 = vld [vmem:[#allocation2 + $0x2a8] sm:$0xff]
      %v4414 = vld [vmem:[#allocation2 + $0x2b0] sm:$0xff]
      %v4415 = vld [vmem:[#allocation2 + $0x2b8] sm:$0xff]
      %v4416 = vld [vmem:[#allocation2 + $0x2c0] sm:$0xff]
      %v4417 = vld [vmem:[#allocation2 + $0x2c8] sm:$0xff]
      %v4418 = vld [vmem:[#allocation2 + $0x2d0] sm:$0xff]
      %v4419 = vld [vmem:[#allocation2 + $0x2d8] sm:$0xff]
      %v4420 = vld [vmem:[#allocation2 + $0x2e0] sm:$0xff]
      %v4421 = vld [vmem:[#allocation2 + $0x2e8] sm:$0xff]
      %v4422 = vld [vmem:[#allocation2 + $0x2f0] sm:$0xff]
      %v4423 = vld [vmem:[#allocation2 + $0x2f8] sm:$0xff]
      %v4424 = vld [vmem:[#allocation2 + $0x300] sm:$0xff]
      %v4425 = vld [vmem:[#allocation2 + $0x308] sm:$0xff]
      %v4426 = vld [vmem:[#allocation2 + $0x310] sm:$0xff]
      %v4427 = vld [vmem:[#allocation2 + $0x318] sm:$0xff]
      %v4428 = vld [vmem:[#allocation2 + $0x320] sm:$0xff]
      %v4429 = vld [vmem:[#allocation2 + $0x328] sm:$0xff]
      %v4430 = vld [vmem:[#allocation2 + $0x330] sm:$0xff]
      %v4431 = vld [vmem:[#allocation2 + $0x338] sm:$0xff]
      %v4432 = vld [vmem:[#allocation2 + $0x340] sm:$0xff]
      %v4433 = vld [vmem:[#allocation2 + $0x348] sm:$0xff]
      %v4434 = vld [vmem:[#allocation2 + $0x350] sm:$0xff]
      %v4435 = vld [vmem:[#allocation2 + $0x358] sm:$0xff]
      %v4436 = vld [vmem:[#allocation2 + $0x360] sm:$0xff]
      %v4437 = vld [vmem:[#allocation2 + $0x368] sm:$0xff]
      %v4438 = vld [vmem:[#allocation2 + $0x370] sm:$0xff]
      %v4439 = vld [vmem:[#allocation2 + $0x378] sm:$0xff]
      %v4440 = vld [vmem:[#allocation2 + $0x380] sm:$0xff]
      %v4441 = vld [vmem:[#allocation2 + $0x388] sm:$0xff]
      %v4442 = vld [vmem:[#allocation2 + $0x390] sm:$0xff]
      %v4443 = vld [vmem:[#allocation2 + $0x398] sm:$0xff]
      %v4444 = vld [vmem:[#allocation2 + $0x3a0] sm:$0xff]
      %v4445 = vld [vmem:[#allocation2 + $0x3a8] sm:$0xff]
      %v4446 = vld [vmem:[#allocation2 + $0x3b0] sm:$0xff]
      %v4447 = vld [vmem:[#allocation2 + $0x3b8] sm:$0xff]
      %v4448 = vld [vmem:[#allocation2 + $0x3c0] sm:$0xff]
      %v4449 = vld [vmem:[#allocation2 + $0x3c8] sm:$0xff]
      %v4450 = vld [vmem:[#allocation2 + $0x3d0] sm:$0xff]
      %v4451 = vld [vmem:[#allocation2 + $0x3d8] sm:$0xff]
      %v4452 = vld [vmem:[#allocation2 + $0x3e0] sm:$0xff]
      %v4453 = vld [vmem:[#allocation2 + $0x3e8] sm:$0xff]
      %v4454 = vld [vmem:[#allocation2 + $0x3f0] sm:$0xff]
      %v4455 = vld [vmem:[#allocation2 + $0x3f8] sm:$0xff]
      %v4456 = vld [vmem:[#allocation2 + $0x400] sm:$0xff]
      %v4457 = vld [vmem:[#allocation2 + $0x408] sm:$0xff]
      %v4458 = vld [vmem:[#allocation2 + $0x410] sm:$0xff]
      %v4459 = vld [vmem:[#allocation2 + $0x418] sm:$0xff]
      %v4460 = vld [vmem:[#allocation2 + $0x420] sm:$0xff]
      %v4461 = vld [vmem:[#allocation2 + $0x428] sm:$0xff]
      %v4462 = vld [vmem:[#allocation2 + $0x430] sm:$0xff]
      %v4463 = vld [vmem:[#allocation2 + $0x438] sm:$0xff]
      %v4464 = vld [vmem:[#allocation2 + $0x440] sm:$0xff]
      %v4465 = vld [vmem:[#allocation2 + $0x448] sm:$0xff]
      %v4466 = vld [vmem:[#allocation2 + $0x450] sm:$0xff]
      %v4467 = vld [vmem:[#allocation2 + $0x458] sm:$0xff]
      %v4468 = vld [vmem:[#allocation2 + $0x460] sm:$0xff]
      %v4469 = vld [vmem:[#allocation2 + $0x468] sm:$0xff]
      %v4470 = vld [vmem:[#allocation2 + $0x470] sm:$0xff]
      %v4471 = vld [vmem:[#allocation2 + $0x478] sm:$0xff]
      %v4472 = vld [vmem:[#allocation2 + $0x480] sm:$0xff]
      %v4473 = vld [vmem:[#allocation2 + $0x488] sm:$0xff]
      %v4474 = vld [vmem:[#allocation2 + $0x490] sm:$0xff]
      %v4475 = vld [vmem:[#allocation2 + $0x498] sm:$0xff]
      %v4476 = vld [vmem:[#allocation2 + $0x4a0] sm:$0xff]
      %v4477 = vld [vmem:[#allocation2 + $0x4a8] sm:$0xff]
      %v4478 = vld [vmem:[#allocation2 + $0x4b0] sm:$0xff]
      %v4479 = vld [vmem:[#allocation2 + $0x4b8] sm:$0xff]
      %v4480 = vld [vmem:[#allocation2 + $0x4c0] sm:$0xff]
      %v4481 = vld [vmem:[#allocation2 + $0x4c8] sm:$0xff]
      %v4482 = vld [vmem:[#allocation2 + $0x4d0] sm:$0xff]
      %v4483 = vld [vmem:[#allocation2 + $0x4d8] sm:$0xff]
      %v4484 = vld [vmem:[#allocation2 + $0x4e0] sm:$0xff]
      %v4485 = vld [vmem:[#allocation2 + $0x4e8] sm:$0xff]
      %v4486 = vld [vmem:[#allocation2 + $0x4f0] sm:$0xff]
      %v4487 = vld [vmem:[#allocation2 + $0x4f8] sm:$0xff]
      %v4488 = vld [vmem:[#allocation2 + $0x500] sm:$0xff]
      %v4489 = vld [vmem:[#allocation2 + $0x508] sm:$0xff]
      %v4490 = vld [vmem:[#allocation2 + $0x510] sm:$0xff]
      %v4491 = vld [vmem:[#allocation2 + $0x518] sm:$0xff]
      %v4492 = vld [vmem:[#allocation2 + $0x520] sm:$0xff]
      %v4493 = vld [vmem:[#allocation2 + $0x528] sm:$0xff]
      %v4494 = vld [vmem:[#allocation2 + $0x530] sm:$0xff]
      %v4495 = vld [vmem:[#allocation2 + $0x538] sm:$0xff]
      %v4496 = vld [vmem:[#allocation2 + $0x540] sm:$0xff]
      %v4497 = vld [vmem:[#allocation2 + $0x548] sm:$0xff]
      %v4498 = vld [vmem:[#allocation2 + $0x550] sm:$0xff]
      %v4499 = vld [vmem:[#allocation2 + $0x558] sm:$0xff]
      %v4500 = vld [vmem:[#allocation2 + $0x560] sm:$0xff]
      %v4501 = vld [vmem:[#allocation2 + $0x568] sm:$0xff]
      %v4502 = vld [vmem:[#allocation2 + $0x570] sm:$0xff]
      %v4503 = vld [vmem:[#allocation2 + $0x578] sm:$0xff]
      %v4504 = vld [vmem:[#allocation2 + $0x580] sm:$0xff]
      %v4505 = vld [vmem:[#allocation2 + $0x588] sm:$0xff]
      %v4506 = vld [vmem:[#allocation2 + $0x590] sm:$0xff]
      %v4507 = vld [vmem:[#allocation2 + $0x598] sm:$0xff]
      %v4508 = vld [vmem:[#allocation2 + $0x5a0] sm:$0xff]
      %v4509 = vld [vmem:[#allocation2 + $0x5a8] sm:$0xff]
      %v4510 = vld [vmem:[#allocation2 + $0x5b0] sm:$0xff]
      %v4511 = vld [vmem:[#allocation2 + $0x5b8] sm:$0xff]
      %v4512 = vld [vmem:[#allocation2 + $0x5c0] sm:$0xff]
      %v4513 = vld [vmem:[#allocation2 + $0x5c8] sm:$0xff]
      %v4514 = vld [vmem:[#allocation2 + $0x5d0] sm:$0xff]
      %v4515 = vld [vmem:[#allocation2 + $0x5d8] sm:$0xff]
      %v4516 = vld [vmem:[#allocation2 + $0x5e0] sm:$0xff]
      %v4517 = vld [vmem:[#allocation2 + $0x5e8] sm:$0xff]
      %v4518 = vld [vmem:[#allocation2 + $0x5f0] sm:$0xff]
      %v4519 = vld [vmem:[#allocation2 + $0x5f8] sm:$0xff]
      %4521 = vset.pattern.permute.xlu0 2
      %4522 = vperm.xlu0 %4521, %v3736
      %v4523 = vpop.permute.xlu0 %4522
      %4526 = vset.pattern.permute.xlu0 2
      %4527 = vperm.xlu0 %4526, %v3737
      %v4528 = vpop.permute.xlu0 %4527
      %4531 = vset.pattern.permute.xlu0 2
      %4532 = vperm.xlu0 %4531, %v3738
      %v4533 = vpop.permute.xlu0 %4532
      %4536 = vset.pattern.permute.xlu0 2
      %4537 = vperm.xlu0 %4536, %v3739
      %v4538 = vpop.permute.xlu0 %4537
      %4541 = vset.pattern.permute.xlu0 2
      %4542 = vperm.xlu0 %4541, %v3740
      %v4543 = vpop.permute.xlu0 %4542
      %4546 = vset.pattern.permute.xlu0 2
      %4547 = vperm.xlu0 %4546, %v3741
      %v4548 = vpop.permute.xlu0 %4547
      %4551 = vset.pattern.permute.xlu0 2
      %4552 = vperm.xlu0 %4551, %v3742
      %v4553 = vpop.permute.xlu0 %4552
      %4556 = vset.pattern.permute.xlu0 2
      %4557 = vperm.xlu0 %4556, %v3743
      %v4558 = vpop.permute.xlu0 %4557
      %4561 = vset.pattern.permute.xlu0 2
      %4562 = vperm.xlu0 %4561, %v3744
      %v4563 = vpop.permute.xlu0 %4562
      %4566 = vset.pattern.permute.xlu0 2
      %4567 = vperm.xlu0 %4566, %v3745
      %v4568 = vpop.permute.xlu0 %4567
      %4571 = vset.pattern.permute.xlu0 2
      %4572 = vperm.xlu0 %4571, %v3746
      %v4573 = vpop.permute.xlu0 %4572
      %4576 = vset.pattern.permute.xlu0 2
      %4577 = vperm.xlu0 %4576, %v3747
      %v4578 = vpop.permute.xlu0 %4577
      %4581 = vset.pattern.permute.xlu0 2
      %4582 = vperm.xlu0 %4581, %v3748
      %v4583 = vpop.permute.xlu0 %4582
      %4586 = vset.pattern.permute.xlu0 2
      %4587 = vperm.xlu0 %4586, %v3749
      %v4588 = vpop.permute.xlu0 %4587
      %4591 = vset.pattern.permute.xlu0 2
      %4592 = vperm.xlu0 %4591, %v3750
      %v4593 = vpop.permute.xlu0 %4592
      %4596 = vset.pattern.permute.xlu0 2
      %4597 = vperm.xlu0 %4596, %v3751
      %v4598 = vpop.permute.xlu0 %4597
      %4600 = vmatprep.subr.mxu0 %v4389
      %4601 = vmatpush1.msra.mxu0 %v4388
      %4602 = vmatprep.subr.mxu0 %v4385
      %4603 = vmatpush1.msra.mxu0 %v4384
      %4604 = vmatprep.subr.mxu0 %v4381
      %4605 = vmatpush1.msra.mxu0 %v4380
      %4606 = vmatprep.subr.mxu0 %v4377
      %4607 = vmatpush1.msra.mxu0 %v4376
      %4608 = vmatprep.subr.mxu0 %v4373
      %4609 = vmatpush1.msra.mxu0 %v4372
      %4610 = vmatprep.subr.mxu0 %v4369
      %4611 = vmatpush1.msra.mxu0 %v4368
      %4612 = vmatprep.subr.mxu0 %v4365
      %4613 = vmatpush1.msra.mxu0 %v4364
      %4614 = vmatprep.subr.mxu0 %v4361
      %4615 = vmatpush1.msra.mxu0 %v4360
      %4616 = vmatprep.subr.mxu0 %v4357
      %4617 = vmatpush1.msra.mxu0 %v4356
      %4618 = vmatprep.subr.mxu0 %v4353
      %4619 = vmatpush1.msra.mxu0 %v4352
      %4620 = vmatprep.subr.mxu0 %v4349
      %4621 = vmatpush1.msra.mxu0 %v4348
      %4622 = vmatprep.subr.mxu0 %v4345
      %4623 = vmatpush1.msra.mxu0 %v4344
      %4624 = vmatprep.subr.mxu0 %v4341
      %4625 = vmatpush1.msra.mxu0 %v4340
      %4626 = vmatprep.subr.mxu0 %v4337
      %4627 = vmatpush1.msra.mxu0 %v4336
      %4628 = vmatprep.subr.mxu0 %v4333
      %4629 = vmatpush1.msra.mxu0 %v4332
      %4630 = vmatprep.subr.mxu0 %v4329
      %4631 = vmatpush1.msra.mxu0 %v4328
      %4632 = vmatprep.subr.mxu0 %v4453
      %4633 = vmatpush2.msra.mxu0 %v4452
      %4634 = vmatprep.subr.mxu0 %v4449
      %4635 = vmatpush2.msra.mxu0 %v4448
      %4636 = vmatprep.subr.mxu0 %v4445
      %4637 = vmatpush2.msra.mxu0 %v4444
      %4638 = vmatprep.subr.mxu0 %v4441
      %4639 = vmatpush2.msra.mxu0 %v4440
      %4640 = vmatprep.subr.mxu0 %v4437
      %4641 = vmatpush2.msra.mxu0 %v4436
      %4642 = vmatprep.subr.mxu0 %v4433
      %4643 = vmatpush2.msra.mxu0 %v4432
      %4644 = vmatprep.subr.mxu0 %v4429
      %4645 = vmatpush2.msra.mxu0 %v4428
      %4646 = vmatprep.subr.mxu0 %v4425
      %4647 = vmatpush2.msra.mxu0 %v4424
      %4648 = vmatprep.subr.mxu0 %v4421
      %4649 = vmatpush2.msra.mxu0 %v4420
      %4650 = vmatprep.subr.mxu0 %v4417
      %4651 = vmatpush2.msra.mxu0 %v4416
      %4652 = vmatprep.subr.mxu0 %v4413
      %4653 = vmatpush2.msra.mxu0 %v4412
      %4654 = vmatprep.subr.mxu0 %v4409
      %4655 = vmatpush2.msra.mxu0 %v4408
      %4656 = vmatprep.subr.mxu0 %v4405
      %4657 = vmatpush2.msra.mxu0 %v4404
      %4658 = vmatprep.subr.mxu0 %v4401
      %4659 = vmatpush2.msra.mxu0 %v4400
      %4660 = vmatprep.subr.mxu0 %v4397
      %4661 = vmatpush2.msra.mxu0 %v4396
      %4662 = vmatprep.subr.mxu0 %v4393
      %4663 = vmatpush2.msra.mxu0 %v4392
      %4664 = vmatprep.mubr.f32.mxu0 %v3689
      %4665 = vmatmul.mubr.f32.gmra.mxu0 %v3688
      %v4666 = vpop.f32.mrf.mxu0
      %v4667 = vadd.f32 %v4523, %v4666
      %v4668 = vpop.f32.mrf.mxu0
      %v4669 = vadd.f32 %v4523, %v4668
      %4670 = vmatprep.mubr.f32.mxu0 %v3692
      %4671 = vmatmul.mubr.f32.gmra.mxu0 %v3691
      %v4672 = vpop.f32.mrf.mxu0
      %v4673 = vadd.f32 %v4528, %v4672
      %v4674 = vpop.f32.mrf.mxu0
      %v4675 = vadd.f32 %v4528, %v4674
      %4676 = vmatprep.mubr.f32.mxu0 %v3695
      %4677 = vmatmul.mubr.f32.gmra.mxu0 %v3694
      %v4678 = vpop.f32.mrf.mxu0
      %v4679 = vadd.f32 %v4533, %v4678
      %v4680 = vpop.f32.mrf.mxu0
      %v4681 = vadd.f32 %v4533, %v4680
      %4682 = vmatprep.mubr.f32.mxu0 %v3698
      %4683 = vmatmul.mubr.f32.gmra.mxu0 %v3697
      %v4684 = vpop.f32.mrf.mxu0
      %v4685 = vadd.f32 %v4538, %v4684
      %v4686 = vpop.f32.mrf.mxu0
      %v4687 = vadd.f32 %v4538, %v4686
      %4688 = vmatprep.mubr.f32.mxu0 %v3701
      %4689 = vmatmul.mubr.f32.gmra.mxu0 %v3700
      %v4690 = vpop.f32.mrf.mxu0
      %v4691 = vadd.f32 %v4543, %v4690
      %v4692 = vpop.f32.mrf.mxu0
      %v4693 = vadd.f32 %v4543, %v4692
      %4694 = vmatprep.mubr.f32.mxu0 %v3704
      %4695 = vmatmul.mubr.f32.gmra.mxu0 %v3703
      %v4696 = vpop.f32.mrf.mxu0
      %v4697 = vadd.f32 %v4548, %v4696
      %v4698 = vpop.f32.mrf.mxu0
      %v4699 = vadd.f32 %v4548, %v4698
      %4700 = vmatprep.mubr.f32.mxu0 %v3707
      %4701 = vmatmul.mubr.f32.gmra.mxu0 %v3706
      %v4702 = vpop.f32.mrf.mxu0
      %v4703 = vadd.f32 %v4553, %v4702
      %v4704 = vpop.f32.mrf.mxu0
      %v4705 = vadd.f32 %v4553, %v4704
      %4706 = vmatprep.mubr.f32.mxu0 %v3710
      %4707 = vmatmul.mubr.f32.gmra.mxu0 %v3709
      %v4708 = vpop.f32.mrf.mxu0
      %v4709 = vadd.f32 %v4558, %v4708
      %v4710 = vpop.f32.mrf.mxu0
      %v4711 = vadd.f32 %v4558, %v4710
      %4712 = vmatprep.mubr.f32.mxu0 %v3713
      %4713 = vmatmul.mubr.f32.gmra.mxu0 %v3712
      %v4714 = vpop.f32.mrf.mxu0
      %v4715 = vadd.f32 %v4563, %v4714
      %v4716 = vpop.f32.mrf.mxu0
      %v4717 = vadd.f32 %v4563, %v4716
      %4718 = vmatprep.mubr.f32.mxu0 %v3716
      %4719 = vmatmul.mubr.f32.gmra.mxu0 %v3715
      %v4720 = vpop.f32.mrf.mxu0
      %v4721 = vadd.f32 %v4568, %v4720
      %v4722 = vpop.f32.mrf.mxu0
      %v4723 = vadd.f32 %v4568, %v4722
      %4724 = vmatprep.mubr.f32.mxu0 %v3719
      %4725 = vmatmul.mubr.f32.gmra.mxu0 %v3718
      %v4726 = vpop.f32.mrf.mxu0
      %v4727 = vadd.f32 %v4573, %v4726
      %v4728 = vpop.f32.mrf.mxu0
      %v4729 = vadd.f32 %v4573, %v4728
      %4730 = vmatprep.mubr.f32.mxu0 %v3722
      %4731 = vmatmul.mubr.f32.gmra.mxu0 %v3721
      %v4732 = vpop.f32.mrf.mxu0
      %v4733 = vadd.f32 %v4578, %v4732
      %v4734 = vpop.f32.mrf.mxu0
      %v4735 = vadd.f32 %v4578, %v4734
      %4736 = vmatprep.mubr.f32.mxu0 %v3725
      %4737 = vmatmul.mubr.f32.gmra.mxu0 %v3724
      %v4738 = vpop.f32.mrf.mxu0
      %v4739 = vadd.f32 %v4583, %v4738
      %v4740 = vpop.f32.mrf.mxu0
      %v4741 = vadd.f32 %v4583, %v4740
      %4742 = vmatprep.mubr.f32.mxu0 %v3728
      %4743 = vmatmul.mubr.f32.gmra.mxu0 %v3727
      %v4744 = vpop.f32.mrf.mxu0
      %v4745 = vadd.f32 %v4588, %v4744
      %v4746 = vpop.f32.mrf.mxu0
      %v4747 = vadd.f32 %v4588, %v4746
      %4748 = vmatprep.mubr.f32.mxu0 %v3731
      %4749 = vmatmul.mubr.f32.gmra.mxu0 %v3730
      %v4750 = vpop.f32.mrf.mxu0
      %v4751 = vadd.f32 %v4593, %v4750
      %v4752 = vpop.f32.mrf.mxu0
      %v4753 = vadd.f32 %v4593, %v4752
      %4754 = vmatprep.mubr.f32.mxu0 %v3734
      %4755 = vmatmul.mubr.f32.gmra.mxu0 %v3733
      %v4756 = vpop.f32.mrf.mxu0
      %v4757 = vadd.f32 %v4598, %v4756
      %v4758 = vpop.f32.mrf.mxu0
      %v4759 = vadd.f32 %v4598, %v4758
      %4760 = vdwg.mxu0
      %4761 = vmatprep.subr.mxu0 %v4517
      %4762 = vmatpush1.msra.mxu0 %v4516
      %4763 = vmatprep.subr.mxu0 %v4513
      %4764 = vmatpush1.msra.mxu0 %v4512
      %4765 = vmatprep.subr.mxu0 %v4509
      %4766 = vmatpush1.msra.mxu0 %v4508
      %4767 = vmatprep.subr.mxu0 %v4505
      %4768 = vmatpush1.msra.mxu0 %v4504
      %4769 = vmatprep.subr.mxu0 %v4501
      %4770 = vmatpush1.msra.mxu0 %v4500
      %4771 = vmatprep.subr.mxu0 %v4497
      %4772 = vmatpush1.msra.mxu0 %v4496
      %4773 = vmatprep.subr.mxu0 %v4493
      %4774 = vmatpush1.msra.mxu0 %v4492
      %4775 = vmatprep.subr.mxu0 %v4489
      %4776 = vmatpush1.msra.mxu0 %v4488
      %4777 = vmatprep.subr.mxu0 %v4485
      %4778 = vmatpush1.msra.mxu0 %v4484
      %4779 = vmatprep.subr.mxu0 %v4481
      %4780 = vmatpush1.msra.mxu0 %v4480
      %4781 = vmatprep.subr.mxu0 %v4477
      %4782 = vmatpush1.msra.mxu0 %v4476
      %4783 = vmatprep.subr.mxu0 %v4473
      %4784 = vmatpush1.msra.mxu0 %v4472
      %4785 = vmatprep.subr.mxu0 %v4469
      %4786 = vmatpush1.msra.mxu0 %v4468
      %4787 = vmatprep.subr.mxu0 %v4465
      %4788 = vmatpush1.msra.mxu0 %v4464
      %4789 = vmatprep.subr.mxu0 %v4461
      %4790 = vmatpush1.msra.mxu0 %v4460
      %4791 = vmatprep.subr.mxu0 %v4457
      %4792 = vmatpush1.msra.mxu0 %v4456
      %4793 = vmatprep.subr.mxu0 0.0
      %4794 = vmatpush2.msra.mxu0 0.0
      %4795 = vmatprep.subr.mxu0 0.0
      %4796 = vmatpush2.msra.mxu0 0.0
      %4797 = vmatprep.subr.mxu0 0.0
      %4798 = vmatpush2.msra.mxu0 0.0
      %4799 = vmatprep.subr.mxu0 0.0
      %4800 = vmatpush2.msra.mxu0 0.0
      %4801 = vmatprep.subr.mxu0 0.0
      %4802 = vmatpush2.msra.mxu0 0.0
      %4803 = vmatprep.subr.mxu0 0.0
      %4804 = vmatpush2.msra.mxu0 0.0
      %4805 = vmatprep.subr.mxu0 0.0
      %4806 = vmatpush2.msra.mxu0 0.0
      %4807 = vmatprep.subr.mxu0 0.0
      %4808 = vmatpush2.msra.mxu0 0.0
      %4809 = vmatprep.subr.mxu0 0.0
      %4810 = vmatpush2.msra.mxu0 0.0
      %4811 = vmatprep.subr.mxu0 0.0
      %4812 = vmatpush2.msra.mxu0 0.0
      %4813 = vmatprep.subr.mxu0 0.0
      %4814 = vmatpush2.msra.mxu0 0.0
      %4815 = vmatprep.subr.mxu0 0.0
      %4816 = vmatpush2.msra.mxu0 0.0
      %4817 = vmatprep.subr.mxu0 0.0
      %4818 = vmatpush2.msra.mxu0 0.0
      %4819 = vmatprep.subr.mxu0 0.0
      %4820 = vmatpush2.msra.mxu0 0.0
      %4821 = vmatprep.subr.mxu0 0.0
      %4822 = vmatpush2.msra.mxu0 0.0
      %4823 = vmatprep.subr.mxu0 0.0
      %4824 = vmatpush2.msra.mxu0 0.0
      %4825 = vmatprep.mubr.f32.mxu0 0.0
      %4826 = vmatmul.mubr.f32.gmra.mxu0 %v3690
      %v4827 = vpop.f32.mrf.mxu0
      %v4828 = vadd.f32 %v4667, %v4827
      %v4829 = vpop.f32.mrf.mxu0
      %v4830 = vadd.f32 %v4669, %v4829
      %4831 = vmatprep.mubr.f32.mxu0 0.0
      %4832 = vmatmul.mubr.f32.gmra.mxu0 %v3693
      %v4833 = vpop.f32.mrf.mxu0
      %v4834 = vadd.f32 %v4673, %v4833
      %v4835 = vpop.f32.mrf.mxu0
      %v4836 = vadd.f32 %v4675, %v4835
      %4837 = vmatprep.mubr.f32.mxu0 0.0
      %4838 = vmatmul.mubr.f32.gmra.mxu0 %v3696
      %v4839 = vpop.f32.mrf.mxu0
      %v4840 = vadd.f32 %v4679, %v4839
      %v4841 = vpop.f32.mrf.mxu0
      %v4842 = vadd.f32 %v4681, %v4841
      %4843 = vmatprep.mubr.f32.mxu0 0.0
      %4844 = vmatmul.mubr.f32.gmra.mxu0 %v3699
      %v4845 = vpop.f32.mrf.mxu0
      %v4846 = vadd.f32 %v4685, %v4845
      %v4847 = vpop.f32.mrf.mxu0
      %v4848 = vadd.f32 %v4687, %v4847
      %4849 = vmatprep.mubr.f32.mxu0 0.0
      %4850 = vmatmul.mubr.f32.gmra.mxu0 %v3702
      %v4851 = vpop.f32.mrf.mxu0
      %v4852 = vadd.f32 %v4691, %v4851
      %v4853 = vpop.f32.mrf.mxu0
      %v4854 = vadd.f32 %v4693, %v4853
      %4855 = vmatprep.mubr.f32.mxu0 0.0
      %4856 = vmatmul.mubr.f32.gmra.mxu0 %v3705
      %v4857 = vpop.f32.mrf.mxu0
      %v4858 = vadd.f32 %v4697, %v4857
      %v4859 = vpop.f32.mrf.mxu0
      %v4860 = vadd.f32 %v4699, %v4859
      %4861 = vmatprep.mubr.f32.mxu0 0.0
      %4862 = vmatmul.mubr.f32.gmra.mxu0 %v3708
      %v4863 = vpop.f32.mrf.mxu0
      %v4864 = vadd.f32 %v4703, %v4863
      %v4865 = vpop.f32.mrf.mxu0
      %v4866 = vadd.f32 %v4705, %v4865
      %4867 = vmatprep.mubr.f32.mxu0 0.0
      %4868 = vmatmul.mubr.f32.gmra.mxu0 %v3711
      %v4869 = vpop.f32.mrf.mxu0
      %v4870 = vadd.f32 %v4709, %v4869
      %v4871 = vpop.f32.mrf.mxu0
      %v4872 = vadd.f32 %v4711, %v4871
      %4873 = vmatprep.mubr.f32.mxu0 0.0
      %4874 = vmatmul.mubr.f32.gmra.mxu0 %v3714
      %v4875 = vpop.f32.mrf.mxu0
      %v4876 = vadd.f32 %v4715, %v4875
      %v4877 = vpop.f32.mrf.mxu0
      %v4878 = vadd.f32 %v4717, %v4877
      %4879 = vmatprep.mubr.f32.mxu0 0.0
      %4880 = vmatmul.mubr.f32.gmra.mxu0 %v3717
      %v4881 = vpop.f32.mrf.mxu0
      %v4882 = vadd.f32 %v4721, %v4881
      %v4883 = vpop.f32.mrf.mxu0
      %v4884 = vadd.f32 %v4723, %v4883
      %4885 = vmatprep.mubr.f32.mxu0 0.0
      %4886 = vmatmul.mubr.f32.gmra.mxu0 %v3720
      %v4887 = vpop.f32.mrf.mxu0
      %v4888 = vadd.f32 %v4727, %v4887
      %v4889 = vpop.f32.mrf.mxu0
      %v4890 = vadd.f32 %v4729, %v4889
      %4891 = vmatprep.mubr.f32.mxu0 0.0
      %4892 = vmatmul.mubr.f32.gmra.mxu0 %v3723
      %v4893 = vpop.f32.mrf.mxu0
      %v4894 = vadd.f32 %v4733, %v4893
      %v4895 = vpop.f32.mrf.mxu0
      %v4896 = vadd.f32 %v4735, %v4895
      %4897 = vmatprep.mubr.f32.mxu0 0.0
      %4898 = vmatmul.mubr.f32.gmra.mxu0 %v3726
      %v4899 = vpop.f32.mrf.mxu0
      %v4900 = vadd.f32 %v4739, %v4899
      %v4901 = vpop.f32.mrf.mxu0
      %v4902 = vadd.f32 %v4741, %v4901
      %4903 = vmatprep.mubr.f32.mxu0 0.0
      %4904 = vmatmul.mubr.f32.gmra.mxu0 %v3729
      %v4905 = vpop.f32.mrf.mxu0
      %v4906 = vadd.f32 %v4745, %v4905
      %v4907 = vpop.f32.mrf.mxu0
      %v4908 = vadd.f32 %v4747, %v4907
      %4909 = vmatprep.mubr.f32.mxu0 0.0
      %4910 = vmatmul.mubr.f32.gmra.mxu0 %v3732
      %v4911 = vpop.f32.mrf.mxu0
      %v4912 = vadd.f32 %v4751, %v4911
      %v4913 = vpop.f32.mrf.mxu0
      %v4914 = vadd.f32 %v4753, %v4913
      %4915 = vmatprep.mubr.f32.mxu0 0.0
      %4916 = vmatmul.mubr.f32.gmra.mxu0 %v3735
      %v4917 = vpop.f32.mrf.mxu0
      %v4918 = vadd.f32 %v4757, %v4917
      %v4919 = vpop.f32.mrf.mxu0
      %v4920 = vadd.f32 %v4759, %v4919
      %4921 = vdwg.mxu0
      %4922 = vmatprep.subr.mxu0 %v4391
      %4923 = vmatpush1.msra.mxu0 %v4390
      %4924 = vmatprep.subr.mxu0 %v4387
      %4925 = vmatpush1.msra.mxu0 %v4386
      %4926 = vmatprep.subr.mxu0 %v4383
      %4927 = vmatpush1.msra.mxu0 %v4382
      %4928 = vmatprep.subr.mxu0 %v4379
      %4929 = vmatpush1.msra.mxu0 %v4378
      %4930 = vmatprep.subr.mxu0 %v4375
      %4931 = vmatpush1.msra.mxu0 %v4374
      %4932 = vmatprep.subr.mxu0 %v4371
      %4933 = vmatpush1.msra.mxu0 %v4370
      %4934 = vmatprep.subr.mxu0 %v4367
      %4935 = vmatpush1.msra.mxu0 %v4366
      %4936 = vmatprep.subr.mxu0 %v4363
      %4937 = vmatpush1.msra.mxu0 %v4362
      %4938 = vmatprep.subr.mxu0 %v4359
      %4939 = vmatpush1.msra.mxu0 %v4358
      %4940 = vmatprep.subr.mxu0 %v4355
      %4941 = vmatpush1.msra.mxu0 %v4354
      %4942 = vmatprep.subr.mxu0 %v4351
      %4943 = vmatpush1.msra.mxu0 %v4350
      %4944 = vmatprep.subr.mxu0 %v4347
      %4945 = vmatpush1.msra.mxu0 %v4346
      %4946 = vmatprep.subr.mxu0 %v4343
      %4947 = vmatpush1.msra.mxu0 %v4342
      %4948 = vmatprep.subr.mxu0 %v4339
      %4949 = vmatpush1.msra.mxu0 %v4338
      %4950 = vmatprep.subr.mxu0 %v4335
      %4951 = vmatpush1.msra.mxu0 %v4334
      %4952 = vmatprep.subr.mxu0 %v4331
      %4953 = vmatpush1.msra.mxu0 %v4330
      %4954 = vmatprep.subr.mxu0 %v4455
      %4955 = vmatpush2.msra.mxu0 %v4454
      %4956 = vmatprep.subr.mxu0 %v4451
      %4957 = vmatpush2.msra.mxu0 %v4450
      %4958 = vmatprep.subr.mxu0 %v4447
      %4959 = vmatpush2.msra.mxu0 %v4446
      %4960 = vmatprep.subr.mxu0 %v4443
      %4961 = vmatpush2.msra.mxu0 %v4442
      %4962 = vmatprep.subr.mxu0 %v4439
      %4963 = vmatpush2.msra.mxu0 %v4438
      %4964 = vmatprep.subr.mxu0 %v4435
      %4965 = vmatpush2.msra.mxu0 %v4434
      %4966 = vmatprep.subr.mxu0 %v4431
      %4967 = vmatpush2.msra.mxu0 %v4430
      %4968 = vmatprep.subr.mxu0 %v4427
      %4969 = vmatpush2.msra.mxu0 %v4426
      %4970 = vmatprep.subr.mxu0 %v4423
      %4971 = vmatpush2.msra.mxu0 %v4422
      %4972 = vmatprep.subr.mxu0 %v4419
      %4973 = vmatpush2.msra.mxu0 %v4418
      %4974 = vmatprep.subr.mxu0 %v4415
      %4975 = vmatpush2.msra.mxu0 %v4414
      %4976 = vmatprep.subr.mxu0 %v4411
      %4977 = vmatpush2.msra.mxu0 %v4410
      %4978 = vmatprep.subr.mxu0 %v4407
      %4979 = vmatpush2.msra.mxu0 %v4406
      %4980 = vmatprep.subr.mxu0 %v4403
      %4981 = vmatpush2.msra.mxu0 %v4402
      %4982 = vmatprep.subr.mxu0 %v4399
      %4983 = vmatpush2.msra.mxu0 %v4398
      %4984 = vmatprep.subr.mxu0 %v4395
      %4985 = vmatpush2.msra.mxu0 %v4394
      %4986 = vmatprep.mubr.f32.mxu0 %v3689
      %4987 = vmatmul.mubr.f32.gmra.mxu0 %v3688
      %v4988 = vpop.f32.mrf.mxu0
      %v4989 = vadd.f32 %v4523, %v4988
      %v4990 = vpop.f32.mrf.mxu0
      %v4991 = vadd.f32 %v4523, %v4990
      %4992 = vmatprep.mubr.f32.mxu0 %v3692
      %4993 = vmatmul.mubr.f32.gmra.mxu0 %v3691
      %v4994 = vpop.f32.mrf.mxu0
      %v4995 = vadd.f32 %v4528, %v4994
      %v4996 = vpop.f32.mrf.mxu0
      %v4997 = vadd.f32 %v4528, %v4996
      %4998 = vmatprep.mubr.f32.mxu0 %v3695
      %4999 = vmatmul.mubr.f32.gmra.mxu0 %v3694
      %v5000 = vpop.f32.mrf.mxu0
      %v5001 = vadd.f32 %v4533, %v5000
      %v5002 = vpop.f32.mrf.mxu0
      %v5003 = vadd.f32 %v4533, %v5002
      %5004 = vmatprep.mubr.f32.mxu0 %v3698
      %5005 = vmatmul.mubr.f32.gmra.mxu0 %v3697
      %v5006 = vpop.f32.mrf.mxu0
      %v5007 = vadd.f32 %v4538, %v5006
      %v5008 = vpop.f32.mrf.mxu0
      %v5009 = vadd.f32 %v4538, %v5008
      %5010 = vmatprep.mubr.f32.mxu0 %v3701
      %5011 = vmatmul.mubr.f32.gmra.mxu0 %v3700
      %v5012 = vpop.f32.mrf.mxu0
      %v5013 = vadd.f32 %v4543, %v5012
      %v5014 = vpop.f32.mrf.mxu0
      %v5015 = vadd.f32 %v4543, %v5014
      %5016 = vmatprep.mubr.f32.mxu0 %v3704
      %5017 = vmatmul.mubr.f32.gmra.mxu0 %v3703
      %v5018 = vpop.f32.mrf.mxu0
      %v5019 = vadd.f32 %v4548, %v5018
      %v5020 = vpop.f32.mrf.mxu0
      %v5021 = vadd.f32 %v4548, %v5020
      %5022 = vmatprep.mubr.f32.mxu0 %v3707
      %5023 = vmatmul.mubr.f32.gmra.mxu0 %v3706
      %v5024 = vpop.f32.mrf.mxu0
      %v5025 = vadd.f32 %v4553, %v5024
      %v5026 = vpop.f32.mrf.mxu0
      %v5027 = vadd.f32 %v4553, %v5026
      %5028 = vmatprep.mubr.f32.mxu0 %v3710
      %5029 = vmatmul.mubr.f32.gmra.mxu0 %v3709
      %v5030 = vpop.f32.mrf.mxu0
      %v5031 = vadd.f32 %v4558, %v5030
      %v5032 = vpop.f32.mrf.mxu0
      %v5033 = vadd.f32 %v4558, %v5032
      %5034 = vmatprep.mubr.f32.mxu0 %v3713
      %5035 = vmatmul.mubr.f32.gmra.mxu0 %v3712
      %v5036 = vpop.f32.mrf.mxu0
      %v5037 = vadd.f32 %v4563, %v5036
      %v5038 = vpop.f32.mrf.mxu0
      %v5039 = vadd.f32 %v4563, %v5038
      %5040 = vmatprep.mubr.f32.mxu0 %v3716
      %5041 = vmatmul.mubr.f32.gmra.mxu0 %v3715
      %v5042 = vpop.f32.mrf.mxu0
      %v5043 = vadd.f32 %v4568, %v5042
      %v5044 = vpop.f32.mrf.mxu0
      %v5045 = vadd.f32 %v4568, %v5044
      %5046 = vmatprep.mubr.f32.mxu0 %v3719
      %5047 = vmatmul.mubr.f32.gmra.mxu0 %v3718
      %v5048 = vpop.f32.mrf.mxu0
      %v5049 = vadd.f32 %v4573, %v5048
      %v5050 = vpop.f32.mrf.mxu0
      %v5051 = vadd.f32 %v4573, %v5050
      %5052 = vmatprep.mubr.f32.mxu0 %v3722
      %5053 = vmatmul.mubr.f32.gmra.mxu0 %v3721
      %v5054 = vpop.f32.mrf.mxu0
      %v5055 = vadd.f32 %v4578, %v5054
      %v5056 = vpop.f32.mrf.mxu0
      %v5057 = vadd.f32 %v4578, %v5056
      %5058 = vmatprep.mubr.f32.mxu0 %v3725
      %5059 = vmatmul.mubr.f32.gmra.mxu0 %v3724
      %v5060 = vpop.f32.mrf.mxu0
      %v5061 = vadd.f32 %v4583, %v5060
      %v5062 = vpop.f32.mrf.mxu0
      %v5063 = vadd.f32 %v4583, %v5062
      %5064 = vmatprep.mubr.f32.mxu0 %v3728
      %5065 = vmatmul.mubr.f32.gmra.mxu0 %v3727
      %v5066 = vpop.f32.mrf.mxu0
      %v5067 = vadd.f32 %v4588, %v5066
      %v5068 = vpop.f32.mrf.mxu0
      %v5069 = vadd.f32 %v4588, %v5068
      %5070 = vmatprep.mubr.f32.mxu0 %v3731
      %5071 = vmatmul.mubr.f32.gmra.mxu0 %v3730
      %v5072 = vpop.f32.mrf.mxu0
      %v5073 = vadd.f32 %v4593, %v5072
      %v5074 = vpop.f32.mrf.mxu0
      %v5075 = vadd.f32 %v4593, %v5074
      %5076 = vmatprep.mubr.f32.mxu0 %v3734
      %5077 = vmatmul.mubr.f32.gmra.mxu0 %v3733
      %v5078 = vpop.f32.mrf.mxu0
      %v5079 = vadd.f32 %v4598, %v5078
      %v5080 = vpop.f32.mrf.mxu0
      %v5081 = vadd.f32 %v4598, %v5080
      %5082 = vdwg.mxu0
      %5083 = vmatprep.subr.mxu0 %v4519
      %5084 = vmatpush1.msra.mxu0 %v4518
      %5085 = vmatprep.subr.mxu0 %v4515
      %5086 = vmatpush1.msra.mxu0 %v4514
      %5087 = vmatprep.subr.mxu0 %v4511
      %5088 = vmatpush1.msra.mxu0 %v4510
      %5089 = vmatprep.subr.mxu0 %v4507
      %5090 = vmatpush1.msra.mxu0 %v4506
      %5091 = vmatprep.subr.mxu0 %v4503
      %5092 = vmatpush1.msra.mxu0 %v4502
      %5093 = vmatprep.subr.mxu0 %v4499
      %5094 = vmatpush1.msra.mxu0 %v4498
      %5095 = vmatprep.subr.mxu0 %v4495
      %5096 = vmatpush1.msra.mxu0 %v4494
      %5097 = vmatprep.subr.mxu0 %v4491
      %5098 = vmatpush1.msra.mxu0 %v4490
      %5099 = vmatprep.subr.mxu0 %v4487
      %5100 = vmatpush1.msra.mxu0 %v4486
      %5101 = vmatprep.subr.mxu0 %v4483
      %5102 = vmatpush1.msra.mxu0 %v4482
      %5103 = vmatprep.subr.mxu0 %v4479
      %5104 = vmatpush1.msra.mxu0 %v4478
      %5105 = vmatprep.subr.mxu0 %v4475
      %5106 = vmatpush1.msra.mxu0 %v4474
      %5107 = vmatprep.subr.mxu0 %v4471
      %5108 = vmatpush1.msra.mxu0 %v4470
      %5109 = vmatprep.subr.mxu0 %v4467
      %5110 = vmatpush1.msra.mxu0 %v4466
      %5111 = vmatprep.subr.mxu0 %v4463
      %5112 = vmatpush1.msra.mxu0 %v4462
      %5113 = vmatprep.subr.mxu0 %v4459
      %5114 = vmatpush1.msra.mxu0 %v4458
      %5115 = vmatprep.subr.mxu0 0.0
      %5116 = vmatpush2.msra.mxu0 0.0
      %5117 = vmatprep.subr.mxu0 0.0
      %5118 = vmatpush2.msra.mxu0 0.0
      %5119 = vmatprep.subr.mxu0 0.0
      %5120 = vmatpush2.msra.mxu0 0.0
      %5121 = vmatprep.subr.mxu0 0.0
      %5122 = vmatpush2.msra.mxu0 0.0
      %5123 = vmatprep.subr.mxu0 0.0
      %5124 = vmatpush2.msra.mxu0 0.0
      %5125 = vmatprep.subr.mxu0 0.0
      %5126 = vmatpush2.msra.mxu0 0.0
      %5127 = vmatprep.subr.mxu0 0.0
      %5128 = vmatpush2.msra.mxu0 0.0
      %5129 = vmatprep.subr.mxu0 0.0
      %5130 = vmatpush2.msra.mxu0 0.0
      %5131 = vmatprep.subr.mxu0 0.0
      %5132 = vmatpush2.msra.mxu0 0.0
      %5133 = vmatprep.subr.mxu0 0.0
      %5134 = vmatpush2.msra.mxu0 0.0
      %5135 = vmatprep.subr.mxu0 0.0
      %5136 = vmatpush2.msra.mxu0 0.0
      %5137 = vmatprep.subr.mxu0 0.0
      %5138 = vmatpush2.msra.mxu0 0.0
      %5139 = vmatprep.subr.mxu0 0.0
      %5140 = vmatpush2.msra.mxu0 0.0
      %5141 = vmatprep.subr.mxu0 0.0
      %5142 = vmatpush2.msra.mxu0 0.0
      %5143 = vmatprep.subr.mxu0 0.0
      %5144 = vmatpush2.msra.mxu0 0.0
      %5145 = vmatprep.subr.mxu0 0.0
      %5146 = vmatpush2.msra.mxu0 0.0
      %5147 = vmatprep.mubr.f32.mxu0 0.0
      %5148 = vmatmul.mubr.f32.gmra.mxu0 %v3690
      %v5149 = vpop.f32.mrf.mxu0
      %v5150 = vadd.f32 %v4989, %v5149
      %v5151 = vpop.f32.mrf.mxu0
      %v5152 = vadd.f32 %v4991, %v5151
      %5153 = vmatprep.mubr.f32.mxu0 0.0
      %5154 = vmatmul.mubr.f32.gmra.mxu0 %v3693
      %v5155 = vpop.f32.mrf.mxu0
      %v5156 = vadd.f32 %v4995, %v5155
      %v5157 = vpop.f32.mrf.mxu0
      %v5158 = vadd.f32 %v4997, %v5157
      %5159 = vmatprep.mubr.f32.mxu0 0.0
      %5160 = vmatmul.mubr.f32.gmra.mxu0 %v3696
      %v5161 = vpop.f32.mrf.mxu0
      %v5162 = vadd.f32 %v5001, %v5161
      %v5163 = vpop.f32.mrf.mxu0
      %v5164 = vadd.f32 %v5003, %v5163
      %5165 = vmatprep.mubr.f32.mxu0 0.0
      %5166 = vmatmul.mubr.f32.gmra.mxu0 %v3699
      %v5167 = vpop.f32.mrf.mxu0
      %v5168 = vadd.f32 %v5007, %v5167
      %v5169 = vpop.f32.mrf.mxu0
      %v5170 = vadd.f32 %v5009, %v5169
      %5171 = vmatprep.mubr.f32.mxu0 0.0
      %5172 = vmatmul.mubr.f32.gmra.mxu0 %v3702
      %v5173 = vpop.f32.mrf.mxu0
      %v5174 = vadd.f32 %v5013, %v5173
      %v5175 = vpop.f32.mrf.mxu0
      %v5176 = vadd.f32 %v5015, %v5175
      %5177 = vmatprep.mubr.f32.mxu0 0.0
      %5178 = vmatmul.mubr.f32.gmra.mxu0 %v3705
      %v5179 = vpop.f32.mrf.mxu0
      %v5180 = vadd.f32 %v5019, %v5179
      %v5181 = vpop.f32.mrf.mxu0
      %v5182 = vadd.f32 %v5021, %v5181
      %5183 = vmatprep.mubr.f32.mxu0 0.0
      %5184 = vmatmul.mubr.f32.gmra.mxu0 %v3708
      %v5185 = vpop.f32.mrf.mxu0
      %v5186 = vadd.f32 %v5025, %v5185
      %v5187 = vpop.f32.mrf.mxu0
      %v5188 = vadd.f32 %v5027, %v5187
      %5189 = vmatprep.mubr.f32.mxu0 0.0
      %5190 = vmatmul.mubr.f32.gmra.mxu0 %v3711
      %v5191 = vpop.f32.mrf.mxu0
      %v5192 = vadd.f32 %v5031, %v5191
      %v5193 = vpop.f32.mrf.mxu0
      %v5194 = vadd.f32 %v5033, %v5193
      %5195 = vmatprep.mubr.f32.mxu0 0.0
      %5196 = vmatmul.mubr.f32.gmra.mxu0 %v3714
      %v5197 = vpop.f32.mrf.mxu0
      %v5198 = vadd.f32 %v5037, %v5197
      %v5199 = vpop.f32.mrf.mxu0
      %v5200 = vadd.f32 %v5039, %v5199
      %5201 = vmatprep.mubr.f32.mxu0 0.0
      %5202 = vmatmul.mubr.f32.gmra.mxu0 %v3717
      %v5203 = vpop.f32.mrf.mxu0
      %v5204 = vadd.f32 %v5043, %v5203
      %v5205 = vpop.f32.mrf.mxu0
      %v5206 = vadd.f32 %v5045, %v5205
      %5207 = vmatprep.mubr.f32.mxu0 0.0
      %5208 = vmatmul.mubr.f32.gmra.mxu0 %v3720
      %v5209 = vpop.f32.mrf.mxu0
      %v5210 = vadd.f32 %v5049, %v5209
      %v5211 = vpop.f32.mrf.mxu0
      %v5212 = vadd.f32 %v5051, %v5211
      %5213 = vmatprep.mubr.f32.mxu0 0.0
      %5214 = vmatmul.mubr.f32.gmra.mxu0 %v3723
      %v5215 = vpop.f32.mrf.mxu0
      %v5216 = vadd.f32 %v5055, %v5215
      %v5217 = vpop.f32.mrf.mxu0
      %v5218 = vadd.f32 %v5057, %v5217
      %5219 = vmatprep.mubr.f32.mxu0 0.0
      %5220 = vmatmul.mubr.f32.gmra.mxu0 %v3726
      %v5221 = vpop.f32.mrf.mxu0
      %v5222 = vadd.f32 %v5061, %v5221
      %v5223 = vpop.f32.mrf.mxu0
      %v5224 = vadd.f32 %v5063, %v5223
      %5225 = vmatprep.mubr.f32.mxu0 0.0
      %5226 = vmatmul.mubr.f32.gmra.mxu0 %v3729
      %v5227 = vpop.f32.mrf.mxu0
      %v5228 = vadd.f32 %v5067, %v5227
      %v5229 = vpop.f32.mrf.mxu0
      %v5230 = vadd.f32 %v5069, %v5229
      %5231 = vmatprep.mubr.f32.mxu0 0.0
      %5232 = vmatmul.mubr.f32.gmra.mxu0 %v3732
      %v5233 = vpop.f32.mrf.mxu0
      %v5234 = vadd.f32 %v5073, %v5233
      %v5235 = vpop.f32.mrf.mxu0
      %v5236 = vadd.f32 %v5075, %v5235
      %5237 = vmatprep.mubr.f32.mxu0 0.0
      %5238 = vmatmul.mubr.f32.gmra.mxu0 %v3735
      %v5239 = vpop.f32.mrf.mxu0
      %v5240 = vadd.f32 %v5079, %v5239
      %v5241 = vpop.f32.mrf.mxu0
      %v5242 = vadd.f32 %v5081, %v5241
      %5243 = vdwg.mxu0
      %v5244 = vmax.f32 %v4828, 0.0
      %v5245 = vmax.f32 %v4830, 0.0
      %v5246 = vmax.f32 %v5150, 0.0
      %v5247 = vmax.f32 %v5152, 0.0
      %v5248 = vmax.f32 %v4834, 0.0
      %v5249 = vmax.f32 %v4836, 0.0
      %v5250 = vmax.f32 %v5156, 0.0
      %v5251 = vmax.f32 %v5158, 0.0
      %v5252 = vmax.f32 %v4840, 0.0
      %v5253 = vmax.f32 %v4842, 0.0
      %v5254 = vmax.f32 %v5162, 0.0
      %v5255 = vmax.f32 %v5164, 0.0
      %v5256 = vmax.f32 %v4846, 0.0
      %v5257 = vmax.f32 %v4848, 0.0
      %v5258 = vmax.f32 %v5168, 0.0
      %v5259 = vmax.f32 %v5170, 0.0
      %v5260 = vmax.f32 %v4852, 0.0
      %v5261 = vmax.f32 %v4854, 0.0
      %v5262 = vmax.f32 %v5174, 0.0
      %v5263 = vmax.f32 %v5176, 0.0
      %v5264 = vmax.f32 %v4858, 0.0
      %v5265 = vmax.f32 %v4860, 0.0
      %v5266 = vmax.f32 %v5180, 0.0
      %v5267 = vmax.f32 %v5182, 0.0
      %v5268 = vmax.f32 %v4864, 0.0
      %v5269 = vmax.f32 %v4866, 0.0
      %v5270 = vmax.f32 %v5186, 0.0
      %v5271 = vmax.f32 %v5188, 0.0
      %v5272 = vmax.f32 %v4870, 0.0
      %v5273 = vmax.f32 %v4872, 0.0
      %v5274 = vmax.f32 %v5192, 0.0
      %v5275 = vmax.f32 %v5194, 0.0
      %v5276 = vmax.f32 %v4876, 0.0
      %v5277 = vmax.f32 %v4878, 0.0
      %v5278 = vmax.f32 %v5198, 0.0
      %v5279 = vmax.f32 %v5200, 0.0
      %v5280 = vmax.f32 %v4882, 0.0
      %v5281 = vmax.f32 %v4884, 0.0
      %v5282 = vmax.f32 %v5204, 0.0
      %v5283 = vmax.f32 %v5206, 0.0
      %v5284 = vmax.f32 %v4888, 0.0
      %v5285 = vmax.f32 %v4890, 0.0
      %v5286 = vmax.f32 %v5210, 0.0
      %v5287 = vmax.f32 %v5212, 0.0
      %v5288 = vmax.f32 %v4894, 0.0
      %v5289 = vmax.f32 %v4896, 0.0
      %v5290 = vmax.f32 %v5216, 0.0
      %v5291 = vmax.f32 %v5218, 0.0
      %v5292 = vmax.f32 %v4900, 0.0
      %v5293 = vmax.f32 %v4902, 0.0
      %v5294 = vmax.f32 %v5222, 0.0
      %v5295 = vmax.f32 %v5224, 0.0
      %v5296 = vmax.f32 %v4906, 0.0
      %v5297 = vmax.f32 %v4908, 0.0
      %v5298 = vmax.f32 %v5228, 0.0
      %v5299 = vmax.f32 %v5230, 0.0
      %v5300 = vmax.f32 %v4912, 0.0
      %v5301 = vmax.f32 %v4914, 0.0
      %v5302 = vmax.f32 %v5234, 0.0
      %v5303 = vmax.f32 %v5236, 0.0
      %v5304 = vmax.f32 %v4918, 0.0
      %v5305 = vmax.f32 %v4920, 0.0
      %v5306 = vmax.f32 %v5240, 0.0
      %v5307 = vmax.f32 %v5242, 0.0
      %v5308 = vmul.f32 %v5244, %v184
      %v5309 = vmul.f32 %v5245, %v185
      %v5310 = vmul.f32 %v5246, %v186
      %v5311 = vmul.f32 %v5247, %v187
      %v5312 = vmul.f32 %v5248, %v184
      %v5313 = vmul.f32 %v5249, %v185
      %v5314 = vmul.f32 %v5250, %v186
      %v5315 = vmul.f32 %v5251, %v187
      %v5316 = vmul.f32 %v5252, %v184
      %v5317 = vmul.f32 %v5253, %v185
      %v5318 = vmul.f32 %v5254, %v186
      %v5319 = vmul.f32 %v5255, %v187
      %v5320 = vmul.f32 %v5256, %v184
      %v5321 = vmul.f32 %v5257, %v185
      %v5322 = vmul.f32 %v5258, %v186
      %v5323 = vmul.f32 %v5259, %v187
      %v5324 = vmul.f32 %v5260, %v184
      %v5325 = vmul.f32 %v5261, %v185
      %v5326 = vmul.f32 %v5262, %v186
      %v5327 = vmul.f32 %v5263, %v187
      %v5328 = vmul.f32 %v5264, %v184
      %v5329 = vmul.f32 %v5265, %v185
      %v5330 = vmul.f32 %v5266, %v186
      %v5331 = vmul.f32 %v5267, %v187
      %v5332 = vmul.f32 %v5268, %v184
      %v5333 = vmul.f32 %v5269, %v185
      %v5334 = vmul.f32 %v5270, %v186
      %v5335 = vmul.f32 %v5271, %v187
      %v5336 = vmul.f32 %v5272, %v184
      %v5337 = vmul.f32 %v5273, %v185
      %v5338 = vmul.f32 %v5274, %v186
      %v5339 = vmul.f32 %v5275, %v187
      %v5340 = vmul.f32 %v5276, %v184
      %v5341 = vmul.f32 %v5277, %v185
      %v5342 = vmul.f32 %v5278, %v186
      %v5343 = vmul.f32 %v5279, %v187
      %v5344 = vmul.f32 %v5280, %v184
      %v5345 = vmul.f32 %v5281, %v185
      %v5346 = vmul.f32 %v5282, %v186
      %v5347 = vmul.f32 %v5283, %v187
      %v5348 = vmul.f32 %v5284, %v184
      %v5349 = vmul.f32 %v5285, %v185
      %v5350 = vmul.f32 %v5286, %v186
      %v5351 = vmul.f32 %v5287, %v187
      %v5352 = vmul.f32 %v5288, %v184
      %v5353 = vmul.f32 %v5289, %v185
      %v5354 = vmul.f32 %v5290, %v186
      %v5355 = vmul.f32 %v5291, %v187
      %v5356 = vmul.f32 %v5292, %v184
      %v5357 = vmul.f32 %v5293, %v185
      %v5358 = vmul.f32 %v5294, %v186
      %v5359 = vmul.f32 %v5295, %v187
      %v5360 = vmul.f32 %v5296, %v184
      %v5361 = vmul.f32 %v5297, %v185
      %v5362 = vmul.f32 %v5298, %v186
      %v5363 = vmul.f32 %v5299, %v187
      %v5364 = vmul.f32 %v5300, %v184
      %v5365 = vmul.f32 %v5301, %v185
      %v5366 = vmul.f32 %v5302, %v186
      %v5367 = vmul.f32 %v5303, %v187
      %v5368 = vmul.f32 %v5304, %v184
      %v5369 = vmul.f32 %v5305, %v185
      %v5370 = vmul.f32 %v5306, %v186
      %v5371 = vmul.f32 %v5307, %v187
      %s5372 = scalar_lea.vmem %s1, 1152
      %v5373 = vld [vmem:[%s5372] sm:$0xff]
      %v5374 = vld [vmem:[%s5372 + $0x8] sm:$0xff]
      %v5375 = vld [vmem:[%s5372 + $0x10] sm:$0xff]
      %v5376 = vld [vmem:[%s5372 + $0x18] sm:$0xff]
      %v5377 = vld [vmem:[%s5372 + $0x20] sm:$0xff]
      %v5378 = vld [vmem:[%s5372 + $0x28] sm:$0xff]
      %v5379 = vld [vmem:[%s5372 + $0x30] sm:$0xff]
      %v5380 = vld [vmem:[%s5372 + $0x38] sm:$0xff]
      %v5381 = vld [vmem:[%s5372 + $0x40] sm:$0xff]
      %v5382 = vld [vmem:[%s5372 + $0x48] sm:$0xff]
      %v5383 = vld [vmem:[%s5372 + $0x50] sm:$0xff]
      %v5384 = vld [vmem:[%s5372 + $0x58] sm:$0xff]
      %v5385 = vld [vmem:[%s5372 + $0x60] sm:$0xff]
      %v5386 = vld [vmem:[%s5372 + $0x68] sm:$0xff]
      %v5387 = vld [vmem:[%s5372 + $0x70] sm:$0xff]
      %v5388 = vld [vmem:[%s5372 + $0x78] sm:$0xff]
      %v5389 = vld [vmem:[%s5372 + $0x80] sm:$0xff]
      %v5390 = vld [vmem:[%s5372 + $0x88] sm:$0xff]
      %v5391 = vld [vmem:[%s5372 + $0x90] sm:$0xff]
      %v5392 = vld [vmem:[%s5372 + $0x98] sm:$0xff]
      %v5393 = vld [vmem:[%s5372 + $0xa0] sm:$0xff]
      %v5394 = vld [vmem:[%s5372 + $0xa8] sm:$0xff]
      %v5395 = vld [vmem:[%s5372 + $0xb0] sm:$0xff]
      %v5396 = vld [vmem:[%s5372 + $0xb8] sm:$0xff]
      %v5397 = vld [vmem:[%s5372 + $0xc0] sm:$0xff]
      %v5398 = vld [vmem:[%s5372 + $0xc8] sm:$0xff]
      %v5399 = vld [vmem:[%s5372 + $0xd0] sm:$0xff]
      %v5400 = vld [vmem:[%s5372 + $0xd8] sm:$0xff]
      %v5401 = vld [vmem:[%s5372 + $0xe0] sm:$0xff]
      %v5402 = vld [vmem:[%s5372 + $0xe8] sm:$0xff]
      %v5403 = vld [vmem:[%s5372 + $0xf0] sm:$0xff]
      %v5404 = vld [vmem:[%s5372 + $0xf8] sm:$0xff]
      %v5405 = vld [vmem:[%s5372 + $0x100] sm:$0xff]
      %v5406 = vld [vmem:[%s5372 + $0x108] sm:$0xff]
      %v5407 = vld [vmem:[%s5372 + $0x110] sm:$0xff]
      %v5408 = vld [vmem:[%s5372 + $0x118] sm:$0xff]
      %v5409 = vld [vmem:[%s5372 + $0x120] sm:$0xff]
      %v5410 = vld [vmem:[%s5372 + $0x128] sm:$0xff]
      %v5411 = vld [vmem:[%s5372 + $0x130] sm:$0xff]
      %v5412 = vld [vmem:[%s5372 + $0x138] sm:$0xff]
      %v5413 = vld [vmem:[%s5372 + $0x140] sm:$0xff]
      %v5414 = vld [vmem:[%s5372 + $0x148] sm:$0xff]
      %v5415 = vld [vmem:[%s5372 + $0x150] sm:$0xff]
      %v5416 = vld [vmem:[%s5372 + $0x158] sm:$0xff]
      %v5417 = vld [vmem:[%s5372 + $0x160] sm:$0xff]
      %v5418 = vld [vmem:[%s5372 + $0x168] sm:$0xff]
      %v5419 = vld [vmem:[%s5372 + $0x170] sm:$0xff]
      %v5420 = vld [vmem:[%s5372 + $0x178] sm:$0xff]
      %v5421 = vld [vmem:[%s2] sm:$0xff]
      %v5422 = vld [vmem:[%s2 + $0x8] sm:$0xff]
      %v5423 = vld [vmem:[%s2 + $0x10] sm:$0xff]
      %v5424 = vld [vmem:[%s2 + $0x18] sm:$0xff]
      %v5425 = vld [vmem:[%s2 + $0x20] sm:$0xff]
      %v5426 = vld [vmem:[%s2 + $0x28] sm:$0xff]
      %v5427 = vld [vmem:[%s2 + $0x30] sm:$0xff]
      %v5428 = vld [vmem:[%s2 + $0x38] sm:$0xff]
      %v5429 = vld [vmem:[%s2 + $0x40] sm:$0xff]
      %v5430 = vld [vmem:[%s2 + $0x48] sm:$0xff]
      %v5431 = vld [vmem:[%s2 + $0x50] sm:$0xff]
      %v5432 = vld [vmem:[%s2 + $0x58] sm:$0xff]
      %v5433 = vld [vmem:[%s2 + $0x60] sm:$0xff]
      %v5434 = vld [vmem:[%s2 + $0x68] sm:$0xff]
      %v5435 = vld [vmem:[%s2 + $0x70] sm:$0xff]
      %v5436 = vld [vmem:[%s2 + $0x78] sm:$0xff]
      %5437 = vrot.lane.b32.xlu0 %v5308, 1
      %v5438 = vpop.permute.xlu0 %5437
      %5439 = vrot.lane.b32.xlu0 %v5312, 1
      %v5440 = vpop.permute.xlu0 %5439
      %5441 = vrot.lane.b32.xlu0 %v5316, 1
      %v5442 = vpop.permute.xlu0 %5441
      %5443 = vrot.lane.b32.xlu0 %v5320, 1
      %v5444 = vpop.permute.xlu0 %5443
      %5445 = vrot.lane.b32.xlu0 %v5324, 1
      %v5446 = vpop.permute.xlu0 %5445
      %5447 = vrot.lane.b32.xlu0 %v5328, 1
      %v5448 = vpop.permute.xlu0 %5447
      %5449 = vrot.lane.b32.xlu0 %v5332, 1
      %v5450 = vpop.permute.xlu0 %5449
      %5451 = vrot.lane.b32.xlu0 %v5336, 1
      %v5452 = vpop.permute.xlu0 %5451
      %5453 = vrot.lane.b32.xlu0 %v5340, 1
      %v5454 = vpop.permute.xlu0 %5453
      %5455 = vrot.lane.b32.xlu0 %v5344, 1
      %v5456 = vpop.permute.xlu0 %5455
      %5457 = vrot.lane.b32.xlu0 %v5348, 1
      %v5458 = vpop.permute.xlu0 %5457
      %5459 = vrot.lane.b32.xlu0 %v5352, 1
      %v5460 = vpop.permute.xlu0 %5459
      %5461 = vrot.lane.b32.xlu0 %v5356, 1
      %v5462 = vpop.permute.xlu0 %5461
      %5463 = vrot.lane.b32.xlu0 %v5360, 1
      %v5464 = vpop.permute.xlu0 %5463
      %5465 = vrot.lane.b32.xlu0 %v5364, 1
      %v5466 = vpop.permute.xlu0 %5465
      %5467 = vrot.lane.b32.xlu0 %v5368, 1
      %v5468 = vpop.permute.xlu0 %5467
      %5469 = vrot.lane.b32.xlu0 %v5309, 1
      %v5470 = vpop.permute.xlu0 %5469
      %5471 = vrot.lane.b32.xlu0 %v5313, 1
      %v5472 = vpop.permute.xlu0 %5471
      %5473 = vrot.lane.b32.xlu0 %v5317, 1
      %v5474 = vpop.permute.xlu0 %5473
      %5475 = vrot.lane.b32.xlu0 %v5321, 1
      %v5476 = vpop.permute.xlu0 %5475
      %5477 = vrot.lane.b32.xlu0 %v5325, 1
      %v5478 = vpop.permute.xlu0 %5477
      %5479 = vrot.lane.b32.xlu0 %v5329, 1
      %v5480 = vpop.permute.xlu0 %5479
      %5481 = vrot.lane.b32.xlu0 %v5333, 1
      %v5482 = vpop.permute.xlu0 %5481
      %5483 = vrot.lane.b32.xlu0 %v5337, 1
      %v5484 = vpop.permute.xlu0 %5483
      %5485 = vrot.lane.b32.xlu0 %v5341, 1
      %v5486 = vpop.permute.xlu0 %5485
      %5487 = vrot.lane.b32.xlu0 %v5345, 1
      %v5488 = vpop.permute.xlu0 %5487
      %5489 = vrot.lane.b32.xlu0 %v5349, 1
      %v5490 = vpop.permute.xlu0 %5489
      %5491 = vrot.lane.b32.xlu0 %v5353, 1
      %v5492 = vpop.permute.xlu0 %5491
      %5493 = vrot.lane.b32.xlu0 %v5357, 1
      %v5494 = vpop.permute.xlu0 %5493
      %5495 = vrot.lane.b32.xlu0 %v5361, 1
      %v5496 = vpop.permute.xlu0 %5495
      %5497 = vrot.lane.b32.xlu0 %v5365, 1
      %v5498 = vpop.permute.xlu0 %5497
      %5499 = vrot.lane.b32.xlu0 %v5369, 1
      %v5500 = vpop.permute.xlu0 %5499
      %5501 = vrot.lane.b32.xlu0 %v5310, 1
      %v5502 = vpop.permute.xlu0 %5501
      %5503 = vrot.lane.b32.xlu0 %v5314, 1
      %v5504 = vpop.permute.xlu0 %5503
      %5505 = vrot.lane.b32.xlu0 %v5318, 1
      %v5506 = vpop.permute.xlu0 %5505
      %5507 = vrot.lane.b32.xlu0 %v5322, 1
      %v5508 = vpop.permute.xlu0 %5507
      %5509 = vrot.lane.b32.xlu0 %v5326, 1
      %v5510 = vpop.permute.xlu0 %5509
      %5511 = vrot.lane.b32.xlu0 %v5330, 1
      %v5512 = vpop.permute.xlu0 %5511
      %5513 = vrot.lane.b32.xlu0 %v5334, 1
      %v5514 = vpop.permute.xlu0 %5513
      %5515 = vrot.lane.b32.xlu0 %v5338, 1
      %v5516 = vpop.permute.xlu0 %5515
      %5517 = vrot.lane.b32.xlu0 %v5342, 1
      %v5518 = vpop.permute.xlu0 %5517
      %5519 = vrot.lane.b32.xlu0 %v5346, 1
      %v5520 = vpop.permute.xlu0 %5519
      %5521 = vrot.lane.b32.xlu0 %v5350, 1
      %v5522 = vpop.permute.xlu0 %5521
      %5523 = vrot.lane.b32.xlu0 %v5354, 1
      %v5524 = vpop.permute.xlu0 %5523
      %5525 = vrot.lane.b32.xlu0 %v5358, 1
      %v5526 = vpop.permute.xlu0 %5525
      %5527 = vrot.lane.b32.xlu0 %v5362, 1
      %v5528 = vpop.permute.xlu0 %5527
      %5529 = vrot.lane.b32.xlu0 %v5366, 1
      %v5530 = vpop.permute.xlu0 %5529
      %5531 = vrot.lane.b32.xlu0 %v5370, 1
      %v5532 = vpop.permute.xlu0 %5531
      %5533 = vrot.lane.b32.xlu0 %v5311, 1
      %v5534 = vpop.permute.xlu0 %5533
      %5535 = vrot.lane.b32.xlu0 %v5315, 1
      %v5536 = vpop.permute.xlu0 %5535
      %5537 = vrot.lane.b32.xlu0 %v5319, 1
      %v5538 = vpop.permute.xlu0 %5537
      %5539 = vrot.lane.b32.xlu0 %v5323, 1
      %v5540 = vpop.permute.xlu0 %5539
      %5541 = vrot.lane.b32.xlu0 %v5327, 1
      %v5542 = vpop.permute.xlu0 %5541
      %5543 = vrot.lane.b32.xlu0 %v5331, 1
      %v5544 = vpop.permute.xlu0 %5543
      %5545 = vrot.lane.b32.xlu0 %v5335, 1
      %v5546 = vpop.permute.xlu0 %5545
      %5547 = vrot.lane.b32.xlu0 %v5339, 1
      %v5548 = vpop.permute.xlu0 %5547
      %5549 = vrot.lane.b32.xlu0 %v5343, 1
      %v5550 = vpop.permute.xlu0 %5549
      %5551 = vrot.lane.b32.xlu0 %v5347, 1
      %v5552 = vpop.permute.xlu0 %5551
      %5553 = vrot.lane.b32.xlu0 %v5351, 1
      %v5554 = vpop.permute.xlu0 %5553
      %5555 = vrot.lane.b32.xlu0 %v5355, 1
      %v5556 = vpop.permute.xlu0 %5555
      %5557 = vrot.lane.b32.xlu0 %v5359, 1
      %v5558 = vpop.permute.xlu0 %5557
      %5559 = vrot.lane.b32.xlu0 %v5363, 1
      %v5560 = vpop.permute.xlu0 %5559
      %5561 = vrot.lane.b32.xlu0 %v5367, 1
      %v5562 = vpop.permute.xlu0 %5561
      %5563 = vrot.lane.b32.xlu0 %v5371, 1
      %v5564 = vpop.permute.xlu0 %5563
      %v5565 = vsel %vm444, %v5502, %v5534
      %v5566 = vsel %vm444, %v5504, %v5536
      %v5567 = vsel %vm444, %v5506, %v5538
      %v5568 = vsel %vm444, %v5508, %v5540
      %v5569 = vsel %vm444, %v5510, %v5542
      %v5570 = vsel %vm444, %v5512, %v5544
      %v5571 = vsel %vm444, %v5514, %v5546
      %v5572 = vsel %vm444, %v5516, %v5548
      %v5573 = vsel %vm444, %v5518, %v5550
      %v5574 = vsel %vm444, %v5520, %v5552
      %v5575 = vsel %vm444, %v5522, %v5554
      %v5576 = vsel %vm444, %v5524, %v5556
      %v5577 = vsel %vm444, %v5526, %v5558
      %v5578 = vsel %vm444, %v5528, %v5560
      %v5579 = vsel %vm444, %v5530, %v5562
      %v5580 = vsel %vm444, %v5532, %v5564
      %v5581 = vsel %vm444, %v5470, %v5502
      %v5582 = vsel %vm444, %v5472, %v5504
      %v5583 = vsel %vm444, %v5474, %v5506
      %v5584 = vsel %vm444, %v5476, %v5508
      %v5585 = vsel %vm444, %v5478, %v5510
      %v5586 = vsel %vm444, %v5480, %v5512
      %v5587 = vsel %vm444, %v5482, %v5514
      %v5588 = vsel %vm444, %v5484, %v5516
      %v5589 = vsel %vm444, %v5486, %v5518
      %v5590 = vsel %vm444, %v5488, %v5520
      %v5591 = vsel %vm444, %v5490, %v5522
      %v5592 = vsel %vm444, %v5492, %v5524
      %v5593 = vsel %vm444, %v5494, %v5526
      %v5594 = vsel %vm444, %v5496, %v5528
      %v5595 = vsel %vm444, %v5498, %v5530
      %v5596 = vsel %vm444, %v5500, %v5532
      %v5597 = vsel %vm444, %v5438, %v5470
      %v5598 = vsel %vm444, %v5440, %v5472
      %v5599 = vsel %vm444, %v5442, %v5474
      %v5600 = vsel %vm444, %v5444, %v5476
      %v5601 = vsel %vm444, %v5446, %v5478
      %v5602 = vsel %vm444, %v5448, %v5480
      %v5603 = vsel %vm444, %v5450, %v5482
      %v5604 = vsel %vm444, %v5452, %v5484
      %v5605 = vsel %vm444, %v5454, %v5486
      %v5606 = vsel %vm444, %v5456, %v5488
      %v5607 = vsel %vm444, %v5458, %v5490
      %v5608 = vsel %vm444, %v5460, %v5492
      %v5609 = vsel %vm444, %v5462, %v5494
      %v5610 = vsel %vm444, %v5464, %v5496
      %v5611 = vsel %vm444, %v5466, %v5498
      %v5612 = vsel %vm444, %v5468, %v5500
      %v5613 = vsel %vm444, %v5534, %v5438
      %v5614 = vsel %vm444, %v5536, %v5440
      %v5615 = vsel %vm444, %v5538, %v5442
      %v5616 = vsel %vm444, %v5540, %v5444
      %v5617 = vsel %vm444, %v5542, %v5446
      %v5618 = vsel %vm444, %v5544, %v5448
      %v5619 = vsel %vm444, %v5546, %v5450
      %v5620 = vsel %vm444, %v5548, %v5452
      %v5621 = vsel %vm444, %v5550, %v5454
      %v5622 = vsel %vm444, %v5552, %v5456
      %v5623 = vsel %vm444, %v5554, %v5458
      %v5624 = vsel %vm444, %v5556, %v5460
      %v5625 = vsel %vm444, %v5558, %v5462
      %v5626 = vsel %vm444, %v5560, %v5464
      %v5627 = vsel %vm444, %v5562, %v5466
      %v5628 = vsel %vm444, %v5564, %v5468
      %5629 = vst [vmem:[#allocation2] sm:$0xff] %v5613
      %5630 = vst [vmem:[#allocation2 + $0x8] sm:$0xff] %v5597
      %5631 = vst [vmem:[#allocation2 + $0x10] sm:$0xff] %v5581
      %5632 = vst [vmem:[#allocation2 + $0x18] sm:$0xff] %v5565
      %5633 = vst [vmem:[#allocation2 + $0x20] sm:$0xff] %v5614
      %5634 = vst [vmem:[#allocation2 + $0x28] sm:$0xff] %v5598
      %5635 = vst [vmem:[#allocation2 + $0x30] sm:$0xff] %v5582
      %5636 = vst [vmem:[#allocation2 + $0x38] sm:$0xff] %v5566
      %5637 = vst [vmem:[#allocation2 + $0x40] sm:$0xff] %v5615
      %5638 = vst [vmem:[#allocation2 + $0x48] sm:$0xff] %v5599
      %5639 = vst [vmem:[#allocation2 + $0x50] sm:$0xff] %v5583
      %5640 = vst [vmem:[#allocation2 + $0x58] sm:$0xff] %v5567
      %5641 = vst [vmem:[#allocation2 + $0x60] sm:$0xff] %v5616
      %5642 = vst [vmem:[#allocation2 + $0x68] sm:$0xff] %v5600
      %5643 = vst [vmem:[#allocation2 + $0x70] sm:$0xff] %v5584
      %5644 = vst [vmem:[#allocation2 + $0x78] sm:$0xff] %v5568
      %5645 = vst [vmem:[#allocation2 + $0x80] sm:$0xff] %v5617
      %5646 = vst [vmem:[#allocation2 + $0x88] sm:$0xff] %v5601
      %5647 = vst [vmem:[#allocation2 + $0x90] sm:$0xff] %v5585
      %5648 = vst [vmem:[#allocation2 + $0x98] sm:$0xff] %v5569
      %5649 = vst [vmem:[#allocation2 + $0xa0] sm:$0xff] %v5618
      %5650 = vst [vmem:[#allocation2 + $0xa8] sm:$0xff] %v5602
      %5651 = vst [vmem:[#allocation2 + $0xb0] sm:$0xff] %v5586
      %5652 = vst [vmem:[#allocation2 + $0xb8] sm:$0xff] %v5570
      %5653 = vst [vmem:[#allocation2 + $0xc0] sm:$0xff] %v5619
      %5654 = vst [vmem:[#allocation2 + $0xc8] sm:$0xff] %v5603
      %5655 = vst [vmem:[#allocation2 + $0xd0] sm:$0xff] %v5587
      %5656 = vst [vmem:[#allocation2 + $0xd8] sm:$0xff] %v5571
      %5657 = vst [vmem:[#allocation2 + $0xe0] sm:$0xff] %v5620
      %5658 = vst [vmem:[#allocation2 + $0xe8] sm:$0xff] %v5604
      %5659 = vst [vmem:[#allocation2 + $0xf0] sm:$0xff] %v5588
      %5660 = vst [vmem:[#allocation2 + $0xf8] sm:$0xff] %v5572
      %5661 = vst [vmem:[#allocation2 + $0x100] sm:$0xff] %v5621
      %5662 = vst [vmem:[#allocation2 + $0x108] sm:$0xff] %v5605
      %5663 = vst [vmem:[#allocation2 + $0x110] sm:$0xff] %v5589
      %5664 = vst [vmem:[#allocation2 + $0x118] sm:$0xff] %v5573
      %5665 = vst [vmem:[#allocation2 + $0x120] sm:$0xff] %v5622
      %5666 = vst [vmem:[#allocation2 + $0x128] sm:$0xff] %v5606
      %5667 = vst [vmem:[#allocation2 + $0x130] sm:$0xff] %v5590
      %5668 = vst [vmem:[#allocation2 + $0x138] sm:$0xff] %v5574
      %5669 = vst [vmem:[#allocation2 + $0x140] sm:$0xff] %v5623
      %5670 = vst [vmem:[#allocation2 + $0x148] sm:$0xff] %v5607
      %5671 = vst [vmem:[#allocation2 + $0x150] sm:$0xff] %v5591
      %5672 = vst [vmem:[#allocation2 + $0x158] sm:$0xff] %v5575
      %5673 = vst [vmem:[#allocation2 + $0x160] sm:$0xff] %v5624
      %5674 = vst [vmem:[#allocation2 + $0x168] sm:$0xff] %v5608
      %5675 = vst [vmem:[#allocation2 + $0x170] sm:$0xff] %v5592
      %5676 = vst [vmem:[#allocation2 + $0x178] sm:$0xff] %v5576
      %5677 = vst [vmem:[#allocation2 + $0x180] sm:$0xff] %v5625
      %5678 = vst [vmem:[#allocation2 + $0x188] sm:$0xff] %v5609
      %5679 = vst [vmem:[#allocation2 + $0x190] sm:$0xff] %v5593
      %5680 = vst [vmem:[#allocation2 + $0x198] sm:$0xff] %v5577
      %5681 = vst [vmem:[#allocation2 + $0x1a0] sm:$0xff] %v5626
      %5682 = vst [vmem:[#allocation2 + $0x1a8] sm:$0xff] %v5610
      %5683 = vst [vmem:[#allocation2 + $0x1b0] sm:$0xff] %v5594
      %5684 = vst [vmem:[#allocation2 + $0x1b8] sm:$0xff] %v5578
      %5685 = vst [vmem:[#allocation2 + $0x1c0] sm:$0xff] %v5627
      %5686 = vst [vmem:[#allocation2 + $0x1c8] sm:$0xff] %v5611
      %5687 = vst [vmem:[#allocation2 + $0x1d0] sm:$0xff] %v5595
      %5688 = vst [vmem:[#allocation2 + $0x1d8] sm:$0xff] %v5579
      %5689 = vst [vmem:[#allocation2 + $0x1e0] sm:$0xff] %v5628
      %5690 = vst [vmem:[#allocation2 + $0x1e8] sm:$0xff] %v5612
      %5691 = vst [vmem:[#allocation2 + $0x1f0] sm:$0xff] %v5596
      %5692 = vst [vmem:[#allocation2 + $0x1f8] sm:$0xff] %v5580
      %5693 = vst [vmem:[#allocation2 + $0x200] sm:$0xff] %v5308
      %5694 = vst [vmem:[#allocation2 + $0x208] sm:$0xff] %v5309
      %5695 = vst [vmem:[#allocation2 + $0x210] sm:$0xff] %v5310
      %5696 = vst [vmem:[#allocation2 + $0x218] sm:$0xff] %v5311
      %5697 = vst [vmem:[#allocation2 + $0x220] sm:$0xff] %v5312
      %5698 = vst [vmem:[#allocation2 + $0x228] sm:$0xff] %v5313
      %5699 = vst [vmem:[#allocation2 + $0x230] sm:$0xff] %v5314
      %5700 = vst [vmem:[#allocation2 + $0x238] sm:$0xff] %v5315
      %5701 = vst [vmem:[#allocation2 + $0x240] sm:$0xff] %v5316
      %5702 = vst [vmem:[#allocation2 + $0x248] sm:$0xff] %v5317
      %5703 = vst [vmem:[#allocation2 + $0x250] sm:$0xff] %v5318
      %5704 = vst [vmem:[#allocation2 + $0x258] sm:$0xff] %v5319
      %5705 = vst [vmem:[#allocation2 + $0x260] sm:$0xff] %v5320
      %5706 = vst [vmem:[#allocation2 + $0x268] sm:$0xff] %v5321
      %5707 = vst [vmem:[#allocation2 + $0x270] sm:$0xff] %v5322
      %5708 = vst [vmem:[#allocation2 + $0x278] sm:$0xff] %v5323
      %5709 = vst [vmem:[#allocation2 + $0x280] sm:$0xff] %v5324
      %5710 = vst [vmem:[#allocation2 + $0x288] sm:$0xff] %v5325
      %5711 = vst [vmem:[#allocation2 + $0x290] sm:$0xff] %v5326
      %5712 = vst [vmem:[#allocation2 + $0x298] sm:$0xff] %v5327
      %5713 = vst [vmem:[#allocation2 + $0x2a0] sm:$0xff] %v5328
      %5714 = vst [vmem:[#allocation2 + $0x2a8] sm:$0xff] %v5329
      %5715 = vst [vmem:[#allocation2 + $0x2b0] sm:$0xff] %v5330
      %5716 = vst [vmem:[#allocation2 + $0x2b8] sm:$0xff] %v5331
      %5717 = vst [vmem:[#allocation2 + $0x2c0] sm:$0xff] %v5332
      %5718 = vst [vmem:[#allocation2 + $0x2c8] sm:$0xff] %v5333
      %5719 = vst [vmem:[#allocation2 + $0x2d0] sm:$0xff] %v5334
      %5720 = vst [vmem:[#allocation2 + $0x2d8] sm:$0xff] %v5335
      %5721 = vst [vmem:[#allocation2 + $0x2e0] sm:$0xff] %v5336
      %5722 = vst [vmem:[#allocation2 + $0x2e8] sm:$0xff] %v5337
      %5723 = vst [vmem:[#allocation2 + $0x2f0] sm:$0xff] %v5338
      %5724 = vst [vmem:[#allocation2 + $0x2f8] sm:$0xff] %v5339
      %5725 = vst [vmem:[#allocation2 + $0x300] sm:$0xff] %v5340
      %5726 = vst [vmem:[#allocation2 + $0x308] sm:$0xff] %v5341
      %5727 = vst [vmem:[#allocation2 + $0x310] sm:$0xff] %v5342
      %5728 = vst [vmem:[#allocation2 + $0x318] sm:$0xff] %v5343
      %5729 = vst [vmem:[#allocation2 + $0x320] sm:$0xff] %v5344
      %5730 = vst [vmem:[#allocation2 + $0x328] sm:$0xff] %v5345
      %5731 = vst [vmem:[#allocation2 + $0x330] sm:$0xff] %v5346
      %5732 = vst [vmem:[#allocation2 + $0x338] sm:$0xff] %v5347
      %5733 = vst [vmem:[#allocation2 + $0x340] sm:$0xff] %v5348
      %5734 = vst [vmem:[#allocation2 + $0x348] sm:$0xff] %v5349
      %5735 = vst [vmem:[#allocation2 + $0x350] sm:$0xff] %v5350
      %5736 = vst [vmem:[#allocation2 + $0x358] sm:$0xff] %v5351
      %5737 = vst [vmem:[#allocation2 + $0x360] sm:$0xff] %v5352
      %5738 = vst [vmem:[#allocation2 + $0x368] sm:$0xff] %v5353
      %5739 = vst [vmem:[#allocation2 + $0x370] sm:$0xff] %v5354
      %5740 = vst [vmem:[#allocation2 + $0x378] sm:$0xff] %v5355
      %5741 = vst [vmem:[#allocation2 + $0x380] sm:$0xff] %v5356
      %5742 = vst [vmem:[#allocation2 + $0x388] sm:$0xff] %v5357
      %5743 = vst [vmem:[#allocation2 + $0x390] sm:$0xff] %v5358
      %5744 = vst [vmem:[#allocation2 + $0x398] sm:$0xff] %v5359
      %5745 = vst [vmem:[#allocation2 + $0x3a0] sm:$0xff] %v5360
      %5746 = vst [vmem:[#allocation2 + $0x3a8] sm:$0xff] %v5361
      %5747 = vst [vmem:[#allocation2 + $0x3b0] sm:$0xff] %v5362
      %5748 = vst [vmem:[#allocation2 + $0x3b8] sm:$0xff] %v5363
      %5749 = vst [vmem:[#allocation2 + $0x3c0] sm:$0xff] %v5364
      %5750 = vst [vmem:[#allocation2 + $0x3c8] sm:$0xff] %v5365
      %5751 = vst [vmem:[#allocation2 + $0x3d0] sm:$0xff] %v5366
      %5752 = vst [vmem:[#allocation2 + $0x3d8] sm:$0xff] %v5367
      %5753 = vst [vmem:[#allocation2 + $0x3e0] sm:$0xff] %v5368
      %5754 = vst [vmem:[#allocation2 + $0x3e8] sm:$0xff] %v5369
      %5755 = vst [vmem:[#allocation2 + $0x3f0] sm:$0xff] %v5370
      %5756 = vst [vmem:[#allocation2 + $0x3f8] sm:$0xff] %v5371
      %5757 = vrot.lane.b32.xlu0 %v5308, 127
      %v5758 = vpop.permute.xlu0 %5757
      %5759 = vrot.lane.b32.xlu0 %v5312, 127
      %v5760 = vpop.permute.xlu0 %5759
      %5761 = vrot.lane.b32.xlu0 %v5316, 127
      %v5762 = vpop.permute.xlu0 %5761
      %5763 = vrot.lane.b32.xlu0 %v5320, 127
      %v5764 = vpop.permute.xlu0 %5763
      %5765 = vrot.lane.b32.xlu0 %v5324, 127
      %v5766 = vpop.permute.xlu0 %5765
      %5767 = vrot.lane.b32.xlu0 %v5328, 127
      %v5768 = vpop.permute.xlu0 %5767
      %5769 = vrot.lane.b32.xlu0 %v5332, 127
      %v5770 = vpop.permute.xlu0 %5769
      %5771 = vrot.lane.b32.xlu0 %v5336, 127
      %v5772 = vpop.permute.xlu0 %5771
      %5773 = vrot.lane.b32.xlu0 %v5340, 127
      %v5774 = vpop.permute.xlu0 %5773
      %5775 = vrot.lane.b32.xlu0 %v5344, 127
      %v5776 = vpop.permute.xlu0 %5775
      %5777 = vrot.lane.b32.xlu0 %v5348, 127
      %v5778 = vpop.permute.xlu0 %5777
      %5779 = vrot.lane.b32.xlu0 %v5352, 127
      %v5780 = vpop.permute.xlu0 %5779
      %5781 = vrot.lane.b32.xlu0 %v5356, 127
      %v5782 = vpop.permute.xlu0 %5781
      %5783 = vrot.lane.b32.xlu0 %v5360, 127
      %v5784 = vpop.permute.xlu0 %5783
      %5785 = vrot.lane.b32.xlu0 %v5364, 127
      %v5786 = vpop.permute.xlu0 %5785
      %5787 = vrot.lane.b32.xlu0 %v5368, 127
      %v5788 = vpop.permute.xlu0 %5787
      %5789 = vrot.lane.b32.xlu0 %v5309, 127
      %v5790 = vpop.permute.xlu0 %5789
      %5791 = vrot.lane.b32.xlu0 %v5313, 127
      %v5792 = vpop.permute.xlu0 %5791
      %5793 = vrot.lane.b32.xlu0 %v5317, 127
      %v5794 = vpop.permute.xlu0 %5793
      %5795 = vrot.lane.b32.xlu0 %v5321, 127
      %v5796 = vpop.permute.xlu0 %5795
      %5797 = vrot.lane.b32.xlu0 %v5325, 127
      %v5798 = vpop.permute.xlu0 %5797
      %5799 = vrot.lane.b32.xlu0 %v5329, 127
      %v5800 = vpop.permute.xlu0 %5799
      %5801 = vrot.lane.b32.xlu0 %v5333, 127
      %v5802 = vpop.permute.xlu0 %5801
      %5803 = vrot.lane.b32.xlu0 %v5337, 127
      %v5804 = vpop.permute.xlu0 %5803
      %5805 = vrot.lane.b32.xlu0 %v5341, 127
      %v5806 = vpop.permute.xlu0 %5805
      %5807 = vrot.lane.b32.xlu0 %v5345, 127
      %v5808 = vpop.permute.xlu0 %5807
      %5809 = vrot.lane.b32.xlu0 %v5349, 127
      %v5810 = vpop.permute.xlu0 %5809
      %5811 = vrot.lane.b32.xlu0 %v5353, 127
      %v5812 = vpop.permute.xlu0 %5811
      %5813 = vrot.lane.b32.xlu0 %v5357, 127
      %v5814 = vpop.permute.xlu0 %5813
      %5815 = vrot.lane.b32.xlu0 %v5361, 127
      %v5816 = vpop.permute.xlu0 %5815
      %5817 = vrot.lane.b32.xlu0 %v5365, 127
      %v5818 = vpop.permute.xlu0 %5817
      %5819 = vrot.lane.b32.xlu0 %v5369, 127
      %v5820 = vpop.permute.xlu0 %5819
      %5821 = vrot.lane.b32.xlu0 %v5310, 127
      %v5822 = vpop.permute.xlu0 %5821
      %5823 = vrot.lane.b32.xlu0 %v5314, 127
      %v5824 = vpop.permute.xlu0 %5823
      %5825 = vrot.lane.b32.xlu0 %v5318, 127
      %v5826 = vpop.permute.xlu0 %5825
      %5827 = vrot.lane.b32.xlu0 %v5322, 127
      %v5828 = vpop.permute.xlu0 %5827
      %5829 = vrot.lane.b32.xlu0 %v5326, 127
      %v5830 = vpop.permute.xlu0 %5829
      %5831 = vrot.lane.b32.xlu0 %v5330, 127
      %v5832 = vpop.permute.xlu0 %5831
      %5833 = vrot.lane.b32.xlu0 %v5334, 127
      %v5834 = vpop.permute.xlu0 %5833
      %5835 = vrot.lane.b32.xlu0 %v5338, 127
      %v5836 = vpop.permute.xlu0 %5835
      %5837 = vrot.lane.b32.xlu0 %v5342, 127
      %v5838 = vpop.permute.xlu0 %5837
      %5839 = vrot.lane.b32.xlu0 %v5346, 127
      %v5840 = vpop.permute.xlu0 %5839
      %5841 = vrot.lane.b32.xlu0 %v5350, 127
      %v5842 = vpop.permute.xlu0 %5841
      %5843 = vrot.lane.b32.xlu0 %v5354, 127
      %v5844 = vpop.permute.xlu0 %5843
      %5845 = vrot.lane.b32.xlu0 %v5358, 127
      %v5846 = vpop.permute.xlu0 %5845
      %5847 = vrot.lane.b32.xlu0 %v5362, 127
      %v5848 = vpop.permute.xlu0 %5847
      %5849 = vrot.lane.b32.xlu0 %v5366, 127
      %v5850 = vpop.permute.xlu0 %5849
      %5851 = vrot.lane.b32.xlu0 %v5370, 127
      %v5852 = vpop.permute.xlu0 %5851
      %5853 = vrot.lane.b32.xlu0 %v5311, 127
      %v5854 = vpop.permute.xlu0 %5853
      %5855 = vrot.lane.b32.xlu0 %v5315, 127
      %v5856 = vpop.permute.xlu0 %5855
      %5857 = vrot.lane.b32.xlu0 %v5319, 127
      %v5858 = vpop.permute.xlu0 %5857
      %5859 = vrot.lane.b32.xlu0 %v5323, 127
      %v5860 = vpop.permute.xlu0 %5859
      %5861 = vrot.lane.b32.xlu0 %v5327, 127
      %v5862 = vpop.permute.xlu0 %5861
      %5863 = vrot.lane.b32.xlu0 %v5331, 127
      %v5864 = vpop.permute.xlu0 %5863
      %5865 = vrot.lane.b32.xlu0 %v5335, 127
      %v5866 = vpop.permute.xlu0 %5865
      %5867 = vrot.lane.b32.xlu0 %v5339, 127
      %v5868 = vpop.permute.xlu0 %5867
      %5869 = vrot.lane.b32.xlu0 %v5343, 127
      %v5870 = vpop.permute.xlu0 %5869
      %5871 = vrot.lane.b32.xlu0 %v5347, 127
      %v5872 = vpop.permute.xlu0 %5871
      %5873 = vrot.lane.b32.xlu0 %v5351, 127
      %v5874 = vpop.permute.xlu0 %5873
      %5875 = vrot.lane.b32.xlu0 %v5355, 127
      %v5876 = vpop.permute.xlu0 %5875
      %5877 = vrot.lane.b32.xlu0 %v5359, 127
      %v5878 = vpop.permute.xlu0 %5877
      %5879 = vrot.lane.b32.xlu0 %v5363, 127
      %v5880 = vpop.permute.xlu0 %5879
      %5881 = vrot.lane.b32.xlu0 %v5367, 127
      %v5882 = vpop.permute.xlu0 %5881
      %5883 = vrot.lane.b32.xlu0 %v5371, 127
      %v5884 = vpop.permute.xlu0 %5883
      %v5885 = vsel %vm765, %v5822, %v5854
      %v5886 = vsel %vm765, %v5824, %v5856
      %v5887 = vsel %vm765, %v5826, %v5858
      %v5888 = vsel %vm765, %v5828, %v5860
      %v5889 = vsel %vm765, %v5830, %v5862
      %v5890 = vsel %vm765, %v5832, %v5864
      %v5891 = vsel %vm765, %v5834, %v5866
      %v5892 = vsel %vm765, %v5836, %v5868
      %v5893 = vsel %vm765, %v5838, %v5870
      %v5894 = vsel %vm765, %v5840, %v5872
      %v5895 = vsel %vm765, %v5842, %v5874
      %v5896 = vsel %vm765, %v5844, %v5876
      %v5897 = vsel %vm765, %v5846, %v5878
      %v5898 = vsel %vm765, %v5848, %v5880
      %v5899 = vsel %vm765, %v5850, %v5882
      %v5900 = vsel %vm765, %v5852, %v5884
      %v5901 = vsel %vm765, %v5790, %v5822
      %v5902 = vsel %vm765, %v5792, %v5824
      %v5903 = vsel %vm765, %v5794, %v5826
      %v5904 = vsel %vm765, %v5796, %v5828
      %v5905 = vsel %vm765, %v5798, %v5830
      %v5906 = vsel %vm765, %v5800, %v5832
      %v5907 = vsel %vm765, %v5802, %v5834
      %v5908 = vsel %vm765, %v5804, %v5836
      %v5909 = vsel %vm765, %v5806, %v5838
      %v5910 = vsel %vm765, %v5808, %v5840
      %v5911 = vsel %vm765, %v5810, %v5842
      %v5912 = vsel %vm765, %v5812, %v5844
      %v5913 = vsel %vm765, %v5814, %v5846
      %v5914 = vsel %vm765, %v5816, %v5848
      %v5915 = vsel %vm765, %v5818, %v5850
      %v5916 = vsel %vm765, %v5820, %v5852
      %v5917 = vsel %vm765, %v5758, %v5790
      %v5918 = vsel %vm765, %v5760, %v5792
      %v5919 = vsel %vm765, %v5762, %v5794
      %v5920 = vsel %vm765, %v5764, %v5796
      %v5921 = vsel %vm765, %v5766, %v5798
      %v5922 = vsel %vm765, %v5768, %v5800
      %v5923 = vsel %vm765, %v5770, %v5802
      %v5924 = vsel %vm765, %v5772, %v5804
      %v5925 = vsel %vm765, %v5774, %v5806
      %v5926 = vsel %vm765, %v5776, %v5808
      %v5927 = vsel %vm765, %v5778, %v5810
      %v5928 = vsel %vm765, %v5780, %v5812
      %v5929 = vsel %vm765, %v5782, %v5814
      %v5930 = vsel %vm765, %v5784, %v5816
      %v5931 = vsel %vm765, %v5786, %v5818
      %v5932 = vsel %vm765, %v5788, %v5820
      %v5933 = vsel %vm765, %v5854, %v5758
      %v5934 = vsel %vm765, %v5856, %v5760
      %v5935 = vsel %vm765, %v5858, %v5762
      %v5936 = vsel %vm765, %v5860, %v5764
      %v5937 = vsel %vm765, %v5862, %v5766
      %v5938 = vsel %vm765, %v5864, %v5768
      %v5939 = vsel %vm765, %v5866, %v5770
      %v5940 = vsel %vm765, %v5868, %v5772
      %v5941 = vsel %vm765, %v5870, %v5774
      %v5942 = vsel %vm765, %v5872, %v5776
      %v5943 = vsel %vm765, %v5874, %v5778
      %v5944 = vsel %vm765, %v5876, %v5780
      %v5945 = vsel %vm765, %v5878, %v5782
      %v5946 = vsel %vm765, %v5880, %v5784
      %v5947 = vsel %vm765, %v5882, %v5786
      %v5948 = vsel %vm765, %v5884, %v5788
      %5949 = vst [vmem:[#allocation2 + $0x400] sm:$0xff] %v5917
      %5950 = vst [vmem:[#allocation2 + $0x408] sm:$0xff] %v5901
      %5951 = vst [vmem:[#allocation2 + $0x410] sm:$0xff] %v5885
      %5952 = vst [vmem:[#allocation2 + $0x418] sm:$0xff] %v5933
      %5953 = vst [vmem:[#allocation2 + $0x420] sm:$0xff] %v5918
      %5954 = vst [vmem:[#allocation2 + $0x428] sm:$0xff] %v5902
      %5955 = vst [vmem:[#allocation2 + $0x430] sm:$0xff] %v5886
      %5956 = vst [vmem:[#allocation2 + $0x438] sm:$0xff] %v5934
      %5957 = vst [vmem:[#allocation2 + $0x440] sm:$0xff] %v5919
      %5958 = vst [vmem:[#allocation2 + $0x448] sm:$0xff] %v5903
      %5959 = vst [vmem:[#allocation2 + $0x450] sm:$0xff] %v5887
      %5960 = vst [vmem:[#allocation2 + $0x458] sm:$0xff] %v5935
      %5961 = vst [vmem:[#allocation2 + $0x460] sm:$0xff] %v5920
      %5962 = vst [vmem:[#allocation2 + $0x468] sm:$0xff] %v5904
      %5963 = vst [vmem:[#allocation2 + $0x470] sm:$0xff] %v5888
      %5964 = vst [vmem:[#allocation2 + $0x478] sm:$0xff] %v5936
      %5965 = vst [vmem:[#allocation2 + $0x480] sm:$0xff] %v5921
      %5966 = vst [vmem:[#allocation2 + $0x488] sm:$0xff] %v5905
      %5967 = vst [vmem:[#allocation2 + $0x490] sm:$0xff] %v5889
      %5968 = vst [vmem:[#allocation2 + $0x498] sm:$0xff] %v5937
      %5969 = vst [vmem:[#allocation2 + $0x4a0] sm:$0xff] %v5922
      %5970 = vst [vmem:[#allocation2 + $0x4a8] sm:$0xff] %v5906
      %5971 = vst [vmem:[#allocation2 + $0x4b0] sm:$0xff] %v5890
      %5972 = vst [vmem:[#allocation2 + $0x4b8] sm:$0xff] %v5938
      %5973 = vst [vmem:[#allocation2 + $0x4c0] sm:$0xff] %v5923
      %5974 = vst [vmem:[#allocation2 + $0x4c8] sm:$0xff] %v5907
      %5975 = vst [vmem:[#allocation2 + $0x4d0] sm:$0xff] %v5891
      %5976 = vst [vmem:[#allocation2 + $0x4d8] sm:$0xff] %v5939
      %5977 = vst [vmem:[#allocation2 + $0x4e0] sm:$0xff] %v5924
      %5978 = vst [vmem:[#allocation2 + $0x4e8] sm:$0xff] %v5908
      %5979 = vst [vmem:[#allocation2 + $0x4f0] sm:$0xff] %v5892
      %5980 = vst [vmem:[#allocation2 + $0x4f8] sm:$0xff] %v5940
      %5981 = vst [vmem:[#allocation2 + $0x500] sm:$0xff] %v5925
      %5982 = vst [vmem:[#allocation2 + $0x508] sm:$0xff] %v5909
      %5983 = vst [vmem:[#allocation2 + $0x510] sm:$0xff] %v5893
      %5984 = vst [vmem:[#allocation2 + $0x518] sm:$0xff] %v5941
      %5985 = vst [vmem:[#allocation2 + $0x520] sm:$0xff] %v5926
      %5986 = vst [vmem:[#allocation2 + $0x528] sm:$0xff] %v5910
      %5987 = vst [vmem:[#allocation2 + $0x530] sm:$0xff] %v5894
      %5988 = vst [vmem:[#allocation2 + $0x538] sm:$0xff] %v5942
      %5989 = vst [vmem:[#allocation2 + $0x540] sm:$0xff] %v5927
      %5990 = vst [vmem:[#allocation2 + $0x548] sm:$0xff] %v5911
      %5991 = vst [vmem:[#allocation2 + $0x550] sm:$0xff] %v5895
      %5992 = vst [vmem:[#allocation2 + $0x558] sm:$0xff] %v5943
      %5993 = vst [vmem:[#allocation2 + $0x560] sm:$0xff] %v5928
      %5994 = vst [vmem:[#allocation2 + $0x568] sm:$0xff] %v5912
      %5995 = vst [vmem:[#allocation2 + $0x570] sm:$0xff] %v5896
      %5996 = vst [vmem:[#allocation2 + $0x578] sm:$0xff] %v5944
      %5997 = vst [vmem:[#allocation2 + $0x580] sm:$0xff] %v5929
      %5998 = vst [vmem:[#allocation2 + $0x588] sm:$0xff] %v5913
      %5999 = vst [vmem:[#allocation2 + $0x590] sm:$0xff] %v5897
      %6000 = vst [vmem:[#allocation2 + $0x598] sm:$0xff] %v5945
      %6001 = vst [vmem:[#allocation2 + $0x5a0] sm:$0xff] %v5930
      %6002 = vst [vmem:[#allocation2 + $0x5a8] sm:$0xff] %v5914
      %6003 = vst [vmem:[#allocation2 + $0x5b0] sm:$0xff] %v5898
      %6004 = vst [vmem:[#allocation2 + $0x5b8] sm:$0xff] %v5946
      %6005 = vst [vmem:[#allocation2 + $0x5c0] sm:$0xff] %v5931
      %6006 = vst [vmem:[#allocation2 + $0x5c8] sm:$0xff] %v5915
      %6007 = vst [vmem:[#allocation2 + $0x5d0] sm:$0xff] %v5899
      %6008 = vst [vmem:[#allocation2 + $0x5d8] sm:$0xff] %v5947
      %6009 = vst [vmem:[#allocation2 + $0x5e0] sm:$0xff] %v5932
      %6010 = vst [vmem:[#allocation2 + $0x5e8] sm:$0xff] %v5916
      %6011 = vst [vmem:[#allocation2 + $0x5f0] sm:$0xff] %v5900
      %6012 = vst [vmem:[#allocation2 + $0x5f8] sm:$0xff] %v5948
      %v6013 = vld [vmem:[#allocation2] sm:$0xff]
      %v6014 = vld [vmem:[#allocation2 + $0x8] sm:$0xff]
      %v6015 = vld [vmem:[#allocation2 + $0x10] sm:$0xff]
      %v6016 = vld [vmem:[#allocation2 + $0x18] sm:$0xff]
      %v6017 = vld [vmem:[#allocation2 + $0x20] sm:$0xff]
      %v6018 = vld [vmem:[#allocation2 + $0x28] sm:$0xff]
      %v6019 = vld [vmem:[#allocation2 + $0x30] sm:$0xff]
      %v6020 = vld [vmem:[#allocation2 + $0x38] sm:$0xff]
      %v6021 = vld [vmem:[#allocation2 + $0x40] sm:$0xff]
      %v6022 = vld [vmem:[#allocation2 + $0x48] sm:$0xff]
      %v6023 = vld [vmem:[#allocation2 + $0x50] sm:$0xff]
      %v6024 = vld [vmem:[#allocation2 + $0x58] sm:$0xff]
      %v6025 = vld [vmem:[#allocation2 + $0x60] sm:$0xff]
      %v6026 = vld [vmem:[#allocation2 + $0x68] sm:$0xff]
      %v6027 = vld [vmem:[#allocation2 + $0x70] sm:$0xff]
      %v6028 = vld [vmem:[#allocation2 + $0x78] sm:$0xff]
      %v6029 = vld [vmem:[#allocation2 + $0x80] sm:$0xff]
      %v6030 = vld [vmem:[#allocation2 + $0x88] sm:$0xff]
      %v6031 = vld [vmem:[#allocation2 + $0x90] sm:$0xff]
      %v6032 = vld [vmem:[#allocation2 + $0x98] sm:$0xff]
      %v6033 = vld [vmem:[#allocation2 + $0xa0] sm:$0xff]
      %v6034 = vld [vmem:[#allocation2 + $0xa8] sm:$0xff]
      %v6035 = vld [vmem:[#allocation2 + $0xb0] sm:$0xff]
      %v6036 = vld [vmem:[#allocation2 + $0xb8] sm:$0xff]
      %v6037 = vld [vmem:[#allocation2 + $0xc0] sm:$0xff]
      %v6038 = vld [vmem:[#allocation2 + $0xc8] sm:$0xff]
      %v6039 = vld [vmem:[#allocation2 + $0xd0] sm:$0xff]
      %v6040 = vld [vmem:[#allocation2 + $0xd8] sm:$0xff]
      %v6041 = vld [vmem:[#allocation2 + $0xe0] sm:$0xff]
      %v6042 = vld [vmem:[#allocation2 + $0xe8] sm:$0xff]
      %v6043 = vld [vmem:[#allocation2 + $0xf0] sm:$0xff]
      %v6044 = vld [vmem:[#allocation2 + $0xf8] sm:$0xff]
      %v6045 = vld [vmem:[#allocation2 + $0x100] sm:$0xff]
      %v6046 = vld [vmem:[#allocation2 + $0x108] sm:$0xff]
      %v6047 = vld [vmem:[#allocation2 + $0x110] sm:$0xff]
      %v6048 = vld [vmem:[#allocation2 + $0x118] sm:$0xff]
      %v6049 = vld [vmem:[#allocation2 + $0x120] sm:$0xff]
      %v6050 = vld [vmem:[#allocation2 + $0x128] sm:$0xff]
      %v6051 = vld [vmem:[#allocation2 + $0x130] sm:$0xff]
      %v6052 = vld [vmem:[#allocation2 + $0x138] sm:$0xff]
      %v6053 = vld [vmem:[#allocation2 + $0x140] sm:$0xff]
      %v6054 = vld [vmem:[#allocation2 + $0x148] sm:$0xff]
      %v6055 = vld [vmem:[#allocation2 + $0x150] sm:$0xff]
      %v6056 = vld [vmem:[#allocation2 + $0x158] sm:$0xff]
      %v6057 = vld [vmem:[#allocation2 + $0x160] sm:$0xff]
      %v6058 = vld [vmem:[#allocation2 + $0x168] sm:$0xff]
      %v6059 = vld [vmem:[#allocation2 + $0x170] sm:$0xff]
      %v6060 = vld [vmem:[#allocation2 + $0x178] sm:$0xff]
      %v6061 = vld [vmem:[#allocation2 + $0x180] sm:$0xff]
      %v6062 = vld [vmem:[#allocation2 + $0x188] sm:$0xff]
      %v6063 = vld [vmem:[#allocation2 + $0x190] sm:$0xff]
      %v6064 = vld [vmem:[#allocation2 + $0x198] sm:$0xff]
      %v6065 = vld [vmem:[#allocation2 + $0x1a0] sm:$0xff]
      %v6066 = vld [vmem:[#allocation2 + $0x1a8] sm:$0xff]
      %v6067 = vld [vmem:[#allocation2 + $0x1b0] sm:$0xff]
      %v6068 = vld [vmem:[#allocation2 + $0x1b8] sm:$0xff]
      %v6069 = vld [vmem:[#allocation2 + $0x1c0] sm:$0xff]
      %v6070 = vld [vmem:[#allocation2 + $0x1c8] sm:$0xff]
      %v6071 = vld [vmem:[#allocation2 + $0x1d0] sm:$0xff]
      %v6072 = vld [vmem:[#allocation2 + $0x1d8] sm:$0xff]
      %v6073 = vld [vmem:[#allocation2 + $0x1e0] sm:$0xff]
      %v6074 = vld [vmem:[#allocation2 + $0x1e8] sm:$0xff]
      %v6075 = vld [vmem:[#allocation2 + $0x1f0] sm:$0xff]
      %v6076 = vld [vmem:[#allocation2 + $0x1f8] sm:$0xff]
      %v6077 = vld [vmem:[#allocation2 + $0x200] sm:$0xff]
      %v6078 = vld [vmem:[#allocation2 + $0x208] sm:$0xff]
      %v6079 = vld [vmem:[#allocation2 + $0x210] sm:$0xff]
      %v6080 = vld [vmem:[#allocation2 + $0x218] sm:$0xff]
      %v6081 = vld [vmem:[#allocation2 + $0x220] sm:$0xff]
      %v6082 = vld [vmem:[#allocation2 + $0x228] sm:$0xff]
      %v6083 = vld [vmem:[#allocation2 + $0x230] sm:$0xff]
      %v6084 = vld [vmem:[#allocation2 + $0x238] sm:$0xff]
      %v6085 = vld [vmem:[#allocation2 + $0x240] sm:$0xff]
      %v6086 = vld [vmem:[#allocation2 + $0x248] sm:$0xff]
      %v6087 = vld [vmem:[#allocation2 + $0x250] sm:$0xff]
      %v6088 = vld [vmem:[#allocation2 + $0x258] sm:$0xff]
      %v6089 = vld [vmem:[#allocation2 + $0x260] sm:$0xff]
      %v6090 = vld [vmem:[#allocation2 + $0x268] sm:$0xff]
      %v6091 = vld [vmem:[#allocation2 + $0x270] sm:$0xff]
      %v6092 = vld [vmem:[#allocation2 + $0x278] sm:$0xff]
      %v6093 = vld [vmem:[#allocation2 + $0x280] sm:$0xff]
      %v6094 = vld [vmem:[#allocation2 + $0x288] sm:$0xff]
      %v6095 = vld [vmem:[#allocation2 + $0x290] sm:$0xff]
      %v6096 = vld [vmem:[#allocation2 + $0x298] sm:$0xff]
      %v6097 = vld [vmem:[#allocation2 + $0x2a0] sm:$0xff]
      %v6098 = vld [vmem:[#allocation2 + $0x2a8] sm:$0xff]
      %v6099 = vld [vmem:[#allocation2 + $0x2b0] sm:$0xff]
      %v6100 = vld [vmem:[#allocation2 + $0x2b8] sm:$0xff]
      %v6101 = vld [vmem:[#allocation2 + $0x2c0] sm:$0xff]
      %v6102 = vld [vmem:[#allocation2 + $0x2c8] sm:$0xff]
      %v6103 = vld [vmem:[#allocation2 + $0x2d0] sm:$0xff]
      %v6104 = vld [vmem:[#allocation2 + $0x2d8] sm:$0xff]
      %v6105 = vld [vmem:[#allocation2 + $0x2e0] sm:$0xff]
      %v6106 = vld [vmem:[#allocation2 + $0x2e8] sm:$0xff]
      %v6107 = vld [vmem:[#allocation2 + $0x2f0] sm:$0xff]
      %v6108 = vld [vmem:[#allocation2 + $0x2f8] sm:$0xff]
      %v6109 = vld [vmem:[#allocation2 + $0x300] sm:$0xff]
      %v6110 = vld [vmem:[#allocation2 + $0x308] sm:$0xff]
      %v6111 = vld [vmem:[#allocation2 + $0x310] sm:$0xff]
      %v6112 = vld [vmem:[#allocation2 + $0x318] sm:$0xff]
      %v6113 = vld [vmem:[#allocation2 + $0x320] sm:$0xff]
      %v6114 = vld [vmem:[#allocation2 + $0x328] sm:$0xff]
      %v6115 = vld [vmem:[#allocation2 + $0x330] sm:$0xff]
      %v6116 = vld [vmem:[#allocation2 + $0x338] sm:$0xff]
      %v6117 = vld [vmem:[#allocation2 + $0x340] sm:$0xff]
      %v6118 = vld [vmem:[#allocation2 + $0x348] sm:$0xff]
      %v6119 = vld [vmem:[#allocation2 + $0x350] sm:$0xff]
      %v6120 = vld [vmem:[#allocation2 + $0x358] sm:$0xff]
      %v6121 = vld [vmem:[#allocation2 + $0x360] sm:$0xff]
      %v6122 = vld [vmem:[#allocation2 + $0x368] sm:$0xff]
      %v6123 = vld [vmem:[#allocation2 + $0x370] sm:$0xff]
      %v6124 = vld [vmem:[#allocation2 + $0x378] sm:$0xff]
      %v6125 = vld [vmem:[#allocation2 + $0x380] sm:$0xff]
      %v6126 = vld [vmem:[#allocation2 + $0x388] sm:$0xff]
      %v6127 = vld [vmem:[#allocation2 + $0x390] sm:$0xff]
      %v6128 = vld [vmem:[#allocation2 + $0x398] sm:$0xff]
      %v6129 = vld [vmem:[#allocation2 + $0x3a0] sm:$0xff]
      %v6130 = vld [vmem:[#allocation2 + $0x3a8] sm:$0xff]
      %v6131 = vld [vmem:[#allocation2 + $0x3b0] sm:$0xff]
      %v6132 = vld [vmem:[#allocation2 + $0x3b8] sm:$0xff]
      %v6133 = vld [vmem:[#allocation2 + $0x3c0] sm:$0xff]
      %v6134 = vld [vmem:[#allocation2 + $0x3c8] sm:$0xff]
      %v6135 = vld [vmem:[#allocation2 + $0x3d0] sm:$0xff]
      %v6136 = vld [vmem:[#allocation2 + $0x3d8] sm:$0xff]
      %v6137 = vld [vmem:[#allocation2 + $0x3e0] sm:$0xff]
      %v6138 = vld [vmem:[#allocation2 + $0x3e8] sm:$0xff]
      %v6139 = vld [vmem:[#allocation2 + $0x3f0] sm:$0xff]
      %v6140 = vld [vmem:[#allocation2 + $0x3f8] sm:$0xff]
      %v6141 = vld [vmem:[#allocation2 + $0x400] sm:$0xff]
      %v6142 = vld [vmem:[#allocation2 + $0x408] sm:$0xff]
      %v6143 = vld [vmem:[#allocation2 + $0x410] sm:$0xff]
      %v6144 = vld [vmem:[#allocation2 + $0x418] sm:$0xff]
      %v6145 = vld [vmem:[#allocation2 + $0x420] sm:$0xff]
      %v6146 = vld [vmem:[#allocation2 + $0x428] sm:$0xff]
      %v6147 = vld [vmem:[#allocation2 + $0x430] sm:$0xff]
      %v6148 = vld [vmem:[#allocation2 + $0x438] sm:$0xff]
      %v6149 = vld [vmem:[#allocation2 + $0x440] sm:$0xff]
      %v6150 = vld [vmem:[#allocation2 + $0x448] sm:$0xff]
      %v6151 = vld [vmem:[#allocation2 + $0x450] sm:$0xff]
      %v6152 = vld [vmem:[#allocation2 + $0x458] sm:$0xff]
      %v6153 = vld [vmem:[#allocation2 + $0x460] sm:$0xff]
      %v6154 = vld [vmem:[#allocation2 + $0x468] sm:$0xff]
      %v6155 = vld [vmem:[#allocation2 + $0x470] sm:$0xff]
      %v6156 = vld [vmem:[#allocation2 + $0x478] sm:$0xff]
      %v6157 = vld [vmem:[#allocation2 + $0x480] sm:$0xff]
      %v6158 = vld [vmem:[#allocation2 + $0x488] sm:$0xff]
      %v6159 = vld [vmem:[#allocation2 + $0x490] sm:$0xff]
      %v6160 = vld [vmem:[#allocation2 + $0x498] sm:$0xff]
      %v6161 = vld [vmem:[#allocation2 + $0x4a0] sm:$0xff]
      %v6162 = vld [vmem:[#allocation2 + $0x4a8] sm:$0xff]
      %v6163 = vld [vmem:[#allocation2 + $0x4b0] sm:$0xff]
      %v6164 = vld [vmem:[#allocation2 + $0x4b8] sm:$0xff]
      %v6165 = vld [vmem:[#allocation2 + $0x4c0] sm:$0xff]
      %v6166 = vld [vmem:[#allocation2 + $0x4c8] sm:$0xff]
      %v6167 = vld [vmem:[#allocation2 + $0x4d0] sm:$0xff]
      %v6168 = vld [vmem:[#allocation2 + $0x4d8] sm:$0xff]
      %v6169 = vld [vmem:[#allocation2 + $0x4e0] sm:$0xff]
      %v6170 = vld [vmem:[#allocation2 + $0x4e8] sm:$0xff]
      %v6171 = vld [vmem:[#allocation2 + $0x4f0] sm:$0xff]
      %v6172 = vld [vmem:[#allocation2 + $0x4f8] sm:$0xff]
      %v6173 = vld [vmem:[#allocation2 + $0x500] sm:$0xff]
      %v6174 = vld [vmem:[#allocation2 + $0x508] sm:$0xff]
      %v6175 = vld [vmem:[#allocation2 + $0x510] sm:$0xff]
      %v6176 = vld [vmem:[#allocation2 + $0x518] sm:$0xff]
      %v6177 = vld [vmem:[#allocation2 + $0x520] sm:$0xff]
      %v6178 = vld [vmem:[#allocation2 + $0x528] sm:$0xff]
      %v6179 = vld [vmem:[#allocation2 + $0x530] sm:$0xff]
      %v6180 = vld [vmem:[#allocation2 + $0x538] sm:$0xff]
      %v6181 = vld [vmem:[#allocation2 + $0x540] sm:$0xff]
      %v6182 = vld [vmem:[#allocation2 + $0x548] sm:$0xff]
      %v6183 = vld [vmem:[#allocation2 + $0x550] sm:$0xff]
      %v6184 = vld [vmem:[#allocation2 + $0x558] sm:$0xff]
      %v6185 = vld [vmem:[#allocation2 + $0x560] sm:$0xff]
      %v6186 = vld [vmem:[#allocation2 + $0x568] sm:$0xff]
      %v6187 = vld [vmem:[#allocation2 + $0x570] sm:$0xff]
      %v6188 = vld [vmem:[#allocation2 + $0x578] sm:$0xff]
      %v6189 = vld [vmem:[#allocation2 + $0x580] sm:$0xff]
      %v6190 = vld [vmem:[#allocation2 + $0x588] sm:$0xff]
      %v6191 = vld [vmem:[#allocation2 + $0x590] sm:$0xff]
      %v6192 = vld [vmem:[#allocation2 + $0x598] sm:$0xff]
      %v6193 = vld [vmem:[#allocation2 + $0x5a0] sm:$0xff]
      %v6194 = vld [vmem:[#allocation2 + $0x5a8] sm:$0xff]
      %v6195 = vld [vmem:[#allocation2 + $0x5b0] sm:$0xff]
      %v6196 = vld [vmem:[#allocation2 + $0x5b8] sm:$0xff]
      %v6197 = vld [vmem:[#allocation2 + $0x5c0] sm:$0xff]
      %v6198 = vld [vmem:[#allocation2 + $0x5c8] sm:$0xff]
      %v6199 = vld [vmem:[#allocation2 + $0x5d0] sm:$0xff]
      %v6200 = vld [vmem:[#allocation2 + $0x5d8] sm:$0xff]
      %v6201 = vld [vmem:[#allocation2 + $0x5e0] sm:$0xff]
      %v6202 = vld [vmem:[#allocation2 + $0x5e8] sm:$0xff]
      %v6203 = vld [vmem:[#allocation2 + $0x5f0] sm:$0xff]
      %v6204 = vld [vmem:[#allocation2 + $0x5f8] sm:$0xff]
      %6206 = vset.pattern.permute.xlu0 3
      %6207 = vperm.xlu0 %6206, %v5421
      %v6208 = vpop.permute.xlu0 %6207
      %6211 = vset.pattern.permute.xlu0 3
      %6212 = vperm.xlu0 %6211, %v5422
      %v6213 = vpop.permute.xlu0 %6212
      %6216 = vset.pattern.permute.xlu0 3
      %6217 = vperm.xlu0 %6216, %v5423
      %v6218 = vpop.permute.xlu0 %6217
      %6221 = vset.pattern.permute.xlu0 3
      %6222 = vperm.xlu0 %6221, %v5424
      %v6223 = vpop.permute.xlu0 %6222
      %6226 = vset.pattern.permute.xlu0 3
      %6227 = vperm.xlu0 %6226, %v5425
      %v6228 = vpop.permute.xlu0 %6227
      %6231 = vset.pattern.permute.xlu0 3
      %6232 = vperm.xlu0 %6231, %v5426
      %v6233 = vpop.permute.xlu0 %6232
      %6236 = vset.pattern.permute.xlu0 3
      %6237 = vperm.xlu0 %6236, %v5427
      %v6238 = vpop.permute.xlu0 %6237
      %6241 = vset.pattern.permute.xlu0 3
      %6242 = vperm.xlu0 %6241, %v5428
      %v6243 = vpop.permute.xlu0 %6242
      %6246 = vset.pattern.permute.xlu0 3
      %6247 = vperm.xlu0 %6246, %v5429
      %v6248 = vpop.permute.xlu0 %6247
      %6251 = vset.pattern.permute.xlu0 3
      %6252 = vperm.xlu0 %6251, %v5430
      %v6253 = vpop.permute.xlu0 %6252
      %6256 = vset.pattern.permute.xlu0 3
      %6257 = vperm.xlu0 %6256, %v5431
      %v6258 = vpop.permute.xlu0 %6257
      %6261 = vset.pattern.permute.xlu0 3
      %6262 = vperm.xlu0 %6261, %v5432
      %v6263 = vpop.permute.xlu0 %6262
      %6266 = vset.pattern.permute.xlu0 3
      %6267 = vperm.xlu0 %6266, %v5433
      %v6268 = vpop.permute.xlu0 %6267
      %6271 = vset.pattern.permute.xlu0 3
      %6272 = vperm.xlu0 %6271, %v5434
      %v6273 = vpop.permute.xlu0 %6272
      %6276 = vset.pattern.permute.xlu0 3
      %6277 = vperm.xlu0 %6276, %v5435
      %v6278 = vpop.permute.xlu0 %6277
      %6281 = vset.pattern.permute.xlu0 3
      %6282 = vperm.xlu0 %6281, %v5436
      %v6283 = vpop.permute.xlu0 %6282
      %6285 = vmatprep.subr.mxu0 %v6074
      %6286 = vmatpush1.msra.mxu0 %v6073
      %6287 = vmatprep.subr.mxu0 %v6070
      %6288 = vmatpush1.msra.mxu0 %v6069
      %6289 = vmatprep.subr.mxu0 %v6066
      %6290 = vmatpush1.msra.mxu0 %v6065
      %6291 = vmatprep.subr.mxu0 %v6062
      %6292 = vmatpush1.msra.mxu0 %v6061
      %6293 = vmatprep.subr.mxu0 %v6058
      %6294 = vmatpush1.msra.mxu0 %v6057
      %6295 = vmatprep.subr.mxu0 %v6054
      %6296 = vmatpush1.msra.mxu0 %v6053
      %6297 = vmatprep.subr.mxu0 %v6050
      %6298 = vmatpush1.msra.mxu0 %v6049
      %6299 = vmatprep.subr.mxu0 %v6046
      %6300 = vmatpush1.msra.mxu0 %v6045
      %6301 = vmatprep.subr.mxu0 %v6042
      %6302 = vmatpush1.msra.mxu0 %v6041
      %6303 = vmatprep.subr.mxu0 %v6038
      %6304 = vmatpush1.msra.mxu0 %v6037
      %6305 = vmatprep.subr.mxu0 %v6034
      %6306 = vmatpush1.msra.mxu0 %v6033
      %6307 = vmatprep.subr.mxu0 %v6030
      %6308 = vmatpush1.msra.mxu0 %v6029
      %6309 = vmatprep.subr.mxu0 %v6026
      %6310 = vmatpush1.msra.mxu0 %v6025
      %6311 = vmatprep.subr.mxu0 %v6022
      %6312 = vmatpush1.msra.mxu0 %v6021
      %6313 = vmatprep.subr.mxu0 %v6018
      %6314 = vmatpush1.msra.mxu0 %v6017
      %6315 = vmatprep.subr.mxu0 %v6014
      %6316 = vmatpush1.msra.mxu0 %v6013
      %6317 = vmatprep.subr.mxu0 %v6138
      %6318 = vmatpush2.msra.mxu0 %v6137
      %6319 = vmatprep.subr.mxu0 %v6134
      %6320 = vmatpush2.msra.mxu0 %v6133
      %6321 = vmatprep.subr.mxu0 %v6130
      %6322 = vmatpush2.msra.mxu0 %v6129
      %6323 = vmatprep.subr.mxu0 %v6126
      %6324 = vmatpush2.msra.mxu0 %v6125
      %6325 = vmatprep.subr.mxu0 %v6122
      %6326 = vmatpush2.msra.mxu0 %v6121
      %6327 = vmatprep.subr.mxu0 %v6118
      %6328 = vmatpush2.msra.mxu0 %v6117
      %6329 = vmatprep.subr.mxu0 %v6114
      %6330 = vmatpush2.msra.mxu0 %v6113
      %6331 = vmatprep.subr.mxu0 %v6110
      %6332 = vmatpush2.msra.mxu0 %v6109
      %6333 = vmatprep.subr.mxu0 %v6106
      %6334 = vmatpush2.msra.mxu0 %v6105
      %6335 = vmatprep.subr.mxu0 %v6102
      %6336 = vmatpush2.msra.mxu0 %v6101
      %6337 = vmatprep.subr.mxu0 %v6098
      %6338 = vmatpush2.msra.mxu0 %v6097
      %6339 = vmatprep.subr.mxu0 %v6094
      %6340 = vmatpush2.msra.mxu0 %v6093
      %6341 = vmatprep.subr.mxu0 %v6090
      %6342 = vmatpush2.msra.mxu0 %v6089
      %6343 = vmatprep.subr.mxu0 %v6086
      %6344 = vmatpush2.msra.mxu0 %v6085
      %6345 = vmatprep.subr.mxu0 %v6082
      %6346 = vmatpush2.msra.mxu0 %v6081
      %6347 = vmatprep.subr.mxu0 %v6078
      %6348 = vmatpush2.msra.mxu0 %v6077
      %6349 = vmatprep.mubr.f32.mxu0 %v5374
      %6350 = vmatmul.mubr.f32.gmra.mxu0 %v5373
      %v6351 = vpop.f32.mrf.mxu0
      %v6352 = vadd.f32 %v6208, %v6351
      %v6353 = vpop.f32.mrf.mxu0
      %v6354 = vadd.f32 %v6208, %v6353
      %6355 = vmatprep.mubr.f32.mxu0 %v5377
      %6356 = vmatmul.mubr.f32.gmra.mxu0 %v5376
      %v6357 = vpop.f32.mrf.mxu0
      %v6358 = vadd.f32 %v6213, %v6357
      %v6359 = vpop.f32.mrf.mxu0
      %v6360 = vadd.f32 %v6213, %v6359
      %6361 = vmatprep.mubr.f32.mxu0 %v5380
      %6362 = vmatmul.mubr.f32.gmra.mxu0 %v5379
      %v6363 = vpop.f32.mrf.mxu0
      %v6364 = vadd.f32 %v6218, %v6363
      %v6365 = vpop.f32.mrf.mxu0
      %v6366 = vadd.f32 %v6218, %v6365
      %6367 = vmatprep.mubr.f32.mxu0 %v5383
      %6368 = vmatmul.mubr.f32.gmra.mxu0 %v5382
      %v6369 = vpop.f32.mrf.mxu0
      %v6370 = vadd.f32 %v6223, %v6369
      %v6371 = vpop.f32.mrf.mxu0
      %v6372 = vadd.f32 %v6223, %v6371
      %6373 = vmatprep.mubr.f32.mxu0 %v5386
      %6374 = vmatmul.mubr.f32.gmra.mxu0 %v5385
      %v6375 = vpop.f32.mrf.mxu0
      %v6376 = vadd.f32 %v6228, %v6375
      %v6377 = vpop.f32.mrf.mxu0
      %v6378 = vadd.f32 %v6228, %v6377
      %6379 = vmatprep.mubr.f32.mxu0 %v5389
      %6380 = vmatmul.mubr.f32.gmra.mxu0 %v5388
      %v6381 = vpop.f32.mrf.mxu0
      %v6382 = vadd.f32 %v6233, %v6381
      %v6383 = vpop.f32.mrf.mxu0
      %v6384 = vadd.f32 %v6233, %v6383
      %6385 = vmatprep.mubr.f32.mxu0 %v5392
      %6386 = vmatmul.mubr.f32.gmra.mxu0 %v5391
      %v6387 = vpop.f32.mrf.mxu0
      %v6388 = vadd.f32 %v6238, %v6387
      %v6389 = vpop.f32.mrf.mxu0
      %v6390 = vadd.f32 %v6238, %v6389
      %6391 = vmatprep.mubr.f32.mxu0 %v5395
      %6392 = vmatmul.mubr.f32.gmra.mxu0 %v5394
      %v6393 = vpop.f32.mrf.mxu0
      %v6394 = vadd.f32 %v6243, %v6393
      %v6395 = vpop.f32.mrf.mxu0
      %v6396 = vadd.f32 %v6243, %v6395
      %6397 = vmatprep.mubr.f32.mxu0 %v5398
      %6398 = vmatmul.mubr.f32.gmra.mxu0 %v5397
      %v6399 = vpop.f32.mrf.mxu0
      %v6400 = vadd.f32 %v6248, %v6399
      %v6401 = vpop.f32.mrf.mxu0
      %v6402 = vadd.f32 %v6248, %v6401
      %6403 = vmatprep.mubr.f32.mxu0 %v5401
      %6404 = vmatmul.mubr.f32.gmra.mxu0 %v5400
      %v6405 = vpop.f32.mrf.mxu0
      %v6406 = vadd.f32 %v6253, %v6405
      %v6407 = vpop.f32.mrf.mxu0
      %v6408 = vadd.f32 %v6253, %v6407
      %6409 = vmatprep.mubr.f32.mxu0 %v5404
      %6410 = vmatmul.mubr.f32.gmra.mxu0 %v5403
      %v6411 = vpop.f32.mrf.mxu0
      %v6412 = vadd.f32 %v6258, %v6411
      %v6413 = vpop.f32.mrf.mxu0
      %v6414 = vadd.f32 %v6258, %v6413
      %6415 = vmatprep.mubr.f32.mxu0 %v5407
      %6416 = vmatmul.mubr.f32.gmra.mxu0 %v5406
      %v6417 = vpop.f32.mrf.mxu0
      %v6418 = vadd.f32 %v6263, %v6417
      %v6419 = vpop.f32.mrf.mxu0
      %v6420 = vadd.f32 %v6263, %v6419
      %6421 = vmatprep.mubr.f32.mxu0 %v5410
      %6422 = vmatmul.mubr.f32.gmra.mxu0 %v5409
      %v6423 = vpop.f32.mrf.mxu0
      %v6424 = vadd.f32 %v6268, %v6423
      %v6425 = vpop.f32.mrf.mxu0
      %v6426 = vadd.f32 %v6268, %v6425
      %6427 = vmatprep.mubr.f32.mxu0 %v5413
      %6428 = vmatmul.mubr.f32.gmra.mxu0 %v5412
      %v6429 = vpop.f32.mrf.mxu0
      %v6430 = vadd.f32 %v6273, %v6429
      %v6431 = vpop.f32.mrf.mxu0
      %v6432 = vadd.f32 %v6273, %v6431
      %6433 = vmatprep.mubr.f32.mxu0 %v5416
      %6434 = vmatmul.mubr.f32.gmra.mxu0 %v5415
      %v6435 = vpop.f32.mrf.mxu0
      %v6436 = vadd.f32 %v6278, %v6435
      %v6437 = vpop.f32.mrf.mxu0
      %v6438 = vadd.f32 %v6278, %v6437
      %6439 = vmatprep.mubr.f32.mxu0 %v5419
      %6440 = vmatmul.mubr.f32.gmra.mxu0 %v5418
      %v6441 = vpop.f32.mrf.mxu0
      %v6442 = vadd.f32 %v6283, %v6441
      %v6443 = vpop.f32.mrf.mxu0
      %v6444 = vadd.f32 %v6283, %v6443
      %6445 = vdwg.mxu0
      %6446 = vmatprep.subr.mxu0 %v6202
      %6447 = vmatpush1.msra.mxu0 %v6201
      %6448 = vmatprep.subr.mxu0 %v6198
      %6449 = vmatpush1.msra.mxu0 %v6197
      %6450 = vmatprep.subr.mxu0 %v6194
      %6451 = vmatpush1.msra.mxu0 %v6193
      %6452 = vmatprep.subr.mxu0 %v6190
      %6453 = vmatpush1.msra.mxu0 %v6189
      %6454 = vmatprep.subr.mxu0 %v6186
      %6455 = vmatpush1.msra.mxu0 %v6185
      %6456 = vmatprep.subr.mxu0 %v6182
      %6457 = vmatpush1.msra.mxu0 %v6181
      %6458 = vmatprep.subr.mxu0 %v6178
      %6459 = vmatpush1.msra.mxu0 %v6177
      %6460 = vmatprep.subr.mxu0 %v6174
      %6461 = vmatpush1.msra.mxu0 %v6173
      %6462 = vmatprep.subr.mxu0 %v6170
      %6463 = vmatpush1.msra.mxu0 %v6169
      %6464 = vmatprep.subr.mxu0 %v6166
      %6465 = vmatpush1.msra.mxu0 %v6165
      %6466 = vmatprep.subr.mxu0 %v6162
      %6467 = vmatpush1.msra.mxu0 %v6161
      %6468 = vmatprep.subr.mxu0 %v6158
      %6469 = vmatpush1.msra.mxu0 %v6157
      %6470 = vmatprep.subr.mxu0 %v6154
      %6471 = vmatpush1.msra.mxu0 %v6153
      %6472 = vmatprep.subr.mxu0 %v6150
      %6473 = vmatpush1.msra.mxu0 %v6149
      %6474 = vmatprep.subr.mxu0 %v6146
      %6475 = vmatpush1.msra.mxu0 %v6145
      %6476 = vmatprep.subr.mxu0 %v6142
      %6477 = vmatpush1.msra.mxu0 %v6141
      %6478 = vmatprep.subr.mxu0 0.0
      %6479 = vmatpush2.msra.mxu0 0.0
      %6480 = vmatprep.subr.mxu0 0.0
      %6481 = vmatpush2.msra.mxu0 0.0
      %6482 = vmatprep.subr.mxu0 0.0
      %6483 = vmatpush2.msra.mxu0 0.0
      %6484 = vmatprep.subr.mxu0 0.0
      %6485 = vmatpush2.msra.mxu0 0.0
      %6486 = vmatprep.subr.mxu0 0.0
      %6487 = vmatpush2.msra.mxu0 0.0
      %6488 = vmatprep.subr.mxu0 0.0
      %6489 = vmatpush2.msra.mxu0 0.0
      %6490 = vmatprep.subr.mxu0 0.0
      %6491 = vmatpush2.msra.mxu0 0.0
      %6492 = vmatprep.subr.mxu0 0.0
      %6493 = vmatpush2.msra.mxu0 0.0
      %6494 = vmatprep.subr.mxu0 0.0
      %6495 = vmatpush2.msra.mxu0 0.0
      %6496 = vmatprep.subr.mxu0 0.0
      %6497 = vmatpush2.msra.mxu0 0.0
      %6498 = vmatprep.subr.mxu0 0.0
      %6499 = vmatpush2.msra.mxu0 0.0
      %6500 = vmatprep.subr.mxu0 0.0
      %6501 = vmatpush2.msra.mxu0 0.0
      %6502 = vmatprep.subr.mxu0 0.0
      %6503 = vmatpush2.msra.mxu0 0.0
      %6504 = vmatprep.subr.mxu0 0.0
      %6505 = vmatpush2.msra.mxu0 0.0
      %6506 = vmatprep.subr.mxu0 0.0
      %6507 = vmatpush2.msra.mxu0 0.0
      %6508 = vmatprep.subr.mxu0 0.0
      %6509 = vmatpush2.msra.mxu0 0.0
      %6510 = vmatprep.mubr.f32.mxu0 0.0
      %6511 = vmatmul.mubr.f32.gmra.mxu0 %v5375
      %v6512 = vpop.f32.mrf.mxu0
      %v6513 = vadd.f32 %v6352, %v6512
      %v6514 = vpop.f32.mrf.mxu0
      %v6515 = vadd.f32 %v6354, %v6514
      %6516 = vmatprep.mubr.f32.mxu0 0.0
      %6517 = vmatmul.mubr.f32.gmra.mxu0 %v5378
      %v6518 = vpop.f32.mrf.mxu0
      %v6519 = vadd.f32 %v6358, %v6518
      %v6520 = vpop.f32.mrf.mxu0
      %v6521 = vadd.f32 %v6360, %v6520
      %6522 = vmatprep.mubr.f32.mxu0 0.0
      %6523 = vmatmul.mubr.f32.gmra.mxu0 %v5381
      %v6524 = vpop.f32.mrf.mxu0
      %v6525 = vadd.f32 %v6364, %v6524
      %v6526 = vpop.f32.mrf.mxu0
      %v6527 = vadd.f32 %v6366, %v6526
      %6528 = vmatprep.mubr.f32.mxu0 0.0
      %6529 = vmatmul.mubr.f32.gmra.mxu0 %v5384
      %v6530 = vpop.f32.mrf.mxu0
      %v6531 = vadd.f32 %v6370, %v6530
      %v6532 = vpop.f32.mrf.mxu0
      %v6533 = vadd.f32 %v6372, %v6532
      %6534 = vmatprep.mubr.f32.mxu0 0.0
      %6535 = vmatmul.mubr.f32.gmra.mxu0 %v5387
      %v6536 = vpop.f32.mrf.mxu0
      %v6537 = vadd.f32 %v6376, %v6536
      %v6538 = vpop.f32.mrf.mxu0
      %v6539 = vadd.f32 %v6378, %v6538
      %6540 = vmatprep.mubr.f32.mxu0 0.0
      %6541 = vmatmul.mubr.f32.gmra.mxu0 %v5390
      %v6542 = vpop.f32.mrf.mxu0
      %v6543 = vadd.f32 %v6382, %v6542
      %v6544 = vpop.f32.mrf.mxu0
      %v6545 = vadd.f32 %v6384, %v6544
      %6546 = vmatprep.mubr.f32.mxu0 0.0
      %6547 = vmatmul.mubr.f32.gmra.mxu0 %v5393
      %v6548 = vpop.f32.mrf.mxu0
      %v6549 = vadd.f32 %v6388, %v6548
      %v6550 = vpop.f32.mrf.mxu0
      %v6551 = vadd.f32 %v6390, %v6550
      %6552 = vmatprep.mubr.f32.mxu0 0.0
      %6553 = vmatmul.mubr.f32.gmra.mxu0 %v5396
      %v6554 = vpop.f32.mrf.mxu0
      %v6555 = vadd.f32 %v6394, %v6554
      %v6556 = vpop.f32.mrf.mxu0
      %v6557 = vadd.f32 %v6396, %v6556
      %6558 = vmatprep.mubr.f32.mxu0 0.0
      %6559 = vmatmul.mubr.f32.gmra.mxu0 %v5399
      %v6560 = vpop.f32.mrf.mxu0
      %v6561 = vadd.f32 %v6400, %v6560
      %v6562 = vpop.f32.mrf.mxu0
      %v6563 = vadd.f32 %v6402, %v6562
      %6564 = vmatprep.mubr.f32.mxu0 0.0
      %6565 = vmatmul.mubr.f32.gmra.mxu0 %v5402
      %v6566 = vpop.f32.mrf.mxu0
      %v6567 = vadd.f32 %v6406, %v6566
      %v6568 = vpop.f32.mrf.mxu0
      %v6569 = vadd.f32 %v6408, %v6568
      %6570 = vmatprep.mubr.f32.mxu0 0.0
      %6571 = vmatmul.mubr.f32.gmra.mxu0 %v5405
      %v6572 = vpop.f32.mrf.mxu0
      %v6573 = vadd.f32 %v6412, %v6572
      %v6574 = vpop.f32.mrf.mxu0
      %v6575 = vadd.f32 %v6414, %v6574
      %6576 = vmatprep.mubr.f32.mxu0 0.0
      %6577 = vmatmul.mubr.f32.gmra.mxu0 %v5408
      %v6578 = vpop.f32.mrf.mxu0
      %v6579 = vadd.f32 %v6418, %v6578
      %v6580 = vpop.f32.mrf.mxu0
      %v6581 = vadd.f32 %v6420, %v6580
      %6582 = vmatprep.mubr.f32.mxu0 0.0
      %6583 = vmatmul.mubr.f32.gmra.mxu0 %v5411
      %v6584 = vpop.f32.mrf.mxu0
      %v6585 = vadd.f32 %v6424, %v6584
      %v6586 = vpop.f32.mrf.mxu0
      %v6587 = vadd.f32 %v6426, %v6586
      %6588 = vmatprep.mubr.f32.mxu0 0.0
      %6589 = vmatmul.mubr.f32.gmra.mxu0 %v5414
      %v6590 = vpop.f32.mrf.mxu0
      %v6591 = vadd.f32 %v6430, %v6590
      %v6592 = vpop.f32.mrf.mxu0
      %v6593 = vadd.f32 %v6432, %v6592
      %6594 = vmatprep.mubr.f32.mxu0 0.0
      %6595 = vmatmul.mubr.f32.gmra.mxu0 %v5417
      %v6596 = vpop.f32.mrf.mxu0
      %v6597 = vadd.f32 %v6436, %v6596
      %v6598 = vpop.f32.mrf.mxu0
      %v6599 = vadd.f32 %v6438, %v6598
      %6600 = vmatprep.mubr.f32.mxu0 0.0
      %6601 = vmatmul.mubr.f32.gmra.mxu0 %v5420
      %v6602 = vpop.f32.mrf.mxu0
      %v6603 = vadd.f32 %v6442, %v6602
      %v6604 = vpop.f32.mrf.mxu0
      %v6605 = vadd.f32 %v6444, %v6604
      %6606 = vdwg.mxu0
      %6607 = vmatprep.subr.mxu0 %v6076
      %6608 = vmatpush1.msra.mxu0 %v6075
      %6609 = vmatprep.subr.mxu0 %v6072
      %6610 = vmatpush1.msra.mxu0 %v6071
      %6611 = vmatprep.subr.mxu0 %v6068
      %6612 = vmatpush1.msra.mxu0 %v6067
      %6613 = vmatprep.subr.mxu0 %v6064
      %6614 = vmatpush1.msra.mxu0 %v6063
      %6615 = vmatprep.subr.mxu0 %v6060
      %6616 = vmatpush1.msra.mxu0 %v6059
      %6617 = vmatprep.subr.mxu0 %v6056
      %6618 = vmatpush1.msra.mxu0 %v6055
      %6619 = vmatprep.subr.mxu0 %v6052
      %6620 = vmatpush1.msra.mxu0 %v6051
      %6621 = vmatprep.subr.mxu0 %v6048
      %6622 = vmatpush1.msra.mxu0 %v6047
      %6623 = vmatprep.subr.mxu0 %v6044
      %6624 = vmatpush1.msra.mxu0 %v6043
      %6625 = vmatprep.subr.mxu0 %v6040
      %6626 = vmatpush1.msra.mxu0 %v6039
      %6627 = vmatprep.subr.mxu0 %v6036
      %6628 = vmatpush1.msra.mxu0 %v6035
      %6629 = vmatprep.subr.mxu0 %v6032
      %6630 = vmatpush1.msra.mxu0 %v6031
      %6631 = vmatprep.subr.mxu0 %v6028
      %6632 = vmatpush1.msra.mxu0 %v6027
      %6633 = vmatprep.subr.mxu0 %v6024
      %6634 = vmatpush1.msra.mxu0 %v6023
      %6635 = vmatprep.subr.mxu0 %v6020
      %6636 = vmatpush1.msra.mxu0 %v6019
      %6637 = vmatprep.subr.mxu0 %v6016
      %6638 = vmatpush1.msra.mxu0 %v6015
      %6639 = vmatprep.subr.mxu0 %v6140
      %6640 = vmatpush2.msra.mxu0 %v6139
      %6641 = vmatprep.subr.mxu0 %v6136
      %6642 = vmatpush2.msra.mxu0 %v6135
      %6643 = vmatprep.subr.mxu0 %v6132
      %6644 = vmatpush2.msra.mxu0 %v6131
      %6645 = vmatprep.subr.mxu0 %v6128
      %6646 = vmatpush2.msra.mxu0 %v6127
      %6647 = vmatprep.subr.mxu0 %v6124
      %6648 = vmatpush2.msra.mxu0 %v6123
      %6649 = vmatprep.subr.mxu0 %v6120
      %6650 = vmatpush2.msra.mxu0 %v6119
      %6651 = vmatprep.subr.mxu0 %v6116
      %6652 = vmatpush2.msra.mxu0 %v6115
      %6653 = vmatprep.subr.mxu0 %v6112
      %6654 = vmatpush2.msra.mxu0 %v6111
      %6655 = vmatprep.subr.mxu0 %v6108
      %6656 = vmatpush2.msra.mxu0 %v6107
      %6657 = vmatprep.subr.mxu0 %v6104
      %6658 = vmatpush2.msra.mxu0 %v6103
      %6659 = vmatprep.subr.mxu0 %v6100
      %6660 = vmatpush2.msra.mxu0 %v6099
      %6661 = vmatprep.subr.mxu0 %v6096
      %6662 = vmatpush2.msra.mxu0 %v6095
      %6663 = vmatprep.subr.mxu0 %v6092
      %6664 = vmatpush2.msra.mxu0 %v6091
      %6665 = vmatprep.subr.mxu0 %v6088
      %6666 = vmatpush2.msra.mxu0 %v6087
      %6667 = vmatprep.subr.mxu0 %v6084
      %6668 = vmatpush2.msra.mxu0 %v6083
      %6669 = vmatprep.subr.mxu0 %v6080
      %6670 = vmatpush2.msra.mxu0 %v6079
      %6671 = vmatprep.mubr.f32.mxu0 %v5374
      %6672 = vmatmul.mubr.f32.gmra.mxu0 %v5373
      %v6673 = vpop.f32.mrf.mxu0
      %v6674 = vadd.f32 %v6208, %v6673
      %v6675 = vpop.f32.mrf.mxu0
      %v6676 = vadd.f32 %v6208, %v6675
      %6677 = vmatprep.mubr.f32.mxu0 %v5377
      %6678 = vmatmul.mubr.f32.gmra.mxu0 %v5376
      %v6679 = vpop.f32.mrf.mxu0
      %v6680 = vadd.f32 %v6213, %v6679
      %v6681 = vpop.f32.mrf.mxu0
      %v6682 = vadd.f32 %v6213, %v6681
      %6683 = vmatprep.mubr.f32.mxu0 %v5380
      %6684 = vmatmul.mubr.f32.gmra.mxu0 %v5379
      %v6685 = vpop.f32.mrf.mxu0
      %v6686 = vadd.f32 %v6218, %v6685
      %v6687 = vpop.f32.mrf.mxu0
      %v6688 = vadd.f32 %v6218, %v6687
      %6689 = vmatprep.mubr.f32.mxu0 %v5383
      %6690 = vmatmul.mubr.f32.gmra.mxu0 %v5382
      %v6691 = vpop.f32.mrf.mxu0
      %v6692 = vadd.f32 %v6223, %v6691
      %v6693 = vpop.f32.mrf.mxu0
      %v6694 = vadd.f32 %v6223, %v6693
      %6695 = vmatprep.mubr.f32.mxu0 %v5386
      %6696 = vmatmul.mubr.f32.gmra.mxu0 %v5385
      %v6697 = vpop.f32.mrf.mxu0
      %v6698 = vadd.f32 %v6228, %v6697
      %v6699 = vpop.f32.mrf.mxu0
      %v6700 = vadd.f32 %v6228, %v6699
      %6701 = vmatprep.mubr.f32.mxu0 %v5389
      %6702 = vmatmul.mubr.f32.gmra.mxu0 %v5388
      %v6703 = vpop.f32.mrf.mxu0
      %v6704 = vadd.f32 %v6233, %v6703
      %v6705 = vpop.f32.mrf.mxu0
      %v6706 = vadd.f32 %v6233, %v6705
      %6707 = vmatprep.mubr.f32.mxu0 %v5392
      %6708 = vmatmul.mubr.f32.gmra.mxu0 %v5391
      %v6709 = vpop.f32.mrf.mxu0
      %v6710 = vadd.f32 %v6238, %v6709
      %v6711 = vpop.f32.mrf.mxu0
      %v6712 = vadd.f32 %v6238, %v6711
      %6713 = vmatprep.mubr.f32.mxu0 %v5395
      %6714 = vmatmul.mubr.f32.gmra.mxu0 %v5394
      %v6715 = vpop.f32.mrf.mxu0
      %v6716 = vadd.f32 %v6243, %v6715
      %v6717 = vpop.f32.mrf.mxu0
      %v6718 = vadd.f32 %v6243, %v6717
      %6719 = vmatprep.mubr.f32.mxu0 %v5398
      %6720 = vmatmul.mubr.f32.gmra.mxu0 %v5397
      %v6721 = vpop.f32.mrf.mxu0
      %v6722 = vadd.f32 %v6248, %v6721
      %v6723 = vpop.f32.mrf.mxu0
      %v6724 = vadd.f32 %v6248, %v6723
      %6725 = vmatprep.mubr.f32.mxu0 %v5401
      %6726 = vmatmul.mubr.f32.gmra.mxu0 %v5400
      %v6727 = vpop.f32.mrf.mxu0
      %v6728 = vadd.f32 %v6253, %v6727
      %v6729 = vpop.f32.mrf.mxu0
      %v6730 = vadd.f32 %v6253, %v6729
      %6731 = vmatprep.mubr.f32.mxu0 %v5404
      %6732 = vmatmul.mubr.f32.gmra.mxu0 %v5403
      %v6733 = vpop.f32.mrf.mxu0
      %v6734 = vadd.f32 %v6258, %v6733
      %v6735 = vpop.f32.mrf.mxu0
      %v6736 = vadd.f32 %v6258, %v6735
      %6737 = vmatprep.mubr.f32.mxu0 %v5407
      %6738 = vmatmul.mubr.f32.gmra.mxu0 %v5406
      %v6739 = vpop.f32.mrf.mxu0
      %v6740 = vadd.f32 %v6263, %v6739
      %v6741 = vpop.f32.mrf.mxu0
      %v6742 = vadd.f32 %v6263, %v6741
      %6743 = vmatprep.mubr.f32.mxu0 %v5410
      %6744 = vmatmul.mubr.f32.gmra.mxu0 %v5409
      %v6745 = vpop.f32.mrf.mxu0
      %v6746 = vadd.f32 %v6268, %v6745
      %v6747 = vpop.f32.mrf.mxu0
      %v6748 = vadd.f32 %v6268, %v6747
      %6749 = vmatprep.mubr.f32.mxu0 %v5413
      %6750 = vmatmul.mubr.f32.gmra.mxu0 %v5412
      %v6751 = vpop.f32.mrf.mxu0
      %v6752 = vadd.f32 %v6273, %v6751
      %v6753 = vpop.f32.mrf.mxu0
      %v6754 = vadd.f32 %v6273, %v6753
      %6755 = vmatprep.mubr.f32.mxu0 %v5416
      %6756 = vmatmul.mubr.f32.gmra.mxu0 %v5415
      %v6757 = vpop.f32.mrf.mxu0
      %v6758 = vadd.f32 %v6278, %v6757
      %v6759 = vpop.f32.mrf.mxu0
      %v6760 = vadd.f32 %v6278, %v6759
      %6761 = vmatprep.mubr.f32.mxu0 %v5419
      %6762 = vmatmul.mubr.f32.gmra.mxu0 %v5418
      %v6763 = vpop.f32.mrf.mxu0
      %v6764 = vadd.f32 %v6283, %v6763
      %v6765 = vpop.f32.mrf.mxu0
      %v6766 = vadd.f32 %v6283, %v6765
      %6767 = vdwg.mxu0
      %6768 = vmatprep.subr.mxu0 %v6204
      %6769 = vmatpush1.msra.mxu0 %v6203
      %6770 = vmatprep.subr.mxu0 %v6200
      %6771 = vmatpush1.msra.mxu0 %v6199
      %6772 = vmatprep.subr.mxu0 %v6196
      %6773 = vmatpush1.msra.mxu0 %v6195
      %6774 = vmatprep.subr.mxu0 %v6192
      %6775 = vmatpush1.msra.mxu0 %v6191
      %6776 = vmatprep.subr.mxu0 %v6188
      %6777 = vmatpush1.msra.mxu0 %v6187
      %6778 = vmatprep.subr.mxu0 %v6184
      %6779 = vmatpush1.msra.mxu0 %v6183
      %6780 = vmatprep.subr.mxu0 %v6180
      %6781 = vmatpush1.msra.mxu0 %v6179
      %6782 = vmatprep.subr.mxu0 %v6176
      %6783 = vmatpush1.msra.mxu0 %v6175
      %6784 = vmatprep.subr.mxu0 %v6172
      %6785 = vmatpush1.msra.mxu0 %v6171
      %6786 = vmatprep.subr.mxu0 %v6168
      %6787 = vmatpush1.msra.mxu0 %v6167
      %6788 = vmatprep.subr.mxu0 %v6164
      %6789 = vmatpush1.msra.mxu0 %v6163
      %6790 = vmatprep.subr.mxu0 %v6160
      %6791 = vmatpush1.msra.mxu0 %v6159
      %6792 = vmatprep.subr.mxu0 %v6156
      %6793 = vmatpush1.msra.mxu0 %v6155
      %6794 = vmatprep.subr.mxu0 %v6152
      %6795 = vmatpush1.msra.mxu0 %v6151
      %6796 = vmatprep.subr.mxu0 %v6148
      %6797 = vmatpush1.msra.mxu0 %v6147
      %6798 = vmatprep.subr.mxu0 %v6144
      %6799 = vmatpush1.msra.mxu0 %v6143
      %6800 = vmatprep.subr.mxu0 0.0
      %6801 = vmatpush2.msra.mxu0 0.0
      %6802 = vmatprep.subr.mxu0 0.0
      %6803 = vmatpush2.msra.mxu0 0.0
      %6804 = vmatprep.subr.mxu0 0.0
      %6805 = vmatpush2.msra.mxu0 0.0
      %6806 = vmatprep.subr.mxu0 0.0
      %6807 = vmatpush2.msra.mxu0 0.0
      %6808 = vmatprep.subr.mxu0 0.0
      %6809 = vmatpush2.msra.mxu0 0.0
      %6810 = vmatprep.subr.mxu0 0.0
      %6811 = vmatpush2.msra.mxu0 0.0
      %6812 = vmatprep.subr.mxu0 0.0
      %6813 = vmatpush2.msra.mxu0 0.0
      %6814 = vmatprep.subr.mxu0 0.0
      %6815 = vmatpush2.msra.mxu0 0.0
      %6816 = vmatprep.subr.mxu0 0.0
      %6817 = vmatpush2.msra.mxu0 0.0
      %6818 = vmatprep.subr.mxu0 0.0
      %6819 = vmatpush2.msra.mxu0 0.0
      %6820 = vmatprep.subr.mxu0 0.0
      %6821 = vmatpush2.msra.mxu0 0.0
      %6822 = vmatprep.subr.mxu0 0.0
      %6823 = vmatpush2.msra.mxu0 0.0
      %6824 = vmatprep.subr.mxu0 0.0
      %6825 = vmatpush2.msra.mxu0 0.0
      %6826 = vmatprep.subr.mxu0 0.0
      %6827 = vmatpush2.msra.mxu0 0.0
      %6828 = vmatprep.subr.mxu0 0.0
      %6829 = vmatpush2.msra.mxu0 0.0
      %6830 = vmatprep.subr.mxu0 0.0
      %6831 = vmatpush2.msra.mxu0 0.0
      %6832 = vmatprep.mubr.f32.mxu0 0.0
      %6833 = vmatmul.mubr.f32.gmra.mxu0 %v5375
      %v6834 = vpop.f32.mrf.mxu0
      %v6835 = vadd.f32 %v6674, %v6834
      %v6836 = vpop.f32.mrf.mxu0
      %v6837 = vadd.f32 %v6676, %v6836
      %6838 = vmatprep.mubr.f32.mxu0 0.0
      %6839 = vmatmul.mubr.f32.gmra.mxu0 %v5378
      %v6840 = vpop.f32.mrf.mxu0
      %v6841 = vadd.f32 %v6680, %v6840
      %v6842 = vpop.f32.mrf.mxu0
      %v6843 = vadd.f32 %v6682, %v6842
      %6844 = vmatprep.mubr.f32.mxu0 0.0
      %6845 = vmatmul.mubr.f32.gmra.mxu0 %v5381
      %v6846 = vpop.f32.mrf.mxu0
      %v6847 = vadd.f32 %v6686, %v6846
      %v6848 = vpop.f32.mrf.mxu0
      %v6849 = vadd.f32 %v6688, %v6848
      %6850 = vmatprep.mubr.f32.mxu0 0.0
      %6851 = vmatmul.mubr.f32.gmra.mxu0 %v5384
      %v6852 = vpop.f32.mrf.mxu0
      %v6853 = vadd.f32 %v6692, %v6852
      %v6854 = vpop.f32.mrf.mxu0
      %v6855 = vadd.f32 %v6694, %v6854
      %6856 = vmatprep.mubr.f32.mxu0 0.0
      %6857 = vmatmul.mubr.f32.gmra.mxu0 %v5387
      %v6858 = vpop.f32.mrf.mxu0
      %v6859 = vadd.f32 %v6698, %v6858
      %v6860 = vpop.f32.mrf.mxu0
      %v6861 = vadd.f32 %v6700, %v6860
      %6862 = vmatprep.mubr.f32.mxu0 0.0
      %6863 = vmatmul.mubr.f32.gmra.mxu0 %v5390
      %v6864 = vpop.f32.mrf.mxu0
      %v6865 = vadd.f32 %v6704, %v6864
      %v6866 = vpop.f32.mrf.mxu0
      %v6867 = vadd.f32 %v6706, %v6866
      %6868 = vmatprep.mubr.f32.mxu0 0.0
      %6869 = vmatmul.mubr.f32.gmra.mxu0 %v5393
      %v6870 = vpop.f32.mrf.mxu0
      %v6871 = vadd.f32 %v6710, %v6870
      %v6872 = vpop.f32.mrf.mxu0
      %v6873 = vadd.f32 %v6712, %v6872
      %6874 = vmatprep.mubr.f32.mxu0 0.0
      %6875 = vmatmul.mubr.f32.gmra.mxu0 %v5396
      %v6876 = vpop.f32.mrf.mxu0
      %v6877 = vadd.f32 %v6716, %v6876
      %v6878 = vpop.f32.mrf.mxu0
      %v6879 = vadd.f32 %v6718, %v6878
      %6880 = vmatprep.mubr.f32.mxu0 0.0
      %6881 = vmatmul.mubr.f32.gmra.mxu0 %v5399
      %v6882 = vpop.f32.mrf.mxu0
      %v6883 = vadd.f32 %v6722, %v6882
      %v6884 = vpop.f32.mrf.mxu0
      %v6885 = vadd.f32 %v6724, %v6884
      %6886 = vmatprep.mubr.f32.mxu0 0.0
      %6887 = vmatmul.mubr.f32.gmra.mxu0 %v5402
      %v6888 = vpop.f32.mrf.mxu0
      %v6889 = vadd.f32 %v6728, %v6888
      %v6890 = vpop.f32.mrf.mxu0
      %v6891 = vadd.f32 %v6730, %v6890
      %6892 = vmatprep.mubr.f32.mxu0 0.0
      %6893 = vmatmul.mubr.f32.gmra.mxu0 %v5405
      %v6894 = vpop.f32.mrf.mxu0
      %v6895 = vadd.f32 %v6734, %v6894
      %v6896 = vpop.f32.mrf.mxu0
      %v6897 = vadd.f32 %v6736, %v6896
      %6898 = vmatprep.mubr.f32.mxu0 0.0
      %6899 = vmatmul.mubr.f32.gmra.mxu0 %v5408
      %v6900 = vpop.f32.mrf.mxu0
      %v6901 = vadd.f32 %v6740, %v6900
      %v6902 = vpop.f32.mrf.mxu0
      %v6903 = vadd.f32 %v6742, %v6902
      %6904 = vmatprep.mubr.f32.mxu0 0.0
      %6905 = vmatmul.mubr.f32.gmra.mxu0 %v5411
      %v6906 = vpop.f32.mrf.mxu0
      %v6907 = vadd.f32 %v6746, %v6906
      %v6908 = vpop.f32.mrf.mxu0
      %v6909 = vadd.f32 %v6748, %v6908
      %6910 = vmatprep.mubr.f32.mxu0 0.0
      %6911 = vmatmul.mubr.f32.gmra.mxu0 %v5414
      %v6912 = vpop.f32.mrf.mxu0
      %v6913 = vadd.f32 %v6752, %v6912
      %v6914 = vpop.f32.mrf.mxu0
      %v6915 = vadd.f32 %v6754, %v6914
      %6916 = vmatprep.mubr.f32.mxu0 0.0
      %6917 = vmatmul.mubr.f32.gmra.mxu0 %v5417
      %v6918 = vpop.f32.mrf.mxu0
      %v6919 = vadd.f32 %v6758, %v6918
      %v6920 = vpop.f32.mrf.mxu0
      %v6921 = vadd.f32 %v6760, %v6920
      %6922 = vmatprep.mubr.f32.mxu0 0.0
      %6923 = vmatmul.mubr.f32.gmra.mxu0 %v5420
      %v6924 = vpop.f32.mrf.mxu0
      %v6925 = vadd.f32 %v6764, %v6924
      %v6926 = vpop.f32.mrf.mxu0
      %v6927 = vadd.f32 %v6766, %v6926
      %6928 = vdwg.mxu0
      %v6929 = vadd.f32 %v3623, %v6513
      %v6930 = vadd.f32 %v3624, %v6515
      %v6931 = vadd.f32 %v3625, %v6835
      %v6932 = vadd.f32 %v3626, %v6837
      %v6933 = vadd.f32 %v3627, %v6519
      %v6934 = vadd.f32 %v3628, %v6521
      %v6935 = vadd.f32 %v3629, %v6841
      %v6936 = vadd.f32 %v3630, %v6843
      %v6937 = vadd.f32 %v3631, %v6525
      %v6938 = vadd.f32 %v3632, %v6527
      %v6939 = vadd.f32 %v3633, %v6847
      %v6940 = vadd.f32 %v3634, %v6849
      %v6941 = vadd.f32 %v3635, %v6531
      %v6942 = vadd.f32 %v3636, %v6533
      %v6943 = vadd.f32 %v3637, %v6853
      %v6944 = vadd.f32 %v3638, %v6855
      %v6945 = vadd.f32 %v3639, %v6537
      %v6946 = vadd.f32 %v3640, %v6539
      %v6947 = vadd.f32 %v3641, %v6859
      %v6948 = vadd.f32 %v3642, %v6861
      %v6949 = vadd.f32 %v3643, %v6543
      %v6950 = vadd.f32 %v3644, %v6545
      %v6951 = vadd.f32 %v3645, %v6865
      %v6952 = vadd.f32 %v3646, %v6867
      %v6953 = vadd.f32 %v3647, %v6549
      %v6954 = vadd.f32 %v3648, %v6551
      %v6955 = vadd.f32 %v3649, %v6871
      %v6956 = vadd.f32 %v3650, %v6873
      %v6957 = vadd.f32 %v3651, %v6555
      %v6958 = vadd.f32 %v3652, %v6557
      %v6959 = vadd.f32 %v3653, %v6877
      %v6960 = vadd.f32 %v3654, %v6879
      %v6961 = vadd.f32 %v3655, %v6561
      %v6962 = vadd.f32 %v3656, %v6563
      %v6963 = vadd.f32 %v3657, %v6883
      %v6964 = vadd.f32 %v3658, %v6885
      %v6965 = vadd.f32 %v3659, %v6567
      %v6966 = vadd.f32 %v3660, %v6569
      %v6967 = vadd.f32 %v3661, %v6889
      %v6968 = vadd.f32 %v3662, %v6891
      %v6969 = vadd.f32 %v3663, %v6573
      %v6970 = vadd.f32 %v3664, %v6575
      %v6971 = vadd.f32 %v3665, %v6895
      %v6972 = vadd.f32 %v3666, %v6897
      %v6973 = vadd.f32 %v3667, %v6579
      %v6974 = vadd.f32 %v3668, %v6581
      %v6975 = vadd.f32 %v3669, %v6901
      %v6976 = vadd.f32 %v3670, %v6903
      %v6977 = vadd.f32 %v3671, %v6585
      %v6978 = vadd.f32 %v3672, %v6587
      %v6979 = vadd.f32 %v3673, %v6907
      %v6980 = vadd.f32 %v3674, %v6909
      %v6981 = vadd.f32 %v3675, %v6591
      %v6982 = vadd.f32 %v3676, %v6593
      %v6983 = vadd.f32 %v3677, %v6913
      %v6984 = vadd.f32 %v3678, %v6915
      %v6985 = vadd.f32 %v3679, %v6597
      %v6986 = vadd.f32 %v3680, %v6599
      %v6987 = vadd.f32 %v3681, %v6919
      %v6988 = vadd.f32 %v3682, %v6921
      %v6989 = vadd.f32 %v3683, %v6603
      %v6990 = vadd.f32 %v3684, %v6605
      %v6991 = vadd.f32 %v3685, %v6925
      %v6992 = vadd.f32 %v3686, %v6927
      %v6993 = vmax.f32 %v6929, 0.0
      %v6994 = vmax.f32 %v6930, 0.0
      %v6995 = vmax.f32 %v6931, 0.0
      %v6996 = vmax.f32 %v6932, 0.0
      %v6997 = vmax.f32 %v6933, 0.0
      %v6998 = vmax.f32 %v6934, 0.0
      %v6999 = vmax.f32 %v6935, 0.0
      %v7000 = vmax.f32 %v6936, 0.0
      %v7001 = vmax.f32 %v6937, 0.0
      %v7002 = vmax.f32 %v6938, 0.0
      %v7003 = vmax.f32 %v6939, 0.0
      %v7004 = vmax.f32 %v6940, 0.0
      %v7005 = vmax.f32 %v6941, 0.0
      %v7006 = vmax.f32 %v6942, 0.0
      %v7007 = vmax.f32 %v6943, 0.0
      %v7008 = vmax.f32 %v6944, 0.0
      %v7009 = vmax.f32 %v6945, 0.0
      %v7010 = vmax.f32 %v6946, 0.0
      %v7011 = vmax.f32 %v6947, 0.0
      %v7012 = vmax.f32 %v6948, 0.0
      %v7013 = vmax.f32 %v6949, 0.0
      %v7014 = vmax.f32 %v6950, 0.0
      %v7015 = vmax.f32 %v6951, 0.0
      %v7016 = vmax.f32 %v6952, 0.0
      %v7017 = vmax.f32 %v6953, 0.0
      %v7018 = vmax.f32 %v6954, 0.0
      %v7019 = vmax.f32 %v6955, 0.0
      %v7020 = vmax.f32 %v6956, 0.0
      %v7021 = vmax.f32 %v6957, 0.0
      %v7022 = vmax.f32 %v6958, 0.0
      %v7023 = vmax.f32 %v6959, 0.0
      %v7024 = vmax.f32 %v6960, 0.0
      %v7025 = vmax.f32 %v6961, 0.0
      %v7026 = vmax.f32 %v6962, 0.0
      %v7027 = vmax.f32 %v6963, 0.0
      %v7028 = vmax.f32 %v6964, 0.0
      %v7029 = vmax.f32 %v6965, 0.0
      %v7030 = vmax.f32 %v6966, 0.0
      %v7031 = vmax.f32 %v6967, 0.0
      %v7032 = vmax.f32 %v6968, 0.0
      %v7033 = vmax.f32 %v6969, 0.0
      %v7034 = vmax.f32 %v6970, 0.0
      %v7035 = vmax.f32 %v6971, 0.0
      %v7036 = vmax.f32 %v6972, 0.0
      %v7037 = vmax.f32 %v6973, 0.0
      %v7038 = vmax.f32 %v6974, 0.0
      %v7039 = vmax.f32 %v6975, 0.0
      %v7040 = vmax.f32 %v6976, 0.0
      %v7041 = vmax.f32 %v6977, 0.0
      %v7042 = vmax.f32 %v6978, 0.0
      %v7043 = vmax.f32 %v6979, 0.0
      %v7044 = vmax.f32 %v6980, 0.0
      %v7045 = vmax.f32 %v6981, 0.0
      %v7046 = vmax.f32 %v6982, 0.0
      %v7047 = vmax.f32 %v6983, 0.0
      %v7048 = vmax.f32 %v6984, 0.0
      %v7049 = vmax.f32 %v6985, 0.0
      %v7050 = vmax.f32 %v6986, 0.0
      %v7051 = vmax.f32 %v6987, 0.0
      %v7052 = vmax.f32 %v6988, 0.0
      %v7053 = vmax.f32 %v6989, 0.0
      %v7054 = vmax.f32 %v6990, 0.0
      %v7055 = vmax.f32 %v6991, 0.0
      %v7056 = vmax.f32 %v6992, 0.0
      %7057 = vst [vmem:[%s170] sm:$0xff] %v6993
      %7058 = vst [vmem:[%s170 + $0x8] sm:$0xff] %v6994
      %7059 = vst [vmem:[%s170 + $0x10] sm:$0xff] %v6995
      %7060 = vst [vmem:[%s170 + $0x18] sm:$0xff] %v6996
      %7061 = vst [vmem:[%s170 + $0x20] sm:$0xff] %v6997
      %7062 = vst [vmem:[%s170 + $0x28] sm:$0xff] %v6998
      %7063 = vst [vmem:[%s170 + $0x30] sm:$0xff] %v6999
      %7064 = vst [vmem:[%s170 + $0x38] sm:$0xff] %v7000
      %7065 = vst [vmem:[%s170 + $0x40] sm:$0xff] %v7001
      %7066 = vst [vmem:[%s170 + $0x48] sm:$0xff] %v7002
      %7067 = vst [vmem:[%s170 + $0x50] sm:$0xff] %v7003
      %7068 = vst [vmem:[%s170 + $0x58] sm:$0xff] %v7004
      %7069 = vst [vmem:[%s170 + $0x60] sm:$0xff] %v7005
      %7070 = vst [vmem:[%s170 + $0x68] sm:$0xff] %v7006
      %7071 = vst [vmem:[%s170 + $0x70] sm:$0xff] %v7007
      %7072 = vst [vmem:[%s170 + $0x78] sm:$0xff] %v7008
      %7073 = vst [vmem:[%s170 + $0x80] sm:$0xff] %v7009
      %7074 = vst [vmem:[%s170 + $0x88] sm:$0xff] %v7010
      %7075 = vst [vmem:[%s170 + $0x90] sm:$0xff] %v7011
      %7076 = vst [vmem:[%s170 + $0x98] sm:$0xff] %v7012
      %7077 = vst [vmem:[%s170 + $0xa0] sm:$0xff] %v7013
      %7078 = vst [vmem:[%s170 + $0xa8] sm:$0xff] %v7014
      %7079 = vst [vmem:[%s170 + $0xb0] sm:$0xff] %v7015
      %7080 = vst [vmem:[%s170 + $0xb8] sm:$0xff] %v7016
      %7081 = vst [vmem:[%s170 + $0xc0] sm:$0xff] %v7017
      %7082 = vst [vmem:[%s170 + $0xc8] sm:$0xff] %v7018
      %7083 = vst [vmem:[%s170 + $0xd0] sm:$0xff] %v7019
      %7084 = vst [vmem:[%s170 + $0xd8] sm:$0xff] %v7020
      %7085 = vst [vmem:[%s170 + $0xe0] sm:$0xff] %v7021
      %7086 = vst [vmem:[%s170 + $0xe8] sm:$0xff] %v7022
      %7087 = vst [vmem:[%s170 + $0xf0] sm:$0xff] %v7023
      %7088 = vst [vmem:[%s170 + $0xf8] sm:$0xff] %v7024
      %7089 = vst [vmem:[%s170 + $0x100] sm:$0xff] %v7025
      %7090 = vst [vmem:[%s170 + $0x108] sm:$0xff] %v7026
      %7091 = vst [vmem:[%s170 + $0x110] sm:$0xff] %v7027
      %7092 = vst [vmem:[%s170 + $0x118] sm:$0xff] %v7028
      %7093 = vst [vmem:[%s170 + $0x120] sm:$0xff] %v7029
      %7094 = vst [vmem:[%s170 + $0x128] sm:$0xff] %v7030
      %7095 = vst [vmem:[%s170 + $0x130] sm:$0xff] %v7031
      %7096 = vst [vmem:[%s170 + $0x138] sm:$0xff] %v7032
      %7097 = vst [vmem:[%s170 + $0x140] sm:$0xff] %v7033
      %7098 = vst [vmem:[%s170 + $0x148] sm:$0xff] %v7034
      %7099 = vst [vmem:[%s170 + $0x150] sm:$0xff] %v7035
      %7100 = vst [vmem:[%s170 + $0x158] sm:$0xff] %v7036
      %7101 = vst [vmem:[%s170 + $0x160] sm:$0xff] %v7037
      %7102 = vst [vmem:[%s170 + $0x168] sm:$0xff] %v7038
      %7103 = vst [vmem:[%s170 + $0x170] sm:$0xff] %v7039
      %7104 = vst [vmem:[%s170 + $0x178] sm:$0xff] %v7040
      %7105 = vst [vmem:[%s170 + $0x180] sm:$0xff] %v7041
      %7106 = vst [vmem:[%s170 + $0x188] sm:$0xff] %v7042
      %7107 = vst [vmem:[%s170 + $0x190] sm:$0xff] %v7043
      %7108 = vst [vmem:[%s170 + $0x198] sm:$0xff] %v7044
      %7109 = vst [vmem:[%s170 + $0x1a0] sm:$0xff] %v7045
      %7110 = vst [vmem:[%s170 + $0x1a8] sm:$0xff] %v7046
      %7111 = vst [vmem:[%s170 + $0x1b0] sm:$0xff] %v7047
      %7112 = vst [vmem:[%s170 + $0x1b8] sm:$0xff] %v7048
      %7113 = vst [vmem:[%s170 + $0x1c0] sm:$0xff] %v7049
      %7114 = vst [vmem:[%s170 + $0x1c8] sm:$0xff] %v7050
      %7115 = vst [vmem:[%s170 + $0x1d0] sm:$0xff] %v7051
      %7116 = vst [vmem:[%s170 + $0x1d8] sm:$0xff] %v7052
      %7117 = vst [vmem:[%s170 + $0x1e0] sm:$0xff] %v7053
      %7118 = vst [vmem:[%s170 + $0x1e8] sm:$0xff] %v7054
      %7119 = vst [vmem:[%s170 + $0x1f0] sm:$0xff] %v7055
      %7120 = vst [vmem:[%s170 + $0x1f8] sm:$0xff] %v7056
      %p7121 = scmp.lt.s32.totalorder %s14, 1
      %s7122 = scalar_select %p7121, %s14, 1
      %s7123 = smul.addr %s7122, 64
      %s7124 = smul.addr %s7123, 8
      %s7125 = scalar_lea.vmem %s3, %s7124
      // Predicated region
      $region33: #{resnet_stage_pallas.1} parent=31 // pred_check
        %p7126 = pneg %p100
      $region34: #{resnet_stage_pallas.1} parent=31 // pred_check_branch
        %7128 = sbr.rel (%p7126) target = $region36
      $region35: #{resnet_stage_pallas.1} parent=31 // pred_region
        _
      $region36: #{resnet_stage_pallas.1} parent=31 // pred_fallthru
        _
    $region32: #{resnet_stage_pallas.1} parent=5 // pred_fallthru
      _
    %p7129 = scmp.le.s32.totalorder 2, %s9
    // Predicated region
    $region37: #{resnet_stage_pallas.1} parent=5 // pred_check
      %p7130 = pneg %p7129
    $region38: #{resnet_stage_pallas.1} parent=5 // pred_check_branch
      %7132 = sbr.rel (%p7130) target = $region40
    $region39: #{resnet_stage_pallas.1} parent=5 // pred_region
      %s7133 = ssub.s32 %s9, 2
      // Predicated region
      $region41: #{resnet_stage_pallas.1} parent=39 // pred_check
        %p7134 = pneg %p106
      $region42: #{resnet_stage_pallas.1} parent=39 // pred_check_branch
        %7136 = sbr.rel (%p7134) target = $region44
      $region43: #{resnet_stage_pallas.1} parent=39 // pred_region
        %p7137 = scmp.lt.s32.totalorder %s15, 1
        %s7138 = scalar_select %p7137, %s15, 1
        %s7139 = smul.addr %s7138, 64
        %s7140 = smul.addr %s7139, 8
        %s7141 = scalar_lea.vmem %s3, %s7140
      $region44: #{resnet_stage_pallas.1} parent=39 // pred_fallthru
        _
    $region40: #{resnet_stage_pallas.1} parent=5 // pred_fallthru
      _
  $region6: #{resnet_stage_pallas.1} parent=0 // loop_footer
    %s13 = sadd.s32 1, %s9
  $region7: #{resnet_stage_pallas.1} parent=0 // loop_footer_branch
    %8 = sbr.rel target = $region3
  $region8: #{resnet_stage_pallas.1} parent=0 // loop_exit
    _

</llo_original>
